<compile_context>
chip_gen: v5e
topology: v5e:2x2
jax: 0.10.0
libtpu: 0.0.40
codegen_flags: <defaults>
</compile_context>

<pallas_src>
import functools
import math

import numpy as np
import jax
import jax.numpy as jnp
from jax import lax
from jax.experimental import pallas as pl
from jax.experimental.pallas import tpu as pltpu


# ----------------------------------------------------------------------------------
# helpers
# ----------------------------------------------------------------------------------
def _round_up(x, m):
    return ((x + m - 1) // m) * m


def _pick_lane_tile(m):
    # Largest lane tile that still exposes >= 2 grid blocks (v7x megacore); else full M.
    for t in (512, 256, 128):
        if m % t == 0 and m // t >= 2:
            return t
    return m


# ----------------------------------------------------------------------------------
# Pallas kernel 1: lane-dense matmul  (P, M) = A(P, K) @ B(K, M) + bias(P, 1)
#   - single K block (no accumulator scratch / pl.when), grid tiles M only
#   - used for every conv / conv-transpose GEMM (output last dim = B*oh*ow, lane-dense)
# ----------------------------------------------------------------------------------
def _mm_lane_kernel(a_ref, b_ref, bias_ref, o_ref, *, relu):
    r = jnp.dot(a_ref[...], b_ref[...], preferred_element_type=jnp.float32) + bias_ref[...]
    if relu:
        r = jnp.maximum(r, 0.0)
    o_ref[...] = r.astype(o_ref.dtype)


def matmul_lane_dense(a, b, bias, relu=False, out_dtype=jnp.bfloat16):
    P, K = a.shape
    M = b.shape[1]
    tm = _pick_lane_tile(M)
    return pl.pallas_call(
        functools.partial(_mm_lane_kernel, relu=relu),
        out_shape=jax.ShapeDtypeStruct((P, M), out_dtype),
        grid_spec=pltpu.PrefetchScalarGridSpec(
            num_scalar_prefetch=0,
            grid=(M // tm,),
            in_specs=[
                pl.BlockSpec((P, K), lambda i: (0, 0)),
                pl.BlockSpec((K, tm), lambda i: (0, i)),
                pl.BlockSpec((P, 1), lambda i: (0, 0)),
            ],
            out_specs=pl.BlockSpec((P, tm), lambda i: (0, i)),
        ),
        compiler_params=pltpu.CompilerParams(dimension_semantics=("parallel",)),
    )(a.astype(jnp.bfloat16), b.astype(jnp.bfloat16), bias.astype(jnp.float32))


# ----------------------------------------------------------------------------------
# Pallas kernel 2: single-block linear for tiny-M cases (time embed, positional_ff)
# ----------------------------------------------------------------------------------
def _single_mm_kernel(x_ref, w_ref, b_ref, o_ref, *, relu):
    r = jnp.dot(x_ref[...], w_ref[...], preferred_element_type=jnp.float32) + b_ref[...]
    if relu:
        r = jnp.maximum(r, 0.0)
    o_ref[...] = r.astype(o_ref.dtype)


def small_linear(x, w_io, b_row, relu=False, out_dtype=jnp.bfloat16):
    """x: (M, K); w_io: (K, N) pre-transposed bf16; b_row: (1, N) f32."""
    M, K = x.shape
    N = w_io.shape[1]
    Mp = _round_up(max(M, 1), 8)
    xp = x.astype(jnp.bfloat16)
    if Mp != M:
        xp = jnp.pad(xp, ((0, Mp - M), (0, 0)))
    out = pl.pallas_call(
        functools.partial(_single_mm_kernel, relu=relu),
        out_shape=jax.ShapeDtypeStruct((Mp, N), out_dtype),
    )(xp, w_io, b_row.astype(jnp.float32))
    return out[:M]


# ----------------------------------------------------------------------------------
# Pallas kernel 3: fused TransformerDecoderLayer (post-norm, relu FF, inference/no dropout)
#   grid = (B,) "parallel"; all weights live in VMEM as whole blocks; single-pass softmax
# ----------------------------------------------------------------------------------
def _decoder_layer_kernel(x_ref, mem_ref,
                          wqkv_ref, bqkv_ref, wo1_ref, bo1_ref, g1_ref, e1_ref,
                          wq_ref, bq_ref, wkv_ref, bkv_ref, wo2_ref, bo2_ref, g2_ref, e2_ref,
                          w1_ref, b1_ref, w2_ref, b2_ref, g3_ref, e3_ref,
                          o_ref, *, nhead, eps):
    x = x_ref[0]                      # (L, d) bf16
    mem = mem_ref[0]                  # (Lm, d) bf16
    d = x.shape[-1]
    dh = d // nhead
    scale = 1.0 / math.sqrt(dh)

    def layer_norm(v, g_ref, b_ref):          # v: (L, d) f32
        mu = jnp.mean(v, axis=-1, keepdims=True)
        c = v - mu
        var = jnp.mean(c * c, axis=-1, keepdims=True)
        return c * lax.rsqrt(var + eps) * g_ref[...] + b_ref[...]

    def mha(q, k, v, wo_ref, bo_ref):          # q:(L,d) bf16, k/v:(Lk,d) bf16 -> (L,d) f32
        acc = None
        for h in range(nhead):
            sl = slice(h * dh, (h + 1) * dh)
            s = lax.dot_general(q[:, sl], k[:, sl], (((1,), (1,)), ((), ())),
                                preferred_element_type=jnp.float32) * scale
            s = s - jnp.max(s, axis=-1, keepdims=True)
            p = jnp.exp(s)
            p = p / jnp.sum(p, axis=-1, keepdims=True)     # exact divide (bit-parity note)
            o_h = jnp.dot(p.astype(jnp.bfloat16), v[:, sl],
                          preferred_element_type=jnp.float32)
            part = jnp.dot(o_h.astype(jnp.bfloat16), wo_ref[sl, :],
                           preferred_element_type=jnp.float32)
            acc = part if acc is None else acc + part
        return acc + bo_ref[...]

    # --- self attention + add & norm -------------------------------------------------
    qkv = jnp.dot(x, wqkv_ref[...], preferred_element_type=jnp.float32) + bqkv_ref[...]
    q = qkv[:, 0 * d:1 * d].astype(jnp.bfloat16)
    k = qkv[:, 1 * d:2 * d].astype(jnp.bfloat16)
    v = qkv[:, 2 * d:3 * d].astype(jnp.bfloat16)
    h1 = layer_norm(x.astype(jnp.float32) + mha(q, k, v, wo1_ref, bo1_ref), g1_ref, e1_ref)

    # --- cross attention + add & norm ------------------------------------------------
    qc = (jnp.dot(h1.astype(jnp.bfloat16), wq_ref[...],
                  preferred_element_type=jnp.float32) + bq_ref[...]).astype(jnp.bfloat16)
    kv = jnp.dot(mem, wkv_ref[...], preferred_element_type=jnp.float32) + bkv_ref[...]
    kc = kv[:, :d].astype(jnp.bfloat16)
    vc = kv[:, d:].astype(jnp.bfloat16)
    h2 = layer_norm(h1 + mha(qc, kc, vc, wo2_ref, bo2_ref), g2_ref, e2_ref)

    # --- feed-forward (whole 2048-wide K/N inside the kernel) + add & norm -----------
    ff = jnp.dot(h2.astype(jnp.bfloat16), w1_ref[...],
                 preferred_element_type=jnp.float32) + b1_ref[...]
    ff = jnp.maximum(ff, 0.0).astype(jnp.bfloat16)
    ff = jnp.dot(ff, w2_ref[...], preferred_element_type=jnp.float32) + b2_ref[...]
    h3 = layer_norm(h2 + ff, g3_ref, e3_ref)

    o_ref[0] = h3.astype(o_ref.dtype)


def decoder_layer_fused(seq, mem, p, nhead):
    B, L, d = seq.shape
    Lm = mem.shape[1]
    wlist = [p["sa_wqkv"], p["sa_bqkv"], p["sa_wo"], p["sa_bo"], p["ln1_g"], p["ln1_b"],
             p["ca_wq"], p["ca_bq"], p["ca_wkv"], p["ca_bkv"], p["ca_wo"], p["ca_bo"],
             p["ln2_g"], p["ln2_b"],
             p["ff_w1"], p["ff_b1"], p["ff_w2"], p["ff_b2"], p["ln3_g"], p["ln3_b"]]
    in_specs = [pl.BlockSpec((1, L, d), lambda b: (b, 0, 0)),
                pl.BlockSpec((1, Lm, d), lambda b: (b, 0, 0))]
    in_specs += [pl.BlockSpec(w.shape, lambda b: (0, 0)) for w in wlist]
    return pl.pallas_call(
        functools.partial(_decoder_layer_kernel, nhead=nhead, eps=1e-5),
        out_shape=jax.ShapeDtypeStruct((B, L, d), jnp.bfloat16),
        grid_spec=pltpu.PrefetchScalarGridSpec(
            num_scalar_prefetch=0,
            grid=(B,),
            in_specs=in_specs,
            out_specs=pl.BlockSpec((1, L, d), lambda b: (b, 0, 0)),
        ),
        compiler_params=pltpu.CompilerParams(dimension_semantics=("parallel",)),
    )(seq.astype(jnp.bfloat16), mem.astype(jnp.bfloat16), *wlist)


# ----------------------------------------------------------------------------------
# Conv / conv-transpose as channel-first im2col matmuls (lane-dense outputs)
#   activations are kept as (C, B, H, W) bf16 throughout the UNet conv path
# ----------------------------------------------------------------------------------
def conv2d_cf(x, w_mat, b_col, k, stride=1, padding=0, relu=False, out_dtype=jnp.bfloat16):
    """x: (Cin, B, H, W) bf16; w_mat: (Cout, k*k*Cin) bf16 (tap-major, ci-minor);
    b_col: (Cout, 1) f32.  Returns (Cout, B, oh, ow)."""
    C, B, H, W = x.shape
    Cout = w_mat.shape[0]
    if padding:
        x = jnp.pad(x, ((0, 0), (0, 0), (padding, padding), (padding, padding)))
    Hp, Wp = H + 2 * padding, W + 2 * padding
    oh = (Hp - k) // stride + 1
    ow = (Wp - k) // stride + 1
    taps = []
    for i in range(k):
        for j in range(k):
            taps.append(x[:, :, i:i + (oh - 1) * stride + 1:stride,
                          j:j + (ow - 1) * stride + 1:stride])
    patch = jnp.stack(taps, axis=0).reshape(k * k * C, B * oh * ow)
    y = matmul_lane_dense(w_mat, patch, b_col, relu=relu, out_dtype=out_dtype)
    return y.reshape(Cout, B, oh, ow)


def _deconv_weight(w_ct):
    """(Cin, Cout, 3, 3) ConvTranspose2d weight -> (4*Cin, 4*Cout) pixel-shuffle matmul
    weight (rows: the 2x2 input taps, cols: the 4 output sub-pixels ee/eo/oe/oo).
    Derivation re-validated for k=3, s=2, p=1, output_padding=1."""
    Cin, Cout = w_ct.shape[:2]
    Z = jnp.zeros((Cin, Cout), w_ct.dtype)
    wt = lambda i, j: w_ct[:, :, i, j]
    rows = [
        [wt(1, 1), wt(1, 2), wt(2, 1), wt(2, 2)],   # tap in[m,   n  ]
        [Z,        wt(1, 0), Z,        wt(2, 0)],   # tap in[m,   n+1]
        [Z,        Z,        wt(0, 1), wt(0, 2)],   # tap in[m+1, n  ]
        [Z,        Z,        Z,        wt(0, 0)],   # tap in[m+1, n+1]
    ]
    return jnp.concatenate([jnp.concatenate(r, axis=1) for r in rows], axis=0)


def conv_transpose2d_cf(x, w_mat, b_col, out_dtype=jnp.bfloat16):
    """ConvTranspose2d(k=3, s=2, p=1, op=1).  x: (Cin, B, H, W) bf16;
    w_mat: (4*Cout, 4*Cin) bf16 (transposed pixel-shuffle weight);
    b_col: (4*Cout, 1) f32.  Returns (Cout, B, 2H, 2W)."""
    Cin, B, H, W = x.shape
    Cout = w_mat.shape[0] // 4
    xp = jnp.pad(x, ((0, 0), (0, 0), (0, 1), (0, 1)))
    taps = [xp[:, :, 0:H, 0:W], xp[:, :, 0:H, 1:W + 1],
            xp[:, :, 1:H + 1, 0:W], xp[:, :, 1:H + 1, 1:W + 1]]
    patch = jnp.stack(taps, axis=0).reshape(4 * Cin, B * H * W)
    y = matmul_lane_dense(w_mat, patch, b_col, out_dtype=out_dtype)      # (4*Cout, B*H*W)
    y = y.reshape(2, 2, Cout, B, H, W)                                   # (dy, dx, co, b, h, w)
    y = jnp.transpose(y, (2, 3, 4, 0, 5, 1)).reshape(Cout, B, 2 * H, 2 * W)
    return y


# ----------------------------------------------------------------------------------
# Module helpers
# ----------------------------------------------------------------------------------
def timestep_embedding(t, dim, max_period=10000):
    half = dim // 2
    freqs = jnp.exp(-math.log(max_period) * jnp.arange(half, dtype=jnp.float32) / half)
    args = t[:, None].astype(jnp.float32) * freqs[None]
    emb = jnp.concatenate([jnp.cos(args), jnp.sin(args)], axis=-1)
    if dim % 2:
        emb = jnp.concatenate([emb, jnp.zeros_like(emb[:, :1])], axis=-1)
    return emb


# TODO(synk): Camera_v2 / transform_cam / coordRay were not provided with the module;
# the three helpers below are deterministic, shape-faithful stand-ins
# (pinhole rays -> rotate by M[:, :, :3] -> Pluecker-style 6D ray coordinates).
def camera_rays(fx, fy, h, w):
    ys = (jnp.arange(h, dtype=jnp.float32) - (h - 1) / 2.0) / fy
    xs = (jnp.arange(w, dtype=jnp.float32) - (w - 1) / 2.0) / fx
    gy, gx = jnp.meshgrid(ys, xs, indexing="ij")
    d = jnp.stack([gx, gy, jnp.ones_like(gx)], axis=-1)
    return d / jnp.linalg.norm(d, axis=-1, keepdims=True)


def transform_cam(rays, M):
    return jnp.einsum("bhwk,bjk->bhwj", rays, M[:, :, :3])


def coord_ray(spatial, cam):
    o = jnp.broadcast_to(spatial[:, :, :3], cam.shape)
    m = jnp.cross(o, cam)
    return jnp.concatenate([cam, m], axis=-1)[:, :, None, :]


# ----------------------------------------------------------------------------------
# Unet forward / pos_encoder / eval_image
# ----------------------------------------------------------------------------------
def unet_forward(params, x, timesteps, tokens, pos_enc, nhead, max_t):
    p = params
    # NCHW -> channel-first (C, B, H, W), bf16
    xc = jnp.transpose(x, (1, 0, 2, 3)).astype(jnp.bfloat16)
    x0 = conv2d_cf(xc, p["enc_conv0_w"], p["enc_conv0_b"], k=3, stride=1, padding=1)
    x1 = conv2d_cf(x0, p["enc_conv1_w"], p["enc_conv1_b"], k=5, stride=2, padding=2)
    x2 = conv2d_cf(x1, p["enc_conv2_w"], p["enc_conv2_b"], k=5, stride=2, padding=2)
    x3 = conv2d_cf(x2, p["enc_conv3_w"], p["enc_conv3_b"], k=3, stride=1, padding=1)
    D, B, h, w = x3.shape

    temb = small_linear(timestep_embedding(timesteps, D, max_t), p["time_w"], p["time_b"])
    x3 = (x3
          + jnp.transpose(pos_enc, (1, 0, 2, 3)).astype(jnp.bfloat16)
          + jnp.transpose(temb, (1, 0))[:, :, None, None].astype(jnp.bfloat16))

    seq = jnp.transpose(x3, (1, 2, 3, 0)).reshape(B, h * w, D)           # (B, L, D)
    mem = tokens[:, 1:].astype(jnp.bfloat16)
    for lp in p["dec_layers"]:
        seq = decoder_layer_fused(seq, mem, lp, nhead)
    y3 = jnp.transpose(seq.reshape(B, h, w, D), (3, 0, 1, 2))            # (D, B, h, w)

    up0 = conv_transpose2d_cf(y3, p["dec_up0_w"], p["dec_up0_b"])
    y2 = conv2d_cf(jnp.concatenate([x1, up0], axis=0),
                   p["dec_conv0_w"], p["dec_conv0_b"], k=3, padding=1)
    up1 = conv_transpose2d_cf(y2, p["dec_up1_w"], p["dec_up1_b"])
    y1 = conv2d_cf(jnp.concatenate([x0, up1], axis=0),
                   p["dec_conv1_w"], p["dec_conv1_b"], k=3, padding=1, out_dtype=jnp.float32)
    return jnp.transpose(y1, (1, 0, 2, 3))                               # (B, 4, H, W) f32


def pos_encoder(params, tokens, M_relative=None):
    B = tokens.shape[0]
    if M_relative is None:
        M_relative = jnp.tile(
            jnp.concatenate([jnp.eye(3), jnp.zeros((3, 1))], axis=-1)[None], (B, 1, 1))
    spatial = small_linear(tokens[:, 0, :], params["pos_ff_w"], params["pos_ff_b"],
                           out_dtype=jnp.float32)[:, None, :]            # (B, 1, 9)
    shift = jnp.concatenate([jnp.zeros((B, 6)), M_relative[..., -1]], axis=-1)[:, None]
    spatial = spatial - shift
    rays = jnp.tile(params["rays"][None], (B, 1, 1, 1))
    cam = transform_cam(rays, M_relative)
    b, pw, ph, _ = cam.shape
    cam = coord_ray(spatial, cam.reshape(b, -1, 3)).squeeze(-2)          # (B, pw*ph, 6)
    cam_t = jnp.transpose(cam.reshape(b * pw * ph, 6))                   # (6, B*pw*ph)
    emb = matmul_lane_dense(params["soft_wT"], cam_t, params["soft_bcol"],
                            out_dtype=jnp.float32)                       # (D, B*pw*ph)
    return jnp.transpose(emb.reshape(-1, b, pw, ph), (1, 0, 2, 3))       # (B, D, pw, ph)


def eval_image(params, cfg, tokens, key, M_relative=None):
    B = tokens.shape[0]
    key, k0 = jax.random.split(key)
    xt = jax.random.normal(k0, (B, 4, 128, 128), jnp.float32)
    pos_enc = pos_encoder(params, tokens, M_relative)

    @jax.jit
    def step(xt, z, t, a, ab, sig):
        pred = unet_forward(params, xt, t, tokens, pos_enc, cfg["nhead"], cfg["max_t"])
        return a ** -0.5 * (xt - (1.0 - a) / jnp.sqrt(1.0 - ab) * pred) + sig * z

    for i in range(cfg["max_t"] - 1, -1, -1):
        key, kz = jax.random.split(key)
        z = jax.random.normal(kz, xt.shape, jnp.float32)
        t = i + jnp.zeros((B,), jnp.float32)
        xt = step(xt, z, t, jnp.float32(cfg["alpha"][i]),
                  jnp.float32(cfg["alpha_bar"][i]), jnp.float32(cfg["sigma"][i]))
    return xt


# ----------------------------------------------------------------------------------
# Deterministic parameter initialization (pre-transposed, pre-cast matmul layouts)
# ----------------------------------------------------------------------------------
class KeyGen:
    def __init__(self, key):
        self._key = key

    def __call__(self):
        self._key, k = jax.random.split(self._key)
        return k


def _dense_t(kg, i, o, scale=0.05):
    """PyTorch Linear(o, i) -> ((in, out) bf16 weight, (1, out) f32 bias)."""
    w = scale * jax.random.normal(kg(), (o, i), jnp.float32)
    return jnp.transpose(w).astype(jnp.bfloat16), jnp.zeros((1, o), jnp.float32)


def _conv_mat(kg, o, c, k, scale=0.05):
    """PyTorch Conv2d weight (o, c, k, k) -> ((o, k*k*c) bf16, (o, 1) f32 bias)."""
    w = scale * jax.random.normal(kg(), (o, c, k, k), jnp.float32)
    wm = jnp.transpose(w, (0, 2, 3, 1)).reshape(o, k * k * c)
    return wm.astype(jnp.bfloat16), jnp.zeros((o, 1), jnp.float32)


def _deconv_mat(kg, ci, co, scale=0.05):
    """ConvTranspose2d weight (ci, co, 3, 3) -> ((4*co, 4*ci) bf16, (4*co, 1) f32 bias)."""
    w = scale * jax.random.normal(kg(), (ci, co, 3, 3), jnp.float32)
    wm = jnp.transpose(_deconv_weight(w))
    return wm.astype(jnp.bfloat16), jnp.zeros((4 * co, 1), jnp.float32)


def init_dec_layer(kg, d, ff=2048, scale=0.05):
    wqkv, bqkv = _dense_t(kg, d, 3 * d, scale)          # self-attn in_proj (d, 3d)
    wo1, bo1 = _dense_t(kg, d, d, scale)
    wc, bc = _dense_t(kg, d, 3 * d, scale)               # cross-attn in_proj (d, 3d)
    wo2, bo2 = _dense_t(kg, d, d, scale)
    w1, b1 = _dense_t(kg, d, ff, scale)
    w2, b2 = _dense_t(kg, ff, d, scale)
    ones = jnp.ones((1, d), jnp.float32)
    zeros = jnp.zeros((1, d), jnp.float32)
    return {"sa_wqkv": wqkv, "sa_bqkv": bqkv, "sa_wo": wo1, "sa_bo": bo1,
            "ca_wq": wc[:, :d], "ca_bq": bc[:, :d],
            "ca_wkv": wc[:, d:], "ca_bkv": bc[:, d:],
            "ca_wo": wo2, "ca_bo": bo2,
            "ff_w1": w1, "ff_b1": b1, "ff_w2": w2, "ff_b2": b2,
            "ln1_g": ones, "ln1_b": zeros,
            "ln2_g": ones, "ln2_b": zeros,
            "ln3_g": ones, "ln3_b": zeros}


def init_params(key, d_input=32, num_transformer_layer=1, max_t=2, nhead=2):
    kg = KeyGen(key)
    D = d_input
    time_w, time_b = _dense_t(kg, D, D)
    pos_w, pos_b = _dense_t(kg, D, 9)
    soft_w, soft_b = _dense_t(kg, 6, D)
    c0w, c0b = _conv_mat(kg, D // 8, 4, 3)
    c1w, c1b = _conv_mat(kg, D // 4, D // 8, 5)          # bias=False -> zero bias
    c2w, c2b = _conv_mat(kg, D // 2, D // 4, 5)          # bias=False -> zero bias
    c3w, c3b = _conv_mat(kg, D, D // 2, 3)
    u0w, u0b = _deconv_mat(kg, D, D // 4)
    d0w, d0b = _conv_mat(kg, D // 4, D // 2, 3)
    u1w, u1b = _deconv_mat(kg, D // 4, D // 8)
    d1w, d1b = _conv_mat(kg, 4, D // 4, 3)
    params = {
        "time_w": time_w, "time_b": time_b,
        "pos_ff_w": pos_w, "pos_ff_b": pos_b,
        "soft_wT": jnp.transpose(soft_w), "soft_bcol": jnp.transpose(soft_b),
        "rays": camera_rays(35.0, 35.0, 32, 32),
        "enc_conv0_w": c0w, "enc_conv0_b": c0b,
        "enc_conv1_w": c1w, "enc_conv1_b": c1b,
        "enc_conv2_w": c2w, "enc_conv2_b": c2b,
        "enc_conv3_w": c3w, "enc_conv3_b": c3b,
        "dec_layers": [init_dec_layer(kg, D) for _ in range(num_transformer_layer)],
        "dec_up0_w": u0w, "dec_up0_b": u0b,
        "dec_conv0_w": d0w, "dec_conv0_b": d0b,
        "dec_up1_w": u1w, "dec_up1_b": u1b,
        "dec_conv1_w": d1w, "dec_conv1_b": d1b,
    }
    alpha = 1.0 - np.arange(0, 1, 1.0 / (max_t + 1))[1:]
    alpha_bar = np.array([np.prod(alpha[: i + 1]) for i in range(len(alpha))])
    sigma = np.concatenate(
        [np.zeros(1),
         np.sqrt((1 - alpha_bar[:-1]) / (1 - alpha_bar[1:]) * (1 - alpha[1:]))])
    cfg = {"D": D, "nhead": nhead, "max_t": max_t,
           "alpha": alpha, "alpha_bar": alpha_bar, "sigma": sigma}
    return params, cfg


# ----------------------------------------------------------------------------------
if __name__ == "__main__":
    key = jax.random.PRNGKey(0)
    kp, kx, kt, kpe = jax.random.split(key, 4)
    d_input, nhead, max_t = 32, 2, 2
    params, cfg = init_params(kp, d_input=d_input, num_transformer_layer=1,
                              max_t=max_t, nhead=nhead)

    # Small shapes consistent with Unet.forward: x (B,4,H,W); x3 is H/4 x W/4;
    # pos_enc matches x3 (NCHW); tokens (B, T, d) with tokens[:, 1:] as memory.
    B, H, W = 2, 32, 32
    x = jax.random.uniform(kx, (B, 4, H, W), jnp.float32)
    timesteps = jnp.zeros((B,), jnp.float32)
    tokens = 0.1 * jax.random.normal(kt, (B, 5, d_input), jnp.float32)
    pos_enc = 0.1 * jax.random.normal(kpe, (B, d_input, H // 4, W // 4), jnp.float32)

    fwd = jax.jit(functools.partial(unet_forward, nhead=nhead, max_t=max_t))
    out = fwd(params, x, timesteps, tokens, pos_enc)
    out = jax.block_until_ready(out)
    assert out.shape == (B, 4, H, W), out.shape
    assert bool(jnp.isfinite(out).all())
    print("KERNEL_OK")
</pallas_src>

<mosaic_0001>
module attributes {stable_mosaic.version = 11 : i64} {
  func.func @_mm_lane_kernel(%arg0: i32, %arg1: memref<4x36xbf16, #tpu.memory_space<vmem>>, %arg2: memref<36x512xbf16, #tpu.memory_space<vmem>>, %arg3: memref<4x1xf32, #tpu.memory_space<vmem>>, %arg4: memref<4x512xbf16, #tpu.memory_space<vmem>>) attributes {dimension_semantics = [#tpu.dimension_semantics<parallel>], iteration_bounds = array<i64: 4>, scalar_prefetch = 0 : i64, scratch_operands = 0 : i64, tpu.core_type = #tpu.core_type<tc>, window_params = [{pipeline_mode = #tpu.pipeline_mode<synchronous>, transform_indices = @transform_0, window_bounds = array<i64: 4, 36>}, {transform_indices = @transform_1, window_bounds = array<i64: 36, 512>}, {pipeline_mode = #tpu.pipeline_mode<synchronous>, transform_indices = @transform_2, window_bounds = array<i64: 4, 1>}, {transform_indices = @transform_3, window_bounds = array<i64: 4, 512>}]} {
    %c0 = arith.constant 0 : index
    %c0_0 = arith.constant 0 : index
    %0 = vector.load %arg1[%c0, %c0_0] : memref<4x36xbf16, #tpu.memory_space<vmem>>, vector<4x36xbf16>
    %c0_1 = arith.constant 0 : index
    %c0_2 = arith.constant 0 : index
    %1 = vector.load %arg2[%c0_1, %c0_2] : memref<36x512xbf16, #tpu.memory_space<vmem>>, vector<36x512xbf16>
    %cst = arith.constant dense<0.000000e+00> : vector<4x512xf32>
    %2 = tpu.matmul %0, %1, %cst {dimension_numbers = #tpu.dot_dimension_numbers<[1], [0], [0], [1], [0, 0, 1, 1], [], []>} : vector<4x36xbf16>, vector<36x512xbf16>, vector<4x512xf32> -> vector<4x512xf32>
    %c0_3 = arith.constant 0 : index
    %c0_4 = arith.constant 0 : index
    %3 = vector.load %arg3[%c0_3, %c0_4] : memref<4x1xf32, #tpu.memory_space<vmem>>, vector<4x1xf32>
    %4 = vector.broadcast %3 : vector<4x1xf32> to vector<4x512xf32>
    %5 = arith.addf %2, %4 : vector<4x512xf32>
    %6 = arith.truncf %5 : vector<4x512xf32> to vector<4x512xbf16>
    %c0_5 = arith.constant 0 : index
    %c0_6 = arith.constant 0 : index
    %7 = vector.load %arg4[%c0_5, %c0_6] : memref<4x512xbf16, #tpu.memory_space<vmem>>, vector<4x512xbf16>
    tpu.vector_store %arg4[%c0_5, %c0_6], %6 {strides = array<i32>} : memref<4x512xbf16, #tpu.memory_space<vmem>>, vector<4x512xbf16>,
    return
  }
  func.func @transform_0(%arg0: i32) -> (i32, i32) {
    %c0_i32 = arith.constant 0 : i32
    %c0_i32_0 = arith.constant 0 : i32
    %c0_i32_1 = arith.constant 0 : i32
    return %c0_i32, %c0_i32_0 : i32, i32
  }
  func.func @transform_1(%arg0: i32) -> (i32, i32) {
    %c0_i32 = arith.constant 0 : i32
    %c0_i32_0 = arith.constant 0 : i32
    return %c0_i32, %arg0 : i32, i32
  }
  func.func @transform_2(%arg0: i32) -> (i32, i32) {
    %c0_i32 = arith.constant 0 : i32
    %c0_i32_0 = arith.constant 0 : i32
    %c0_i32_1 = arith.constant 0 : i32
    return %c0_i32, %c0_i32_0 : i32, i32
  }
  func.func @transform_3(%arg0: i32) -> (i32, i32) {
    %c0_i32 = arith.constant 0 : i32
    %c0_i32_0 = arith.constant 0 : i32
    return %c0_i32, %arg0 : i32, i32
  }
}

module attributes {stable_mosaic.version = 11 : i64} {
  func.func @_mm_lane_kernel(%arg0: i32, %arg1: memref<8x100xbf16, #tpu.memory_space<vmem>>, %arg2: memref<100x256xbf16, #tpu.memory_space<vmem>>, %arg3: memref<8x1xf32, #tpu.memory_space<vmem>>, %arg4: memref<8x256xbf16, #tpu.memory_space<vmem>>) attributes {dimension_semantics = [#tpu.dimension_semantics<parallel>], iteration_bounds = array<i64: 2>, scalar_prefetch = 0 : i64, scratch_operands = 0 : i64, tpu.core_type = #tpu.core_type<tc>, window_params = [{pipeline_mode = #tpu.pipeline_mode<synchronous>, transform_indices = @transform_0, window_bounds = array<i64: 8, 100>}, {transform_indices = @transform_1, window_bounds = array<i64: 100, 256>}, {pipeline_mode = #tpu.pipeline_mode<synchronous>, transform_indices = @transform_2, window_bounds = array<i64: 8, 1>}, {transform_indices = @transform_3, window_bounds = array<i64: 8, 256>}]} {
    %c0 = arith.constant 0 : index
    %c0_0 = arith.constant 0 : index
    %0 = vector.load %arg1[%c0, %c0_0] : memref<8x100xbf16, #tpu.memory_space<vmem>>, vector<8x100xbf16>
    %c0_1 = arith.constant 0 : index
    %c0_2 = arith.constant 0 : index
    %1 = vector.load %arg2[%c0_1, %c0_2] : memref<100x256xbf16, #tpu.memory_space<vmem>>, vector<100x256xbf16>
    %cst = arith.constant dense<0.000000e+00> : vector<8x256xf32>
    %2 = tpu.matmul %0, %1, %cst {dimension_numbers = #tpu.dot_dimension_numbers<[1], [0], [0], [1], [0, 0, 1, 1], [], []>} : vector<8x100xbf16>, vector<100x256xbf16>, vector<8x256xf32> -> vector<8x256xf32>
    %c0_3 = arith.constant 0 : index
    %c0_4 = arith.constant 0 : index
    %3 = vector.load %arg3[%c0_3, %c0_4] : memref<8x1xf32, #tpu.memory_space<vmem>>, vector<8x1xf32>
    %4 = vector.broadcast %3 : vector<8x1xf32> to vector<8x256xf32>
    %5 = arith.addf %2, %4 : vector<8x256xf32>
    %6 = arith.truncf %5 : vector<8x256xf32> to vector<8x256xbf16>
    %c0_5 = arith.constant 0 : index
    %c0_6 = arith.constant 0 : index
    %7 = vector.load %arg4[%c0_5, %c0_6] : memref<8x256xbf16, #tpu.memory_space<vmem>>, vector<8x256xbf16>
    tpu.vector_store %arg4[%c0_5, %c0_6], %6 {strides = array<i32>} : memref<8x256xbf16, #tpu.memory_space<vmem>>, vector<8x256xbf16>,
    return
  }
  func.func @transform_0(%arg0: i32) -> (i32, i32) {
    %c0_i32 = arith.constant 0 : i32
    %c0_i32_0 = arith.constant 0 : i32
    %c0_i32_1 = arith.constant 0 : i32
    return %c0_i32, %c0_i32_0 : i32, i32
  }
  func.func @transform_1(%arg0: i32) -> (i32, i32) {
    %c0_i32 = arith.constant 0 : i32
    %c0_i32_0 = arith.constant 0 : i32
    return %c0_i32, %arg0 : i32, i32
  }
  func.func @transform_2(%arg0: i32) -> (i32, i32) {
    %c0_i32 = arith.constant 0 : i32
    %c0_i32_0 = arith.constant 0 : i32
    %c0_i32_1 = arith.constant 0 : i32
    return %c0_i32, %c0_i32_0 : i32, i32
  }
  func.func @transform_3(%arg0: i32) -> (i32, i32) {
    %c0_i32 = arith.constant 0 : i32
    %c0_i32_0 = arith.constant 0 : i32
    return %c0_i32, %arg0 : i32, i32
  }
}

module attributes {stable_mosaic.version = 11 : i64} {
  func.func @_mm_lane_kernel(%arg0: i32, %arg1: memref<16x200xbf16, #tpu.memory_space<vmem>>, %arg2: memref<200x128xbf16, #tpu.memory_space<vmem>>, %arg3: memref<16x1xf32, #tpu.memory_space<vmem>>, %arg4: memref<16x128xbf16, #tpu.memory_space<vmem>>) attributes {dimension_semantics = [#tpu.dimension_semantics<parallel>], iteration_bounds = array<i64: 1>, scalar_prefetch = 0 : i64, scratch_operands = 0 : i64, tpu.core_type = #tpu.core_type<tc>, window_params = [{pipeline_mode = #tpu.pipeline_mode<synchronous>, transform_indices = @transform_0, window_bounds = array<i64: 16, 200>}, {transform_indices = @transform_1, window_bounds = array<i64: 200, 128>}, {pipeline_mode = #tpu.pipeline_mode<synchronous>, transform_indices = @transform_2, window_bounds = array<i64: 16, 1>}, {transform_indices = @transform_3, window_bounds = array<i64: 16, 128>}]} {
    %c0 = arith.constant 0 : index
    %c0_0 = arith.constant 0 : index
    %0 = vector.load %arg1[%c0, %c0_0] : memref<16x200xbf16, #tpu.memory_space<vmem>>, vector<16x200xbf16>
    %c0_1 = arith.constant 0 : index
    %c0_2 = arith.constant 0 : index
    %1 = vector.load %arg2[%c0_1, %c0_2] : memref<200x128xbf16, #tpu.memory_space<vmem>>, vector<200x128xbf16>
    %cst = arith.constant dense<0.000000e+00> : vector<16x128xf32>
    %2 = tpu.matmul %0, %1, %cst {dimension_numbers = #tpu.dot_dimension_numbers<[1], [0], [0], [1], [0, 0, 1, 1], [], []>} : vector<16x200xbf16>, vector<200x128xbf16>, vector<16x128xf32> -> vector<16x128xf32>
    %c0_3 = arith.constant 0 : index
    %c0_4 = arith.constant 0 : index
    %3 = vector.load %arg3[%c0_3, %c0_4] : memref<16x1xf32, #tpu.memory_space<vmem>>, vector<16x1xf32>
    %4 = vector.broadcast %3 : vector<16x1xf32> to vector<16x128xf32>
    %5 = arith.addf %2, %4 : vector<16x128xf32>
    %6 = arith.truncf %5 : vector<16x128xf32> to vector<16x128xbf16>
    %c0_5 = arith.constant 0 : index
    %c0_6 = arith.constant 0 : index
    %7 = vector.load %arg4[%c0_5, %c0_6] : memref<16x128xbf16, #tpu.memory_space<vmem>>, vector<16x128xbf16>
    tpu.vector_store %arg4[%c0_5, %c0_6], %6 {strides = array<i32>} : memref<16x128xbf16, #tpu.memory_space<vmem>>, vector<16x128xbf16>,
    return
  }
  func.func @transform_0(%arg0: i32) -> (i32, i32) {
    %c0_i32 = arith.constant 0 : i32
    %c0_i32_0 = arith.constant 0 : i32
    %c0_i32_1 = arith.constant 0 : i32
    return %c0_i32, %c0_i32_0 : i32, i32
  }
  func.func @transform_1(%arg0: i32) -> (i32, i32) {
    %c0_i32 = arith.constant 0 : i32
    %c0_i32_0 = arith.constant 0 : i32
    return %c0_i32, %arg0 : i32, i32
  }
  func.func @transform_2(%arg0: i32) -> (i32, i32) {
    %c0_i32 = arith.constant 0 : i32
    %c0_i32_0 = arith.constant 0 : i32
    %c0_i32_1 = arith.constant 0 : i32
    return %c0_i32, %c0_i32_0 : i32, i32
  }
  func.func @transform_3(%arg0: i32) -> (i32, i32) {
    %c0_i32 = arith.constant 0 : i32
    %c0_i32_0 = arith.constant 0 : i32
    return %c0_i32, %arg0 : i32, i32
  }
}

module attributes {stable_mosaic.version = 11 : i64} {
  func.func @_mm_lane_kernel(%arg0: i32, %arg1: memref<32x144xbf16, #tpu.memory_space<vmem>>, %arg2: memref<144x128xbf16, #tpu.memory_space<vmem>>, %arg3: memref<32x1xf32, #tpu.memory_space<vmem>>, %arg4: memref<32x128xbf16, #tpu.memory_space<vmem>>) attributes {dimension_semantics = [#tpu.dimension_semantics<parallel>], iteration_bounds = array<i64: 1>, scalar_prefetch = 0 : i64, scratch_operands = 0 : i64, tpu.core_type = #tpu.core_type<tc>, window_params = [{pipeline_mode = #tpu.pipeline_mode<synchronous>, transform_indices = @transform_0, window_bounds = array<i64: 32, 144>}, {transform_indices = @transform_1, window_bounds = array<i64: 144, 128>}, {pipeline_mode = #tpu.pipeline_mode<synchronous>, transform_indices = @transform_2, window_bounds = array<i64: 32, 1>}, {transform_indices = @transform_3, window_bounds = array<i64: 32, 128>}]} {
    %c0 = arith.constant 0 : index
    %c0_0 = arith.constant 0 : index
    %0 = vector.load %arg1[%c0, %c0_0] : memref<32x144xbf16, #tpu.memory_space<vmem>>, vector<32x144xbf16>
    %c0_1 = arith.constant 0 : index
    %c0_2 = arith.constant 0 : index
    %1 = vector.load %arg2[%c0_1, %c0_2] : memref<144x128xbf16, #tpu.memory_space<vmem>>, vector<144x128xbf16>
    %cst = arith.constant dense<0.000000e+00> : vector<32x128xf32>
    %2 = tpu.matmul %0, %1, %cst {dimension_numbers = #tpu.dot_dimension_numbers<[1], [0], [0], [1], [0, 0, 1, 1], [], []>} : vector<32x144xbf16>, vector<144x128xbf16>, vector<32x128xf32> -> vector<32x128xf32>
    %c0_3 = arith.constant 0 : index
    %c0_4 = arith.constant 0 : index
    %3 = vector.load %arg3[%c0_3, %c0_4] : memref<32x1xf32, #tpu.memory_space<vmem>>, vector<32x1xf32>
    %4 = vector.broadcast %3 : vector<32x1xf32> to vector<32x128xf32>
    %5 = arith.addf %2, %4 : vector<32x128xf32>
    %6 = arith.truncf %5 : vector<32x128xf32> to vector<32x128xbf16>
    %c0_5 = arith.constant 0 : index
    %c0_6 = arith.constant 0 : index
    %7 = vector.load %arg4[%c0_5, %c0_6] : memref<32x128xbf16, #tpu.memory_space<vmem>>, vector<32x128xbf16>
    tpu.vector_store %arg4[%c0_5, %c0_6], %6 {strides = array<i32>} : memref<32x128xbf16, #tpu.memory_space<vmem>>, vector<32x128xbf16>,
    return
  }
  func.func @transform_0(%arg0: i32) -> (i32, i32) {
    %c0_i32 = arith.constant 0 : i32
    %c0_i32_0 = arith.constant 0 : i32
    %c0_i32_1 = arith.constant 0 : i32
    return %c0_i32, %c0_i32_0 : i32, i32
  }
  func.func @transform_1(%arg0: i32) -> (i32, i32) {
    %c0_i32 = arith.constant 0 : i32
    %c0_i32_0 = arith.constant 0 : i32
    return %c0_i32, %arg0 : i32, i32
  }
  func.func @transform_2(%arg0: i32) -> (i32, i32) {
    %c0_i32 = arith.constant 0 : i32
    %c0_i32_0 = arith.constant 0 : i32
    %c0_i32_1 = arith.constant 0 : i32
    return %c0_i32, %c0_i32_0 : i32, i32
  }
  func.func @transform_3(%arg0: i32) -> (i32, i32) {
    %c0_i32 = arith.constant 0 : i32
    %c0_i32_0 = arith.constant 0 : i32
    return %c0_i32, %arg0 : i32, i32
  }
}

module attributes {stable_mosaic.version = 11 : i64} {
  func.func @_single_mm_kernel(%arg0: memref<8x32xbf16, #tpu.memory_space<vmem>>, %arg1: memref<32x32xbf16, #tpu.memory_space<vmem>>, %arg2: memref<1x32xf32, #tpu.memory_space<vmem>>, %arg3: memref<8x32xbf16, #tpu.memory_space<vmem>>) attributes {dimension_semantics = [], scalar_prefetch = 0 : i64, scratch_operands = 0 : i64, tpu.core_type = #tpu.core_type<tc>} {
    %c0 = arith.constant 0 : index
    %c0_0 = arith.constant 0 : index
    %0 = vector.load %arg0[%c0, %c0_0] : memref<8x32xbf16, #tpu.memory_space<vmem>>, vector<8x32xbf16>
    %c0_1 = arith.constant 0 : index
    %c0_2 = arith.constant 0 : index
    %1 = vector.load %arg1[%c0_1, %c0_2] : memref<32x32xbf16, #tpu.memory_space<vmem>>, vector<32x32xbf16>
    %cst = arith.constant dense<0.000000e+00> : vector<8x32xf32>
    %2 = tpu.matmul %0, %1, %cst {dimension_numbers = #tpu.dot_dimension_numbers<[1], [0], [0], [1], [0, 0, 1, 1], [], []>} : vector<8x32xbf16>, vector<32x32xbf16>, vector<8x32xf32> -> vector<8x32xf32>
    %c0_3 = arith.constant 0 : index
    %c0_4 = arith.constant 0 : index
    %3 = vector.load %arg2[%c0_3, %c0_4] : memref<1x32xf32, #tpu.memory_space<vmem>>, vector<1x32xf32>
    %4 = vector.broadcast %3 : vector<1x32xf32> to vector<8x32xf32>
    %5 = arith.addf %2, %4 : vector<8x32xf32>
    %6 = arith.truncf %5 : vector<8x32xf32> to vector<8x32xbf16>
    %c0_5 = arith.constant 0 : index
    %c0_6 = arith.constant 0 : index
    %7 = vector.load %arg3[%c0_5, %c0_6] : memref<8x32xbf16, #tpu.memory_space<vmem>>, vector<8x32xbf16>
    tpu.vector_store %arg3[%c0_5, %c0_6], %6 {strides = array<i32>} : memref<8x32xbf16, #tpu.memory_space<vmem>>, vector<8x32xbf16>,
    return
  }
}

module attributes {stable_mosaic.version = 11 : i64} {
  func.func @_decoder_layer_kernel(%arg0: i32, %arg1: memref<1x64x32xbf16, #tpu.memory_space<vmem>>, %arg2: memref<1x4x32xbf16, #tpu.memory_space<vmem>>, %arg3: memref<32x96xbf16, #tpu.memory_space<vmem>>, %arg4: memref<1x96xf32, #tpu.memory_space<vmem>>, %arg5: memref<32x32xbf16, #tpu.memory_space<vmem>>, %arg6: memref<1x32xf32, #tpu.memory_space<vmem>>, %arg7: memref<1x32xf32, #tpu.memory_space<vmem>>, %arg8: memref<1x32xf32, #tpu.memory_space<vmem>>, %arg9: memref<32x32xbf16, #tpu.memory_space<vmem>>, %arg10: memref<1x32xf32, #tpu.memory_space<vmem>>, %arg11: memref<32x64xbf16, #tpu.memory_space<vmem>>, %arg12: memref<1x64xf32, #tpu.memory_space<vmem>>, %arg13: memref<32x32xbf16, #tpu.memory_space<vmem>>, %arg14: memref<1x32xf32, #tpu.memory_space<vmem>>, %arg15: memref<1x32xf32, #tpu.memory_space<vmem>>, %arg16: memref<1x32xf32, #tpu.memory_space<vmem>>, %arg17: memref<32x2048xbf16, #tpu.memory_space<vmem>>, %arg18: memref<1x2048xf32, #tpu.memory_space<vmem>>, %arg19: memref<2048x32xbf16, #tpu.memory_space<vmem>>, %arg20: memref<1x32xf32, #tpu.memory_space<vmem>>, %arg21: memref<1x32xf32, #tpu.memory_space<vmem>>, %arg22: memref<1x32xf32, #tpu.memory_space<vmem>>, %arg23: memref<1x64x32xbf16, #tpu.memory_space<vmem>>) attributes {dimension_semantics = [#tpu.dimension_semantics<parallel>], iteration_bounds = array<i64: 2>, scalar_prefetch = 0 : i64, scratch_operands = 0 : i64, tpu.core_type = #tpu.core_type<tc>, window_params = [{transform_indices = @transform_0, window_bounds = array<i64: 1, 64, 32>}, {transform_indices = @transform_1, window_bounds = array<i64: 1, 4, 32>}, {pipeline_mode = #tpu.pipeline_mode<synchronous>, transform_indices = @transform_2, window_bounds = array<i64: 32, 96>}, {pipeline_mode = #tpu.pipeline_mode<synchronous>, transform_indices = @transform_3, window_bounds = array<i64: 1, 96>}, {pipeline_mode = #tpu.pipeline_mode<synchronous>, transform_indices = @transform_4, window_bounds = array<i64: 32, 32>}, {pipeline_mode = #tpu.pipeline_mode<synchronous>, transform_indices = @transform_5, window_bounds = array<i64: 1, 32>}, {pipeline_mode = #tpu.pipeline_mode<synchronous>, transform_indices = @transform_6, window_bounds = array<i64: 1, 32>}, {pipeline_mode = #tpu.pipeline_mode<synchronous>, transform_indices = @transform_7, window_bounds = array<i64: 1, 32>}, {pipeline_mode = #tpu.pipeline_mode<synchronous>, transform_indices = @transform_8, window_bounds = array<i64: 32, 32>}, {pipeline_mode = #tpu.pipeline_mode<synchronous>, transform_indices = @transform_9, window_bounds = array<i64: 1, 32>}, {pipeline_mode = #tpu.pipeline_mode<synchronous>, transform_indices = @transform_10, window_bounds = array<i64: 32, 64>}, {pipeline_mode = #tpu.pipeline_mode<synchronous>, transform_indices = @transform_11, window_bounds = array<i64: 1, 64>}, {pipeline_mode = #tpu.pipeline_mode<synchronous>, transform_indices = @transform_12, window_bounds = array<i64: 32, 32>}, {pipeline_mode = #tpu.pipeline_mode<synchronous>, transform_indices = @transform_13, window_bounds = array<i64: 1, 32>}, {pipeline_mode = #tpu.pipeline_mode<synchronous>, transform_indices = @transform_14, window_bounds = array<i64: 1, 32>}, {pipeline_mode = #tpu.pipeline_mode<synchronous>, transform_indices = @transform_15, window_bounds = array<i64: 1, 32>}, {pipeline_mode = #tpu.pipeline_mode<synchronous>, transform_indices = @transform_16, window_bounds = array<i64: 32, 2048>}, {pipeline_mode = #tpu.pipeline_mode<synchronous>, transform_indices = @transform_17, window_bounds = array<i64: 1, 2048>}, {pipeline_mode = #tpu.pipeline_mode<synchronous>, transform_indices = @transform_18, window_bounds = array<i64: 2048, 32>}, {pipeline_mode = #tpu.pipeline_mode<synchronous>, transform_indices = @transform_19, window_bounds = array<i64: 1, 32>}, {pipeline_mode = #tpu.pipeline_mode<synchronous>, transform_indices = @transform_20, window_bounds = array<i64: 1, 32>}, {pipeline_mode = #tpu.pipeline_mode<synchronous>, transform_indices = @transform_21, window_bounds = array<i64: 1, 32>}, {transform_indices = @transform_22, window_bounds = array<i64: 1, 64, 32>}]} {
    %c0 = arith.constant 0 : index
    %c0_0 = arith.constant 0 : index
    %c0_1 = arith.constant 0 : index
    %0 = vector.load %arg1[%c0, %c0_0, %c0_1] : memref<1x64x32xbf16, #tpu.memory_space<vmem>>, vector<1x64x32xbf16>
    %1 = vector.shape_cast %0 : vector<1x64x32xbf16> to vector<64x32xbf16>
    %c0_2 = arith.constant 0 : index
    %c0_3 = arith.constant 0 : index
    %c0_4 = arith.constant 0 : index
    %2 = vector.load %arg2[%c0_2, %c0_3, %c0_4] : memref<1x4x32xbf16, #tpu.memory_space<vmem>>, vector<1x4x32xbf16>
    %3 = vector.shape_cast %2 : vector<1x4x32xbf16> to vector<4x32xbf16>
    %c0_5 = arith.constant 0 : index
    %c0_6 = arith.constant 0 : index
    %4 = vector.load %arg3[%c0_5, %c0_6] : memref<32x96xbf16, #tpu.memory_space<vmem>>, vector<32x96xbf16>
    %cst = arith.constant dense<0.000000e+00> : vector<64x96xf32>
    %5 = tpu.matmul %1, %4, %cst {dimension_numbers = #tpu.dot_dimension_numbers<[1], [0], [0], [1], [0, 0, 1, 1], [], []>} : vector<64x32xbf16>, vector<32x96xbf16>, vector<64x96xf32> -> vector<64x96xf32>
    %c0_7 = arith.constant 0 : index
    %c0_8 = arith.constant 0 : index
    %6 = vector.load %arg4[%c0_7, %c0_8] : memref<1x96xf32, #tpu.memory_space<vmem>>, vector<1x96xf32>
    %7 = vector.broadcast %6 : vector<1x96xf32> to vector<64x96xf32>
    %8 = arith.addf %5, %7 : vector<64x96xf32>
    %9 = vector.extract_strided_slice %8 {offsets = [0, 0], sizes = [64, 32], strides = [1, 1]} : vector<64x96xf32> to vector<64x32xf32>
    %10 = arith.truncf %9 : vector<64x32xf32> to vector<64x32xbf16>
    %11 = vector.extract_strided_slice %8 {offsets = [0, 32], sizes = [64, 32], strides = [1, 1]} : vector<64x96xf32> to vector<64x32xf32>
    %12 = arith.truncf %11 : vector<64x32xf32> to vector<64x32xbf16>
    %13 = vector.extract_strided_slice %8 {offsets = [0, 64], sizes = [64, 32], strides = [1, 1]} : vector<64x96xf32> to vector<64x32xf32>
    %14 = arith.truncf %13 : vector<64x32xf32> to vector<64x32xbf16>
    %15 = arith.extf %1 : vector<64x32xbf16> to vector<64x32xf32>
    %16 = vector.extract_strided_slice %10 {offsets = [0, 0], sizes = [64, 16], strides = [1, 1]} : vector<64x32xbf16> to vector<64x16xbf16>
    %17 = vector.extract_strided_slice %12 {offsets = [0, 0], sizes = [64, 16], strides = [1, 1]} : vector<64x32xbf16> to vector<64x16xbf16>
    %cst_9 = arith.constant dense<0.000000e+00> : vector<64x64xf32>
    %18 = tpu.matmul %16, %17, %cst_9 {dimension_numbers = #tpu.dot_dimension_numbers<[1], [1], [0], [0], [0, 0, 1, 0], [], []>} : vector<64x16xbf16>, vector<64x16xbf16>, vector<64x64xf32> -> vector<64x64xf32>
    %cst_10 = arith.constant 2.500000e-01 : f32
    %19 = vector.broadcast %cst_10 : f32 to vector<64x64xf32>
    %20 = arith.mulf %18, %19 : vector<64x64xf32>
    %cst_11 = arith.constant dense<0xFF800000> : vector<64xf32>
    %21 = vector.multi_reduction <maximumf>, %20, %cst_11 [1] : vector<64x64xf32> to vector<64xf32>
    %22 = vector.shape_cast %21 : vector<64xf32> to vector<64x1xf32>
    %23 = vector.broadcast %22 : vector<64x1xf32> to vector<64x64xf32>
    %24 = arith.subf %20, %23 : vector<64x64xf32>
    %25 = math.exp %24 : vector<64x64xf32>
    %cst_12 = arith.constant dense<0.000000e+00> : vector<64xf32>
    %26 = vector.multi_reduction <add>, %25, %cst_12 [1] : vector<64x64xf32> to vector<64xf32>
    %27 = vector.shape_cast %26 : vector<64xf32> to vector<64x1xf32>
    %28 = vector.broadcast %27 : vector<64x1xf32> to vector<64x64xf32>
    %29 = arith.divf %25, %28 : vector<64x64xf32>
    %30 = arith.truncf %29 : vector<64x64xf32> to vector<64x64xbf16>
    %31 = vector.extract_strided_slice %14 {offsets = [0, 0], sizes = [64, 16], strides = [1, 1]} : vector<64x32xbf16> to vector<64x16xbf16>
    %cst_13 = arith.constant dense<0.000000e+00> : vector<64x16xf32>
    %32 = tpu.matmul %30, %31, %cst_13 {dimension_numbers = #tpu.dot_dimension_numbers<[1], [0], [0], [1], [0, 0, 1, 1], [], []>} : vector<64x64xbf16>, vector<64x16xbf16>, vector<64x16xf32> -> vector<64x16xf32>
    %33 = arith.truncf %32 : vector<64x16xf32> to vector<64x16xbf16>
    %c0_14 = arith.constant 0 : index
    %c0_15 = arith.constant 0 : index
    %34 = vector.load %arg5[%c0_14, %c0_15] : memref<32x32xbf16, #tpu.memory_space<vmem>>, vector<16x32xbf16>
    %cst_16 = arith.constant dense<0.000000e+00> : vector<64x32xf32>
    %35 = tpu.matmul %33, %34, %cst_16 {dimension_numbers = #tpu.dot_dimension_numbers<[1], [0], [0], [1], [0, 0, 1, 1], [], []>} : vector<64x16xbf16>, vector<16x32xbf16>, vector<64x32xf32> -> vector<64x32xf32>
    %36 = vector.extract_strided_slice %10 {offsets = [0, 16], sizes = [64, 16], strides = [1, 1]} : vector<64x32xbf16> to vector<64x16xbf16>
    %37 = vector.extract_strided_slice %12 {offsets = [0, 16], sizes = [64, 16], strides = [1, 1]} : vector<64x32xbf16> to vector<64x16xbf16>
    %cst_17 = arith.constant dense<0.000000e+00> : vector<64x64xf32>
    %38 = tpu.matmul %36, %37, %cst_17 {dimension_numbers = #tpu.dot_dimension_numbers<[1], [1], [0], [0], [0, 0, 1, 0], [], []>} : vector<64x16xbf16>, vector<64x16xbf16>, vector<64x64xf32> -> vector<64x64xf32>
    %cst_18 = arith.constant 2.500000e-01 : f32
    %39 = vector.broadcast %cst_18 : f32 to vector<64x64xf32>
    %40 = arith.mulf %38, %39 : vector<64x64xf32>
    %cst_19 = arith.constant dense<0xFF800000> : vector<64xf32>
    %41 = vector.multi_reduction <maximumf>, %40, %cst_19 [1] : vector<64x64xf32> to vector<64xf32>
    %42 = vector.shape_cast %41 : vector<64xf32> to vector<64x1xf32>
    %43 = vector.broadcast %42 : vector<64x1xf32> to vector<64x64xf32>
    %44 = arith.subf %40, %43 : vector<64x64xf32>
    %45 = math.exp %44 : vector<64x64xf32>
    %cst_20 = arith.constant dense<0.000000e+00> : vector<64xf32>
    %46 = vector.multi_reduction <add>, %45, %cst_20 [1] : vector<64x64xf32> to vector<64xf32>
    %47 = vector.shape_cast %46 : vector<64xf32> to vector<64x1xf32>
    %48 = vector.broadcast %47 : vector<64x1xf32> to vector<64x64xf32>
    %49 = arith.divf %45, %48 : vector<64x64xf32>
    %50 = arith.truncf %49 : vector<64x64xf32> to vector<64x64xbf16>
    %51 = vector.extract_strided_slice %14 {offsets = [0, 16], sizes = [64, 16], strides = [1, 1]} : vector<64x32xbf16> to vector<64x16xbf16>
    %cst_21 = arith.constant dense<0.000000e+00> : vector<64x16xf32>
    %52 = tpu.matmul %50, %51, %cst_21 {dimension_numbers = #tpu.dot_dimension_numbers<[1], [0], [0], [1], [0, 0, 1, 1], [], []>} : vector<64x64xbf16>, vector<64x16xbf16>, vector<64x16xf32> -> vector<64x16xf32>
    %53 = arith.truncf %52 : vector<64x16xf32> to vector<64x16xbf16>
    %c16 = arith.constant 16 : index
    %c0_22 = arith.constant 0 : index
    %54 = vector.load %arg5[%c16, %c0_22] : memref<32x32xbf16, #tpu.memory_space<vmem>>, vector<16x32xbf16>
    %cst_23 = arith.constant dense<0.000000e+00> : vector<64x32xf32>
    %55 = tpu.matmul %53, %54, %cst_23 {dimension_numbers = #tpu.dot_dimension_numbers<[1], [0], [0], [1], [0, 0, 1, 1], [], []>} : vector<64x16xbf16>, vector<16x32xbf16>, vector<64x32xf32> -> vector<64x32xf32>
    %56 = arith.addf %35, %55 : vector<64x32xf32>
    %c0_24 = arith.constant 0 : index
    %c0_25 = arith.constant 0 : index
    %57 = vector.load %arg6[%c0_24, %c0_25] : memref<1x32xf32, #tpu.memory_space<vmem>>, vector<1x32xf32>
    %58 = vector.broadcast %57 : vector<1x32xf32> to vector<64x32xf32>
    %59 = arith.addf %56, %58 : vector<64x32xf32>
    %60 = arith.addf %15, %59 : vector<64x32xf32>
    %cst_26 = arith.constant dense<0.000000e+00> : vector<64xf32>
    %61 = vector.multi_reduction <add>, %60, %cst_26 [1] : vector<64x32xf32> to vector<64xf32>
    %62 = vector.shape_cast %61 : vector<64xf32> to vector<64x1xf32>
    %cst_27 = arith.constant 3.200000e+01 : f32
    %63 = vector.broadcast %cst_27 : f32 to vector<64x1xf32>
    %64 = arith.divf %62, %63 : vector<64x1xf32>
    %65 = vector.broadcast %64 : vector<64x1xf32> to vector<64x32xf32>
    %66 = arith.subf %60, %65 : vector<64x32xf32>
    %67 = arith.mulf %66, %66 : vector<64x32xf32>
    %cst_28 = arith.constant dense<0.000000e+00> : vector<64xf32>
    %68 = vector.multi_reduction <add>, %67, %cst_28 [1] : vector<64x32xf32> to vector<64xf32>
    %69 = vector.shape_cast %68 : vector<64xf32> to vector<64x1xf32>
    %cst_29 = arith.constant 3.200000e+01 : f32
    %70 = vector.broadcast %cst_29 : f32 to vector<64x1xf32>
    %71 = arith.divf %69, %70 : vector<64x1xf32>
    %cst_30 = arith.constant 9.99999974E-6 : f32
    %72 = vector.broadcast %cst_30 : f32 to vector<64x1xf32>
    %73 = arith.addf %71, %72 : vector<64x1xf32>
    %74 = math.rsqrt %73 : vector<64x1xf32>
    %75 = vector.broadcast %74 : vector<64x1xf32> to vector<64x32xf32>
    %76 = arith.mulf %66, %75 : vector<64x32xf32>
    %c0_31 = arith.constant 0 : index
    %c0_32 = arith.constant 0 : index
    %77 = vector.load %arg7[%c0_31, %c0_32] : memref<1x32xf32, #tpu.memory_space<vmem>>, vector<1x32xf32>
    %78 = vector.broadcast %77 : vector<1x32xf32> to vector<64x32xf32>
    %79 = arith.mulf %76, %78 : vector<64x32xf32>
    %c0_33 = arith.constant 0 : index
    %c0_34 = arith.constant 0 : index
    %80 = vector.load %arg8[%c0_33, %c0_34] : memref<1x32xf32, #tpu.memory_space<vmem>>, vector<1x32xf32>
    %81 = vector.broadcast %80 : vector<1x32xf32> to vector<64x32xf32>
    %82 = arith.addf %79, %81 : vector<64x32xf32>
    %83 = arith.truncf %82 : vector<64x32xf32> to vector<64x32xbf16>
    %c0_35 = arith.constant 0 : index
    %c0_36 = arith.constant 0 : index
    %84 = vector.load %arg9[%c0_35, %c0_36] : memref<32x32xbf16, #tpu.memory_space<vmem>>, vector<32x32xbf16>
    %cst_37 = arith.constant dense<0.000000e+00> : vector<64x32xf32>
    %85 = tpu.matmul %83, %84, %cst_37 {dimension_numbers = #tpu.dot_dimension_numbers<[1], [0], [0], [1], [0, 0, 1, 1], [], []>} : vector<64x32xbf16>, vector<32x32xbf16>, vector<64x32xf32> -> vector<64x32xf32>
    %c0_38 = arith.constant 0 : index
    %c0_39 = arith.constant 0 : index
    %86 = vector.load %arg10[%c0_38, %c0_39] : memref<1x32xf32, #tpu.memory_space<vmem>>, vector<1x32xf32>
    %87 = vector.broadcast %86 : vector<1x32xf32> to vector<64x32xf32>
    %88 = arith.addf %85, %87 : vector<64x32xf32>
    %89 = arith.truncf %88 : vector<64x32xf32> to vector<64x32xbf16>
    %c0_40 = arith.constant 0 : index
    %c0_41 = arith.constant 0 : index
    %90 = vector.load %arg11[%c0_40, %c0_41] : memref<32x64xbf16, #tpu.memory_space<vmem>>, vector<32x64xbf16>
    %cst_42 = arith.constant dense<0.000000e+00> : vector<4x64xf32>
    %91 = tpu.matmul %3, %90, %cst_42 {dimension_numbers = #tpu.dot_dimension_numbers<[1], [0], [0], [1], [0, 0, 1, 1], [], []>} : vector<4x32xbf16>, vector<32x64xbf16>, vector<4x64xf32> -> vector<4x64xf32>
    %c0_43 = arith.constant 0 : index
    %c0_44 = arith.constant 0 : index
    %92 = vector.load %arg12[%c0_43, %c0_44] : memref<1x64xf32, #tpu.memory_space<vmem>>, vector<1x64xf32>
    %93 = vector.broadcast %92 : vector<1x64xf32> to vector<4x64xf32>
    %94 = arith.addf %91, %93 : vector<4x64xf32>
    %95 = vector.extract_strided_slice %94 {offsets = [0, 0], sizes = [4, 32], strides = [1, 1]} : vector<4x64xf32> to vector<4x32xf32>
    %96 = arith.truncf %95 : vector<4x32xf32> to vector<4x32xbf16>
    %97 = vector.extract_strided_slice %94 {offsets = [0, 32], sizes = [4, 32], strides = [1, 1]} : vector<4x64xf32> to vector<4x32xf32>
    %98 = arith.truncf %97 : vector<4x32xf32> to vector<4x32xbf16>
    %99 = vector.extract_strided_slice %89 {offsets = [0, 0], sizes = [64, 16], strides = [1, 1]} : vector<64x32xbf16> to vector<64x16xbf16>
    %100 = vector.extract_strided_slice %96 {offsets = [0, 0], sizes = [4, 16], strides = [1, 1]} : vector<4x32xbf16> to vector<4x16xbf16>
    %cst_45 = arith.constant dense<0.000000e+00> : vector<64x4xf32>
    %101 = tpu.matmul %99, %100, %cst_45 {dimension_numbers = #tpu.dot_dimension_numbers<[1], [1], [0], [0], [0, 0, 1, 0], [], []>} : vector<64x16xbf16>, vector<4x16xbf16>, vector<64x4xf32> -> vector<64x4xf32>
    %cst_46 = arith.constant 2.500000e-01 : f32
    %102 = vector.broadcast %cst_46 : f32 to vector<64x4xf32>
    %103 = arith.mulf %101, %102 : vector<64x4xf32>
    %cst_47 = arith.constant dense<0xFF800000> : vector<64xf32>
    %104 = vector.multi_reduction <maximumf>, %103, %cst_47 [1] : vector<64x4xf32> to vector<64xf32>
    %105 = vector.shape_cast %104 : vector<64xf32> to vector<64x1xf32>
    %106 = vector.broadcast %105 : vector<64x1xf32> to vector<64x4xf32>
    %107 = arith.subf %103, %106 : vector<64x4xf32>
    %108 = math.exp %107 : vector<64x4xf32>
    %cst_48 = arith.constant dense<0.000000e+00> : vector<64xf32>
    %109 = vector.multi_reduction <add>, %108, %cst_48 [1] : vector<64x4xf32> to vector<64xf32>
    %110 = vector.shape_cast %109 : vector<64xf32> to vector<64x1xf32>
    %111 = vector.broadcast %110 : vector<64x1xf32> to vector<64x4xf32>
    %112 = arith.divf %108, %111 : vector<64x4xf32>
    %113 = arith.truncf %112 : vector<64x4xf32> to vector<64x4xbf16>
    %114 = vector.extract_strided_slice %98 {offsets = [0, 0], sizes = [4, 16], strides = [1, 1]} : vector<4x32xbf16> to vector<4x16xbf16>
    %cst_49 = arith.constant dense<0.000000e+00> : vector<64x16xf32>
    %115 = tpu.matmul %113, %114, %cst_49 {dimension_numbers = #tpu.dot_dimension_numbers<[1], [0], [0], [1], [0, 0, 1, 1], [], []>} : vector<64x4xbf16>, vector<4x16xbf16>, vector<64x16xf32> -> vector<64x16xf32>
    %116 = arith.truncf %115 : vector<64x16xf32> to vector<64x16xbf16>
    %c0_50 = arith.constant 0 : index
    %c0_51 = arith.constant 0 : index
    %117 = vector.load %arg13[%c0_50, %c0_51] : memref<32x32xbf16, #tpu.memory_space<vmem>>, vector<16x32xbf16>
    %cst_52 = arith.constant dense<0.000000e+00> : vector<64x32xf32>
    %118 = tpu.matmul %116, %117, %cst_52 {dimension_numbers = #tpu.dot_dimension_numbers<[1], [0], [0], [1], [0, 0, 1, 1], [], []>} : vector<64x16xbf16>, vector<16x32xbf16>, vector<64x32xf32> -> vector<64x32xf32>
    %119 = vector.extract_strided_slice %89 {offsets = [0, 16], sizes = [64, 16], strides = [1, 1]} : vector<64x32xbf16> to vector<64x16xbf16>
    %120 = vector.extract_strided_slice %96 {offsets = [0, 16], sizes = [4, 16], strides = [1, 1]} : vector<4x32xbf16> to vector<4x16xbf16>
    %cst_53 = arith.constant dense<0.000000e+00> : vector<64x4xf32>
    %121 = tpu.matmul %119, %120, %cst_53 {dimension_numbers = #tpu.dot_dimension_numbers<[1], [1], [0], [0], [0, 0, 1, 0], [], []>} : vector<64x16xbf16>, vector<4x16xbf16>, vector<64x4xf32> -> vector<64x4xf32>
    %cst_54 = arith.constant 2.500000e-01 : f32
    %122 = vector.broadcast %cst_54 : f32 to vector<64x4xf32>
    %123 = arith.mulf %121, %122 : vector<64x4xf32>
    %cst_55 = arith.constant dense<0xFF800000> : vector<64xf32>
    %124 = vector.multi_reduction <maximumf>, %123, %cst_55 [1] : vector<64x4xf32> to vector<64xf32>
    %125 = vector.shape_cast %124 : vector<64xf32> to vector<64x1xf32>
    %126 = vector.broadcast %125 : vector<64x1xf32> to vector<64x4xf32>
    %127 = arith.subf %123, %126 : vector<64x4xf32>
    %128 = math.exp %127 : vector<64x4xf32>
    %cst_56 = arith.constant dense<0.000000e+00> : vector<64xf32>
    %129 = vector.multi_reduction <add>, %128, %cst_56 [1] : vector<64x4xf32> to vector<64xf32>
    %130 = vector.shape_cast %129 : vector<64xf32> to vector<64x1xf32>
    %131 = vector.broadcast %130 : vector<64x1xf32> to vector<64x4xf32>
    %132 = arith.divf %128, %131 : vector<64x4xf32>
    %133 = arith.truncf %132 : vector<64x4xf32> to vector<64x4xbf16>
    %134 = vector.extract_strided_slice %98 {offsets = [0, 16], sizes = [4, 16], strides = [1, 1]} : vector<4x32xbf16> to vector<4x16xbf16>
    %cst_57 = arith.constant dense<0.000000e+00> : vector<64x16xf32>
    %135 = tpu.matmul %133, %134, %cst_57 {dimension_numbers = #tpu.dot_dimension_numbers<[1], [0], [0], [1], [0, 0, 1, 1], [], []>} : vector<64x4xbf16>, vector<4x16xbf16>, vector<64x16xf32> -> vector<64x16xf32>
    %136 = arith.truncf %135 : vector<64x16xf32> to vector<64x16xbf16>
    %c16_58 = arith.constant 16 : index
    %c0_59 = arith.constant 0 : index
    %137 = vector.load %arg13[%c16_58, %c0_59] : memref<32x32xbf16, #tpu.memory_space<vmem>>, vector<16x32xbf16>
    %cst_60 = arith.constant dense<0.000000e+00> : vector<64x32xf32>
    %138 = tpu.matmul %136, %137, %cst_60 {dimension_numbers = #tpu.dot_dimension_numbers<[1], [0], [0], [1], [0, 0, 1, 1], [], []>} : vector<64x16xbf16>, vector<16x32xbf16>, vector<64x32xf32> -> vector<64x32xf32>
    %139 = arith.addf %118, %138 : vector<64x32xf32>
    %c0_61 = arith.constant 0 : index
    %c0_62 = arith.constant 0 : index
    %140 = vector.load %arg14[%c0_61, %c0_62] : memref<1x32xf32, #tpu.memory_space<vmem>>, vector<1x32xf32>
    %141 = vector.broadcast %140 : vector<1x32xf32> to vector<64x32xf32>
    %142 = arith.addf %139, %141 : vector<64x32xf32>
    %143 = arith.addf %82, %142 : vector<64x32xf32>
    %cst_63 = arith.constant dense<0.000000e+00> : vector<64xf32>
    %144 = vector.multi_reduction <add>, %143, %cst_63 [1] : vector<64x32xf32> to vector<64xf32>
    %145 = vector.shape_cast %144 : vector<64xf32> to vector<64x1xf32>
    %cst_64 = arith.constant 3.200000e+01 : f32
    %146 = vector.broadcast %cst_64 : f32 to vector<64x1xf32>
    %147 = arith.divf %145, %146 : vector<64x1xf32>
    %148 = vector.broadcast %147 : vector<64x1xf32> to vector<64x32xf32>
    %149 = arith.subf %143, %148 : vector<64x32xf32>
    %150 = arith.mulf %149, %149 : vector<64x32xf32>
    %cst_65 = arith.constant dense<0.000000e+00> : vector<64xf32>
    %151 = vector.multi_reduction <add>, %150, %cst_65 [1] : vector<64x32xf32> to vector<64xf32>
    %152 = vector.shape_cast %151 : vector<64xf32> to vector<64x1xf32>
    %cst_66 = arith.constant 3.200000e+01 : f32
    %153 = vector.broadcast %cst_66 : f32 to vector<64x1xf32>
    %154 = arith.divf %152, %153 : vector<64x1xf32>
    %cst_67 = arith.constant 9.99999974E-6 : f32
    %155 = vector.broadcast %cst_67 : f32 to vector<64x1xf32>
    %156 = arith.addf %154, %155 : vector<64x1xf32>
    %157 = math.rsqrt %156 : vector<64x1xf32>
    %158 = vector.broadcast %157 : vector<64x1xf32> to vector<64x32xf32>
    %159 = arith.mulf %149, %158 : vector<64x32xf32>
    %c0_68 = arith.constant 0 : index
    %c0_69 = arith.constant 0 : index
    %160 = vector.load %arg15[%c0_68, %c0_69] : memref<1x32xf32, #tpu.memory_space<vmem>>, vector<1x32xf32>
    %161 = vector.broadcast %160 : vector<1x32xf32> to vector<64x32xf32>
    %162 = arith.mulf %159, %161 : vector<64x32xf32>
    %c0_70 = arith.constant 0 : index
    %c0_71 = arith.constant 0 : index
    %163 = vector.load %arg16[%c0_70, %c0_71] : memref<1x32xf32, #tpu.memory_space<vmem>>, vector<1x32xf32>
    %164 = vector.broadcast %163 : vector<1x32xf32> to vector<64x32xf32>
    %165 = arith.addf %162, %164 : vector<64x32xf32>
    %166 = arith.truncf %165 : vector<64x32xf32> to vector<64x32xbf16>
    %c0_72 = arith.constant 0 : index
    %c0_73 = arith.constant 0 : index
    %167 = vector.load %arg17[%c0_72, %c0_73] : memref<32x2048xbf16, #tpu.memory_space<vmem>>, vector<32x2048xbf16>
    %cst_74 = arith.constant dense<0.000000e+00> : vector<64x2048xf32>
    %168 = tpu.matmul %166, %167, %cst_74 {dimension_numbers = #tpu.dot_dimension_numbers<[1], [0], [0], [1], [0, 0, 1, 1], [], []>} : vector<64x32xbf16>, vector<32x2048xbf16>, vector<64x2048xf32> -> vector<64x2048xf32>
    %c0_75 = arith.constant 0 : index
    %c0_76 = arith.constant 0 : index
    %169 = vector.load %arg18[%c0_75, %c0_76] : memref<1x2048xf32, #tpu.memory_space<vmem>>, vector<1x2048xf32>
    %170 = vector.broadcast %169 : vector<1x2048xf32> to vector<64x2048xf32>
    %171 = arith.addf %168, %170 : vector<64x2048xf32>
    %cst_77 = arith.constant 0.000000e+00 : f32
    %172 = vector.broadcast %cst_77 : f32 to vector<64x2048xf32>
    %173 = arith.maximumf %171, %172 : vector<64x2048xf32>
    %174 = arith.truncf %173 : vector<64x2048xf32> to vector<64x2048xbf16>
    %c0_78 = arith.constant 0 : index
    %c0_79 = arith.constant 0 : index
    %175 = vector.load %arg19[%c0_78, %c0_79] : memref<2048x32xbf16, #tpu.memory_space<vmem>>, vector<2048x32xbf16>
    %cst_80 = arith.constant dense<0.000000e+00> : vector<64x32xf32>
    %176 = tpu.matmul %174, %175, %cst_80 {dimension_numbers = #tpu.dot_dimension_numbers<[1], [0], [0], [1], [0, 0, 1, 1], [], []>} : vector<64x2048xbf16>, vector<2048x32xbf16>, vector<64x32xf32> -> vector<64x32xf32>
    %c0_81 = arith.constant 0 : index
    %c0_82 = arith.constant 0 : index
    %177 = vector.load %arg20[%c0_81, %c0_82] : memref<1x32xf32, #tpu.memory_space<vmem>>, vector<1x32xf32>
    %178 = vector.broadcast %177 : vector<1x32xf32> to vector<64x32xf32>
    %179 = arith.addf %176, %178 : vector<64x32xf32>
    %180 = arith.addf %165, %179 : vector<64x32xf32>
    %cst_83 = arith.constant dense<0.000000e+00> : vector<64xf32>
    %181 = vector.multi_reduction <add>, %180, %cst_83 [1] : vector<64x32xf32> to vector<64xf32>
    %182 = vector.shape_cast %181 : vector<64xf32> to vector<64x1xf32>
    %cst_84 = arith.constant 3.200000e+01 : f32
    %183 = vector.broadcast %cst_84 : f32 to vector<64x1xf32>
    %184 = arith.divf %182, %183 : vector<64x1xf32>
    %185 = vector.broadcast %184 : vector<64x1xf32> to vector<64x32xf32>
    %186 = arith.subf %180, %185 : vector<64x32xf32>
    %187 = arith.mulf %186, %186 : vector<64x32xf32>
    %cst_85 = arith.constant dense<0.000000e+00> : vector<64xf32>
    %188 = vector.multi_reduction <add>, %187, %cst_85 [1] : vector<64x32xf32> to vector<64xf32>
    %189 = vector.shape_cast %188 : vector<64xf32> to vector<64x1xf32>
    %cst_86 = arith.constant 3.200000e+01 : f32
    %190 = vector.broadcast %cst_86 : f32 to vector<64x1xf32>
    %191 = arith.divf %189, %190 : vector<64x1xf32>
    %cst_87 = arith.constant 9.99999974E-6 : f32
    %192 = vector.broadcast %cst_87 : f32 to vector<64x1xf32>
    %193 = arith.addf %191, %192 : vector<64x1xf32>
    %194 = math.rsqrt %193 : vector<64x1xf32>
    %195 = vector.broadcast %194 : vector<64x1xf32> to vector<64x32xf32>
    %196 = arith.mulf %186, %195 : vector<64x32xf32>
    %c0_88 = arith.constant 0 : index
    %c0_89 = arith.constant 0 : index
    %197 = vector.load %arg21[%c0_88, %c0_89] : memref<1x32xf32, #tpu.memory_space<vmem>>, vector<1x32xf32>
    %198 = vector.broadcast %197 : vector<1x32xf32> to vector<64x32xf32>
    %199 = arith.mulf %196, %198 : vector<64x32xf32>
    %c0_90 = arith.constant 0 : index
    %c0_91 = arith.constant 0 : index
    %200 = vector.load %arg22[%c0_90, %c0_91] : memref<1x32xf32, #tpu.memory_space<vmem>>, vector<1x32xf32>
    %201 = vector.broadcast %200 : vector<1x32xf32> to vector<64x32xf32>
    %202 = arith.addf %199, %201 : vector<64x32xf32>
    %203 = arith.truncf %202 : vector<64x32xf32> to vector<64x32xbf16>
    %c0_92 = arith.constant 0 : index
    %c0_93 = arith.constant 0 : index
    %c0_94 = arith.constant 0 : index
    %204 = vector.load %arg23[%c0_92, %c0_93, %c0_94] : memref<1x64x32xbf16, #tpu.memory_space<vmem>>, vector<1x64x32xbf16>
    %205 = vector.shape_cast %204 : vector<1x64x32xbf16> to vector<64x32xbf16>
    %206 = vector.shape_cast %203 : vector<64x32xbf16> to vector<1x64x32xbf16>
    tpu.vector_store %arg23[%c0_92, %c0_93, %c0_94], %206 {strides = array<i32>} : memref<1x64x32xbf16, #tpu.memory_space<vmem>>, vector<1x64x32xbf16>,
    return
  }
  func.func @transform_0(%arg0: i32) -> (i32, i32, i32) {
    %c0_i32 = arith.constant 0 : i32
    %c0_i32_0 = arith.constant 0 : i32
    %c0_i32_1 = arith.constant 0 : i32
    return %arg0, %c0_i32, %c0_i32_0 : i32, i32, i32
  }
  func.func @transform_1(%arg0: i32) -> (i32, i32, i32) {
    %c0_i32 = arith.constant 0 : i32
    %c0_i32_0 = arith.constant 0 : i32
    %c0_i32_1 = arith.constant 0 : i32
    return %arg0, %c0_i32, %c0_i32_0 : i32, i32, i32
  }
  func.func @transform_2(%arg0: i32) -> (i32, i32) {
    %c0_i32 = arith.constant 0 : i32
    %c0_i32_0 = arith.constant 0 : i32
    %c0_i32_1 = arith.constant 0 : i32
    return %c0_i32, %c0_i32_0 : i32, i32
  }
  func.func @transform_3(%arg0: i32) -> (i32, i32) {
    %c0_i32 = arith.constant 0 : i32
    %c0_i32_0 = arith.constant 0 : i32
    %c0_i32_1 = arith.constant 0 : i32
    return %c0_i32, %c0_i32_0 : i32, i32
  }
  func.func @transform_4(%arg0: i32) -> (i32, i32) {
    %c0_i32 = arith.constant 0 : i32
    %c0_i32_0 = arith.constant 0 : i32
    %c0_i32_1 = arith.constant 0 : i32
    return %c0_i32, %c0_i32_0 : i32, i32
  }
  func.func @transform_5(%arg0: i32) -> (i32, i32) {
    %c0_i32 = arith.constant 0 : i32
    %c0_i32_0 = arith.constant 0 : i32
    %c0_i32_1 = arith.constant 0 : i32
    return %c0_i32, %c0_i32_0 : i32, i32
  }
  func.func @transform_6(%arg0: i32) -> (i32, i32) {
    %c0_i32 = arith.constant 0 : i32
    %c0_i32_0 = arith.constant 0 : i32
    %c0_i32_1 = arith.constant 0 : i32
    return %c0_i32, %c0_i32_0 : i32, i32
  }
  func.func @transform_7(%arg0: i32) -> (i32, i32) {
    %c0_i32 = arith.constant 0 : i32
    %c0_i32_0 = arith.constant 0 : i32
    %c0_i32_1 = arith.constant 0 : i32
    return %c0_i32, %c0_i32_0 : i32, i32
  }
  func.func @transform_8(%arg0: i32) -> (i32, i32) {
    %c0_i32 = arith.constant 0 : i32
    %c0_i32_0 = arith.constant 0 : i32
    %c0_i32_1 = arith.constant 0 : i32
    return %c0_i32, %c0_i32_0 : i32, i32
  }
  func.func @transform_9(%arg0: i32) -> (i32, i32) {
    %c0_i32 = arith.constant 0 : i32
    %c0_i32_0 = arith.constant 0 : i32
    %c0_i32_1 = arith.constant 0 : i32
    return %c0_i32, %c0_i32_0 : i32, i32
  }
  func.func @transform_10(%arg0: i32) -> (i32, i32) {
    %c0_i32 = arith.constant 0 : i32
    %c0_i32_0 = arith.constant 0 : i32
    %c0_i32_1 = arith.constant 0 : i32
    return %c0_i32, %c0_i32_0 : i32, i32
  }
  func.func @transform_11(%arg0: i32) -> (i32, i32) {
    %c0_i32 = arith.constant 0 : i32
    %c0_i32_0 = arith.constant 0 : i32
    %c0_i32_1 = arith.constant 0 : i32
    return %c0_i32, %c0_i32_0 : i32, i32
  }
  func.func @transform_12(%arg0: i32) -> (i32, i32) {
    %c0_i32 = arith.constant 0 : i32
    %c0_i32_0 = arith.constant 0 : i32
    %c0_i32_1 = arith.constant 0 : i32
    return %c0_i32, %c0_i32_0 : i32, i32
  }
  func.func @transform_13(%arg0: i32) -> (i32, i32) {
    %c0_i32 = arith.constant 0 : i32
    %c0_i32_0 = arith.constant 0 : i32
    %c0_i32_1 = arith.constant 0 : i32
    return %c0_i32, %c0_i32_0 : i32, i32
  }
  func.func @transform_14(%arg0: i32) -> (i32, i32) {
    %c0_i32 = arith.constant 0 : i32
    %c0_i32_0 = arith.constant 0 : i32
    %c0_i32_1 = arith.constant 0 : i32
    return %c0_i32, %c0_i32_0 : i32, i32
  }
  func.func @transform_15(%arg0: i32) -> (i32, i32) {
    %c0_i32 = arith.constant 0 : i32
    %c0_i32_0 = arith.constant 0 : i32
    %c0_i32_1 = arith.constant 0 : i32
    return %c0_i32, %c0_i32_0 : i32, i32
  }
  func.func @transform_16(%arg0: i32) -> (i32, i32) {
    %c0_i32 = arith.constant 0 : i32
    %c0_i32_0 = arith.constant 0 : i32
    %c0_i32_1 = arith.constant 0 : i32
    return %c0_i32, %c0_i32_0 : i32, i32
  }
  func.func @transform_17(%arg0: i32) -> (i32, i32) {
    %c0_i32 = arith.constant 0 : i32
    %c0_i32_0 = arith.constant 0 : i32
    %c0_i32_1 = arith.constant 0 : i32
    return %c0_i32, %c0_i32_0 : i32, i32
  }
  func.func @transform_18(%arg0: i32) -> (i32, i32) {
    %c0_i32 = arith.constant 0 : i32
    %c0_i32_0 = arith.constant 0 : i32
    %c0_i32_1 = arith.constant 0 : i32
    return %c0_i32, %c0_i32_0 : i32, i32
  }
  func.func @transform_19(%arg0: i32) -> (i32, i32) {
    %c0_i32 = arith.constant 0 : i32
    %c0_i32_0 = arith.constant 0 : i32
    %c0_i32_1 = arith.constant 0 : i32
    return %c0_i32, %c0_i32_0 : i32, i32
  }
  func.func @transform_20(%arg0: i32) -> (i32, i32) {
    %c0_i32 = arith.constant 0 : i32
    %c0_i32_0 = arith.constant 0 : i32
    %c0_i32_1 = arith.constant 0 : i32
    return %c0_i32, %c0_i32_0 : i32, i32
  }
  func.func @transform_21(%arg0: i32) -> (i32, i32) {
    %c0_i32 = arith.constant 0 : i32
    %c0_i32_0 = arith.constant 0 : i32
    %c0_i32_1 = arith.constant 0 : i32
    return %c0_i32, %c0_i32_0 : i32, i32
  }
  func.func @transform_22(%arg0: i32) -> (i32, i32, i32) {
    %c0_i32 = arith.constant 0 : i32
    %c0_i32_0 = arith.constant 0 : i32
    %c0_i32_1 = arith.constant 0 : i32
    return %arg0, %c0_i32, %c0_i32_0 : i32, i32, i32
  }
}

module attributes {stable_mosaic.version = 11 : i64} {
  func.func @_mm_lane_kernel(%arg0: i32, %arg1: memref<32x128xbf16, #tpu.memory_space<vmem>>, %arg2: memref<128x128xbf16, #tpu.memory_space<vmem>>, %arg3: memref<32x1xf32, #tpu.memory_space<vmem>>, %arg4: memref<32x128xbf16, #tpu.memory_space<vmem>>) attributes {dimension_semantics = [#tpu.dimension_semantics<parallel>], iteration_bounds = array<i64: 1>, scalar_prefetch = 0 : i64, scratch_operands = 0 : i64, tpu.core_type = #tpu.core_type<tc>, window_params = [{pipeline_mode = #tpu.pipeline_mode<synchronous>, transform_indices = @transform_0, window_bounds = array<i64: 32, 128>}, {transform_indices = @transform_1, window_bounds = array<i64: 128, 128>}, {pipeline_mode = #tpu.pipeline_mode<synchronous>, transform_indices = @transform_2, window_bounds = array<i64: 32, 1>}, {transform_indices = @transform_3, window_bounds = array<i64: 32, 128>}]} {
    %c0 = arith.constant 0 : index
    %c0_0 = arith.constant 0 : index
    %0 = vector.load %arg1[%c0, %c0_0] : memref<32x128xbf16, #tpu.memory_space<vmem>>, vector<32x128xbf16>
    %c0_1 = arith.constant 0 : index
    %c0_2 = arith.constant 0 : index
    %1 = vector.load %arg2[%c0_1, %c0_2] : memref<128x128xbf16, #tpu.memory_space<vmem>>, vector<128x128xbf16>
    %cst = arith.constant dense<0.000000e+00> : vector<32x128xf32>
    %2 = tpu.matmul %0, %1, %cst {dimension_numbers = #tpu.dot_dimension_numbers<[1], [0], [0], [1], [0, 0, 1, 1], [], []>} : vector<32x128xbf16>, vector<128x128xbf16>, vector<32x128xf32> -> vector<32x128xf32>
    %c0_3 = arith.constant 0 : index
    %c0_4 = arith.constant 0 : index
    %3 = vector.load %arg3[%c0_3, %c0_4] : memref<32x1xf32, #tpu.memory_space<vmem>>, vector<32x1xf32>
    %4 = vector.broadcast %3 : vector<32x1xf32> to vector<32x128xf32>
    %5 = arith.addf %2, %4 : vector<32x128xf32>
    %6 = arith.truncf %5 : vector<32x128xf32> to vector<32x128xbf16>
    %c0_5 = arith.constant 0 : index
    %c0_6 = arith.constant 0 : index
    %7 = vector.load %arg4[%c0_5, %c0_6] : memref<32x128xbf16, #tpu.memory_space<vmem>>, vector<32x128xbf16>
    tpu.vector_store %arg4[%c0_5, %c0_6], %6 {strides = array<i32>} : memref<32x128xbf16, #tpu.memory_space<vmem>>, vector<32x128xbf16>,
    return
  }
  func.func @transform_0(%arg0: i32) -> (i32, i32) {
    %c0_i32 = arith.constant 0 : i32
    %c0_i32_0 = arith.constant 0 : i32
    %c0_i32_1 = arith.constant 0 : i32
    return %c0_i32, %c0_i32_0 : i32, i32
  }
  func.func @transform_1(%arg0: i32) -> (i32, i32) {
    %c0_i32 = arith.constant 0 : i32
    %c0_i32_0 = arith.constant 0 : i32
    return %c0_i32, %arg0 : i32, i32
  }
  func.func @transform_2(%arg0: i32) -> (i32, i32) {
    %c0_i32 = arith.constant 0 : i32
    %c0_i32_0 = arith.constant 0 : i32
    %c0_i32_1 = arith.constant 0 : i32
    return %c0_i32, %c0_i32_0 : i32, i32
  }
  func.func @transform_3(%arg0: i32) -> (i32, i32) {
    %c0_i32 = arith.constant 0 : i32
    %c0_i32_0 = arith.constant 0 : i32
    return %c0_i32, %arg0 : i32, i32
  }
}

module attributes {stable_mosaic.version = 11 : i64} {
  func.func @_mm_lane_kernel(%arg0: i32, %arg1: memref<8x144xbf16, #tpu.memory_space<vmem>>, %arg2: memref<144x256xbf16, #tpu.memory_space<vmem>>, %arg3: memref<8x1xf32, #tpu.memory_space<vmem>>, %arg4: memref<8x256xbf16, #tpu.memory_space<vmem>>) attributes {dimension_semantics = [#tpu.dimension_semantics<parallel>], iteration_bounds = array<i64: 2>, scalar_prefetch = 0 : i64, scratch_operands = 0 : i64, tpu.core_type = #tpu.core_type<tc>, window_params = [{pipeline_mode = #tpu.pipeline_mode<synchronous>, transform_indices = @transform_0, window_bounds = array<i64: 8, 144>}, {transform_indices = @transform_1, window_bounds = array<i64: 144, 256>}, {pipeline_mode = #tpu.pipeline_mode<synchronous>, transform_indices = @transform_2, window_bounds = array<i64: 8, 1>}, {transform_indices = @transform_3, window_bounds = array<i64: 8, 256>}]} {
    %c0 = arith.constant 0 : index
    %c0_0 = arith.constant 0 : index
    %0 = vector.load %arg1[%c0, %c0_0] : memref<8x144xbf16, #tpu.memory_space<vmem>>, vector<8x144xbf16>
    %c0_1 = arith.constant 0 : index
    %c0_2 = arith.constant 0 : index
    %1 = vector.load %arg2[%c0_1, %c0_2] : memref<144x256xbf16, #tpu.memory_space<vmem>>, vector<144x256xbf16>
    %cst = arith.constant dense<0.000000e+00> : vector<8x256xf32>
    %2 = tpu.matmul %0, %1, %cst {dimension_numbers = #tpu.dot_dimension_numbers<[1], [0], [0], [1], [0, 0, 1, 1], [], []>} : vector<8x144xbf16>, vector<144x256xbf16>, vector<8x256xf32> -> vector<8x256xf32>
    %c0_3 = arith.constant 0 : index
    %c0_4 = arith.constant 0 : index
    %3 = vector.load %arg3[%c0_3, %c0_4] : memref<8x1xf32, #tpu.memory_space<vmem>>, vector<8x1xf32>
    %4 = vector.broadcast %3 : vector<8x1xf32> to vector<8x256xf32>
    %5 = arith.addf %2, %4 : vector<8x256xf32>
    %6 = arith.truncf %5 : vector<8x256xf32> to vector<8x256xbf16>
    %c0_5 = arith.constant 0 : index
    %c0_6 = arith.constant 0 : index
    %7 = vector.load %arg4[%c0_5, %c0_6] : memref<8x256xbf16, #tpu.memory_space<vmem>>, vector<8x256xbf16>
    tpu.vector_store %arg4[%c0_5, %c0_6], %6 {strides = array<i32>} : memref<8x256xbf16, #tpu.memory_space<vmem>>, vector<8x256xbf16>,
    return
  }
  func.func @transform_0(%arg0: i32) -> (i32, i32) {
    %c0_i32 = arith.constant 0 : i32
    %c0_i32_0 = arith.constant 0 : i32
    %c0_i32_1 = arith.constant 0 : i32
    return %c0_i32, %c0_i32_0 : i32, i32
  }
  func.func @transform_1(%arg0: i32) -> (i32, i32) {
    %c0_i32 = arith.constant 0 : i32
    %c0_i32_0 = arith.constant 0 : i32
    return %c0_i32, %arg0 : i32, i32
  }
  func.func @transform_2(%arg0: i32) -> (i32, i32) {
    %c0_i32 = arith.constant 0 : i32
    %c0_i32_0 = arith.constant 0 : i32
    %c0_i32_1 = arith.constant 0 : i32
    return %c0_i32, %c0_i32_0 : i32, i32
  }
  func.func @transform_3(%arg0: i32) -> (i32, i32) {
    %c0_i32 = arith.constant 0 : i32
    %c0_i32_0 = arith.constant 0 : i32
    return %c0_i32, %arg0 : i32, i32
  }
}

module attributes {stable_mosaic.version = 11 : i64} {
  func.func @_mm_lane_kernel(%arg0: i32, %arg1: memref<16x32xbf16, #tpu.memory_space<vmem>>, %arg2: memref<32x256xbf16, #tpu.memory_space<vmem>>, %arg3: memref<16x1xf32, #tpu.memory_space<vmem>>, %arg4: memref<16x256xbf16, #tpu.memory_space<vmem>>) attributes {dimension_semantics = [#tpu.dimension_semantics<parallel>], iteration_bounds = array<i64: 2>, scalar_prefetch = 0 : i64, scratch_operands = 0 : i64, tpu.core_type = #tpu.core_type<tc>, window_params = [{pipeline_mode = #tpu.pipeline_mode<synchronous>, transform_indices = @transform_0, window_bounds = array<i64: 16, 32>}, {transform_indices = @transform_1, window_bounds = array<i64: 32, 256>}, {pipeline_mode = #tpu.pipeline_mode<synchronous>, transform_indices = @transform_2, window_bounds = array<i64: 16, 1>}, {transform_indices = @transform_3, window_bounds = array<i64: 16, 256>}]} {
    %c0 = arith.constant 0 : index
    %c0_0 = arith.constant 0 : index
    %0 = vector.load %arg1[%c0, %c0_0] : memref<16x32xbf16, #tpu.memory_space<vmem>>, vector<16x32xbf16>
    %c0_1 = arith.constant 0 : index
    %c0_2 = arith.constant 0 : index
    %1 = vector.load %arg2[%c0_1, %c0_2] : memref<32x256xbf16, #tpu.memory_space<vmem>>, vector<32x256xbf16>
    %cst = arith.constant dense<0.000000e+00> : vector<16x256xf32>
    %2 = tpu.matmul %0, %1, %cst {dimension_numbers = #tpu.dot_dimension_numbers<[1], [0], [0], [1], [0, 0, 1, 1], [], []>} : vector<16x32xbf16>, vector<32x256xbf16>, vector<16x256xf32> -> vector<16x256xf32>
    %c0_3 = arith.constant 0 : index
    %c0_4 = arith.constant 0 : index
    %3 = vector.load %arg3[%c0_3, %c0_4] : memref<16x1xf32, #tpu.memory_space<vmem>>, vector<16x1xf32>
    %4 = vector.broadcast %3 : vector<16x1xf32> to vector<16x256xf32>
    %5 = arith.addf %2, %4 : vector<16x256xf32>
    %6 = arith.truncf %5 : vector<16x256xf32> to vector<16x256xbf16>
    %c0_5 = arith.constant 0 : index
    %c0_6 = arith.constant 0 : index
    %7 = vector.load %arg4[%c0_5, %c0_6] : memref<16x256xbf16, #tpu.memory_space<vmem>>, vector<16x256xbf16>
    tpu.vector_store %arg4[%c0_5, %c0_6], %6 {strides = array<i32>} : memref<16x256xbf16, #tpu.memory_space<vmem>>, vector<16x256xbf16>,
    return
  }
  func.func @transform_0(%arg0: i32) -> (i32, i32) {
    %c0_i32 = arith.constant 0 : i32
    %c0_i32_0 = arith.constant 0 : i32
    %c0_i32_1 = arith.constant 0 : i32
    return %c0_i32, %c0_i32_0 : i32, i32
  }
  func.func @transform_1(%arg0: i32) -> (i32, i32) {
    %c0_i32 = arith.constant 0 : i32
    %c0_i32_0 = arith.constant 0 : i32
    return %c0_i32, %arg0 : i32, i32
  }
  func.func @transform_2(%arg0: i32) -> (i32, i32) {
    %c0_i32 = arith.constant 0 : i32
    %c0_i32_0 = arith.constant 0 : i32
    %c0_i32_1 = arith.constant 0 : i32
    return %c0_i32, %c0_i32_0 : i32, i32
  }
  func.func @transform_3(%arg0: i32) -> (i32, i32) {
    %c0_i32 = arith.constant 0 : i32
    %c0_i32_0 = arith.constant 0 : i32
    return %c0_i32, %arg0 : i32, i32
  }
}

module attributes {stable_mosaic.version = 11 : i64} {
  func.func @_mm_lane_kernel(%arg0: i32, %arg1: memref<4x72xbf16, #tpu.memory_space<vmem>>, %arg2: memref<72x512xbf16, #tpu.memory_space<vmem>>, %arg3: memref<4x1xf32, #tpu.memory_space<vmem>>, %arg4: memref<4x512xf32, #tpu.memory_space<vmem>>) attributes {dimension_semantics = [#tpu.dimension_semantics<parallel>], iteration_bounds = array<i64: 4>, scalar_prefetch = 0 : i64, scratch_operands = 0 : i64, tpu.core_type = #tpu.core_type<tc>, window_params = [{pipeline_mode = #tpu.pipeline_mode<synchronous>, transform_indices = @transform_0, window_bounds = array<i64: 4, 72>}, {transform_indices = @transform_1, window_bounds = array<i64: 72, 512>}, {pipeline_mode = #tpu.pipeline_mode<synchronous>, transform_indices = @transform_2, window_bounds = array<i64: 4, 1>}, {transform_indices = @transform_3, window_bounds = array<i64: 4, 512>}]} {
    %c0 = arith.constant 0 : index
    %c0_0 = arith.constant 0 : index
    %0 = vector.load %arg1[%c0, %c0_0] : memref<4x72xbf16, #tpu.memory_space<vmem>>, vector<4x72xbf16>
    %c0_1 = arith.constant 0 : index
    %c0_2 = arith.constant 0 : index
    %1 = vector.load %arg2[%c0_1, %c0_2] : memref<72x512xbf16, #tpu.memory_space<vmem>>, vector<72x512xbf16>
    %cst = arith.constant dense<0.000000e+00> : vector<4x512xf32>
    %2 = tpu.matmul %0, %1, %cst {dimension_numbers = #tpu.dot_dimension_numbers<[1], [0], [0], [1], [0, 0, 1, 1], [], []>} : vector<4x72xbf16>, vector<72x512xbf16>, vector<4x512xf32> -> vector<4x512xf32>
    %c0_3 = arith.constant 0 : index
    %c0_4 = arith.constant 0 : index
    %3 = vector.load %arg3[%c0_3, %c0_4] : memref<4x1xf32, #tpu.memory_space<vmem>>, vector<4x1xf32>
    %4 = vector.broadcast %3 : vector<4x1xf32> to vector<4x512xf32>
    %5 = arith.addf %2, %4 : vector<4x512xf32>
    %c0_5 = arith.constant 0 : index
    %c0_6 = arith.constant 0 : index
    %6 = vector.load %arg4[%c0_5, %c0_6] : memref<4x512xf32, #tpu.memory_space<vmem>>, vector<4x512xf32>
    tpu.vector_store %arg4[%c0_5, %c0_6], %5 {strides = array<i32>} : memref<4x512xf32, #tpu.memory_space<vmem>>, vector<4x512xf32>,
    return
  }
  func.func @transform_0(%arg0: i32) -> (i32, i32) {
    %c0_i32 = arith.constant 0 : i32
    %c0_i32_0 = arith.constant 0 : i32
    %c0_i32_1 = arith.constant 0 : i32
    return %c0_i32, %c0_i32_0 : i32, i32
  }
  func.func @transform_1(%arg0: i32) -> (i32, i32) {
    %c0_i32 = arith.constant 0 : i32
    %c0_i32_0 = arith.constant 0 : i32
    return %c0_i32, %arg0 : i32, i32
  }
  func.func @transform_2(%arg0: i32) -> (i32, i32) {
    %c0_i32 = arith.constant 0 : i32
    %c0_i32_0 = arith.constant 0 : i32
    %c0_i32_1 = arith.constant 0 : i32
    return %c0_i32, %c0_i32_0 : i32, i32
  }
  func.func @transform_3(%arg0: i32) -> (i32, i32) {
    %c0_i32 = arith.constant 0 : i32
    %c0_i32_0 = arith.constant 0 : i32
    return %c0_i32, %arg0 : i32, i32
  }
}

</mosaic_0001>

<llo_original>
// kernel: unet_forward.10
$region0: #{unet_forward.10}
  #allocation0 [shape = 'u32[]', space=smem, size = 0x4, offset = 0x4, fixed_abs, tag = 'smem constant byte address 0x4 - core index']
  #allocation1 [shape = 'u32[72,128]{1,0:T(1,128)}', space=vmem, size = 0x9000, scoped, tag = 'internal scratch']
  %s0 = inlined_call_operand.vmem [shape: bf16[4,36], index: 0, kind: input, shape index: {}]
  %s1 = inlined_call_operand.vmem [shape: bf16[36,2048], index: 1, kind: input, shape index: {}]
  %s2 = inlined_call_operand.vmem [shape: f32[4,1], index: 2, kind: input, shape index: {}]
  %s3 = inlined_call_operand.vmem [shape: bf16[4,2048], index: 3, kind: output, shape index: {}]
  %s4 = sld [smem:[#allocation0]]
  $region68: #{unet_forward.10} parent=0
    _
  %s6 = ssub.s32 1, %s4
  %s7 = scalar_select 0, %s6, %s4
  $region1: #{unet_forward.10} parent=0
    #allocation2 [shape = 'u8[81920]{0}', space=vmem, size = 0x14000, scoped, tag = 'input window, operand 1']
    loop: start=0, step=1, limit=6
    $region2: #{unet_forward.10} parent=1 // loop_pre_header
      _
    $region3: #{unet_forward.10} parent=1 // loop_header
      %s9 = sphi 0, %s13
      %p10 = scmp.ge.s32.totalorder %s9, 6
      %s17 = sphi 0, %s17
      %s19 = sphi 0, %s17
      %s20 = sphi 0, %s19
      %s34 = sphi 0, %s20
      %s40 = sphi 0, %s42
      %s43 = sphi 0, %s40
      %s44 = sphi 0, %s43
      %s60 = sphi 0, %s44
      %s64 = sphi 0, %s64
      %s66 = sphi 0, %s64
      %s67 = sphi 0, %s66
      %s81 = sphi 0, %s67
      %s87 = sphi 0, %s89
      %s90 = sphi 0, %s87
      %s91 = sphi 0, %s90
      %s107 = sphi 0, %s91
    $region4: #{unet_forward.10} parent=1 // loop_header_branch
      %12 = sbr.rel (%p10) target = $region8
    $region5: #{unet_forward.10} parent=1 // loop_body
      %s14 = ssub.s32 %s9, 1
      %s15 = ssub.s32 %s9, 2
      %s16 = sadd.s32 %s9, 1
      %s18 = sadd.s32 %s17, 1
      %p21 = scmp.eq.s32.totalorder %s9, 3
      %p22 = scmp.ne.s32.totalorder %s17, %s19
      %p23 = scmp.eq.s32.totalorder %s9, 0
      %p24 = por %p22, %p23
      %p25 = scmp.ne.s32.totalorder %s17, %s19
      %p26 = scmp.eq.s32.totalorder %s14, 3
      %p27 = por %p25, %p26
      %p28 = scmp.ne.s32.totalorder %s19, %s20
      %p29 = scmp.eq.s32.totalorder %s14, 0
      %p30 = por %p28, %p29
      %p31 = scmp.ne.s32.totalorder %s19, %s20
      %p32 = scmp.eq.s32.totalorder %s15, 3
      %p33 = por %p31, %p32
      %p35 = scmp.ne.s32.totalorder %s20, %s34
      %p36 = scmp.eq.s32.totalorder %s15, 0
      %p37 = por %p35, %p36
      %s38 = ssub.s32 %s9, %s16
      %p39 = scmp.eq.s32.totalorder %s38, 0
      %s41 = sadd.s32 %s40, 1
      %s42 = scalar_select %p39, %s40, %s41
      %p45 = pneg %p39
      %p46 = scmp.eq.s32.totalorder %s9, 3
      %p47 = por %p45, %p46
      %p48 = scmp.ne.s32.totalorder %s40, %s43
      %p49 = scmp.eq.s32.totalorder %s9, 0
      %p50 = por %p48, %p49
      %p51 = scmp.ne.s32.totalorder %s40, %s43
      %p52 = scmp.eq.s32.totalorder %s14, 3
      %p53 = por %p51, %p52
      %p54 = scmp.ne.s32.totalorder %s43, %s44
      %p55 = scmp.eq.s32.totalorder %s14, 0
      %p56 = por %p54, %p55
      %p57 = scmp.ne.s32.totalorder %s43, %s44
      %p58 = scmp.eq.s32.totalorder %s15, 3
      %p59 = por %p57, %p58
      %p61 = scmp.ne.s32.totalorder %s44, %s60
      %p62 = scmp.eq.s32.totalorder %s15, 0
      %p63 = por %p61, %p62
      %s65 = sadd.s32 %s64, 1
      %p68 = scmp.eq.s32.totalorder %s9, 3
      %p69 = scmp.ne.s32.totalorder %s64, %s66
      %p70 = scmp.eq.s32.totalorder %s9, 0
      %p71 = por %p69, %p70
      %p72 = scmp.ne.s32.totalorder %s64, %s66
      %p73 = scmp.eq.s32.totalorder %s14, 3
      %p74 = por %p72, %p73
      %p75 = scmp.ne.s32.totalorder %s66, %s67
      %p76 = scmp.eq.s32.totalorder %s14, 0
      %p77 = por %p75, %p76
      %p78 = scmp.ne.s32.totalorder %s66, %s67
      %p79 = scmp.eq.s32.totalorder %s15, 3
      %p80 = por %p78, %p79
      %p82 = scmp.ne.s32.totalorder %s67, %s81
      %p83 = scmp.eq.s32.totalorder %s15, 0
      %p84 = por %p82, %p83
      %s85 = ssub.s32 %s9, %s16
      %p86 = scmp.eq.s32.totalorder %s85, 0
      %s88 = sadd.s32 %s87, 1
      %s89 = scalar_select %p86, %s87, %s88
      %p92 = pneg %p86
      %p93 = scmp.eq.s32.totalorder %s9, 3
      %p94 = por %p92, %p93
      %p95 = scmp.ne.s32.totalorder %s87, %s90
      %p96 = scmp.eq.s32.totalorder %s9, 0
      %p97 = por %p95, %p96
      %p98 = scmp.ne.s32.totalorder %s87, %s90
      %p99 = scmp.eq.s32.totalorder %s14, 3
      %p100 = por %p98, %p99
      %p101 = scmp.ne.s32.totalorder %s90, %s91
      %p102 = scmp.eq.s32.totalorder %s14, 0
      %p103 = por %p101, %p102
      %p104 = scmp.ne.s32.totalorder %s90, %s91
      %p105 = scmp.eq.s32.totalorder %s15, 3
      %p106 = por %p104, %p105
      %p108 = scmp.ne.s32.totalorder %s91, %s107
      %p109 = scmp.eq.s32.totalorder %s15, 0
      %p110 = por %p108, %p109
      %p111 = scmp.le.s32.totalorder 1, %s9
      %p112 = scmp.lt.s32.totalorder %s9, 5
      %p113 = pnand %p111, %p112
      %p114 = pneg %p113
      // Predicated region
      $region9: #{unet_forward.10} parent=5 // pred_check
        _
      $region10: #{unet_forward.10} parent=5 // pred_check_branch
        %116 = sbr.rel (%p113) target = $region12
      $region11: #{unet_forward.10} parent=5 // pred_region
        %s117 = ssub.s32 %s9, 1
        // Predicated region
        $region13: #{unet_forward.10} parent=11 // pred_check
          %p118 = pneg %p30
        $region14: #{unet_forward.10} parent=11 // pred_check_branch
          %120 = sbr.rel (%p118) target = $region16
        $region15: #{unet_forward.10} parent=11 // pred_region
          _
        $region16: #{unet_forward.10} parent=11 // pred_fallthru
          _
        // Predicated region
        $region17: #{unet_forward.10} parent=11 // pred_check
          %p121 = pneg %p77
        $region18: #{unet_forward.10} parent=11 // pred_check_branch
          %123 = sbr.rel (%p121) target = $region20
        $region19: #{unet_forward.10} parent=11 // pred_region
          _
        $region20: #{unet_forward.10} parent=11 // pred_fallthru
          _
      $region12: #{unet_forward.10} parent=5 // pred_fallthru
        _
      %p124 = scmp.lt.s32.totalorder %s9, 4
      // Predicated region
      $region21: #{unet_forward.10} parent=5 // pred_check
        %p125 = pneg %p124
      $region22: #{unet_forward.10} parent=5 // pred_check_branch
        %127 = sbr.rel (%p125) target = $region24
      $region23: #{unet_forward.10} parent=5 // pred_region
        // Predicated region
        $region25: #{unet_forward.10} parent=23 // pred_check
          %p128 = pneg %p50
        $region26: #{unet_forward.10} parent=23 // pred_check_branch
          %130 = sbr.rel (%p128) target = $region28
        $region27: #{unet_forward.10} parent=23 // pred_region
          %s131 = sand.u32 %s40, 1
          %s132 = sand.u32 %s40, 1
          %s133 = smul.addr %s132, 80
          %s134 = scalar_lea.vmem [#allocation2], %s133
          %s135 = smul.u32 4, %s9
          %s136 = smul.addr %s135, 4
          %s137 = scalar_lea.vmem %s1, %s136
          // Predicated region
          $region29: #{unet_forward.10} parent=27 // pred_check
            _
          $region30: #{unet_forward.10} parent=27 // pred_check_branch
            %139 = sbr.rel (0) target = $region32
          $region31: #{unet_forward.10} parent=27 // pred_region
            // Predicated region
            $region33: #{unet_forward.10} parent=31 // pred_check
              _
            $region34: #{unet_forward.10} parent=31 // pred_check_branch
              %141 = sbr.rel (0) target = $region36
            $region35: #{unet_forward.10} parent=31 // pred_region
              loop: start=0, step=1, limit=1
              $region37: #{unet_forward.10} parent=35 // loop_pre_header
                _
              $region38: #{unet_forward.10} parent=35 // loop_header
                %s143 = sphi 0, %s147
                %p144 = scmp.ge.s32.totalorder %s143, 1
                %s148 = sphi %s137, %s137
                %s149 = sphi %s134, %s134
              $region39: #{unet_forward.10} parent=35 // loop_header_branch
                %146 = sbr.rel (%p144) target = $region43
              $region40: #{unet_forward.10} parent=35 // loop_body
                %v150 = vld [vmem:[%s148] sm:$0xff]
                %151 = vst [vmem:[%s149] sm:$0xff] %v150
                %v152 = vld [vmem:[%s148 + $0x8] sm:$0xff]
                %153 = vst [vmem:[%s149 + $0x8] sm:$0xff] %v152
                %v154 = vld [vmem:[%s148 + $0x40] sm:$0xff]
                %155 = vst [vmem:[%s149 + $0x10] sm:$0xff] %v154
                %v156 = vld [vmem:[%s148 + $0x48] sm:$0xff]
                %157 = vst [vmem:[%s149 + $0x18] sm:$0xff] %v156
                %v158 = vld [vmem:[%s148 + $0x80] sm:$0xff]
                %159 = vst [vmem:[%s149 + $0x20] sm:$0xff] %v158
                %v160 = vld [vmem:[%s148 + $0x88] sm:$0xff]
                %161 = vst [vmem:[%s149 + $0x28] sm:$0xff] %v160
                %v162 = vld [vmem:[%s148 + $0xc0] sm:$0xff]
                %163 = vst [vmem:[%s149 + $0x30] sm:$0xff] %v162
                %v164 = vld [vmem:[%s148 + $0xc8] sm:$0xff]
                %165 = vst [vmem:[%s149 + $0x38] sm:$0xff] %v164
                %v166 = vld [vmem:[%s148 + $0x100] sm:$0xff]
                %167 = vst [vmem:[%s149 + $0x40] sm:$0xff] %v166
                %v168 = vld [vmem:[%s148 + $0x108] sm:$0xff]
                %169 = vst [vmem:[%s149 + $0x48] sm:$0xff] %v168
              $region41: #{unet_forward.10} parent=35 // loop_footer
                %s147 = sadd.s32 1, %s143
              $region42: #{unet_forward.10} parent=35 // loop_footer_branch
                %142 = sbr.rel target = $region38
              $region43: #{unet_forward.10} parent=35 // loop_exit
                _
            $region36: #{unet_forward.10} parent=31 // pred_fallthru
              _
            // Predicated region
            $region44: #{unet_forward.10} parent=31 // pred_check
              _
            $region45: #{unet_forward.10} parent=31 // pred_check_branch
              %171 = sbr.rel target = $region47
            $region46: #{unet_forward.10} parent=31 // pred_region
              _
            $region47: #{unet_forward.10} parent=31 // pred_fallthru
              _
          $region32: #{unet_forward.10} parent=27 // pred_fallthru
            _
          %172 = vnop
        $region28: #{unet_forward.10} parent=23 // pred_fallthru
          _
      $region24: #{unet_forward.10} parent=5 // pred_fallthru
        _
      %p173 = scmp.le.s32.totalorder 1, %s9
      %p174 = scmp.lt.s32.totalorder %s9, 5
      %p175 = pnand %p173, %p174
      %p176 = pneg %p175
      // Predicated region
      $region48: #{unet_forward.10} parent=5 // pred_check
        _
      $region49: #{unet_forward.10} parent=5 // pred_check_branch
        %178 = sbr.rel (%p175) target = $region51
      $region50: #{unet_forward.10} parent=5 // pred_region
        %s179 = ssub.s32 %s9, 1
        %s180 = sand.u32 %s43, 1
        %s181 = sand.u32 %s43, 1
        %s182 = smul.addr %s181, 80
        %s183 = scalar_lea.vmem [#allocation2], %s182
        // Predicated region
        $region52: #{unet_forward.10} parent=50 // pred_check
          %p184 = pneg %p56
        $region53: #{unet_forward.10} parent=50 // pred_check_branch
          %186 = sbr.rel (%p184) target = $region55
        $region54: #{unet_forward.10} parent=50 // pred_region
          _
        $region55: #{unet_forward.10} parent=50 // pred_fallthru
          _
        %p187 = pneg %p30
        %p188 = pneg %p27
        %s189 = sand.u32 %s43, 1
        %s190 = sand.u32 %s43, 1
        %s191 = smul.addr %s190, 80
        %s192 = scalar_lea.vmem [#allocation2], %s191
        %p193 = pneg %p56
        %p194 = pneg %p53
        %p195 = pneg %p77
        %p196 = pneg %p74
        %p197 = pneg %p103
        %p198 = pneg %p100
        %s199 = smul.u32 4, %s14
        %p200 = scmp.lt.s32.totalorder %s199, 15
        %s201 = scalar_select %p200, %s199, 15
        %s202 = smul.addr %s201, 2
        %s203 = scalar_lea.vmem %s3, %s202
        %s204 = smul.u32 4, %s14
        %s205 = smul.u32 4, %s14
        %p206 = scmp.lt.s32.totalorder %s205, 15
        %s207 = scalar_select %p206, %s205, 15
        %s208 = smul.addr %s207, 2
        %s209 = scalar_lea.vmem %s3, %s208
        %s210 = smul.u32 4, %s14
        %v212 = vld [vmem:[%s0] sm:$0x3]
        %v213 = vld [vmem:[%s183] sm:$0xff]
        %v214 = vld [vmem:[%s183 + $0x8] sm:$0xff]
        %v215 = vld [vmem:[%s183 + $0x10] sm:$0xff]
        %v216 = vld [vmem:[%s183 + $0x18] sm:$0xff]
        %v217 = vld [vmem:[%s183 + $0x20] sm:$0xff]
        %v218 = vld [vmem:[%s183 + $0x28] sm:$0xff]
        %v219 = vld [vmem:[%s183 + $0x30] sm:$0xff]
        %v220 = vld [vmem:[%s183 + $0x38] sm:$0xff]
        %v221 = vld [vmem:[%s183 + $0x40] sm:$0x33]
        %v222 = vld [vmem:[%s183 + $0x48] sm:$0x33]
        %v223 = vld [vmem:[%s2] sm:$0xf]
        %225 = vset.pattern.permute.xlu0 0
        %226 = vperm.xlu0 %225, %v223
        %v227 = vpop.permute.xlu0 %226
        %v239 = vunpack.c.l.b16 %v213
        %v240 = vunpack.c.h.b16 %v213
        %v241 = vunpack.c.l.b16 %v214
        %v242 = vunpack.c.h.b16 %v214
        %v243 = vunpack.c.l.b16 %v215
        %v244 = vunpack.c.h.b16 %v215
        %v245 = vunpack.c.l.b16 %v216
        %v246 = vunpack.c.h.b16 %v216
        %v247 = vunpack.c.l.b16 %v217
        %v248 = vunpack.c.h.b16 %v217
        %v249 = vunpack.c.l.b16 %v218
        %v250 = vunpack.c.h.b16 %v218
        %v251 = vunpack.c.l.b16 %v219
        %v252 = vunpack.c.h.b16 %v219
        %v253 = vunpack.c.l.b16 %v220
        %v254 = vunpack.c.h.b16 %v220
        %v255 = vunpack.c.l.b16 %v221
        %v256 = vunpack.c.h.b16 %v221
        %v257 = vunpack.c.l.b16 %v222
        %v258 = vunpack.c.h.b16 %v222
        %v259 = vpack.c.b16 %v243, %v239
        %v260 = vpack.c.b16 %v244, %v240
        %v261 = vpack.c.b16 %v245, %v241
        %v262 = vpack.c.b16 %v246, %v242
        %v263 = vpack.c.b16 %v251, %v247
        %v264 = vpack.c.b16 %v252, %v248
        %v265 = vpack.c.b16 %v253, %v249
        %v266 = vpack.c.b16 %v254, %v250
        %v267 = vpack.c.b16 %v255, %v255
        %v268 = vpack.c.b16 %v256, %v256
        %v269 = vpack.c.b16 %v257, %v257
        %v270 = vpack.c.b16 %v258, %v258
        %vm279 = vcmask 293888
        %v281 = vsel %vm279, %v212, 0
        %vm283 = vcmask 1041408
        %v285 = vsel %vm283, %v267, 0
        %v288 = vsel %vm283, %v268, 0
        %v291 = vsel %vm283, %v269, 0
        %v294 = vsel %vm283, %v270, 0
        %296 = vmatpush.bf16.msra.mxu0 0
        %297 = vmatpush.bf16.msra.mxu0 0
        %298 = vmatpush.bf16.msra.mxu0 0
        %299 = vmatpush.bf16.msra.mxu0 0
        %300 = vmatpush.bf16.msra.mxu0 0
        %301 = vmatpush.bf16.msra.mxu0 %v285
        %302 = vmatpush.bf16.msra.mxu0 %v263
        %303 = vmatpush.bf16.msra.mxu0 %v259
        %304 = vmatmul.bf16.gmra.mxu0 %v281
        %v305 = vpop.f32.mrf.mxu0
        %v306 = vadd.f32 %v227, %v305
        %v307 = vpop.f32.mrf.mxu0
        %308 = vdwg.mxu0
        %309 = vmatpush.bf16.msra.mxu0 0
        %310 = vmatpush.bf16.msra.mxu0 0
        %311 = vmatpush.bf16.msra.mxu0 0
        %312 = vmatpush.bf16.msra.mxu0 0
        %313 = vmatpush.bf16.msra.mxu0 0
        %314 = vmatpush.bf16.msra.mxu0 %v288
        %315 = vmatpush.bf16.msra.mxu0 %v264
        %316 = vmatpush.bf16.msra.mxu0 %v260
        %317 = vmatmul.bf16.gmra.mxu0 %v281
        %v318 = vpop.f32.mrf.mxu0
        %v319 = vadd.f32 %v227, %v318
        %v320 = vpop.f32.mrf.mxu0
        %321 = vdwg.mxu0
        %322 = vmatpush.bf16.msra.mxu0 0
        %323 = vmatpush.bf16.msra.mxu0 0
        %324 = vmatpush.bf16.msra.mxu0 0
        %325 = vmatpush.bf16.msra.mxu0 0
        %326 = vmatpush.bf16.msra.mxu0 0
        %327 = vmatpush.bf16.msra.mxu0 %v291
        %328 = vmatpush.bf16.msra.mxu0 %v265
        %329 = vmatpush.bf16.msra.mxu0 %v261
        %330 = vmatmul.bf16.gmra.mxu0 %v281
        %v331 = vpop.f32.mrf.mxu0
        %v332 = vadd.f32 %v227, %v331
        %v333 = vpop.f32.mrf.mxu0
        %334 = vdwg.mxu0
        %335 = vmatpush.bf16.msra.mxu0 0
        %336 = vmatpush.bf16.msra.mxu0 0
        %337 = vmatpush.bf16.msra.mxu0 0
        %338 = vmatpush.bf16.msra.mxu0 0
        %339 = vmatpush.bf16.msra.mxu0 0
        %340 = vmatpush.bf16.msra.mxu0 %v294
        %341 = vmatpush.bf16.msra.mxu0 %v266
        %342 = vmatpush.bf16.msra.mxu0 %v262
        %343 = vmatmul.bf16.gmra.mxu0 %v281
        %v344 = vpop.f32.mrf.mxu0
        %v345 = vadd.f32 %v227, %v344
        %v346 = vpop.f32.mrf.mxu0
        %347 = vdwg.mxu0
        %v348 = vpack.c.bf16 %v319, %v306
        %v349 = vpack.c.bf16 %v345, %v332
        %v352 = vrot.slane %v348, 2
        %v353 = vrot.slane %v349, 4
        %v354 = vrot.slane %v349, 6
        %v357 = vsel %vm283, %v348, %v352
        %vm358 = vcmask 1045508
        %v361 = vsel %vm358, %v353, %v354
        %vm362 = vcmask 1043456
        %v363 = vsel %vm362, %v357, %v361
        %365 = vst [vmem:[%s209] sm:$0xff] %v363
        %s366 = smul.u32 4, %s14
        %p367 = scmp.lt.s32.totalorder %s366, 15
        %s368 = scalar_select %p367, %s366, 15
        %s369 = smul.addr %s368, 2
        %s370 = scalar_lea.vmem %s3, %s369
        // Predicated region
        $region56: #{unet_forward.10} parent=50 // pred_check
          %p371 = pneg %p100
        $region57: #{unet_forward.10} parent=50 // pred_check_branch
          %373 = sbr.rel (%p371) target = $region59
        $region58: #{unet_forward.10} parent=50 // pred_region
          %s374 = smul.u32 4, %s14
        $region59: #{unet_forward.10} parent=50 // pred_fallthru
          _
      $region51: #{unet_forward.10} parent=5 // pred_fallthru
        _
      %p375 = scmp.le.s32.totalorder 2, %s9
      // Predicated region
      $region60: #{unet_forward.10} parent=5 // pred_check
        %p376 = pneg %p375
      $region61: #{unet_forward.10} parent=5 // pred_check_branch
        %378 = sbr.rel (%p376) target = $region63
      $region62: #{unet_forward.10} parent=5 // pred_region
        %s379 = ssub.s32 %s9, 2
        // Predicated region
        $region64: #{unet_forward.10} parent=62 // pred_check
          %p380 = pneg %p106
        $region65: #{unet_forward.10} parent=62 // pred_check_branch
          %382 = sbr.rel (%p380) target = $region67
        $region66: #{unet_forward.10} parent=62 // pred_region
          %s383 = smul.u32 4, %s15
          %p384 = scmp.lt.s32.totalorder %s383, 15
          %s385 = scalar_select %p384, %s383, 15
          %s386 = smul.addr %s385, 2
          %s387 = scalar_lea.vmem %s3, %s386
        $region67: #{unet_forward.10} parent=62 // pred_fallthru
          _
      $region63: #{unet_forward.10} parent=5 // pred_fallthru
        _
    $region6: #{unet_forward.10} parent=1 // loop_footer
      %s13 = sadd.s32 1, %s9
    $region7: #{unet_forward.10} parent=1 // loop_footer_branch
      %8 = sbr.rel target = $region3
    $region8: #{unet_forward.10} parent=1 // loop_exit
      _

// kernel: unet_forward.11
$region0: #{unet_forward.11}
  #allocation0 [shape = 'u32[]', space=smem, size = 0x4, offset = 0x4, fixed_abs, tag = 'smem constant byte address 0x4 - core index']
  #allocation1 [shape = 'u32[72,128]{1,0:T(1,128)}', space=vmem, size = 0x9000, scoped, tag = 'internal scratch']
  %s0 = inlined_call_operand.vmem [shape: bf16[8,100], index: 0, kind: input, shape index: {}]
  %s1 = inlined_call_operand.vmem [shape: bf16[100,512], index: 1, kind: input, shape index: {}]
  %s2 = inlined_call_operand.vmem [shape: f32[8,1], index: 2, kind: input, shape index: {}]
  %s3 = inlined_call_operand.vmem [shape: bf16[8,512], index: 3, kind: output, shape index: {}]
  %s4 = sld [smem:[#allocation0]]
  $region83: #{unet_forward.11} parent=0
    _
  %s6 = ssub.s32 1, %s4
  %s7 = scalar_select 0, %s6, %s4
  $region1: #{unet_forward.11} parent=0
    #allocation2 [shape = 'u8[106496]{0}', space=vmem, size = 0x1a000, scoped, tag = 'input window, operand 1']
    loop: start=0, step=1, limit=4
    $region2: #{unet_forward.11} parent=1 // loop_pre_header
      _
    $region3: #{unet_forward.11} parent=1 // loop_header
      %s9 = sphi 0, %s13
      %p10 = scmp.ge.s32.totalorder %s9, 4
      %s17 = sphi 0, %s17
      %s19 = sphi 0, %s17
      %s20 = sphi 0, %s19
      %s34 = sphi 0, %s20
      %s40 = sphi 0, %s42
      %s43 = sphi 0, %s40
      %s44 = sphi 0, %s43
      %s60 = sphi 0, %s44
      %s64 = sphi 0, %s64
      %s66 = sphi 0, %s64
      %s67 = sphi 0, %s66
      %s81 = sphi 0, %s67
      %s87 = sphi 0, %s89
      %s90 = sphi 0, %s87
      %s91 = sphi 0, %s90
      %s107 = sphi 0, %s91
    $region4: #{unet_forward.11} parent=1 // loop_header_branch
      %12 = sbr.rel (%p10) target = $region8
    $region5: #{unet_forward.11} parent=1 // loop_body
      %s14 = ssub.s32 %s9, 1
      %s15 = ssub.s32 %s9, 2
      %s16 = sadd.s32 %s9, 1
      %s18 = sadd.s32 %s17, 1
      %p21 = scmp.eq.s32.totalorder %s9, 1
      %p22 = scmp.ne.s32.totalorder %s17, %s19
      %p23 = scmp.eq.s32.totalorder %s9, 0
      %p24 = por %p22, %p23
      %p25 = scmp.ne.s32.totalorder %s17, %s19
      %p26 = scmp.eq.s32.totalorder %s14, 1
      %p27 = por %p25, %p26
      %p28 = scmp.ne.s32.totalorder %s19, %s20
      %p29 = scmp.eq.s32.totalorder %s14, 0
      %p30 = por %p28, %p29
      %p31 = scmp.ne.s32.totalorder %s19, %s20
      %p32 = scmp.eq.s32.totalorder %s15, 1
      %p33 = por %p31, %p32
      %p35 = scmp.ne.s32.totalorder %s20, %s34
      %p36 = scmp.eq.s32.totalorder %s15, 0
      %p37 = por %p35, %p36
      %s38 = ssub.s32 %s9, %s16
      %p39 = scmp.eq.s32.totalorder %s38, 0
      %s41 = sadd.s32 %s40, 1
      %s42 = scalar_select %p39, %s40, %s41
      %p45 = pneg %p39
      %p46 = scmp.eq.s32.totalorder %s9, 1
      %p47 = por %p45, %p46
      %p48 = scmp.ne.s32.totalorder %s40, %s43
      %p49 = scmp.eq.s32.totalorder %s9, 0
      %p50 = por %p48, %p49
      %p51 = scmp.ne.s32.totalorder %s40, %s43
      %p52 = scmp.eq.s32.totalorder %s14, 1
      %p53 = por %p51, %p52
      %p54 = scmp.ne.s32.totalorder %s43, %s44
      %p55 = scmp.eq.s32.totalorder %s14, 0
      %p56 = por %p54, %p55
      %p57 = scmp.ne.s32.totalorder %s43, %s44
      %p58 = scmp.eq.s32.totalorder %s15, 1
      %p59 = por %p57, %p58
      %p61 = scmp.ne.s32.totalorder %s44, %s60
      %p62 = scmp.eq.s32.totalorder %s15, 0
      %p63 = por %p61, %p62
      %s65 = sadd.s32 %s64, 1
      %p68 = scmp.eq.s32.totalorder %s9, 1
      %p69 = scmp.ne.s32.totalorder %s64, %s66
      %p70 = scmp.eq.s32.totalorder %s9, 0
      %p71 = por %p69, %p70
      %p72 = scmp.ne.s32.totalorder %s64, %s66
      %p73 = scmp.eq.s32.totalorder %s14, 1
      %p74 = por %p72, %p73
      %p75 = scmp.ne.s32.totalorder %s66, %s67
      %p76 = scmp.eq.s32.totalorder %s14, 0
      %p77 = por %p75, %p76
      %p78 = scmp.ne.s32.totalorder %s66, %s67
      %p79 = scmp.eq.s32.totalorder %s15, 1
      %p80 = por %p78, %p79
      %p82 = scmp.ne.s32.totalorder %s67, %s81
      %p83 = scmp.eq.s32.totalorder %s15, 0
      %p84 = por %p82, %p83
      %s85 = ssub.s32 %s9, %s16
      %p86 = scmp.eq.s32.totalorder %s85, 0
      %s88 = sadd.s32 %s87, 1
      %s89 = scalar_select %p86, %s87, %s88
      %p92 = pneg %p86
      %p93 = scmp.eq.s32.totalorder %s9, 1
      %p94 = por %p92, %p93
      %p95 = scmp.ne.s32.totalorder %s87, %s90
      %p96 = scmp.eq.s32.totalorder %s9, 0
      %p97 = por %p95, %p96
      %p98 = scmp.ne.s32.totalorder %s87, %s90
      %p99 = scmp.eq.s32.totalorder %s14, 1
      %p100 = por %p98, %p99
      %p101 = scmp.ne.s32.totalorder %s90, %s91
      %p102 = scmp.eq.s32.totalorder %s14, 0
      %p103 = por %p101, %p102
      %p104 = scmp.ne.s32.totalorder %s90, %s91
      %p105 = scmp.eq.s32.totalorder %s15, 1
      %p106 = por %p104, %p105
      %p108 = scmp.ne.s32.totalorder %s91, %s107
      %p109 = scmp.eq.s32.totalorder %s15, 0
      %p110 = por %p108, %p109
      %p111 = scmp.le.s32.totalorder 1, %s9
      %p112 = scmp.lt.s32.totalorder %s9, 3
      %p113 = pnand %p111, %p112
      %p114 = pneg %p113
      // Predicated region
      $region9: #{unet_forward.11} parent=5 // pred_check
        _
      $region10: #{unet_forward.11} parent=5 // pred_check_branch
        %116 = sbr.rel (%p113) target = $region12
      $region11: #{unet_forward.11} parent=5 // pred_region
        %s117 = ssub.s32 %s9, 1
        // Predicated region
        $region13: #{unet_forward.11} parent=11 // pred_check
          %p118 = pneg %p30
        $region14: #{unet_forward.11} parent=11 // pred_check_branch
          %120 = sbr.rel (%p118) target = $region16
        $region15: #{unet_forward.11} parent=11 // pred_region
          _
        $region16: #{unet_forward.11} parent=11 // pred_fallthru
          _
        // Predicated region
        $region17: #{unet_forward.11} parent=11 // pred_check
          %p121 = pneg %p77
        $region18: #{unet_forward.11} parent=11 // pred_check_branch
          %123 = sbr.rel (%p121) target = $region20
        $region19: #{unet_forward.11} parent=11 // pred_region
          _
        $region20: #{unet_forward.11} parent=11 // pred_fallthru
          _
      $region12: #{unet_forward.11} parent=5 // pred_fallthru
        _
      %p124 = scmp.lt.s32.totalorder %s9, 2
      // Predicated region
      $region21: #{unet_forward.11} parent=5 // pred_check
        %p125 = pneg %p124
      $region22: #{unet_forward.11} parent=5 // pred_check_branch
        %127 = sbr.rel (%p125) target = $region24
      $region23: #{unet_forward.11} parent=5 // pred_region
        // Predicated region
        $region25: #{unet_forward.11} parent=23 // pred_check
          %p128 = pneg %p50
        $region26: #{unet_forward.11} parent=23 // pred_check_branch
          %130 = sbr.rel (%p128) target = $region28
        $region27: #{unet_forward.11} parent=23 // pred_region
          %s131 = sand.u32 %s40, 1
          %s132 = sand.u32 %s40, 1
          %s133 = smul.addr %s132, 104
          %s134 = scalar_lea.vmem [#allocation2], %s133
          %s135 = smul.u32 2, %s9
          %s136 = smul.addr %s135, 4
          %s137 = scalar_lea.vmem %s1, %s136
          // Predicated region
          $region29: #{unet_forward.11} parent=27 // pred_check
            _
          $region30: #{unet_forward.11} parent=27 // pred_check_branch
            %139 = sbr.rel (0) target = $region32
          $region31: #{unet_forward.11} parent=27 // pred_region
            // Predicated region
            $region33: #{unet_forward.11} parent=31 // pred_check
              _
            $region34: #{unet_forward.11} parent=31 // pred_check_branch
              %141 = sbr.rel (0) target = $region36
            $region35: #{unet_forward.11} parent=31 // pred_region
              // Predicated region
              $region48: #{unet_forward.11} parent=35 // pred_check
                _
              $region49: #{unet_forward.11} parent=35 // pred_check_branch
                %181 = sbr.rel (0) target = $region51
              $region50: #{unet_forward.11} parent=35 // pred_region
                loop: start=0, step=1, limit=1
                $region52: #{unet_forward.11} parent=50 // loop_pre_header
                  _
                $region53: #{unet_forward.11} parent=50 // loop_header
                  %s183 = sphi 0, %s187
                  %p184 = scmp.ge.s32.totalorder %s183, 1
                  %s188 = sphi %s137, %s137
                  %s189 = sphi %s134, %s134
                $region54: #{unet_forward.11} parent=50 // loop_header_branch
                  %186 = sbr.rel (%p184) target = $region58
                $region55: #{unet_forward.11} parent=50 // loop_body
                  %v190 = vld [vmem:[%s188] sm:$0xff]
                  %191 = vst [vmem:[%s189] sm:$0xff] %v190
                  %v192 = vld [vmem:[%s188 + $0x10] sm:$0xff]
                  %193 = vst [vmem:[%s189 + $0x8] sm:$0xff] %v192
                  %v194 = vld [vmem:[%s188 + $0x20] sm:$0xff]
                  %195 = vst [vmem:[%s189 + $0x10] sm:$0xff] %v194
                  %v196 = vld [vmem:[%s188 + $0x30] sm:$0xff]
                  %197 = vst [vmem:[%s189 + $0x18] sm:$0xff] %v196
                  %v198 = vld [vmem:[%s188 + $0x40] sm:$0xff]
                  %199 = vst [vmem:[%s189 + $0x20] sm:$0xff] %v198
                  %v200 = vld [vmem:[%s188 + $0x50] sm:$0xff]
                  %201 = vst [vmem:[%s189 + $0x28] sm:$0xff] %v200
                  %v202 = vld [vmem:[%s188 + $0x60] sm:$0xff]
                  %203 = vst [vmem:[%s189 + $0x30] sm:$0xff] %v202
                  %v204 = vld [vmem:[%s188 + $0x70] sm:$0xff]
                  %205 = vst [vmem:[%s189 + $0x38] sm:$0xff] %v204
                  %v206 = vld [vmem:[%s188 + $0x80] sm:$0xff]
                  %207 = vst [vmem:[%s189 + $0x40] sm:$0xff] %v206
                  %v208 = vld [vmem:[%s188 + $0x90] sm:$0xff]
                  %209 = vst [vmem:[%s189 + $0x48] sm:$0xff] %v208
                  %v210 = vld [vmem:[%s188 + $0xa0] sm:$0xff]
                  %211 = vst [vmem:[%s189 + $0x50] sm:$0xff] %v210
                  %v212 = vld [vmem:[%s188 + $0xb0] sm:$0xff]
                  %213 = vst [vmem:[%s189 + $0x58] sm:$0xff] %v212
                  %v214 = vld [vmem:[%s188 + $0xc0] sm:$0xff]
                  %215 = vst [vmem:[%s189 + $0x60] sm:$0xff] %v214
                $region56: #{unet_forward.11} parent=50 // loop_footer
                  %s187 = sadd.s32 1, %s183
                $region57: #{unet_forward.11} parent=50 // loop_footer_branch
                  %182 = sbr.rel target = $region53
                $region58: #{unet_forward.11} parent=50 // loop_exit
                  _
              $region51: #{unet_forward.11} parent=35 // pred_fallthru
                _
              // Predicated region
              $region59: #{unet_forward.11} parent=35 // pred_check
                _
              $region60: #{unet_forward.11} parent=35 // pred_check_branch
                %217 = sbr.rel target = $region62
              $region61: #{unet_forward.11} parent=35 // pred_region
                _
              $region62: #{unet_forward.11} parent=35 // pred_fallthru
                _
            $region36: #{unet_forward.11} parent=31 // pred_fallthru
              _
            // Predicated region
            $region37: #{unet_forward.11} parent=31 // pred_check
              _
            $region38: #{unet_forward.11} parent=31 // pred_check_branch
              %143 = sbr.rel target = $region40
            $region39: #{unet_forward.11} parent=31 // pred_region
              %s145 = ssub.s32 256, 1
              loop: start=0, step=1, limit=1
              $region41: #{unet_forward.11} parent=39 // loop_pre_header
                _
              $region42: #{unet_forward.11} parent=39 // loop_header
                %s147 = sphi 0, %s151
                %p148 = scmp.ge.s32.totalorder %s147, 1
                %s152 = sphi %s137, %s137
                %s153 = sphi %s134, %s134
              $region43: #{unet_forward.11} parent=39 // loop_header_branch
                %150 = sbr.rel (%p148) target = $region47
              $region44: #{unet_forward.11} parent=39 // loop_body
                %v154 = vld [vmem:[%s152] sm:%s145]
                %155 = vst [vmem:[%s153] sm:%s145] %v154
                %v156 = vld [vmem:[%s152 + $0x10] sm:%s145]
                %157 = vst [vmem:[%s153 + $0x8] sm:%s145] %v156
                %v158 = vld [vmem:[%s152 + $0x20] sm:%s145]
                %159 = vst [vmem:[%s153 + $0x10] sm:%s145] %v158
                %v160 = vld [vmem:[%s152 + $0x30] sm:%s145]
                %161 = vst [vmem:[%s153 + $0x18] sm:%s145] %v160
                %v162 = vld [vmem:[%s152 + $0x40] sm:%s145]
                %163 = vst [vmem:[%s153 + $0x20] sm:%s145] %v162
                %v164 = vld [vmem:[%s152 + $0x50] sm:%s145]
                %165 = vst [vmem:[%s153 + $0x28] sm:%s145] %v164
                %v166 = vld [vmem:[%s152 + $0x60] sm:%s145]
                %167 = vst [vmem:[%s153 + $0x30] sm:%s145] %v166
                %v168 = vld [vmem:[%s152 + $0x70] sm:%s145]
                %169 = vst [vmem:[%s153 + $0x38] sm:%s145] %v168
                %v170 = vld [vmem:[%s152 + $0x80] sm:%s145]
                %171 = vst [vmem:[%s153 + $0x40] sm:%s145] %v170
                %v172 = vld [vmem:[%s152 + $0x90] sm:%s145]
                %173 = vst [vmem:[%s153 + $0x48] sm:%s145] %v172
                %v174 = vld [vmem:[%s152 + $0xa0] sm:%s145]
                %175 = vst [vmem:[%s153 + $0x50] sm:%s145] %v174
                %v176 = vld [vmem:[%s152 + $0xb0] sm:%s145]
                %177 = vst [vmem:[%s153 + $0x58] sm:%s145] %v176
                %v178 = vld [vmem:[%s152 + $0xc0] sm:%s145]
                %179 = vst [vmem:[%s153 + $0x60] sm:%s145] %v178
              $region45: #{unet_forward.11} parent=39 // loop_footer
                %s151 = sadd.s32 1, %s147
              $region46: #{unet_forward.11} parent=39 // loop_footer_branch
                %146 = sbr.rel target = $region42
              $region47: #{unet_forward.11} parent=39 // loop_exit
                _
            $region40: #{unet_forward.11} parent=31 // pred_fallthru
              _
          $region32: #{unet_forward.11} parent=27 // pred_fallthru
            _
          %218 = vnop
        $region28: #{unet_forward.11} parent=23 // pred_fallthru
          _
      $region24: #{unet_forward.11} parent=5 // pred_fallthru
        _
      %p219 = scmp.le.s32.totalorder 1, %s9
      %p220 = scmp.lt.s32.totalorder %s9, 3
      %p221 = pnand %p219, %p220
      %p222 = pneg %p221
      // Predicated region
      $region63: #{unet_forward.11} parent=5 // pred_check
        _
      $region64: #{unet_forward.11} parent=5 // pred_check_branch
        %224 = sbr.rel (%p221) target = $region66
      $region65: #{unet_forward.11} parent=5 // pred_region
        %s225 = ssub.s32 %s9, 1
        %s226 = sand.u32 %s43, 1
        %s227 = sand.u32 %s43, 1
        %s228 = smul.addr %s227, 104
        %s229 = scalar_lea.vmem [#allocation2], %s228
        // Predicated region
        $region67: #{unet_forward.11} parent=65 // pred_check
          %p230 = pneg %p56
        $region68: #{unet_forward.11} parent=65 // pred_check_branch
          %232 = sbr.rel (%p230) target = $region70
        $region69: #{unet_forward.11} parent=65 // pred_region
          _
        $region70: #{unet_forward.11} parent=65 // pred_fallthru
          _
        %p233 = pneg %p30
        %p234 = pneg %p27
        %s235 = sand.u32 %s43, 1
        %s236 = sand.u32 %s43, 1
        %s237 = smul.addr %s236, 104
        %s238 = scalar_lea.vmem [#allocation2], %s237
        %p239 = pneg %p56
        %p240 = pneg %p53
        %p241 = pneg %p77
        %p242 = pneg %p74
        %p243 = pneg %p103
        %p244 = pneg %p100
        %s245 = smul.u32 2, %s14
        %p246 = scmp.lt.s32.totalorder %s245, 3
        %s247 = scalar_select %p246, %s245, 3
        %s248 = smul.addr %s247, 4
        %s249 = scalar_lea.vmem %s3, %s248
        %s250 = smul.u32 2, %s14
        %s251 = smul.u32 2, %s14
        %p252 = scmp.lt.s32.totalorder %s251, 3
        %s253 = scalar_select %p252, %s251, 3
        %s254 = smul.addr %s253, 4
        %s255 = scalar_lea.vmem %s3, %s254
        %s256 = smul.u32 2, %s14
        %v258 = vld [vmem:[%s0] sm:$0xf]
        %v259 = vld [vmem:[%s229] sm:$0xff]
        %v260 = vld [vmem:[%s229 + $0x8] sm:$0xff]
        %v261 = vld [vmem:[%s229 + $0x10] sm:$0xff]
        %v262 = vld [vmem:[%s229 + $0x18] sm:$0xff]
        %v263 = vld [vmem:[%s229 + $0x20] sm:$0xff]
        %v264 = vld [vmem:[%s229 + $0x28] sm:$0xff]
        %v265 = vld [vmem:[%s229 + $0x30] sm:$0xff]
        %v266 = vld [vmem:[%s229 + $0x38] sm:$0xff]
        %v267 = vld [vmem:[%s229 + $0x40] sm:$0xff]
        %v268 = vld [vmem:[%s229 + $0x48] sm:$0xff]
        %v269 = vld [vmem:[%s229 + $0x50] sm:$0xff]
        %v270 = vld [vmem:[%s229 + $0x58] sm:$0xff]
        %v271 = vld [vmem:[%s229 + $0x60] sm:$0x33]
        %v272 = vld [vmem:[%s2] sm:$0xff]
        %274 = vset.pattern.permute.xlu0 0
        %275 = vperm.xlu0 %274, %v272
        %v276 = vpop.permute.xlu0 %275
        %v291 = vunpack.c.l.b16 %v259
        %v292 = vunpack.c.h.b16 %v259
        %v293 = vunpack.c.l.b16 %v260
        %v294 = vunpack.c.h.b16 %v260
        %v295 = vunpack.c.l.b16 %v261
        %v296 = vunpack.c.h.b16 %v261
        %v297 = vunpack.c.l.b16 %v262
        %v298 = vunpack.c.h.b16 %v262
        %v299 = vunpack.c.l.b16 %v263
        %v300 = vunpack.c.h.b16 %v263
        %v301 = vunpack.c.l.b16 %v264
        %v302 = vunpack.c.h.b16 %v264
        %v303 = vunpack.c.l.b16 %v265
        %v304 = vunpack.c.h.b16 %v265
        %v305 = vunpack.c.l.b16 %v266
        %v306 = vunpack.c.h.b16 %v266
        %v307 = vunpack.c.l.b16 %v267
        %v308 = vunpack.c.h.b16 %v267
        %v309 = vunpack.c.l.b16 %v268
        %v310 = vunpack.c.h.b16 %v268
        %v311 = vunpack.c.l.b16 %v269
        %v312 = vunpack.c.h.b16 %v269
        %v313 = vunpack.c.l.b16 %v270
        %v314 = vunpack.c.h.b16 %v270
        %v315 = vunpack.c.l.b16 %v271
        %v316 = vunpack.c.h.b16 %v271
        %v317 = vpack.c.b16 %v293, %v291
        %v318 = vpack.c.b16 %v294, %v292
        %v319 = vpack.c.b16 %v297, %v295
        %v320 = vpack.c.b16 %v298, %v296
        %v321 = vpack.c.b16 %v301, %v299
        %v322 = vpack.c.b16 %v302, %v300
        %v323 = vpack.c.b16 %v305, %v303
        %v324 = vpack.c.b16 %v306, %v304
        %v325 = vpack.c.b16 %v309, %v307
        %v326 = vpack.c.b16 %v310, %v308
        %v327 = vpack.c.b16 %v313, %v311
        %v328 = vpack.c.b16 %v314, %v312
        %v329 = vpack.c.b16 %v315, %v315
        %v330 = vpack.c.b16 %v316, %v316
        %vm343 = vcmask 818176
        %v345 = vsel %vm343, %v258, 0
        %vm347 = vcmask 1041408
        %v349 = vsel %vm347, %v329, 0
        %v352 = vsel %vm347, %v330, 0
        %354 = vmatpush.bf16.msra.mxu0 0
        %355 = vmatpush.bf16.msra.mxu0 %v349
        %356 = vmatpush.bf16.msra.mxu0 %v327
        %357 = vmatpush.bf16.msra.mxu0 %v325
        %358 = vmatpush.bf16.msra.mxu0 %v323
        %359 = vmatpush.bf16.msra.mxu0 %v321
        %360 = vmatpush.bf16.msra.mxu0 %v319
        %361 = vmatpush.bf16.msra.mxu0 %v317
        %362 = vmatmul.bf16.gmra.mxu0 %v345
        %v363 = vpop.f32.mrf.mxu0
        %v364 = vadd.f32 %v276, %v363
        %v365 = vpop.f32.mrf.mxu0
        %366 = vdwg.mxu0
        %367 = vmatpush.bf16.msra.mxu0 0
        %368 = vmatpush.bf16.msra.mxu0 %v352
        %369 = vmatpush.bf16.msra.mxu0 %v328
        %370 = vmatpush.bf16.msra.mxu0 %v326
        %371 = vmatpush.bf16.msra.mxu0 %v324
        %372 = vmatpush.bf16.msra.mxu0 %v322
        %373 = vmatpush.bf16.msra.mxu0 %v320
        %374 = vmatpush.bf16.msra.mxu0 %v318
        %375 = vmatmul.bf16.gmra.mxu0 %v345
        %v376 = vpop.f32.mrf.mxu0
        %v377 = vadd.f32 %v276, %v376
        %v378 = vpop.f32.mrf.mxu0
        %379 = vdwg.mxu0
        %v380 = vpack.c.bf16 %v377, %v364
        %381 = vst [vmem:[%s255] sm:$0xff] %v380
        %s382 = smul.u32 2, %s14
        %p383 = scmp.lt.s32.totalorder %s382, 3
        %s384 = scalar_select %p383, %s382, 3
        %s385 = smul.addr %s384, 4
        %s386 = scalar_lea.vmem %s3, %s385
        // Predicated region
        $region71: #{unet_forward.11} parent=65 // pred_check
          %p387 = pneg %p100
        $region72: #{unet_forward.11} parent=65 // pred_check_branch
          %389 = sbr.rel (%p387) target = $region74
        $region73: #{unet_forward.11} parent=65 // pred_region
          %s390 = smul.u32 2, %s14
        $region74: #{unet_forward.11} parent=65 // pred_fallthru
          _
      $region66: #{unet_forward.11} parent=5 // pred_fallthru
        _
      %p391 = scmp.le.s32.totalorder 2, %s9
      // Predicated region
      $region75: #{unet_forward.11} parent=5 // pred_check
        %p392 = pneg %p391
      $region76: #{unet_forward.11} parent=5 // pred_check_branch
        %394 = sbr.rel (%p392) target = $region78
      $region77: #{unet_forward.11} parent=5 // pred_region
        %s395 = ssub.s32 %s9, 2
        // Predicated region
        $region79: #{unet_forward.11} parent=77 // pred_check
          %p396 = pneg %p106
        $region80: #{unet_forward.11} parent=77 // pred_check_branch
          %398 = sbr.rel (%p396) target = $region82
        $region81: #{unet_forward.11} parent=77 // pred_region
          %s399 = smul.u32 2, %s15
          %p400 = scmp.lt.s32.totalorder %s399, 3
          %s401 = scalar_select %p400, %s399, 3
          %s402 = smul.addr %s401, 4
          %s403 = scalar_lea.vmem %s3, %s402
        $region82: #{unet_forward.11} parent=77 // pred_fallthru
          _
      $region78: #{unet_forward.11} parent=5 // pred_fallthru
        _
    $region6: #{unet_forward.11} parent=1 // loop_footer
      %s13 = sadd.s32 1, %s9
    $region7: #{unet_forward.11} parent=1 // loop_footer_branch
      %8 = sbr.rel target = $region3
    $region8: #{unet_forward.11} parent=1 // loop_exit
      _

// kernel: unet_forward.12
$region0: #{unet_forward.12}
  #allocation0 [shape = 'u32[]', space=smem, size = 0x4, offset = 0x4, fixed_abs, tag = 'smem constant byte address 0x4 - core index']
  #allocation1 [shape = 'u32[72,128]{1,0:T(1,128)}', space=vmem, size = 0x9000, scoped, tag = 'internal scratch']
  %s0 = inlined_call_operand.vmem [shape: bf16[16,200], index: 0, kind: input, shape index: {}]
  %s1 = inlined_call_operand.vmem [shape: bf16[200,128], index: 1, kind: input, shape index: {}]
  %s2 = inlined_call_operand.vmem [shape: f32[16,1], index: 2, kind: input, shape index: {}]
  %s3 = inlined_call_operand.vmem [shape: bf16[16,128], index: 3, kind: output, shape index: {}]
  %s4 = sld [smem:[#allocation0]]
  $region22: #{unet_forward.12} parent=0
    _
  %s6 = ssub.s32 1, %s4
  %s7 = scalar_select 0, %s6, %s4
  // Predicated region
  $region2: #{unet_forward.12} parent=0 // pred_check
    _
  $region3: #{unet_forward.12} parent=0 // pred_check_branch
    %9 = sbr.rel (0) target = $region5
  $region4: #{unet_forward.12} parent=0 // pred_region
    _
  $region5: #{unet_forward.12} parent=0 // pred_fallthru
    _
  // Predicated region
  $region6: #{unet_forward.12} parent=0 // pred_check
    _
  $region7: #{unet_forward.12} parent=0 // pred_check_branch
    %11 = sbr.rel (0) target = $region9
  $region8: #{unet_forward.12} parent=0 // pred_region
    _
  $region9: #{unet_forward.12} parent=0 // pred_fallthru
    _
  // Predicated region
  $region10: #{unet_forward.12} parent=0 // pred_check
    _
  $region11: #{unet_forward.12} parent=0 // pred_check_branch
    %13 = sbr.rel (0) target = $region13
  $region12: #{unet_forward.12} parent=0 // pred_region
    _
  $region13: #{unet_forward.12} parent=0 // pred_fallthru
    _
  %v15 = vld [vmem:[%s0] sm:$0xff]
  %v16 = vld [vmem:[%s0 + $0x8] sm:$0xff]
  %v17 = vld [vmem:[%s1] sm:$0xf]
  %v18 = vld [vmem:[%s1 + $0x4] sm:$0xf]
  %v19 = vld [vmem:[%s1 + $0x8] sm:$0xf]
  %v20 = vld [vmem:[%s1 + $0xc] sm:$0xf]
  %v21 = vld [vmem:[%s1 + $0x10] sm:$0xf]
  %v22 = vld [vmem:[%s1 + $0x14] sm:$0xf]
  %v23 = vld [vmem:[%s1 + $0x18] sm:$0xf]
  %v24 = vld [vmem:[%s1 + $0x1c] sm:$0xf]
  %v25 = vld [vmem:[%s1 + $0x20] sm:$0xf]
  %v26 = vld [vmem:[%s1 + $0x24] sm:$0xf]
  %v27 = vld [vmem:[%s1 + $0x28] sm:$0xf]
  %v28 = vld [vmem:[%s1 + $0x2c] sm:$0xf]
  %v29 = vld [vmem:[%s1 + $0x30] sm:$0xf]
  %v30 = vld [vmem:[%s1 + $0x34] sm:$0xf]
  %v31 = vld [vmem:[%s1 + $0x38] sm:$0xf]
  %v32 = vld [vmem:[%s1 + $0x3c] sm:$0xf]
  %v33 = vld [vmem:[%s1 + $0x40] sm:$0xf]
  %v34 = vld [vmem:[%s1 + $0x44] sm:$0xf]
  %v35 = vld [vmem:[%s1 + $0x48] sm:$0xf]
  %v36 = vld [vmem:[%s1 + $0x4c] sm:$0xf]
  %v37 = vld [vmem:[%s1 + $0x50] sm:$0xf]
  %v38 = vld [vmem:[%s1 + $0x54] sm:$0xf]
  %v39 = vld [vmem:[%s1 + $0x58] sm:$0xf]
  %v40 = vld [vmem:[%s1 + $0x5c] sm:$0xf]
  %v41 = vld [vmem:[%s1 + $0x60] sm:$0xf]
  %v42 = vld [vmem:[%s2] sm:$0xff]
  %v43 = vld [vmem:[%s2 + $0x8] sm:$0xff]
  %45 = vset.pattern.permute.xlu0 0
  %46 = vperm.xlu0 %45, %v42
  %v47 = vpop.permute.xlu0 %46
  %50 = vset.pattern.permute.xlu0 0
  %51 = vperm.xlu0 %50, %v43
  %v52 = vpop.permute.xlu0 %51
  %v56 = vunpack.c.l.b16 %v15
  %v57 = vunpack.c.h.b16 %v15
  %v58 = vunpack.c.l.b16 %v16
  %v59 = vunpack.c.h.b16 %v16
  %v60 = vpack.c.b16 %v58, %v56
  %v61 = vpack.c.b16 %v59, %v57
  %v88 = vunpack.c.l.b16 %v17
  %v89 = vunpack.c.l.b16 %v18
  %v90 = vunpack.c.l.b16 %v19
  %v91 = vunpack.c.l.b16 %v20
  %v92 = vunpack.c.l.b16 %v21
  %v93 = vunpack.c.l.b16 %v22
  %v94 = vunpack.c.l.b16 %v23
  %v95 = vunpack.c.l.b16 %v24
  %v96 = vunpack.c.l.b16 %v25
  %v97 = vunpack.c.l.b16 %v26
  %v98 = vunpack.c.l.b16 %v27
  %v99 = vunpack.c.l.b16 %v28
  %v100 = vunpack.c.l.b16 %v29
  %v101 = vunpack.c.l.b16 %v30
  %v102 = vunpack.c.l.b16 %v31
  %v103 = vunpack.c.l.b16 %v32
  %v104 = vunpack.c.l.b16 %v33
  %v105 = vunpack.c.l.b16 %v34
  %v106 = vunpack.c.l.b16 %v35
  %v107 = vunpack.c.l.b16 %v36
  %v108 = vunpack.c.l.b16 %v37
  %v109 = vunpack.c.l.b16 %v38
  %v110 = vunpack.c.l.b16 %v39
  %v111 = vunpack.c.l.b16 %v40
  %v112 = vunpack.c.l.b16 %v41
  %v113 = vpack.c.b16 %v89, %v88
  %v114 = vpack.c.b16 %v91, %v90
  %v115 = vpack.c.b16 %v93, %v92
  %v116 = vpack.c.b16 %v95, %v94
  %v117 = vpack.c.b16 %v97, %v96
  %v118 = vpack.c.b16 %v99, %v98
  %v119 = vpack.c.b16 %v101, %v100
  %v120 = vpack.c.b16 %v103, %v102
  %v121 = vpack.c.b16 %v105, %v104
  %v122 = vpack.c.b16 %v107, %v106
  %v123 = vpack.c.b16 %v109, %v108
  %v124 = vpack.c.b16 %v111, %v110
  %v125 = vpack.c.b16 %v112, %v112
  %vm138 = vcmask 588800
  %v140 = vsel %vm138, %v61, 0
  %vm142 = vcmask 1043456
  %v144 = vsel %vm142, %v125, 0
  %146 = vmatpush.bf16.msra.mxu0 %v120
  %147 = vmatpush.bf16.msra.mxu0 %v119
  %148 = vmatpush.bf16.msra.mxu0 %v118
  %149 = vmatpush.bf16.msra.mxu0 %v117
  %150 = vmatpush.bf16.msra.mxu0 %v116
  %151 = vmatpush.bf16.msra.mxu0 %v115
  %152 = vmatpush.bf16.msra.mxu0 %v114
  %153 = vmatpush.bf16.msra.mxu0 %v113
  %154 = vmatmul.bf16.gmra.mxu0 %v60
  %v155 = vpop.f32.mrf.mxu0
  %v156 = vadd.f32 %v47, %v155
  %v157 = vpop.f32.mrf.mxu0
  %v158 = vadd.f32 %v52, %v157
  %159 = vdwg.mxu0
  %160 = vmatpush.bf16.msra.mxu0 0
  %161 = vmatpush.bf16.msra.mxu0 0
  %162 = vmatpush.bf16.msra.mxu0 0
  %163 = vmatpush.bf16.msra.mxu0 %v144
  %164 = vmatpush.bf16.msra.mxu0 %v124
  %165 = vmatpush.bf16.msra.mxu0 %v123
  %166 = vmatpush.bf16.msra.mxu0 %v122
  %167 = vmatpush.bf16.msra.mxu0 %v121
  %168 = vmatmul.bf16.gmra.mxu0 %v140
  %v169 = vpop.f32.mrf.mxu0
  %v170 = vadd.f32 %v156, %v169
  %v171 = vpop.f32.mrf.mxu0
  %v172 = vadd.f32 %v158, %v171
  %173 = vdwg.mxu0
  %v174 = vpack.c.bf16 %v170, %v170
  %v175 = vpack.c.bf16 %v172, %v172
  %176 = vst [vmem:[%s3] sm:$0xf] %v174
  %177 = vst [vmem:[%s3 + $0x4] sm:$0xf] %v175
  // Predicated region
  $region14: #{unet_forward.12} parent=0 // pred_check
    _
  $region15: #{unet_forward.12} parent=0 // pred_check_branch
    %179 = sbr.rel (0) target = $region17
  $region16: #{unet_forward.12} parent=0 // pred_region
    _
  $region17: #{unet_forward.12} parent=0 // pred_fallthru
    _
  // Predicated region
  $region18: #{unet_forward.12} parent=0 // pred_check
    _
  $region19: #{unet_forward.12} parent=0 // pred_check_branch
    %181 = sbr.rel (0) target = $region21
  $region20: #{unet_forward.12} parent=0 // pred_region
    _
  $region21: #{unet_forward.12} parent=0 // pred_fallthru
    _

// kernel: unet_forward.13
$region0: #{unet_forward.13}
  #allocation0 [shape = 'u32[]', space=smem, size = 0x4, offset = 0x4, fixed_abs, tag = 'smem constant byte address 0x4 - core index']
  #allocation1 [shape = 'u32[72,128]{1,0:T(1,128)}', space=vmem, size = 0x9000, scoped, tag = 'internal scratch']
  %s0 = inlined_call_operand.vmem [shape: bf16[32,144], index: 0, kind: input, shape index: {}]
  %s1 = inlined_call_operand.vmem [shape: bf16[144,128], index: 1, kind: input, shape index: {}]
  %s2 = inlined_call_operand.vmem [shape: f32[32,1], index: 2, kind: input, shape index: {}]
  %s3 = inlined_call_operand.vmem [shape: bf16[32,128], index: 3, kind: output, shape index: {}]
  %s4 = sld [smem:[#allocation0]]
  $region22: #{unet_forward.13} parent=0
    _
  %s6 = ssub.s32 1, %s4
  %s7 = scalar_select 0, %s6, %s4
  // Predicated region
  $region2: #{unet_forward.13} parent=0 // pred_check
    _
  $region3: #{unet_forward.13} parent=0 // pred_check_branch
    %9 = sbr.rel (0) target = $region5
  $region4: #{unet_forward.13} parent=0 // pred_region
    _
  $region5: #{unet_forward.13} parent=0 // pred_fallthru
    _
  // Predicated region
  $region6: #{unet_forward.13} parent=0 // pred_check
    _
  $region7: #{unet_forward.13} parent=0 // pred_check_branch
    %11 = sbr.rel (0) target = $region9
  $region8: #{unet_forward.13} parent=0 // pred_region
    _
  $region9: #{unet_forward.13} parent=0 // pred_fallthru
    _
  // Predicated region
  $region10: #{unet_forward.13} parent=0 // pred_check
    _
  $region11: #{unet_forward.13} parent=0 // pred_check_branch
    %13 = sbr.rel (0) target = $region13
  $region12: #{unet_forward.13} parent=0 // pred_region
    _
  $region13: #{unet_forward.13} parent=0 // pred_fallthru
    _
  %v15 = vld [vmem:[%s0] sm:$0xff]
  %v16 = vld [vmem:[%s0 + $0x8] sm:$0xff]
  %v17 = vld [vmem:[%s0 + $0x10] sm:$0xff]
  %v18 = vld [vmem:[%s0 + $0x18] sm:$0xff]
  %v19 = vld [vmem:[%s1] sm:$0xf]
  %v20 = vld [vmem:[%s1 + $0x4] sm:$0xf]
  %v21 = vld [vmem:[%s1 + $0x8] sm:$0xf]
  %v22 = vld [vmem:[%s1 + $0xc] sm:$0xf]
  %v23 = vld [vmem:[%s1 + $0x10] sm:$0xf]
  %v24 = vld [vmem:[%s1 + $0x14] sm:$0xf]
  %v25 = vld [vmem:[%s1 + $0x18] sm:$0xf]
  %v26 = vld [vmem:[%s1 + $0x1c] sm:$0xf]
  %v27 = vld [vmem:[%s1 + $0x20] sm:$0xf]
  %v28 = vld [vmem:[%s1 + $0x24] sm:$0xf]
  %v29 = vld [vmem:[%s1 + $0x28] sm:$0xf]
  %v30 = vld [vmem:[%s1 + $0x2c] sm:$0xf]
  %v31 = vld [vmem:[%s1 + $0x30] sm:$0xf]
  %v32 = vld [vmem:[%s1 + $0x34] sm:$0xf]
  %v33 = vld [vmem:[%s1 + $0x38] sm:$0xf]
  %v34 = vld [vmem:[%s1 + $0x3c] sm:$0xf]
  %v35 = vld [vmem:[%s1 + $0x40] sm:$0xf]
  %v36 = vld [vmem:[%s1 + $0x44] sm:$0xf]
  %v37 = vld [vmem:[%s2] sm:$0xff]
  %v38 = vld [vmem:[%s2 + $0x8] sm:$0xff]
  %v39 = vld [vmem:[%s2 + $0x10] sm:$0xff]
  %v40 = vld [vmem:[%s2 + $0x18] sm:$0xff]
  %42 = vset.pattern.permute.xlu0 0
  %43 = vperm.xlu0 %42, %v37
  %v44 = vpop.permute.xlu0 %43
  %47 = vset.pattern.permute.xlu0 0
  %48 = vperm.xlu0 %47, %v38
  %v49 = vpop.permute.xlu0 %48
  %52 = vset.pattern.permute.xlu0 0
  %53 = vperm.xlu0 %52, %v39
  %v54 = vpop.permute.xlu0 %53
  %57 = vset.pattern.permute.xlu0 0
  %58 = vperm.xlu0 %57, %v40
  %v59 = vpop.permute.xlu0 %58
  %v65 = vunpack.c.l.b16 %v15
  %v66 = vunpack.c.h.b16 %v15
  %v67 = vunpack.c.l.b16 %v16
  %v68 = vunpack.c.h.b16 %v16
  %v69 = vunpack.c.l.b16 %v17
  %v70 = vunpack.c.h.b16 %v17
  %v71 = vunpack.c.l.b16 %v18
  %v72 = vunpack.c.h.b16 %v18
  %v73 = vpack.c.b16 %v67, %v65
  %v74 = vpack.c.b16 %v68, %v66
  %v75 = vpack.c.b16 %v71, %v69
  %v76 = vpack.c.b16 %v72, %v70
  %v97 = vunpack.c.l.b16 %v19
  %v98 = vunpack.c.l.b16 %v20
  %v99 = vunpack.c.l.b16 %v21
  %v100 = vunpack.c.l.b16 %v22
  %v101 = vunpack.c.l.b16 %v23
  %v102 = vunpack.c.l.b16 %v24
  %v103 = vunpack.c.l.b16 %v25
  %v104 = vunpack.c.l.b16 %v26
  %v105 = vunpack.c.l.b16 %v27
  %v106 = vunpack.c.l.b16 %v28
  %v107 = vunpack.c.l.b16 %v29
  %v108 = vunpack.c.l.b16 %v30
  %v109 = vunpack.c.l.b16 %v31
  %v110 = vunpack.c.l.b16 %v32
  %v111 = vunpack.c.l.b16 %v33
  %v112 = vunpack.c.l.b16 %v34
  %v113 = vunpack.c.l.b16 %v35
  %v114 = vunpack.c.l.b16 %v36
  %v115 = vpack.c.b16 %v98, %v97
  %v116 = vpack.c.b16 %v100, %v99
  %v117 = vpack.c.b16 %v102, %v101
  %v118 = vpack.c.b16 %v104, %v103
  %v119 = vpack.c.b16 %v106, %v105
  %v120 = vpack.c.b16 %v108, %v107
  %v121 = vpack.c.b16 %v110, %v109
  %v122 = vpack.c.b16 %v112, %v111
  %v123 = vpack.c.b16 %v114, %v113
  %vm133 = vcmask 130048
  %v135 = vsel %vm133, %v74, 0
  %v138 = vsel %vm133, %v76, 0
  %140 = vmatpush.bf16.msra.mxu0 %v122
  %141 = vmatpush.bf16.msra.mxu0 %v121
  %142 = vmatpush.bf16.msra.mxu0 %v120
  %143 = vmatpush.bf16.msra.mxu0 %v119
  %144 = vmatpush.bf16.msra.mxu0 %v118
  %145 = vmatpush.bf16.msra.mxu0 %v117
  %146 = vmatpush.bf16.msra.mxu0 %v116
  %147 = vmatpush.bf16.msra.mxu0 %v115
  %148 = vmatmul.bf16.gmra.mxu0 %v73
  %v149 = vpop.f32.mrf.mxu0
  %v150 = vadd.f32 %v44, %v149
  %v151 = vpop.f32.mrf.mxu0
  %v152 = vadd.f32 %v49, %v151
  %153 = vmatmul.bf16.gmra.mxu0 %v75
  %v154 = vpop.f32.mrf.mxu0
  %v155 = vadd.f32 %v54, %v154
  %v156 = vpop.f32.mrf.mxu0
  %v157 = vadd.f32 %v59, %v156
  %158 = vdwg.mxu0
  %159 = vmatpush.bf16.msra.mxu0 0
  %160 = vmatpush.bf16.msra.mxu0 0
  %161 = vmatpush.bf16.msra.mxu0 0
  %162 = vmatpush.bf16.msra.mxu0 0
  %163 = vmatpush.bf16.msra.mxu0 0
  %164 = vmatpush.bf16.msra.mxu0 0
  %165 = vmatpush.bf16.msra.mxu0 0
  %166 = vmatpush.bf16.msra.mxu0 %v123
  %167 = vmatmul.bf16.gmra.mxu0 %v135
  %v168 = vpop.f32.mrf.mxu0
  %v169 = vadd.f32 %v150, %v168
  %v170 = vpop.f32.mrf.mxu0
  %v171 = vadd.f32 %v152, %v170
  %172 = vmatmul.bf16.gmra.mxu0 %v138
  %v173 = vpop.f32.mrf.mxu0
  %v174 = vadd.f32 %v155, %v173
  %v175 = vpop.f32.mrf.mxu0
  %v176 = vadd.f32 %v157, %v175
  %177 = vdwg.mxu0
  %v178 = vpack.c.bf16 %v169, %v169
  %v179 = vpack.c.bf16 %v171, %v171
  %v180 = vpack.c.bf16 %v174, %v174
  %v181 = vpack.c.bf16 %v176, %v176
  %182 = vst [vmem:[%s3] sm:$0xf] %v178
  %183 = vst [vmem:[%s3 + $0x4] sm:$0xf] %v179
  %184 = vst [vmem:[%s3 + $0x8] sm:$0xf] %v180
  %185 = vst [vmem:[%s3 + $0xc] sm:$0xf] %v181
  // Predicated region
  $region14: #{unet_forward.13} parent=0 // pred_check
    _
  $region15: #{unet_forward.13} parent=0 // pred_check_branch
    %187 = sbr.rel (0) target = $region17
  $region16: #{unet_forward.13} parent=0 // pred_region
    _
  $region17: #{unet_forward.13} parent=0 // pred_fallthru
    _
  // Predicated region
  $region18: #{unet_forward.13} parent=0 // pred_check
    _
  $region19: #{unet_forward.13} parent=0 // pred_check_branch
    %189 = sbr.rel (0) target = $region21
  $region20: #{unet_forward.13} parent=0 // pred_region
    _
  $region21: #{unet_forward.13} parent=0 // pred_fallthru
    _

// kernel: unet_forward.14
$region0: #{unet_forward.14}
  #allocation0 [shape = 'u32[]', space=smem, size = 0x4, offset = 0x4, fixed_abs, tag = 'smem constant byte address 0x4 - core index']
  #allocation1 [shape = 'u32[72,128]{1,0:T(1,128)}', space=vmem, size = 0x9000, scoped, tag = 'internal scratch']
  %s0 = inlined_call_operand.vmem [shape: bf16[8,32], index: 0, kind: input, shape index: {}]
  %s1 = inlined_call_operand.vmem [shape: bf16[32,32], index: 1, kind: input, shape index: {}]
  %s2 = inlined_call_operand.vmem [shape: f32[1,32], index: 2, kind: input, shape index: {}]
  %s3 = inlined_call_operand.vmem [shape: bf16[8,32], index: 3, kind: output, shape index: {}]
  %s4 = sld [smem:[#allocation0]]
  $region22: #{unet_forward.14} parent=0
    _
  %s6 = ssub.s32 1, %s4
  %s7 = scalar_select 0, %s6, %s4
  // Predicated region
  $region2: #{unet_forward.14} parent=0 // pred_check
    _
  $region3: #{unet_forward.14} parent=0 // pred_check_branch
    %9 = sbr.rel (0) target = $region5
  $region4: #{unet_forward.14} parent=0 // pred_region
    _
  $region5: #{unet_forward.14} parent=0 // pred_fallthru
    _
  // Predicated region
  $region6: #{unet_forward.14} parent=0 // pred_check
    _
  $region7: #{unet_forward.14} parent=0 // pred_check_branch
    %11 = sbr.rel (0) target = $region9
  $region8: #{unet_forward.14} parent=0 // pred_region
    _
  $region9: #{unet_forward.14} parent=0 // pred_fallthru
    _
  // Predicated region
  $region10: #{unet_forward.14} parent=0 // pred_check
    _
  $region11: #{unet_forward.14} parent=0 // pred_check_branch
    %13 = sbr.rel (0) target = $region13
  $region12: #{unet_forward.14} parent=0 // pred_region
    _
  $region13: #{unet_forward.14} parent=0 // pred_fallthru
    _
  %v15 = vld [vmem:[%s0] sm:$0xf]
  %v16 = vld [vmem:[%s1] sm:$0xf]
  %v17 = vld [vmem:[%s1 + $0x4] sm:$0xf]
  %v18 = vld [vmem:[%s1 + $0x8] sm:$0xf]
  %v19 = vld [vmem:[%s1 + $0xc] sm:$0xf]
  %v20 = vld [vmem:[%s2] sm:$0x1]
  %v22 = vperm.slane %v20, 0
  %v28 = vunpack.c.l.b16 %v16
  %v29 = vunpack.c.l.b16 %v17
  %v30 = vunpack.c.l.b16 %v18
  %v31 = vunpack.c.l.b16 %v19
  %v32 = vpack.c.b16 %v29, %v28
  %v33 = vpack.c.b16 %v31, %v30
  %vm36 = vcmask 261120
  %v38 = vsel %vm36, %v15, 0
  %40 = vmatpush.bf16.msra.mxu0 0
  %41 = vmatpush.bf16.msra.mxu0 0
  %42 = vmatpush.bf16.msra.mxu0 0
  %43 = vmatpush.bf16.msra.mxu0 0
  %44 = vmatpush.bf16.msra.mxu0 0
  %45 = vmatpush.bf16.msra.mxu0 0
  %46 = vmatpush.bf16.msra.mxu0 %v33
  %47 = vmatpush.bf16.msra.mxu0 %v32
  %48 = vmatmul.bf16.gmra.mxu0 %v38
  %v49 = vpop.f32.mrf.mxu0
  %v50 = vadd.f32 %v22, %v49
  %v51 = vpop.f32.mrf.mxu0
  %52 = vdwg.mxu0
  %v53 = vpack.c.bf16 %v50, %v50
  %vm54 = vcmask 257024
  %55 = vst.msk [vmem:[%s3] sm:$0xf] %vm54, %v53
  // Predicated region
  $region14: #{unet_forward.14} parent=0 // pred_check
    _
  $region15: #{unet_forward.14} parent=0 // pred_check_branch
    %57 = sbr.rel (0) target = $region17
  $region16: #{unet_forward.14} parent=0 // pred_region
    _
  $region17: #{unet_forward.14} parent=0 // pred_fallthru
    _
  // Predicated region
  $region18: #{unet_forward.14} parent=0 // pred_check
    _
  $region19: #{unet_forward.14} parent=0 // pred_check_branch
    %59 = sbr.rel (0) target = $region21
  $region20: #{unet_forward.14} parent=0 // pred_region
    _
  $region21: #{unet_forward.14} parent=0 // pred_fallthru
    _

// kernel: unet_forward.16
$region0: #{unet_forward.16}
  #allocation0 [shape = 'u32[]', space=smem, size = 0x4, offset = 0x4, fixed_abs, tag = 'smem constant byte address 0x4 - core index']
  #allocation1 [shape = 'u32[72,128]{1,0:T(1,128)}', space=vmem, size = 0x9000, scoped, tag = 'internal scratch']
  %s0 = inlined_call_operand.vmem [shape: bf16[32,128], index: 0, kind: input, shape index: {}]
  %s1 = inlined_call_operand.vmem [shape: bf16[128,128], index: 1, kind: input, shape index: {}]
  %s2 = inlined_call_operand.vmem [shape: f32[32,1], index: 2, kind: input, shape index: {}]
  %s3 = inlined_call_operand.vmem [shape: bf16[32,128], index: 3, kind: output, shape index: {}]
  %s4 = sld [smem:[#allocation0]]
  $region22: #{unet_forward.16} parent=0
    _
  %s6 = ssub.s32 1, %s4
  %s7 = scalar_select 0, %s6, %s4
  // Predicated region
  $region2: #{unet_forward.16} parent=0 // pred_check
    _
  $region3: #{unet_forward.16} parent=0 // pred_check_branch
    %9 = sbr.rel (0) target = $region5
  $region4: #{unet_forward.16} parent=0 // pred_region
    _
  $region5: #{unet_forward.16} parent=0 // pred_fallthru
    _
  // Predicated region
  $region6: #{unet_forward.16} parent=0 // pred_check
    _
  $region7: #{unet_forward.16} parent=0 // pred_check_branch
    %11 = sbr.rel (0) target = $region9
  $region8: #{unet_forward.16} parent=0 // pred_region
    _
  $region9: #{unet_forward.16} parent=0 // pred_fallthru
    _
  // Predicated region
  $region10: #{unet_forward.16} parent=0 // pred_check
    _
  $region11: #{unet_forward.16} parent=0 // pred_check_branch
    %13 = sbr.rel (0) target = $region13
  $region12: #{unet_forward.16} parent=0 // pred_region
    _
  $region13: #{unet_forward.16} parent=0 // pred_fallthru
    _
  %v14 = vld [vmem:[%s0] sm:$0xf]
  %v15 = vld [vmem:[%s0 + $0x4] sm:$0xf]
  %v16 = vld [vmem:[%s0 + $0x8] sm:$0xf]
  %v17 = vld [vmem:[%s0 + $0xc] sm:$0xf]
  %v18 = vld [vmem:[%s1] sm:$0xf]
  %v19 = vld [vmem:[%s1 + $0x4] sm:$0xf]
  %v20 = vld [vmem:[%s1 + $0x8] sm:$0xf]
  %v21 = vld [vmem:[%s1 + $0xc] sm:$0xf]
  %v22 = vld [vmem:[%s1 + $0x10] sm:$0xf]
  %v23 = vld [vmem:[%s1 + $0x14] sm:$0xf]
  %v24 = vld [vmem:[%s1 + $0x18] sm:$0xf]
  %v25 = vld [vmem:[%s1 + $0x1c] sm:$0xf]
  %v26 = vld [vmem:[%s1 + $0x20] sm:$0xf]
  %v27 = vld [vmem:[%s1 + $0x24] sm:$0xf]
  %v28 = vld [vmem:[%s1 + $0x28] sm:$0xf]
  %v29 = vld [vmem:[%s1 + $0x2c] sm:$0xf]
  %v30 = vld [vmem:[%s1 + $0x30] sm:$0xf]
  %v31 = vld [vmem:[%s1 + $0x34] sm:$0xf]
  %v32 = vld [vmem:[%s1 + $0x38] sm:$0xf]
  %v33 = vld [vmem:[%s1 + $0x3c] sm:$0xf]
  %v34 = vld [vmem:[%s2] sm:$0xff]
  %v35 = vld [vmem:[%s2 + $0x8] sm:$0xff]
  %v36 = vld [vmem:[%s2 + $0x10] sm:$0xff]
  %v37 = vld [vmem:[%s2 + $0x18] sm:$0xff]
  %39 = vset.pattern.permute.xlu0 0
  %40 = vperm.xlu0 %39, %v34
  %v41 = vpop.permute.xlu0 %40
  %44 = vset.pattern.permute.xlu0 0
  %45 = vperm.xlu0 %44, %v35
  %v46 = vpop.permute.xlu0 %45
  %49 = vset.pattern.permute.xlu0 0
  %50 = vperm.xlu0 %49, %v36
  %v51 = vpop.permute.xlu0 %50
  %54 = vset.pattern.permute.xlu0 0
  %55 = vperm.xlu0 %54, %v37
  %v56 = vpop.permute.xlu0 %55
  %v62 = vunpack.c.l.b16 %v14
  %v63 = vunpack.c.l.b16 %v15
  %v64 = vunpack.c.l.b16 %v16
  %v65 = vunpack.c.l.b16 %v17
  %v66 = vpack.c.b16 %v63, %v62
  %v67 = vpack.c.b16 %v65, %v64
  %v86 = vunpack.c.l.b16 %v18
  %v87 = vunpack.c.l.b16 %v19
  %v88 = vunpack.c.l.b16 %v20
  %v89 = vunpack.c.l.b16 %v21
  %v90 = vunpack.c.l.b16 %v22
  %v91 = vunpack.c.l.b16 %v23
  %v92 = vunpack.c.l.b16 %v24
  %v93 = vunpack.c.l.b16 %v25
  %v94 = vunpack.c.l.b16 %v26
  %v95 = vunpack.c.l.b16 %v27
  %v96 = vunpack.c.l.b16 %v28
  %v97 = vunpack.c.l.b16 %v29
  %v98 = vunpack.c.l.b16 %v30
  %v99 = vunpack.c.l.b16 %v31
  %v100 = vunpack.c.l.b16 %v32
  %v101 = vunpack.c.l.b16 %v33
  %v102 = vpack.c.b16 %v87, %v86
  %v103 = vpack.c.b16 %v89, %v88
  %v104 = vpack.c.b16 %v91, %v90
  %v105 = vpack.c.b16 %v93, %v92
  %v106 = vpack.c.b16 %v95, %v94
  %v107 = vpack.c.b16 %v97, %v96
  %v108 = vpack.c.b16 %v99, %v98
  %v109 = vpack.c.b16 %v101, %v100
  %118 = vmatpush.bf16.msra.mxu0 %v109
  %119 = vmatpush.bf16.msra.mxu0 %v108
  %120 = vmatpush.bf16.msra.mxu0 %v107
  %121 = vmatpush.bf16.msra.mxu0 %v106
  %122 = vmatpush.bf16.msra.mxu0 %v105
  %123 = vmatpush.bf16.msra.mxu0 %v104
  %124 = vmatpush.bf16.msra.mxu0 %v103
  %125 = vmatpush.bf16.msra.mxu0 %v102
  %126 = vmatmul.bf16.gmra.mxu0 %v66
  %v127 = vpop.f32.mrf.mxu0
  %v128 = vadd.f32 %v41, %v127
  %v129 = vpop.f32.mrf.mxu0
  %v130 = vadd.f32 %v46, %v129
  %131 = vmatmul.bf16.gmra.mxu0 %v67
  %v132 = vpop.f32.mrf.mxu0
  %v133 = vadd.f32 %v51, %v132
  %v134 = vpop.f32.mrf.mxu0
  %v135 = vadd.f32 %v56, %v134
  %136 = vdwg.mxu0
  %v137 = vpack.c.bf16 %v128, %v128
  %v138 = vpack.c.bf16 %v130, %v130
  %v139 = vpack.c.bf16 %v133, %v133
  %v140 = vpack.c.bf16 %v135, %v135
  %141 = vst [vmem:[%s3] sm:$0xf] %v137
  %142 = vst [vmem:[%s3 + $0x4] sm:$0xf] %v138
  %143 = vst [vmem:[%s3 + $0x8] sm:$0xf] %v139
  %144 = vst [vmem:[%s3 + $0xc] sm:$0xf] %v140
  // Predicated region
  $region14: #{unet_forward.16} parent=0 // pred_check
    _
  $region15: #{unet_forward.16} parent=0 // pred_check_branch
    %146 = sbr.rel (0) target = $region17
  $region16: #{unet_forward.16} parent=0 // pred_region
    _
  $region17: #{unet_forward.16} parent=0 // pred_fallthru
    _
  // Predicated region
  $region18: #{unet_forward.16} parent=0 // pred_check
    _
  $region19: #{unet_forward.16} parent=0 // pred_check_branch
    %148 = sbr.rel (0) target = $region21
  $region20: #{unet_forward.16} parent=0 // pred_region
    _
  $region21: #{unet_forward.16} parent=0 // pred_fallthru
    _

// kernel: unet_forward.15
$region0: #{unet_forward.15}
  #allocation0 [shape = 'u32[]', space=smem, size = 0x4, offset = 0x4, fixed_abs, tag = 'smem constant byte address 0x4 - core index']
  #allocation1 [shape = 'u32[72,128]{1,0:T(1,128)}', space=vmem, size = 0x9000, scoped, tag = 'internal scratch']
  %s0 = inlined_call_operand.vmem [shape: bf16[2,64,32], index: 0, kind: input, shape index: {}]
  %s1 = inlined_call_operand.vmem [shape: bf16[2,4,32], index: 1, kind: input, shape index: {}]
  %s2 = inlined_call_operand.vmem [shape: bf16[32,96], index: 2, kind: input, shape index: {}]
  %s3 = inlined_call_operand.vmem [shape: f32[1,96], index: 3, kind: input, shape index: {}]
  %s4 = inlined_call_operand.vmem [shape: bf16[32,32], index: 4, kind: input, shape index: {}]
  %s5 = inlined_call_operand.vmem [shape: f32[1,32], index: 5, kind: input, shape index: {}]
  %s6 = inlined_call_operand.vmem [shape: f32[1,32], index: 6, kind: input, shape index: {}]
  %s7 = inlined_call_operand.vmem [shape: f32[1,32], index: 7, kind: input, shape index: {}]
  %s8 = inlined_call_operand.vmem [shape: bf16[32,32], index: 8, kind: input, shape index: {}]
  %s9 = inlined_call_operand.vmem [shape: f32[1,32], index: 9, kind: input, shape index: {}]
  %s10 = inlined_call_operand.vmem [shape: bf16[32,64], index: 10, kind: input, shape index: {}]
  %s11 = inlined_call_operand.vmem [shape: f32[1,64], index: 11, kind: input, shape index: {}]
  %s12 = inlined_call_operand.vmem [shape: bf16[32,32], index: 12, kind: input, shape index: {}]
  %s13 = inlined_call_operand.vmem [shape: f32[1,32], index: 13, kind: input, shape index: {}]
  %s14 = inlined_call_operand.vmem [shape: f32[1,32], index: 14, kind: input, shape index: {}]
  %s15 = inlined_call_operand.vmem [shape: f32[1,32], index: 15, kind: input, shape index: {}]
  %s16 = inlined_call_operand.vmem [shape: bf16[32,2048], index: 16, kind: input, shape index: {}]
  %s17 = inlined_call_operand.vmem [shape: f32[1,2048], index: 17, kind: input, shape index: {}]
  %s18 = inlined_call_operand.vmem [shape: bf16[2048,32], index: 18, kind: input, shape index: {}]
  %s19 = inlined_call_operand.vmem [shape: f32[1,32], index: 19, kind: input, shape index: {}]
  %s20 = inlined_call_operand.vmem [shape: f32[1,32], index: 20, kind: input, shape index: {}]
  %s21 = inlined_call_operand.vmem [shape: f32[1,32], index: 21, kind: input, shape index: {}]
  %s22 = inlined_call_operand.vmem [shape: bf16[2,64,32], index: 22, kind: output, shape index: {}]
  %s23 = sld [smem:[#allocation0]]
  $region121: #{unet_forward.15} parent=0
    _
  %s25 = ssub.s32 1, %s23
  %s26 = scalar_select 0, %s25, %s23
  loop: start=0, step=1, limit=4
  $region2: #{unet_forward.15} parent=0 // loop_pre_header
    _
  $region3: #{unet_forward.15} parent=0 // loop_header
    %s28 = sphi 0, %s32
    %p29 = scmp.ge.s32.totalorder %s28, 4
    %s38 = sphi 0, %s40
    %s41 = sphi 0, %s38
    %s42 = sphi 0, %s41
    %s58 = sphi 0, %s42
    %s64 = sphi 0, %s66
    %s67 = sphi 0, %s64
    %s68 = sphi 0, %s67
    %s84 = sphi 0, %s68
    %s88 = sphi 0, %s88
    %s90 = sphi 0, %s88
    %s91 = sphi 0, %s90
    %s105 = sphi 0, %s91
    %s109 = sphi 0, %s109
    %s111 = sphi 0, %s109
    %s112 = sphi 0, %s111
    %s126 = sphi 0, %s112
    %s130 = sphi 0, %s130
    %s132 = sphi 0, %s130
    %s133 = sphi 0, %s132
    %s147 = sphi 0, %s133
    %s151 = sphi 0, %s151
    %s153 = sphi 0, %s151
    %s154 = sphi 0, %s153
    %s168 = sphi 0, %s154
    %s172 = sphi 0, %s172
    %s174 = sphi 0, %s172
    %s175 = sphi 0, %s174
    %s189 = sphi 0, %s175
    %s193 = sphi 0, %s193
    %s195 = sphi 0, %s193
    %s196 = sphi 0, %s195
    %s210 = sphi 0, %s196
    %s214 = sphi 0, %s214
    %s216 = sphi 0, %s214
    %s217 = sphi 0, %s216
    %s231 = sphi 0, %s217
    %s235 = sphi 0, %s235
    %s237 = sphi 0, %s235
    %s238 = sphi 0, %s237
    %s252 = sphi 0, %s238
    %s256 = sphi 0, %s256
    %s258 = sphi 0, %s256
    %s259 = sphi 0, %s258
    %s273 = sphi 0, %s259
    %s277 = sphi 0, %s277
    %s279 = sphi 0, %s277
    %s280 = sphi 0, %s279
    %s294 = sphi 0, %s280
    %s298 = sphi 0, %s298
    %s300 = sphi 0, %s298
    %s301 = sphi 0, %s300
    %s315 = sphi 0, %s301
    %s319 = sphi 0, %s319
    %s321 = sphi 0, %s319
    %s322 = sphi 0, %s321
    %s336 = sphi 0, %s322
    %s340 = sphi 0, %s340
    %s342 = sphi 0, %s340
    %s343 = sphi 0, %s342
    %s357 = sphi 0, %s343
    %s361 = sphi 0, %s361
    %s363 = sphi 0, %s361
    %s364 = sphi 0, %s363
    %s378 = sphi 0, %s364
    %s382 = sphi 0, %s382
    %s384 = sphi 0, %s382
    %s385 = sphi 0, %s384
    %s399 = sphi 0, %s385
    %s403 = sphi 0, %s403
    %s405 = sphi 0, %s403
    %s406 = sphi 0, %s405
    %s420 = sphi 0, %s406
    %s424 = sphi 0, %s424
    %s426 = sphi 0, %s424
    %s427 = sphi 0, %s426
    %s441 = sphi 0, %s427
    %s445 = sphi 0, %s445
    %s447 = sphi 0, %s445
    %s448 = sphi 0, %s447
    %s462 = sphi 0, %s448
    %s466 = sphi 0, %s466
    %s468 = sphi 0, %s466
    %s469 = sphi 0, %s468
    %s483 = sphi 0, %s469
    %s487 = sphi 0, %s487
    %s489 = sphi 0, %s487
    %s490 = sphi 0, %s489
    %s504 = sphi 0, %s490
    %s510 = sphi 0, %s512
    %s513 = sphi 0, %s510
    %s514 = sphi 0, %s513
    %s530 = sphi 0, %s514
  $region4: #{unet_forward.15} parent=0 // loop_header_branch
    %31 = sbr.rel (%p29) target = $region8
  $region5: #{unet_forward.15} parent=0 // loop_body
    %s33 = ssub.s32 %s28, 1
    %s34 = ssub.s32 %s28, 2
    %s35 = sadd.s32 %s28, 1
    %s36 = ssub.s32 %s28, %s35
    %p37 = scmp.eq.s32.totalorder %s36, 0
    %s39 = sadd.s32 %s38, 1
    %s40 = scalar_select %p37, %s38, %s39
    %p43 = pneg %p37
    %p44 = scmp.eq.s32.totalorder %s28, 1
    %p45 = por %p43, %p44
    %p46 = scmp.ne.s32.totalorder %s38, %s41
    %p47 = scmp.eq.s32.totalorder %s28, 0
    %p48 = por %p46, %p47
    %p49 = scmp.ne.s32.totalorder %s38, %s41
    %p50 = scmp.eq.s32.totalorder %s33, 1
    %p51 = por %p49, %p50
    %p52 = scmp.ne.s32.totalorder %s41, %s42
    %p53 = scmp.eq.s32.totalorder %s33, 0
    %p54 = por %p52, %p53
    %p55 = scmp.ne.s32.totalorder %s41, %s42
    %p56 = scmp.eq.s32.totalorder %s34, 1
    %p57 = por %p55, %p56
    %p59 = scmp.ne.s32.totalorder %s42, %s58
    %p60 = scmp.eq.s32.totalorder %s34, 0
    %p61 = por %p59, %p60
    %s62 = ssub.s32 %s28, %s35
    %p63 = scmp.eq.s32.totalorder %s62, 0
    %s65 = sadd.s32 %s64, 1
    %s66 = scalar_select %p63, %s64, %s65
    %p69 = pneg %p63
    %p70 = scmp.eq.s32.totalorder %s28, 1
    %p71 = por %p69, %p70
    %p72 = scmp.ne.s32.totalorder %s64, %s67
    %p73 = scmp.eq.s32.totalorder %s28, 0
    %p74 = por %p72, %p73
    %p75 = scmp.ne.s32.totalorder %s64, %s67
    %p76 = scmp.eq.s32.totalorder %s33, 1
    %p77 = por %p75, %p76
    %p78 = scmp.ne.s32.totalorder %s67, %s68
    %p79 = scmp.eq.s32.totalorder %s33, 0
    %p80 = por %p78, %p79
    %p81 = scmp.ne.s32.totalorder %s67, %s68
    %p82 = scmp.eq.s32.totalorder %s34, 1
    %p83 = por %p81, %p82
    %p85 = scmp.ne.s32.totalorder %s68, %s84
    %p86 = scmp.eq.s32.totalorder %s34, 0
    %p87 = por %p85, %p86
    %s89 = sadd.s32 %s88, 1
    %p92 = scmp.eq.s32.totalorder %s28, 1
    %p93 = scmp.ne.s32.totalorder %s88, %s90
    %p94 = scmp.eq.s32.totalorder %s28, 0
    %p95 = por %p93, %p94
    %p96 = scmp.ne.s32.totalorder %s88, %s90
    %p97 = scmp.eq.s32.totalorder %s33, 1
    %p98 = por %p96, %p97
    %p99 = scmp.ne.s32.totalorder %s90, %s91
    %p100 = scmp.eq.s32.totalorder %s33, 0
    %p101 = por %p99, %p100
    %p102 = scmp.ne.s32.totalorder %s90, %s91
    %p103 = scmp.eq.s32.totalorder %s34, 1
    %p104 = por %p102, %p103
    %p106 = scmp.ne.s32.totalorder %s91, %s105
    %p107 = scmp.eq.s32.totalorder %s34, 0
    %p108 = por %p106, %p107
    %s110 = sadd.s32 %s109, 1
    %p113 = scmp.eq.s32.totalorder %s28, 1
    %p114 = scmp.ne.s32.totalorder %s109, %s111
    %p115 = scmp.eq.s32.totalorder %s28, 0
    %p116 = por %p114, %p115
    %p117 = scmp.ne.s32.totalorder %s109, %s111
    %p118 = scmp.eq.s32.totalorder %s33, 1
    %p119 = por %p117, %p118
    %p120 = scmp.ne.s32.totalorder %s111, %s112
    %p121 = scmp.eq.s32.totalorder %s33, 0
    %p122 = por %p120, %p121
    %p123 = scmp.ne.s32.totalorder %s111, %s112
    %p124 = scmp.eq.s32.totalorder %s34, 1
    %p125 = por %p123, %p124
    %p127 = scmp.ne.s32.totalorder %s112, %s126
    %p128 = scmp.eq.s32.totalorder %s34, 0
    %p129 = por %p127, %p128
    %s131 = sadd.s32 %s130, 1
    %p134 = scmp.eq.s32.totalorder %s28, 1
    %p135 = scmp.ne.s32.totalorder %s130, %s132
    %p136 = scmp.eq.s32.totalorder %s28, 0
    %p137 = por %p135, %p136
    %p138 = scmp.ne.s32.totalorder %s130, %s132
    %p139 = scmp.eq.s32.totalorder %s33, 1
    %p140 = por %p138, %p139
    %p141 = scmp.ne.s32.totalorder %s132, %s133
    %p142 = scmp.eq.s32.totalorder %s33, 0
    %p143 = por %p141, %p142
    %p144 = scmp.ne.s32.totalorder %s132, %s133
    %p145 = scmp.eq.s32.totalorder %s34, 1
    %p146 = por %p144, %p145
    %p148 = scmp.ne.s32.totalorder %s133, %s147
    %p149 = scmp.eq.s32.totalorder %s34, 0
    %p150 = por %p148, %p149
    %s152 = sadd.s32 %s151, 1
    %p155 = scmp.eq.s32.totalorder %s28, 1
    %p156 = scmp.ne.s32.totalorder %s151, %s153
    %p157 = scmp.eq.s32.totalorder %s28, 0
    %p158 = por %p156, %p157
    %p159 = scmp.ne.s32.totalorder %s151, %s153
    %p160 = scmp.eq.s32.totalorder %s33, 1
    %p161 = por %p159, %p160
    %p162 = scmp.ne.s32.totalorder %s153, %s154
    %p163 = scmp.eq.s32.totalorder %s33, 0
    %p164 = por %p162, %p163
    %p165 = scmp.ne.s32.totalorder %s153, %s154
    %p166 = scmp.eq.s32.totalorder %s34, 1
    %p167 = por %p165, %p166
    %p169 = scmp.ne.s32.totalorder %s154, %s168
    %p170 = scmp.eq.s32.totalorder %s34, 0
    %p171 = por %p169, %p170
    %s173 = sadd.s32 %s172, 1
    %p176 = scmp.eq.s32.totalorder %s28, 1
    %p177 = scmp.ne.s32.totalorder %s172, %s174
    %p178 = scmp.eq.s32.totalorder %s28, 0
    %p179 = por %p177, %p178
    %p180 = scmp.ne.s32.totalorder %s172, %s174
    %p181 = scmp.eq.s32.totalorder %s33, 1
    %p182 = por %p180, %p181
    %p183 = scmp.ne.s32.totalorder %s174, %s175
    %p184 = scmp.eq.s32.totalorder %s33, 0
    %p185 = por %p183, %p184
    %p186 = scmp.ne.s32.totalorder %s174, %s175
    %p187 = scmp.eq.s32.totalorder %s34, 1
    %p188 = por %p186, %p187
    %p190 = scmp.ne.s32.totalorder %s175, %s189
    %p191 = scmp.eq.s32.totalorder %s34, 0
    %p192 = por %p190, %p191
    %s194 = sadd.s32 %s193, 1
    %p197 = scmp.eq.s32.totalorder %s28, 1
    %p198 = scmp.ne.s32.totalorder %s193, %s195
    %p199 = scmp.eq.s32.totalorder %s28, 0
    %p200 = por %p198, %p199
    %p201 = scmp.ne.s32.totalorder %s193, %s195
    %p202 = scmp.eq.s32.totalorder %s33, 1
    %p203 = por %p201, %p202
    %p204 = scmp.ne.s32.totalorder %s195, %s196
    %p205 = scmp.eq.s32.totalorder %s33, 0
    %p206 = por %p204, %p205
    %p207 = scmp.ne.s32.totalorder %s195, %s196
    %p208 = scmp.eq.s32.totalorder %s34, 1
    %p209 = por %p207, %p208
    %p211 = scmp.ne.s32.totalorder %s196, %s210
    %p212 = scmp.eq.s32.totalorder %s34, 0
    %p213 = por %p211, %p212
    %s215 = sadd.s32 %s214, 1
    %p218 = scmp.eq.s32.totalorder %s28, 1
    %p219 = scmp.ne.s32.totalorder %s214, %s216
    %p220 = scmp.eq.s32.totalorder %s28, 0
    %p221 = por %p219, %p220
    %p222 = scmp.ne.s32.totalorder %s214, %s216
    %p223 = scmp.eq.s32.totalorder %s33, 1
    %p224 = por %p222, %p223
    %p225 = scmp.ne.s32.totalorder %s216, %s217
    %p226 = scmp.eq.s32.totalorder %s33, 0
    %p227 = por %p225, %p226
    %p228 = scmp.ne.s32.totalorder %s216, %s217
    %p229 = scmp.eq.s32.totalorder %s34, 1
    %p230 = por %p228, %p229
    %p232 = scmp.ne.s32.totalorder %s217, %s231
    %p233 = scmp.eq.s32.totalorder %s34, 0
    %p234 = por %p232, %p233
    %s236 = sadd.s32 %s235, 1
    %p239 = scmp.eq.s32.totalorder %s28, 1
    %p240 = scmp.ne.s32.totalorder %s235, %s237
    %p241 = scmp.eq.s32.totalorder %s28, 0
    %p242 = por %p240, %p241
    %p243 = scmp.ne.s32.totalorder %s235, %s237
    %p244 = scmp.eq.s32.totalorder %s33, 1
    %p245 = por %p243, %p244
    %p246 = scmp.ne.s32.totalorder %s237, %s238
    %p247 = scmp.eq.s32.totalorder %s33, 0
    %p248 = por %p246, %p247
    %p249 = scmp.ne.s32.totalorder %s237, %s238
    %p250 = scmp.eq.s32.totalorder %s34, 1
    %p251 = por %p249, %p250
    %p253 = scmp.ne.s32.totalorder %s238, %s252
    %p254 = scmp.eq.s32.totalorder %s34, 0
    %p255 = por %p253, %p254
    %s257 = sadd.s32 %s256, 1
    %p260 = scmp.eq.s32.totalorder %s28, 1
    %p261 = scmp.ne.s32.totalorder %s256, %s258
    %p262 = scmp.eq.s32.totalorder %s28, 0
    %p263 = por %p261, %p262
    %p264 = scmp.ne.s32.totalorder %s256, %s258
    %p265 = scmp.eq.s32.totalorder %s33, 1
    %p266 = por %p264, %p265
    %p267 = scmp.ne.s32.totalorder %s258, %s259
    %p268 = scmp.eq.s32.totalorder %s33, 0
    %p269 = por %p267, %p268
    %p270 = scmp.ne.s32.totalorder %s258, %s259
    %p271 = scmp.eq.s32.totalorder %s34, 1
    %p272 = por %p270, %p271
    %p274 = scmp.ne.s32.totalorder %s259, %s273
    %p275 = scmp.eq.s32.totalorder %s34, 0
    %p276 = por %p274, %p275
    %s278 = sadd.s32 %s277, 1
    %p281 = scmp.eq.s32.totalorder %s28, 1
    %p282 = scmp.ne.s32.totalorder %s277, %s279
    %p283 = scmp.eq.s32.totalorder %s28, 0
    %p284 = por %p282, %p283
    %p285 = scmp.ne.s32.totalorder %s277, %s279
    %p286 = scmp.eq.s32.totalorder %s33, 1
    %p287 = por %p285, %p286
    %p288 = scmp.ne.s32.totalorder %s279, %s280
    %p289 = scmp.eq.s32.totalorder %s33, 0
    %p290 = por %p288, %p289
    %p291 = scmp.ne.s32.totalorder %s279, %s280
    %p292 = scmp.eq.s32.totalorder %s34, 1
    %p293 = por %p291, %p292
    %p295 = scmp.ne.s32.totalorder %s280, %s294
    %p296 = scmp.eq.s32.totalorder %s34, 0
    %p297 = por %p295, %p296
    %s299 = sadd.s32 %s298, 1
    %p302 = scmp.eq.s32.totalorder %s28, 1
    %p303 = scmp.ne.s32.totalorder %s298, %s300
    %p304 = scmp.eq.s32.totalorder %s28, 0
    %p305 = por %p303, %p304
    %p306 = scmp.ne.s32.totalorder %s298, %s300
    %p307 = scmp.eq.s32.totalorder %s33, 1
    %p308 = por %p306, %p307
    %p309 = scmp.ne.s32.totalorder %s300, %s301
    %p310 = scmp.eq.s32.totalorder %s33, 0
    %p311 = por %p309, %p310
    %p312 = scmp.ne.s32.totalorder %s300, %s301
    %p313 = scmp.eq.s32.totalorder %s34, 1
    %p314 = por %p312, %p313
    %p316 = scmp.ne.s32.totalorder %s301, %s315
    %p317 = scmp.eq.s32.totalorder %s34, 0
    %p318 = por %p316, %p317
    %s320 = sadd.s32 %s319, 1
    %p323 = scmp.eq.s32.totalorder %s28, 1
    %p324 = scmp.ne.s32.totalorder %s319, %s321
    %p325 = scmp.eq.s32.totalorder %s28, 0
    %p326 = por %p324, %p325
    %p327 = scmp.ne.s32.totalorder %s319, %s321
    %p328 = scmp.eq.s32.totalorder %s33, 1
    %p329 = por %p327, %p328
    %p330 = scmp.ne.s32.totalorder %s321, %s322
    %p331 = scmp.eq.s32.totalorder %s33, 0
    %p332 = por %p330, %p331
    %p333 = scmp.ne.s32.totalorder %s321, %s322
    %p334 = scmp.eq.s32.totalorder %s34, 1
    %p335 = por %p333, %p334
    %p337 = scmp.ne.s32.totalorder %s322, %s336
    %p338 = scmp.eq.s32.totalorder %s34, 0
    %p339 = por %p337, %p338
    %s341 = sadd.s32 %s340, 1
    %p344 = scmp.eq.s32.totalorder %s28, 1
    %p345 = scmp.ne.s32.totalorder %s340, %s342
    %p346 = scmp.eq.s32.totalorder %s28, 0
    %p347 = por %p345, %p346
    %p348 = scmp.ne.s32.totalorder %s340, %s342
    %p349 = scmp.eq.s32.totalorder %s33, 1
    %p350 = por %p348, %p349
    %p351 = scmp.ne.s32.totalorder %s342, %s343
    %p352 = scmp.eq.s32.totalorder %s33, 0
    %p353 = por %p351, %p352
    %p354 = scmp.ne.s32.totalorder %s342, %s343
    %p355 = scmp.eq.s32.totalorder %s34, 1
    %p356 = por %p354, %p355
    %p358 = scmp.ne.s32.totalorder %s343, %s357
    %p359 = scmp.eq.s32.totalorder %s34, 0
    %p360 = por %p358, %p359
    %s362 = sadd.s32 %s361, 1
    %p365 = scmp.eq.s32.totalorder %s28, 1
    %p366 = scmp.ne.s32.totalorder %s361, %s363
    %p367 = scmp.eq.s32.totalorder %s28, 0
    %p368 = por %p366, %p367
    %p369 = scmp.ne.s32.totalorder %s361, %s363
    %p370 = scmp.eq.s32.totalorder %s33, 1
    %p371 = por %p369, %p370
    %p372 = scmp.ne.s32.totalorder %s363, %s364
    %p373 = scmp.eq.s32.totalorder %s33, 0
    %p374 = por %p372, %p373
    %p375 = scmp.ne.s32.totalorder %s363, %s364
    %p376 = scmp.eq.s32.totalorder %s34, 1
    %p377 = por %p375, %p376
    %p379 = scmp.ne.s32.totalorder %s364, %s378
    %p380 = scmp.eq.s32.totalorder %s34, 0
    %p381 = por %p379, %p380
    %s383 = sadd.s32 %s382, 1
    %p386 = scmp.eq.s32.totalorder %s28, 1
    %p387 = scmp.ne.s32.totalorder %s382, %s384
    %p388 = scmp.eq.s32.totalorder %s28, 0
    %p389 = por %p387, %p388
    %p390 = scmp.ne.s32.totalorder %s382, %s384
    %p391 = scmp.eq.s32.totalorder %s33, 1
    %p392 = por %p390, %p391
    %p393 = scmp.ne.s32.totalorder %s384, %s385
    %p394 = scmp.eq.s32.totalorder %s33, 0
    %p395 = por %p393, %p394
    %p396 = scmp.ne.s32.totalorder %s384, %s385
    %p397 = scmp.eq.s32.totalorder %s34, 1
    %p398 = por %p396, %p397
    %p400 = scmp.ne.s32.totalorder %s385, %s399
    %p401 = scmp.eq.s32.totalorder %s34, 0
    %p402 = por %p400, %p401
    %s404 = sadd.s32 %s403, 1
    %p407 = scmp.eq.s32.totalorder %s28, 1
    %p408 = scmp.ne.s32.totalorder %s403, %s405
    %p409 = scmp.eq.s32.totalorder %s28, 0
    %p410 = por %p408, %p409
    %p411 = scmp.ne.s32.totalorder %s403, %s405
    %p412 = scmp.eq.s32.totalorder %s33, 1
    %p413 = por %p411, %p412
    %p414 = scmp.ne.s32.totalorder %s405, %s406
    %p415 = scmp.eq.s32.totalorder %s33, 0
    %p416 = por %p414, %p415
    %p417 = scmp.ne.s32.totalorder %s405, %s406
    %p418 = scmp.eq.s32.totalorder %s34, 1
    %p419 = por %p417, %p418
    %p421 = scmp.ne.s32.totalorder %s406, %s420
    %p422 = scmp.eq.s32.totalorder %s34, 0
    %p423 = por %p421, %p422
    %s425 = sadd.s32 %s424, 1
    %p428 = scmp.eq.s32.totalorder %s28, 1
    %p429 = scmp.ne.s32.totalorder %s424, %s426
    %p430 = scmp.eq.s32.totalorder %s28, 0
    %p431 = por %p429, %p430
    %p432 = scmp.ne.s32.totalorder %s424, %s426
    %p433 = scmp.eq.s32.totalorder %s33, 1
    %p434 = por %p432, %p433
    %p435 = scmp.ne.s32.totalorder %s426, %s427
    %p436 = scmp.eq.s32.totalorder %s33, 0
    %p437 = por %p435, %p436
    %p438 = scmp.ne.s32.totalorder %s426, %s427
    %p439 = scmp.eq.s32.totalorder %s34, 1
    %p440 = por %p438, %p439
    %p442 = scmp.ne.s32.totalorder %s427, %s441
    %p443 = scmp.eq.s32.totalorder %s34, 0
    %p444 = por %p442, %p443
    %s446 = sadd.s32 %s445, 1
    %p449 = scmp.eq.s32.totalorder %s28, 1
    %p450 = scmp.ne.s32.totalorder %s445, %s447
    %p451 = scmp.eq.s32.totalorder %s28, 0
    %p452 = por %p450, %p451
    %p453 = scmp.ne.s32.totalorder %s445, %s447
    %p454 = scmp.eq.s32.totalorder %s33, 1
    %p455 = por %p453, %p454
    %p456 = scmp.ne.s32.totalorder %s447, %s448
    %p457 = scmp.eq.s32.totalorder %s33, 0
    %p458 = por %p456, %p457
    %p459 = scmp.ne.s32.totalorder %s447, %s448
    %p460 = scmp.eq.s32.totalorder %s34, 1
    %p461 = por %p459, %p460
    %p463 = scmp.ne.s32.totalorder %s448, %s462
    %p464 = scmp.eq.s32.totalorder %s34, 0
    %p465 = por %p463, %p464
    %s467 = sadd.s32 %s466, 1
    %p470 = scmp.eq.s32.totalorder %s28, 1
    %p471 = scmp.ne.s32.totalorder %s466, %s468
    %p472 = scmp.eq.s32.totalorder %s28, 0
    %p473 = por %p471, %p472
    %p474 = scmp.ne.s32.totalorder %s466, %s468
    %p475 = scmp.eq.s32.totalorder %s33, 1
    %p476 = por %p474, %p475
    %p477 = scmp.ne.s32.totalorder %s468, %s469
    %p478 = scmp.eq.s32.totalorder %s33, 0
    %p479 = por %p477, %p478
    %p480 = scmp.ne.s32.totalorder %s468, %s469
    %p481 = scmp.eq.s32.totalorder %s34, 1
    %p482 = por %p480, %p481
    %p484 = scmp.ne.s32.totalorder %s469, %s483
    %p485 = scmp.eq.s32.totalorder %s34, 0
    %p486 = por %p484, %p485
    %s488 = sadd.s32 %s487, 1
    %p491 = scmp.eq.s32.totalorder %s28, 1
    %p492 = scmp.ne.s32.totalorder %s487, %s489
    %p493 = scmp.eq.s32.totalorder %s28, 0
    %p494 = por %p492, %p493
    %p495 = scmp.ne.s32.totalorder %s487, %s489
    %p496 = scmp.eq.s32.totalorder %s33, 1
    %p497 = por %p495, %p496
    %p498 = scmp.ne.s32.totalorder %s489, %s490
    %p499 = scmp.eq.s32.totalorder %s33, 0
    %p500 = por %p498, %p499
    %p501 = scmp.ne.s32.totalorder %s489, %s490
    %p502 = scmp.eq.s32.totalorder %s34, 1
    %p503 = por %p501, %p502
    %p505 = scmp.ne.s32.totalorder %s490, %s504
    %p506 = scmp.eq.s32.totalorder %s34, 0
    %p507 = por %p505, %p506
    %s508 = ssub.s32 %s28, %s35
    %p509 = scmp.eq.s32.totalorder %s508, 0
    %s511 = sadd.s32 %s510, 1
    %s512 = scalar_select %p509, %s510, %s511
    %p515 = pneg %p509
    %p516 = scmp.eq.s32.totalorder %s28, 1
    %p517 = por %p515, %p516
    %p518 = scmp.ne.s32.totalorder %s510, %s513
    %p519 = scmp.eq.s32.totalorder %s28, 0
    %p520 = por %p518, %p519
    %p521 = scmp.ne.s32.totalorder %s510, %s513
    %p522 = scmp.eq.s32.totalorder %s33, 1
    %p523 = por %p521, %p522
    %p524 = scmp.ne.s32.totalorder %s513, %s514
    %p525 = scmp.eq.s32.totalorder %s33, 0
    %p526 = por %p524, %p525
    %p527 = scmp.ne.s32.totalorder %s513, %s514
    %p528 = scmp.eq.s32.totalorder %s34, 1
    %p529 = por %p527, %p528
    %p531 = scmp.ne.s32.totalorder %s514, %s530
    %p532 = scmp.eq.s32.totalorder %s34, 0
    %p533 = por %p531, %p532
    %p534 = scmp.le.s32.totalorder 1, %s28
    %p535 = scmp.lt.s32.totalorder %s28, 3
    %p536 = pnand %p534, %p535
    %p537 = pneg %p536
    // Predicated region
    $region9: #{unet_forward.15} parent=5 // pred_check
      _
    $region10: #{unet_forward.15} parent=5 // pred_check_branch
      %539 = sbr.rel (%p536) target = $region12
    $region11: #{unet_forward.15} parent=5 // pred_region
      %s540 = ssub.s32 %s28, 1
      // Predicated region
      $region13: #{unet_forward.15} parent=11 // pred_check
        %p541 = pneg %p101
      $region14: #{unet_forward.15} parent=11 // pred_check_branch
        %543 = sbr.rel (%p541) target = $region16
      $region15: #{unet_forward.15} parent=11 // pred_region
        _
      $region16: #{unet_forward.15} parent=11 // pred_fallthru
        _
      // Predicated region
      $region17: #{unet_forward.15} parent=11 // pred_check
        %p544 = pneg %p122
      $region18: #{unet_forward.15} parent=11 // pred_check_branch
        %546 = sbr.rel (%p544) target = $region20
      $region19: #{unet_forward.15} parent=11 // pred_region
        _
      $region20: #{unet_forward.15} parent=11 // pred_fallthru
        _
      // Predicated region
      $region21: #{unet_forward.15} parent=11 // pred_check
        %p547 = pneg %p143
      $region22: #{unet_forward.15} parent=11 // pred_check_branch
        %549 = sbr.rel (%p547) target = $region24
      $region23: #{unet_forward.15} parent=11 // pred_region
        _
      $region24: #{unet_forward.15} parent=11 // pred_fallthru
        _
      // Predicated region
      $region25: #{unet_forward.15} parent=11 // pred_check
        %p550 = pneg %p164
      $region26: #{unet_forward.15} parent=11 // pred_check_branch
        %552 = sbr.rel (%p550) target = $region28
      $region27: #{unet_forward.15} parent=11 // pred_region
        _
      $region28: #{unet_forward.15} parent=11 // pred_fallthru
        _
      // Predicated region
      $region29: #{unet_forward.15} parent=11 // pred_check
        %p553 = pneg %p185
      $region30: #{unet_forward.15} parent=11 // pred_check_branch
        %555 = sbr.rel (%p553) target = $region32
      $region31: #{unet_forward.15} parent=11 // pred_region
        _
      $region32: #{unet_forward.15} parent=11 // pred_fallthru
        _
      // Predicated region
      $region33: #{unet_forward.15} parent=11 // pred_check
        %p556 = pneg %p206
      $region34: #{unet_forward.15} parent=11 // pred_check_branch
        %558 = sbr.rel (%p556) target = $region36
      $region35: #{unet_forward.15} parent=11 // pred_region
        _
      $region36: #{unet_forward.15} parent=11 // pred_fallthru
        _
      // Predicated region
      $region37: #{unet_forward.15} parent=11 // pred_check
        %p559 = pneg %p227
      $region38: #{unet_forward.15} parent=11 // pred_check_branch
        %561 = sbr.rel (%p559) target = $region40
      $region39: #{unet_forward.15} parent=11 // pred_region
        _
      $region40: #{unet_forward.15} parent=11 // pred_fallthru
        _
      // Predicated region
      $region41: #{unet_forward.15} parent=11 // pred_check
        %p562 = pneg %p248
      $region42: #{unet_forward.15} parent=11 // pred_check_branch
        %564 = sbr.rel (%p562) target = $region44
      $region43: #{unet_forward.15} parent=11 // pred_region
        _
      $region44: #{unet_forward.15} parent=11 // pred_fallthru
        _
      // Predicated region
      $region45: #{unet_forward.15} parent=11 // pred_check
        %p565 = pneg %p269
      $region46: #{unet_forward.15} parent=11 // pred_check_branch
        %567 = sbr.rel (%p565) target = $region48
      $region47: #{unet_forward.15} parent=11 // pred_region
        _
      $region48: #{unet_forward.15} parent=11 // pred_fallthru
        _
      // Predicated region
      $region49: #{unet_forward.15} parent=11 // pred_check
        %p568 = pneg %p290
      $region50: #{unet_forward.15} parent=11 // pred_check_branch
        %570 = sbr.rel (%p568) target = $region52
      $region51: #{unet_forward.15} parent=11 // pred_region
        _
      $region52: #{unet_forward.15} parent=11 // pred_fallthru
        _
      // Predicated region
      $region53: #{unet_forward.15} parent=11 // pred_check
        %p571 = pneg %p311
      $region54: #{unet_forward.15} parent=11 // pred_check_branch
        %573 = sbr.rel (%p571) target = $region56
      $region55: #{unet_forward.15} parent=11 // pred_region
        _
      $region56: #{unet_forward.15} parent=11 // pred_fallthru
        _
      // Predicated region
      $region57: #{unet_forward.15} parent=11 // pred_check
        %p574 = pneg %p332
      $region58: #{unet_forward.15} parent=11 // pred_check_branch
        %576 = sbr.rel (%p574) target = $region60
      $region59: #{unet_forward.15} parent=11 // pred_region
        _
      $region60: #{unet_forward.15} parent=11 // pred_fallthru
        _
      // Predicated region
      $region61: #{unet_forward.15} parent=11 // pred_check
        %p577 = pneg %p353
      $region62: #{unet_forward.15} parent=11 // pred_check_branch
        %579 = sbr.rel (%p577) target = $region64
      $region63: #{unet_forward.15} parent=11 // pred_region
        _
      $region64: #{unet_forward.15} parent=11 // pred_fallthru
        _
      // Predicated region
      $region65: #{unet_forward.15} parent=11 // pred_check
        %p580 = pneg %p374
      $region66: #{unet_forward.15} parent=11 // pred_check_branch
        %582 = sbr.rel (%p580) target = $region68
      $region67: #{unet_forward.15} parent=11 // pred_region
        _
      $region68: #{unet_forward.15} parent=11 // pred_fallthru
        _
      // Predicated region
      $region69: #{unet_forward.15} parent=11 // pred_check
        %p583 = pneg %p395
      $region70: #{unet_forward.15} parent=11 // pred_check_branch
        %585 = sbr.rel (%p583) target = $region72
      $region71: #{unet_forward.15} parent=11 // pred_region
        _
      $region72: #{unet_forward.15} parent=11 // pred_fallthru
        _
      // Predicated region
      $region73: #{unet_forward.15} parent=11 // pred_check
        %p586 = pneg %p416
      $region74: #{unet_forward.15} parent=11 // pred_check_branch
        %588 = sbr.rel (%p586) target = $region76
      $region75: #{unet_forward.15} parent=11 // pred_region
        _
      $region76: #{unet_forward.15} parent=11 // pred_fallthru
        _
      // Predicated region
      $region77: #{unet_forward.15} parent=11 // pred_check
        %p589 = pneg %p437
      $region78: #{unet_forward.15} parent=11 // pred_check_branch
        %591 = sbr.rel (%p589) target = $region80
      $region79: #{unet_forward.15} parent=11 // pred_region
        _
      $region80: #{unet_forward.15} parent=11 // pred_fallthru
        _
      // Predicated region
      $region81: #{unet_forward.15} parent=11 // pred_check
        %p592 = pneg %p458
      $region82: #{unet_forward.15} parent=11 // pred_check_branch
        %594 = sbr.rel (%p592) target = $region84
      $region83: #{unet_forward.15} parent=11 // pred_region
        _
      $region84: #{unet_forward.15} parent=11 // pred_fallthru
        _
      // Predicated region
      $region85: #{unet_forward.15} parent=11 // pred_check
        %p595 = pneg %p479
      $region86: #{unet_forward.15} parent=11 // pred_check_branch
        %597 = sbr.rel (%p595) target = $region88
      $region87: #{unet_forward.15} parent=11 // pred_region
        _
      $region88: #{unet_forward.15} parent=11 // pred_fallthru
        _
      // Predicated region
      $region89: #{unet_forward.15} parent=11 // pred_check
        %p598 = pneg %p500
      $region90: #{unet_forward.15} parent=11 // pred_check_branch
        %600 = sbr.rel (%p598) target = $region92
      $region91: #{unet_forward.15} parent=11 // pred_region
        _
      $region92: #{unet_forward.15} parent=11 // pred_fallthru
        _
    $region12: #{unet_forward.15} parent=5 // pred_fallthru
      _
    %p601 = scmp.lt.s32.totalorder %s28, 2
    // Predicated region
    $region93: #{unet_forward.15} parent=5 // pred_check
      %p602 = pneg %p601
    $region94: #{unet_forward.15} parent=5 // pred_check_branch
      %604 = sbr.rel (%p602) target = $region96
    $region95: #{unet_forward.15} parent=5 // pred_region
      // Predicated region
      $region97: #{unet_forward.15} parent=95 // pred_check
        %p605 = pneg %p48
      $region98: #{unet_forward.15} parent=95 // pred_check_branch
        %607 = sbr.rel (%p605) target = $region100
      $region99: #{unet_forward.15} parent=95 // pred_region
        %p608 = scmp.lt.s32.totalorder %s28, 1
        %s609 = scalar_select %p608, %s28, 1
        %s610 = smul.addr %s609, 8
        %s611 = smul.addr %s610, 4
        %s612 = scalar_lea.vmem %s0, %s611
      $region100: #{unet_forward.15} parent=95 // pred_fallthru
        _
      // Predicated region
      $region101: #{unet_forward.15} parent=95 // pred_check
        %p613 = pneg %p74
      $region102: #{unet_forward.15} parent=95 // pred_check_branch
        %615 = sbr.rel (%p613) target = $region104
      $region103: #{unet_forward.15} parent=95 // pred_region
        %p616 = scmp.lt.s32.totalorder %s28, 1
        %s617 = scalar_select %p616, %s28, 1
        %s618 = smul.addr %s617, 2
        %s619 = scalar_lea.vmem %s1, %s618
      $region104: #{unet_forward.15} parent=95 // pred_fallthru
        _
    $region96: #{unet_forward.15} parent=5 // pred_fallthru
      _
    %p620 = scmp.le.s32.totalorder 1, %s28
    %p621 = scmp.lt.s32.totalorder %s28, 3
    %p622 = pnand %p620, %p621
    %p623 = pneg %p622
    // Predicated region
    $region105: #{unet_forward.15} parent=5 // pred_check
      _
    $region106: #{unet_forward.15} parent=5 // pred_check_branch
      %625 = sbr.rel (%p622) target = $region108
    $region107: #{unet_forward.15} parent=5 // pred_region
      %s626 = ssub.s32 %s28, 1
      %p627 = scmp.lt.s32.totalorder %s33, 1
      %s628 = scalar_select %p627, %s33, 1
      %s629 = smul.addr %s628, 8
      %s630 = smul.addr %s629, 4
      %s631 = scalar_lea.vmem %s0, %s630
      %p632 = pneg %p54
      %p633 = pneg %p51
      %p634 = scmp.lt.s32.totalorder %s33, 1
      %s635 = scalar_select %p634, %s33, 1
      %s636 = smul.addr %s635, 2
      %s637 = scalar_lea.vmem %s1, %s636
      %p638 = pneg %p80
      %p639 = pneg %p77
      %p640 = pneg %p101
      %p641 = pneg %p98
      %p642 = pneg %p122
      %p643 = pneg %p119
      %p644 = pneg %p143
      %p645 = pneg %p140
      %p646 = pneg %p164
      %p647 = pneg %p161
      %p648 = pneg %p185
      %p649 = pneg %p182
      %p650 = pneg %p206
      %p651 = pneg %p203
      %p652 = pneg %p227
      %p653 = pneg %p224
      %p654 = pneg %p248
      %p655 = pneg %p245
      %p656 = pneg %p269
      %p657 = pneg %p266
      %p658 = pneg %p290
      %p659 = pneg %p287
      %p660 = pneg %p311
      %p661 = pneg %p308
      %p662 = pneg %p332
      %p663 = pneg %p329
      %p664 = pneg %p353
      %p665 = pneg %p350
      %p666 = pneg %p374
      %p667 = pneg %p371
      %p668 = pneg %p395
      %p669 = pneg %p392
      %p670 = pneg %p416
      %p671 = pneg %p413
      %p672 = pneg %p437
      %p673 = pneg %p434
      %p674 = pneg %p458
      %p675 = pneg %p455
      %p676 = pneg %p479
      %p677 = pneg %p476
      %p678 = pneg %p500
      %p679 = pneg %p497
      %p680 = pneg %p526
      %p681 = pneg %p523
      %p682 = scmp.lt.s32.totalorder %s33, 1
      %s683 = scalar_select %p682, %s33, 1
      %s684 = smul.addr %s683, 8
      %s685 = smul.addr %s684, 4
      %s686 = scalar_lea.vmem %s22, %s685
      %p687 = scmp.lt.s32.totalorder %s33, 1
      %s688 = scalar_select %p687, %s33, 1
      %s689 = smul.addr %s688, 8
      %s690 = smul.addr %s689, 4
      %s691 = scalar_lea.vmem %s0, %s690
      %p692 = scmp.lt.s32.totalorder %s33, 1
      %s693 = scalar_select %p692, %s33, 1
      %s694 = smul.addr %s693, 2
      %s695 = scalar_lea.vmem %s1, %s694
      %p696 = scmp.lt.s32.totalorder %s33, 1
      %s697 = scalar_select %p696, %s33, 1
      %s698 = smul.addr %s697, 8
      %s699 = smul.addr %s698, 4
      %s700 = scalar_lea.vmem %s22, %s699
      %v702 = vld [vmem:[%s691] sm:$0xf]
      %v703 = vld [vmem:[%s691 + $0x4] sm:$0xf]
      %v704 = vld [vmem:[%s691 + $0x8] sm:$0xf]
      %v705 = vld [vmem:[%s691 + $0xc] sm:$0xf]
      %v706 = vld [vmem:[%s691 + $0x10] sm:$0xf]
      %v707 = vld [vmem:[%s691 + $0x14] sm:$0xf]
      %v708 = vld [vmem:[%s691 + $0x18] sm:$0xf]
      %v709 = vld [vmem:[%s691 + $0x1c] sm:$0xf]
      %v710 = vld [vmem:[%s695] sm:$0x3]
      %v711 = vld [vmem:[%s2] sm:$0xf]
      %v712 = vld [vmem:[%s2 + $0x4] sm:$0xf]
      %v713 = vld [vmem:[%s2 + $0x8] sm:$0xf]
      %v714 = vld [vmem:[%s2 + $0xc] sm:$0xf]
      %v715 = vld [vmem:[%s3] sm:$0x1]
      %v717 = vperm.slane %v715, 0
      %v727 = vunpack.c.l.b16 %v702
      %v728 = vunpack.c.l.b16 %v703
      %v729 = vunpack.c.l.b16 %v704
      %v730 = vunpack.c.l.b16 %v705
      %v731 = vunpack.c.l.b16 %v706
      %v732 = vunpack.c.l.b16 %v707
      %v733 = vunpack.c.l.b16 %v708
      %v734 = vunpack.c.l.b16 %v709
      %v735 = vpack.c.b16 %v728, %v727
      %v736 = vpack.c.b16 %v730, %v729
      %v737 = vpack.c.b16 %v732, %v731
      %v738 = vpack.c.b16 %v734, %v733
      %v743 = vunpack.c.l.b16 %v711
      %v744 = vunpack.c.l.b16 %v712
      %v745 = vunpack.c.l.b16 %v713
      %v746 = vunpack.c.l.b16 %v714
      %v747 = vpack.c.b16 %v744, %v743
      %v748 = vpack.c.b16 %v746, %v745
      %vm751 = vcmask 261120
      %v753 = vsel %vm751, %v735, 0
      %v756 = vsel %vm751, %v736, 0
      %v759 = vsel %vm751, %v737, 0
      %v762 = vsel %vm751, %v738, 0
      %764 = vmatpush.bf16.msra.mxu0 0
      %765 = vmatpush.bf16.msra.mxu0 0
      %766 = vmatpush.bf16.msra.mxu0 0
      %767 = vmatpush.bf16.msra.mxu0 0
      %768 = vmatpush.bf16.msra.mxu0 0
      %769 = vmatpush.bf16.msra.mxu0 0
      %770 = vmatpush.bf16.msra.mxu0 %v748
      %771 = vmatpush.bf16.msra.mxu0 %v747
      %772 = vmatmul.bf16.gmra.mxu0 %v753
      %v773 = vpop.f32.mrf.mxu0
      %v774 = vadd.f32 %v717, %v773
      %v775 = vpop.f32.mrf.mxu0
      %v776 = vadd.f32 %v717, %v775
      %777 = vmatmul.bf16.gmra.mxu0 %v756
      %v778 = vpop.f32.mrf.mxu0
      %v779 = vadd.f32 %v717, %v778
      %v780 = vpop.f32.mrf.mxu0
      %v781 = vadd.f32 %v717, %v780
      %782 = vmatmul.bf16.gmra.mxu0 %v759
      %v783 = vpop.f32.mrf.mxu0
      %v784 = vadd.f32 %v717, %v783
      %v785 = vpop.f32.mrf.mxu0
      %v786 = vadd.f32 %v717, %v785
      %787 = vmatmul.bf16.gmra.mxu0 %v762
      %v788 = vpop.f32.mrf.mxu0
      %v789 = vadd.f32 %v717, %v788
      %v790 = vpop.f32.mrf.mxu0
      %v791 = vadd.f32 %v717, %v790
      %792 = vdwg.mxu0
      %v793 = vpack.c.bf16 %v774, %v774
      %v794 = vpack.c.bf16 %v776, %v776
      %v795 = vpack.c.bf16 %v779, %v779
      %v796 = vpack.c.bf16 %v781, %v781
      %v797 = vpack.c.bf16 %v784, %v784
      %v798 = vpack.c.bf16 %v786, %v786
      %v799 = vpack.c.bf16 %v789, %v789
      %v800 = vpack.c.bf16 %v791, %v791
      %v801 = vunpack.c.l.bf16 %v702
      %v802 = vunpack.c.l.bf16 %v703
      %v803 = vunpack.c.l.bf16 %v704
      %v804 = vunpack.c.l.bf16 %v705
      %v805 = vunpack.c.l.bf16 %v706
      %v806 = vunpack.c.l.bf16 %v707
      %v807 = vunpack.c.l.bf16 %v708
      %v808 = vunpack.c.l.bf16 %v709
      %v817 = vunpack.c.l.b16 %v793
      %v818 = vunpack.c.l.b16 %v794
      %v819 = vunpack.c.l.b16 %v795
      %v820 = vunpack.c.l.b16 %v796
      %v821 = vunpack.c.l.b16 %v797
      %v822 = vunpack.c.l.b16 %v798
      %v823 = vunpack.c.l.b16 %v799
      %v824 = vunpack.c.l.b16 %v800
      %v825 = vpack.c.b16 %v818, %v817
      %v826 = vpack.c.b16 %v820, %v819
      %v827 = vpack.c.b16 %v822, %v821
      %v828 = vpack.c.b16 %v824, %v823
      %829 = vrot.lane.b32.xlu0 %v825, 96
      %v830 = vpop.permute.xlu0 %829
      %831 = vrot.lane.b32.xlu0 %v826, 96
      %v832 = vpop.permute.xlu0 %831
      %833 = vrot.lane.b32.xlu0 %v827, 96
      %v834 = vpop.permute.xlu0 %833
      %835 = vrot.lane.b32.xlu0 %v828, 96
      %v836 = vpop.permute.xlu0 %835
      %vm837 = vcmask 130048
      %v839 = vsel %vm837, %v825, 0
      %v842 = vsel %vm837, %v826, 0
      %v845 = vsel %vm837, %v827, 0
      %v848 = vsel %vm837, %v828, 0
      %v851 = vsel %vm837, %v830, 0
      %v854 = vsel %vm837, %v832, 0
      %v857 = vsel %vm837, %v834, 0
      %v860 = vsel %vm837, %v836, 0
      %862 = vmatpush.bf16.xpose.msra.mxu0 0
      %863 = vmatpush.bf16.xpose.msra.mxu0 0
      %864 = vmatpush.bf16.xpose.msra.mxu0 0
      %865 = vmatpush.bf16.xpose.msra.mxu0 0
      %866 = vmatpush.bf16.xpose.msra.mxu0 %v860
      %867 = vmatpush.bf16.xpose.msra.mxu0 %v857
      %868 = vmatpush.bf16.xpose.msra.mxu0 %v854
      %869 = vmatpush.bf16.xpose.msra.mxu0 %v851
      %870 = vmatmul.bf16.gmra.mxu0 %v839
      %v871 = vpop.f32.mrf.mxu0
      %v872 = vadd.f32 0.0, %v871
      %v873 = vpop.f32.mrf.mxu0
      %v874 = vadd.f32 0.0, %v873
      %875 = vmatmul.bf16.gmra.mxu0 %v842
      %v876 = vpop.f32.mrf.mxu0
      %v877 = vadd.f32 0.0, %v876
      %v878 = vpop.f32.mrf.mxu0
      %v879 = vadd.f32 0.0, %v878
      %880 = vmatmul.bf16.gmra.mxu0 %v845
      %v881 = vpop.f32.mrf.mxu0
      %v882 = vadd.f32 0.0, %v881
      %v883 = vpop.f32.mrf.mxu0
      %v884 = vadd.f32 0.0, %v883
      %885 = vmatmul.bf16.gmra.mxu0 %v848
      %v886 = vpop.f32.mrf.mxu0
      %v887 = vadd.f32 0.0, %v886
      %v888 = vpop.f32.mrf.mxu0
      %v889 = vadd.f32 0.0, %v888
      %890 = vdwg.mxu0
      %v891 = vmul.f32 %v872, 0.25
      %v892 = vmul.f32 %v874, 0.25
      %v893 = vmul.f32 %v877, 0.25
      %v894 = vmul.f32 %v879, 0.25
      %v895 = vmul.f32 %v882, 0.25
      %v896 = vmul.f32 %v884, 0.25
      %v897 = vmul.f32 %v887, 0.25
      %v898 = vmul.f32 %v889, 0.25
      %vm899 = vcmask 523264
      %v900 = vsel %vm899, %v891, -inf
      %901 = vmax.xlane.f32.xlu0 %v900
      %v902 = vpop.xlane.xlu0 %901
      %v903 = vsel %vm899, %v892, -inf
      %904 = vmax.xlane.f32.xlu0 %v903
      %v905 = vpop.xlane.xlu0 %904
      %v906 = vsel %vm899, %v893, -inf
      %907 = vmax.xlane.f32.xlu0 %v906
      %v908 = vpop.xlane.xlu0 %907
      %v909 = vsel %vm899, %v894, -inf
      %910 = vmax.xlane.f32.xlu0 %v909
      %v911 = vpop.xlane.xlu0 %910
      %v912 = vsel %vm899, %v895, -inf
      %913 = vmax.xlane.f32.xlu0 %v912
      %v914 = vpop.xlane.xlu0 %913
      %v915 = vsel %vm899, %v896, -inf
      %916 = vmax.xlane.f32.xlu0 %v915
      %v917 = vpop.xlane.xlu0 %916
      %v918 = vsel %vm899, %v897, -inf
      %919 = vmax.xlane.f32.xlu0 %v918
      %v920 = vpop.xlane.xlu0 %919
      %v921 = vsel %vm899, %v898, -inf
      %922 = vmax.xlane.f32.xlu0 %v921
      %v923 = vpop.xlane.xlu0 %922
      %v924 = vsub.f32 %v891, %v902
      %v925 = vsub.f32 %v892, %v905
      %v926 = vsub.f32 %v893, %v908
      %v927 = vsub.f32 %v894, %v911
      %v928 = vsub.f32 %v895, %v914
      %v929 = vsub.f32 %v896, %v917
      %v930 = vsub.f32 %v897, %v920
      %v931 = vsub.f32 %v898, %v923
      %v932 = vmul.f32 %v924, 1.442695
      %v933 = vpow.pop %v932
      %v934 = vmul.f32 %v925, 1.442695
      %v935 = vpow.pop %v934
      %v936 = vmul.f32 %v926, 1.442695
      %v937 = vpow.pop %v936
      %v938 = vmul.f32 %v927, 1.442695
      %v939 = vpow.pop %v938
      %v940 = vmul.f32 %v928, 1.442695
      %v941 = vpow.pop %v940
      %v942 = vmul.f32 %v929, 1.442695
      %v943 = vpow.pop %v942
      %v944 = vmul.f32 %v930, 1.442695
      %v945 = vpow.pop %v944
      %v946 = vmul.f32 %v931, 1.442695
      %v947 = vpow.pop %v946
      %v948 = vsel %vm899, %v933, 0.0
      %949 = vadd.xlane.f32.xlu0 %v948
      %v950 = vpop.xlane.xlu0 %949
      %v951 = vsel %vm899, %v935, 0.0
      %952 = vadd.xlane.f32.xlu0 %v951
      %v953 = vpop.xlane.xlu0 %952
      %v954 = vsel %vm899, %v937, 0.0
      %955 = vadd.xlane.f32.xlu0 %v954
      %v956 = vpop.xlane.xlu0 %955
      %v957 = vsel %vm899, %v939, 0.0
      %958 = vadd.xlane.f32.xlu0 %v957
      %v959 = vpop.xlane.xlu0 %958
      %v960 = vsel %vm899, %v941, 0.0
      %961 = vadd.xlane.f32.xlu0 %v960
      %v962 = vpop.xlane.xlu0 %961
      %v963 = vsel %vm899, %v943, 0.0
      %964 = vadd.xlane.f32.xlu0 %v963
      %v965 = vpop.xlane.xlu0 %964
      %v966 = vsel %vm899, %v945, 0.0
      %967 = vadd.xlane.f32.xlu0 %v966
      %v968 = vpop.xlane.xlu0 %967
      %v969 = vsel %vm899, %v947, 0.0
      %970 = vadd.xlane.f32.xlu0 %v969
      %v971 = vpop.xlane.xlu0 %970
      %v972 = vrcp.pop %v950
      %v973 = vmul.f32 %v950, %v972
      %v974 = vsub.f32 1.0, %v973
      %v975 = vmul.f32 %v972, %v974
      %v976 = vadd.f32 %v972, %v975
      %vm977 = vweird.f32 %v950
      %vm978 = vweird.f32 %v972
      %vm979 = vmor %vm977, %vm978
      %v980 = vsel %vm979, %v972, %v976
      %v981 = vand.u32 2147483647, %v950
      %vm982 = vcmp.eq.f32.partialorder %v981, 8.507059e+37
      %v983 = vand.u32 %v950, 2147483648
      %v984 = vor.u32 1.1754944e-38, %v983
      %v985 = vsel %vm982, %v984, %v980
      %v986 = vmul.f32 %v933, %v985
      %v987 = vrcp.pop %v953
      %v988 = vmul.f32 %v953, %v987
      %v989 = vsub.f32 1.0, %v988
      %v990 = vmul.f32 %v987, %v989
      %v991 = vadd.f32 %v987, %v990
      %vm992 = vweird.f32 %v953
      %vm993 = vweird.f32 %v987
      %vm994 = vmor %vm992, %vm993
      %v995 = vsel %vm994, %v987, %v991
      %v996 = vand.u32 2147483647, %v953
      %vm997 = vcmp.eq.f32.partialorder %v996, 8.507059e+37
      %v998 = vand.u32 %v953, 2147483648
      %v999 = vor.u32 1.1754944e-38, %v998
      %v1000 = vsel %vm997, %v999, %v995
      %v1001 = vmul.f32 %v935, %v1000
      %v1002 = vrcp.pop %v956
      %v1003 = vmul.f32 %v956, %v1002
      %v1004 = vsub.f32 1.0, %v1003
      %v1005 = vmul.f32 %v1002, %v1004
      %v1006 = vadd.f32 %v1002, %v1005
      %vm1007 = vweird.f32 %v956
      %vm1008 = vweird.f32 %v1002
      %vm1009 = vmor %vm1007, %vm1008
      %v1010 = vsel %vm1009, %v1002, %v1006
      %v1011 = vand.u32 2147483647, %v956
      %vm1012 = vcmp.eq.f32.partialorder %v1011, 8.507059e+37
      %v1013 = vand.u32 %v956, 2147483648
      %v1014 = vor.u32 1.1754944e-38, %v1013
      %v1015 = vsel %vm1012, %v1014, %v1010
      %v1016 = vmul.f32 %v937, %v1015
      %v1017 = vrcp.pop %v959
      %v1018 = vmul.f32 %v959, %v1017
      %v1019 = vsub.f32 1.0, %v1018
      %v1020 = vmul.f32 %v1017, %v1019
      %v1021 = vadd.f32 %v1017, %v1020
      %vm1022 = vweird.f32 %v959
      %vm1023 = vweird.f32 %v1017
      %vm1024 = vmor %vm1022, %vm1023
      %v1025 = vsel %vm1024, %v1017, %v1021
      %v1026 = vand.u32 2147483647, %v959
      %vm1027 = vcmp.eq.f32.partialorder %v1026, 8.507059e+37
      %v1028 = vand.u32 %v959, 2147483648
      %v1029 = vor.u32 1.1754944e-38, %v1028
      %v1030 = vsel %vm1027, %v1029, %v1025
      %v1031 = vmul.f32 %v939, %v1030
      %v1032 = vrcp.pop %v962
      %v1033 = vmul.f32 %v962, %v1032
      %v1034 = vsub.f32 1.0, %v1033
      %v1035 = vmul.f32 %v1032, %v1034
      %v1036 = vadd.f32 %v1032, %v1035
      %vm1037 = vweird.f32 %v962
      %vm1038 = vweird.f32 %v1032
      %vm1039 = vmor %vm1037, %vm1038
      %v1040 = vsel %vm1039, %v1032, %v1036
      %v1041 = vand.u32 2147483647, %v962
      %vm1042 = vcmp.eq.f32.partialorder %v1041, 8.507059e+37
      %v1043 = vand.u32 %v962, 2147483648
      %v1044 = vor.u32 1.1754944e-38, %v1043
      %v1045 = vsel %vm1042, %v1044, %v1040
      %v1046 = vmul.f32 %v941, %v1045
      %v1047 = vrcp.pop %v965
      %v1048 = vmul.f32 %v965, %v1047
      %v1049 = vsub.f32 1.0, %v1048
      %v1050 = vmul.f32 %v1047, %v1049
      %v1051 = vadd.f32 %v1047, %v1050
      %vm1052 = vweird.f32 %v965
      %vm1053 = vweird.f32 %v1047
      %vm1054 = vmor %vm1052, %vm1053
      %v1055 = vsel %vm1054, %v1047, %v1051
      %v1056 = vand.u32 2147483647, %v965
      %vm1057 = vcmp.eq.f32.partialorder %v1056, 8.507059e+37
      %v1058 = vand.u32 %v965, 2147483648
      %v1059 = vor.u32 1.1754944e-38, %v1058
      %v1060 = vsel %vm1057, %v1059, %v1055
      %v1061 = vmul.f32 %v943, %v1060
      %v1062 = vrcp.pop %v968
      %v1063 = vmul.f32 %v968, %v1062
      %v1064 = vsub.f32 1.0, %v1063
      %v1065 = vmul.f32 %v1062, %v1064
      %v1066 = vadd.f32 %v1062, %v1065
      %vm1067 = vweird.f32 %v968
      %vm1068 = vweird.f32 %v1062
      %vm1069 = vmor %vm1067, %vm1068
      %v1070 = vsel %vm1069, %v1062, %v1066
      %v1071 = vand.u32 2147483647, %v968
      %vm1072 = vcmp.eq.f32.partialorder %v1071, 8.507059e+37
      %v1073 = vand.u32 %v968, 2147483648
      %v1074 = vor.u32 1.1754944e-38, %v1073
      %v1075 = vsel %vm1072, %v1074, %v1070
      %v1076 = vmul.f32 %v945, %v1075
      %v1077 = vrcp.pop %v971
      %v1078 = vmul.f32 %v971, %v1077
      %v1079 = vsub.f32 1.0, %v1078
      %v1080 = vmul.f32 %v1077, %v1079
      %v1081 = vadd.f32 %v1077, %v1080
      %vm1082 = vweird.f32 %v971
      %vm1083 = vweird.f32 %v1077
      %vm1084 = vmor %vm1082, %vm1083
      %v1085 = vsel %vm1084, %v1077, %v1081
      %v1086 = vand.u32 2147483647, %v971
      %vm1087 = vcmp.eq.f32.partialorder %v1086, 8.507059e+37
      %v1088 = vand.u32 %v971, 2147483648
      %v1089 = vor.u32 1.1754944e-38, %v1088
      %v1090 = vsel %vm1087, %v1089, %v1085
      %v1091 = vmul.f32 %v947, %v1090
      %v1092 = vpack.c.bf16 %v1001, %v986
      %v1093 = vpack.c.bf16 %v1031, %v1016
      %v1094 = vpack.c.bf16 %v1061, %v1046
      %v1095 = vpack.c.bf16 %v1091, %v1076
      %1096 = vrot.lane.b32.xlu0 %v825, 64
      %v1097 = vpop.permute.xlu0 %1096
      %1098 = vrot.lane.b32.xlu0 %v826, 64
      %v1099 = vpop.permute.xlu0 %1098
      %1100 = vrot.lane.b32.xlu0 %v827, 64
      %v1101 = vpop.permute.xlu0 %1100
      %1102 = vrot.lane.b32.xlu0 %v828, 64
      %v1103 = vpop.permute.xlu0 %1102
      %v1109 = vsel %vm899, %v1092, 0
      %v1112 = vsel %vm899, %v1093, 0
      %v1115 = vsel %vm899, %v1094, 0
      %v1118 = vsel %vm899, %v1095, 0
      %1120 = vmatpush.bf16.msra.mxu0 0
      %1121 = vmatpush.bf16.msra.mxu0 0
      %1122 = vmatpush.bf16.msra.mxu0 0
      %1123 = vmatpush.bf16.msra.mxu0 0
      %1124 = vmatpush.bf16.msra.mxu0 %v1103
      %1125 = vmatpush.bf16.msra.mxu0 %v1101
      %1126 = vmatpush.bf16.msra.mxu0 %v1099
      %1127 = vmatpush.bf16.msra.mxu0 %v1097
      %1128 = vmatmul.bf16.gmra.mxu0 %v1109
      %v1129 = vpop.f32.mrf.mxu0
      %v1130 = vadd.f32 0.0, %v1129
      %v1131 = vpop.f32.mrf.mxu0
      %v1132 = vadd.f32 0.0, %v1131
      %1133 = vmatmul.bf16.gmra.mxu0 %v1112
      %v1134 = vpop.f32.mrf.mxu0
      %v1135 = vadd.f32 0.0, %v1134
      %v1136 = vpop.f32.mrf.mxu0
      %v1137 = vadd.f32 0.0, %v1136
      %1138 = vmatmul.bf16.gmra.mxu0 %v1115
      %v1139 = vpop.f32.mrf.mxu0
      %v1140 = vadd.f32 0.0, %v1139
      %v1141 = vpop.f32.mrf.mxu0
      %v1142 = vadd.f32 0.0, %v1141
      %1143 = vmatmul.bf16.gmra.mxu0 %v1118
      %v1144 = vpop.f32.mrf.mxu0
      %v1145 = vadd.f32 0.0, %v1144
      %v1146 = vpop.f32.mrf.mxu0
      %v1147 = vadd.f32 0.0, %v1146
      %1148 = vdwg.mxu0
      %v1149 = vpack.c.bf16 %v1132, %v1130
      %v1150 = vpack.c.bf16 %v1137, %v1135
      %v1151 = vpack.c.bf16 %v1142, %v1140
      %v1152 = vpack.c.bf16 %v1147, %v1145
      %v1153 = vld [vmem:[%s4] sm:$0xf]
      %v1154 = vld [vmem:[%s4 + $0x4] sm:$0xf]
      %1155 = vrot.lane.b32.xlu0 %v825, 112
      %v1156 = vpop.permute.xlu0 %1155
      %1157 = vrot.lane.b32.xlu0 %v826, 112
      %v1158 = vpop.permute.xlu0 %1157
      %1159 = vrot.lane.b32.xlu0 %v827, 112
      %v1160 = vpop.permute.xlu0 %1159
      %1161 = vrot.lane.b32.xlu0 %v828, 112
      %v1162 = vpop.permute.xlu0 %1161
      %1163 = vrot.lane.b32.xlu0 %v825, 80
      %v1164 = vpop.permute.xlu0 %1163
      %1165 = vrot.lane.b32.xlu0 %v826, 80
      %v1166 = vpop.permute.xlu0 %1165
      %1167 = vrot.lane.b32.xlu0 %v827, 80
      %v1168 = vpop.permute.xlu0 %1167
      %1169 = vrot.lane.b32.xlu0 %v828, 80
      %v1170 = vpop.permute.xlu0 %1169
      %v1172 = vsel %vm837, %v1156, 0
      %v1175 = vsel %vm837, %v1158, 0
      %v1178 = vsel %vm837, %v1160, 0
      %v1181 = vsel %vm837, %v1162, 0
      %v1184 = vsel %vm837, %v1164, 0
      %v1187 = vsel %vm837, %v1166, 0
      %v1190 = vsel %vm837, %v1168, 0
      %v1193 = vsel %vm837, %v1170, 0
      %1195 = vmatpush.bf16.xpose.msra.mxu0 0
      %1196 = vmatpush.bf16.xpose.msra.mxu0 0
      %1197 = vmatpush.bf16.xpose.msra.mxu0 0
      %1198 = vmatpush.bf16.xpose.msra.mxu0 0
      %1199 = vmatpush.bf16.xpose.msra.mxu0 %v1193
      %1200 = vmatpush.bf16.xpose.msra.mxu0 %v1190
      %1201 = vmatpush.bf16.xpose.msra.mxu0 %v1187
      %1202 = vmatpush.bf16.xpose.msra.mxu0 %v1184
      %1203 = vmatmul.bf16.gmra.mxu0 %v1172
      %v1204 = vpop.f32.mrf.mxu0
      %v1205 = vadd.f32 0.0, %v1204
      %v1206 = vpop.f32.mrf.mxu0
      %v1207 = vadd.f32 0.0, %v1206
      %1208 = vmatmul.bf16.gmra.mxu0 %v1175
      %v1209 = vpop.f32.mrf.mxu0
      %v1210 = vadd.f32 0.0, %v1209
      %v1211 = vpop.f32.mrf.mxu0
      %v1212 = vadd.f32 0.0, %v1211
      %1213 = vmatmul.bf16.gmra.mxu0 %v1178
      %v1214 = vpop.f32.mrf.mxu0
      %v1215 = vadd.f32 0.0, %v1214
      %v1216 = vpop.f32.mrf.mxu0
      %v1217 = vadd.f32 0.0, %v1216
      %1218 = vmatmul.bf16.gmra.mxu0 %v1181
      %v1219 = vpop.f32.mrf.mxu0
      %v1220 = vadd.f32 0.0, %v1219
      %v1221 = vpop.f32.mrf.mxu0
      %v1222 = vadd.f32 0.0, %v1221
      %1223 = vdwg.mxu0
      %v1224 = vmul.f32 %v1205, 0.25
      %v1225 = vmul.f32 %v1207, 0.25
      %v1226 = vmul.f32 %v1210, 0.25
      %v1227 = vmul.f32 %v1212, 0.25
      %v1228 = vmul.f32 %v1215, 0.25
      %v1229 = vmul.f32 %v1217, 0.25
      %v1230 = vmul.f32 %v1220, 0.25
      %v1231 = vmul.f32 %v1222, 0.25
      %v1232 = vsel %vm899, %v1224, -inf
      %1233 = vmax.xlane.f32.xlu0 %v1232
      %v1234 = vpop.xlane.xlu0 %1233
      %v1235 = vsel %vm899, %v1225, -inf
      %1236 = vmax.xlane.f32.xlu0 %v1235
      %v1237 = vpop.xlane.xlu0 %1236
      %v1238 = vsel %vm899, %v1226, -inf
      %1239 = vmax.xlane.f32.xlu0 %v1238
      %v1240 = vpop.xlane.xlu0 %1239
      %v1241 = vsel %vm899, %v1227, -inf
      %1242 = vmax.xlane.f32.xlu0 %v1241
      %v1243 = vpop.xlane.xlu0 %1242
      %v1244 = vsel %vm899, %v1228, -inf
      %1245 = vmax.xlane.f32.xlu0 %v1244
      %v1246 = vpop.xlane.xlu0 %1245
      %v1247 = vsel %vm899, %v1229, -inf
      %1248 = vmax.xlane.f32.xlu0 %v1247
      %v1249 = vpop.xlane.xlu0 %1248
      %v1250 = vsel %vm899, %v1230, -inf
      %1251 = vmax.xlane.f32.xlu0 %v1250
      %v1252 = vpop.xlane.xlu0 %1251
      %v1253 = vsel %vm899, %v1231, -inf
      %1254 = vmax.xlane.f32.xlu0 %v1253
      %v1255 = vpop.xlane.xlu0 %1254
      %v1256 = vsub.f32 %v1224, %v1234
      %v1257 = vsub.f32 %v1225, %v1237
      %v1258 = vsub.f32 %v1226, %v1240
      %v1259 = vsub.f32 %v1227, %v1243
      %v1260 = vsub.f32 %v1228, %v1246
      %v1261 = vsub.f32 %v1229, %v1249
      %v1262 = vsub.f32 %v1230, %v1252
      %v1263 = vsub.f32 %v1231, %v1255
      %v1264 = vmul.f32 %v1256, 1.442695
      %v1265 = vpow.pop %v1264
      %v1266 = vmul.f32 %v1257, 1.442695
      %v1267 = vpow.pop %v1266
      %v1268 = vmul.f32 %v1258, 1.442695
      %v1269 = vpow.pop %v1268
      %v1270 = vmul.f32 %v1259, 1.442695
      %v1271 = vpow.pop %v1270
      %v1272 = vmul.f32 %v1260, 1.442695
      %v1273 = vpow.pop %v1272
      %v1274 = vmul.f32 %v1261, 1.442695
      %v1275 = vpow.pop %v1274
      %v1276 = vmul.f32 %v1262, 1.442695
      %v1277 = vpow.pop %v1276
      %v1278 = vmul.f32 %v1263, 1.442695
      %v1279 = vpow.pop %v1278
      %v1280 = vsel %vm899, %v1265, 0.0
      %1281 = vadd.xlane.f32.xlu0 %v1280
      %v1282 = vpop.xlane.xlu0 %1281
      %v1283 = vsel %vm899, %v1267, 0.0
      %1284 = vadd.xlane.f32.xlu0 %v1283
      %v1285 = vpop.xlane.xlu0 %1284
      %v1286 = vsel %vm899, %v1269, 0.0
      %1287 = vadd.xlane.f32.xlu0 %v1286
      %v1288 = vpop.xlane.xlu0 %1287
      %v1289 = vsel %vm899, %v1271, 0.0
      %1290 = vadd.xlane.f32.xlu0 %v1289
      %v1291 = vpop.xlane.xlu0 %1290
      %v1292 = vsel %vm899, %v1273, 0.0
      %1293 = vadd.xlane.f32.xlu0 %v1292
      %v1294 = vpop.xlane.xlu0 %1293
      %v1295 = vsel %vm899, %v1275, 0.0
      %1296 = vadd.xlane.f32.xlu0 %v1295
      %v1297 = vpop.xlane.xlu0 %1296
      %v1298 = vsel %vm899, %v1277, 0.0
      %1299 = vadd.xlane.f32.xlu0 %v1298
      %v1300 = vpop.xlane.xlu0 %1299
      %v1301 = vsel %vm899, %v1279, 0.0
      %1302 = vadd.xlane.f32.xlu0 %v1301
      %v1303 = vpop.xlane.xlu0 %1302
      %v1304 = vrcp.pop %v1282
      %v1305 = vmul.f32 %v1282, %v1304
      %v1306 = vsub.f32 1.0, %v1305
      %v1307 = vmul.f32 %v1304, %v1306
      %v1308 = vadd.f32 %v1304, %v1307
      %vm1309 = vweird.f32 %v1282
      %vm1310 = vweird.f32 %v1304
      %vm1311 = vmor %vm1309, %vm1310
      %v1312 = vsel %vm1311, %v1304, %v1308
      %v1313 = vand.u32 2147483647, %v1282
      %vm1314 = vcmp.eq.f32.partialorder %v1313, 8.507059e+37
      %v1315 = vand.u32 %v1282, 2147483648
      %v1316 = vor.u32 1.1754944e-38, %v1315
      %v1317 = vsel %vm1314, %v1316, %v1312
      %v1318 = vmul.f32 %v1265, %v1317
      %v1319 = vrcp.pop %v1285
      %v1320 = vmul.f32 %v1285, %v1319
      %v1321 = vsub.f32 1.0, %v1320
      %v1322 = vmul.f32 %v1319, %v1321
      %v1323 = vadd.f32 %v1319, %v1322
      %vm1324 = vweird.f32 %v1285
      %vm1325 = vweird.f32 %v1319
      %vm1326 = vmor %vm1324, %vm1325
      %v1327 = vsel %vm1326, %v1319, %v1323
      %v1328 = vand.u32 2147483647, %v1285
      %vm1329 = vcmp.eq.f32.partialorder %v1328, 8.507059e+37
      %v1330 = vand.u32 %v1285, 2147483648
      %v1331 = vor.u32 1.1754944e-38, %v1330
      %v1332 = vsel %vm1329, %v1331, %v1327
      %v1333 = vmul.f32 %v1267, %v1332
      %v1334 = vrcp.pop %v1288
      %v1335 = vmul.f32 %v1288, %v1334
      %v1336 = vsub.f32 1.0, %v1335
      %v1337 = vmul.f32 %v1334, %v1336
      %v1338 = vadd.f32 %v1334, %v1337
      %vm1339 = vweird.f32 %v1288
      %vm1340 = vweird.f32 %v1334
      %vm1341 = vmor %vm1339, %vm1340
      %v1342 = vsel %vm1341, %v1334, %v1338
      %v1343 = vand.u32 2147483647, %v1288
      %vm1344 = vcmp.eq.f32.partialorder %v1343, 8.507059e+37
      %v1345 = vand.u32 %v1288, 2147483648
      %v1346 = vor.u32 1.1754944e-38, %v1345
      %v1347 = vsel %vm1344, %v1346, %v1342
      %v1348 = vmul.f32 %v1269, %v1347
      %v1349 = vrcp.pop %v1291
      %v1350 = vmul.f32 %v1291, %v1349
      %v1351 = vsub.f32 1.0, %v1350
      %v1352 = vmul.f32 %v1349, %v1351
      %v1353 = vadd.f32 %v1349, %v1352
      %vm1354 = vweird.f32 %v1291
      %vm1355 = vweird.f32 %v1349
      %vm1356 = vmor %vm1354, %vm1355
      %v1357 = vsel %vm1356, %v1349, %v1353
      %v1358 = vand.u32 2147483647, %v1291
      %vm1359 = vcmp.eq.f32.partialorder %v1358, 8.507059e+37
      %v1360 = vand.u32 %v1291, 2147483648
      %v1361 = vor.u32 1.1754944e-38, %v1360
      %v1362 = vsel %vm1359, %v1361, %v1357
      %v1363 = vmul.f32 %v1271, %v1362
      %v1364 = vrcp.pop %v1294
      %v1365 = vmul.f32 %v1294, %v1364
      %v1366 = vsub.f32 1.0, %v1365
      %v1367 = vmul.f32 %v1364, %v1366
      %v1368 = vadd.f32 %v1364, %v1367
      %vm1369 = vweird.f32 %v1294
      %vm1370 = vweird.f32 %v1364
      %vm1371 = vmor %vm1369, %vm1370
      %v1372 = vsel %vm1371, %v1364, %v1368
      %v1373 = vand.u32 2147483647, %v1294
      %vm1374 = vcmp.eq.f32.partialorder %v1373, 8.507059e+37
      %v1375 = vand.u32 %v1294, 2147483648
      %v1376 = vor.u32 1.1754944e-38, %v1375
      %v1377 = vsel %vm1374, %v1376, %v1372
      %v1378 = vmul.f32 %v1273, %v1377
      %v1379 = vrcp.pop %v1297
      %v1380 = vmul.f32 %v1297, %v1379
      %v1381 = vsub.f32 1.0, %v1380
      %v1382 = vmul.f32 %v1379, %v1381
      %v1383 = vadd.f32 %v1379, %v1382
      %vm1384 = vweird.f32 %v1297
      %vm1385 = vweird.f32 %v1379
      %vm1386 = vmor %vm1384, %vm1385
      %v1387 = vsel %vm1386, %v1379, %v1383
      %v1388 = vand.u32 2147483647, %v1297
      %vm1389 = vcmp.eq.f32.partialorder %v1388, 8.507059e+37
      %v1390 = vand.u32 %v1297, 2147483648
      %v1391 = vor.u32 1.1754944e-38, %v1390
      %v1392 = vsel %vm1389, %v1391, %v1387
      %v1393 = vmul.f32 %v1275, %v1392
      %v1394 = vrcp.pop %v1300
      %v1395 = vmul.f32 %v1300, %v1394
      %v1396 = vsub.f32 1.0, %v1395
      %v1397 = vmul.f32 %v1394, %v1396
      %v1398 = vadd.f32 %v1394, %v1397
      %vm1399 = vweird.f32 %v1300
      %vm1400 = vweird.f32 %v1394
      %vm1401 = vmor %vm1399, %vm1400
      %v1402 = vsel %vm1401, %v1394, %v1398
      %v1403 = vand.u32 2147483647, %v1300
      %vm1404 = vcmp.eq.f32.partialorder %v1403, 8.507059e+37
      %v1405 = vand.u32 %v1300, 2147483648
      %v1406 = vor.u32 1.1754944e-38, %v1405
      %v1407 = vsel %vm1404, %v1406, %v1402
      %v1408 = vmul.f32 %v1277, %v1407
      %v1409 = vrcp.pop %v1303
      %v1410 = vmul.f32 %v1303, %v1409
      %v1411 = vsub.f32 1.0, %v1410
      %v1412 = vmul.f32 %v1409, %v1411
      %v1413 = vadd.f32 %v1409, %v1412
      %vm1414 = vweird.f32 %v1303
      %vm1415 = vweird.f32 %v1409
      %vm1416 = vmor %vm1414, %vm1415
      %v1417 = vsel %vm1416, %v1409, %v1413
      %v1418 = vand.u32 2147483647, %v1303
      %vm1419 = vcmp.eq.f32.partialorder %v1418, 8.507059e+37
      %v1420 = vand.u32 %v1303, 2147483648
      %v1421 = vor.u32 1.1754944e-38, %v1420
      %v1422 = vsel %vm1419, %v1421, %v1417
      %v1423 = vmul.f32 %v1279, %v1422
      %v1424 = vpack.c.bf16 %v1333, %v1318
      %v1425 = vpack.c.bf16 %v1363, %v1348
      %v1426 = vpack.c.bf16 %v1393, %v1378
      %v1427 = vpack.c.bf16 %v1423, %v1408
      %1428 = vrot.lane.b32.xlu0 %v825, 48
      %v1429 = vpop.permute.xlu0 %1428
      %1430 = vrot.lane.b32.xlu0 %v826, 48
      %v1431 = vpop.permute.xlu0 %1430
      %1432 = vrot.lane.b32.xlu0 %v827, 48
      %v1433 = vpop.permute.xlu0 %1432
      %1434 = vrot.lane.b32.xlu0 %v828, 48
      %v1435 = vpop.permute.xlu0 %1434
      %v1441 = vsel %vm899, %v1424, 0
      %v1444 = vsel %vm899, %v1425, 0
      %v1447 = vsel %vm899, %v1426, 0
      %v1450 = vsel %vm899, %v1427, 0
      %1452 = vmatpush.bf16.msra.mxu0 0
      %1453 = vmatpush.bf16.msra.mxu0 0
      %1454 = vmatpush.bf16.msra.mxu0 0
      %1455 = vmatpush.bf16.msra.mxu0 0
      %1456 = vmatpush.bf16.msra.mxu0 %v1435
      %1457 = vmatpush.bf16.msra.mxu0 %v1433
      %1458 = vmatpush.bf16.msra.mxu0 %v1431
      %1459 = vmatpush.bf16.msra.mxu0 %v1429
      %1460 = vmatmul.bf16.gmra.mxu0 %v1441
      %v1461 = vpop.f32.mrf.mxu0
      %v1462 = vadd.f32 0.0, %v1461
      %v1463 = vpop.f32.mrf.mxu0
      %v1464 = vadd.f32 0.0, %v1463
      %1465 = vmatmul.bf16.gmra.mxu0 %v1444
      %v1466 = vpop.f32.mrf.mxu0
      %v1467 = vadd.f32 0.0, %v1466
      %v1468 = vpop.f32.mrf.mxu0
      %v1469 = vadd.f32 0.0, %v1468
      %1470 = vmatmul.bf16.gmra.mxu0 %v1447
      %v1471 = vpop.f32.mrf.mxu0
      %v1472 = vadd.f32 0.0, %v1471
      %v1473 = vpop.f32.mrf.mxu0
      %v1474 = vadd.f32 0.0, %v1473
      %1475 = vmatmul.bf16.gmra.mxu0 %v1450
      %v1476 = vpop.f32.mrf.mxu0
      %v1477 = vadd.f32 0.0, %v1476
      %v1478 = vpop.f32.mrf.mxu0
      %v1479 = vadd.f32 0.0, %v1478
      %1480 = vdwg.mxu0
      %v1481 = vpack.c.bf16 %v1464, %v1462
      %v1482 = vpack.c.bf16 %v1469, %v1467
      %v1483 = vpack.c.bf16 %v1474, %v1472
      %v1484 = vpack.c.bf16 %v1479, %v1477
      %v1485 = vld [vmem:[%s4 + $0x8] sm:$0xf]
      %v1486 = vld [vmem:[%s4 + $0xc] sm:$0xf]
      %v1489 = vunpack.c.l.b16 %v1485
      %v1490 = vunpack.c.l.b16 %v1486
      %v1491 = vpack.c.b16 %v1490, %v1489
      %v1494 = vsel %vm837, %v1481, 0
      %v1497 = vsel %vm837, %v1482, 0
      %v1500 = vsel %vm837, %v1483, 0
      %v1503 = vsel %vm837, %v1484, 0
      %1505 = vmatpush.bf16.msra.mxu0 0
      %1506 = vmatpush.bf16.msra.mxu0 0
      %1507 = vmatpush.bf16.msra.mxu0 0
      %1508 = vmatpush.bf16.msra.mxu0 0
      %1509 = vmatpush.bf16.msra.mxu0 0
      %1510 = vmatpush.bf16.msra.mxu0 0
      %1511 = vmatpush.bf16.msra.mxu0 0
      %1512 = vmatpush.bf16.msra.mxu0 %v1491
      %1513 = vmatmul.bf16.gmra.mxu0 %v1494
      %v1514 = vpop.f32.mrf.mxu0
      %v1515 = vadd.f32 0.0, %v1514
      %v1516 = vpop.f32.mrf.mxu0
      %v1517 = vadd.f32 0.0, %v1516
      %1518 = vmatmul.bf16.gmra.mxu0 %v1497
      %v1519 = vpop.f32.mrf.mxu0
      %v1520 = vadd.f32 0.0, %v1519
      %v1521 = vpop.f32.mrf.mxu0
      %v1522 = vadd.f32 0.0, %v1521
      %1523 = vmatmul.bf16.gmra.mxu0 %v1500
      %v1524 = vpop.f32.mrf.mxu0
      %v1525 = vadd.f32 0.0, %v1524
      %v1526 = vpop.f32.mrf.mxu0
      %v1527 = vadd.f32 0.0, %v1526
      %1528 = vmatmul.bf16.gmra.mxu0 %v1503
      %v1529 = vpop.f32.mrf.mxu0
      %v1530 = vadd.f32 0.0, %v1529
      %v1531 = vpop.f32.mrf.mxu0
      %v1532 = vadd.f32 0.0, %v1531
      %1533 = vdwg.mxu0
      %v1536 = vunpack.c.l.b16 %v1153
      %v1537 = vunpack.c.l.b16 %v1154
      %v1538 = vpack.c.b16 %v1537, %v1536
      %v1541 = vsel %vm837, %v1149, 0
      %v1544 = vsel %vm837, %v1150, 0
      %v1547 = vsel %vm837, %v1151, 0
      %v1550 = vsel %vm837, %v1152, 0
      %1552 = vmatpush.bf16.msra.mxu0 0
      %1553 = vmatpush.bf16.msra.mxu0 0
      %1554 = vmatpush.bf16.msra.mxu0 0
      %1555 = vmatpush.bf16.msra.mxu0 0
      %1556 = vmatpush.bf16.msra.mxu0 0
      %1557 = vmatpush.bf16.msra.mxu0 0
      %1558 = vmatpush.bf16.msra.mxu0 0
      %1559 = vmatpush.bf16.msra.mxu0 %v1538
      %1560 = vmatmul.bf16.gmra.mxu0 %v1541
      %v1561 = vpop.f32.mrf.mxu0
      %v1562 = vadd.f32 %v1515, %v1561
      %v1563 = vpop.f32.mrf.mxu0
      %v1564 = vadd.f32 %v1517, %v1563
      %1565 = vmatmul.bf16.gmra.mxu0 %v1544
      %v1566 = vpop.f32.mrf.mxu0
      %v1567 = vadd.f32 %v1520, %v1566
      %v1568 = vpop.f32.mrf.mxu0
      %v1569 = vadd.f32 %v1522, %v1568
      %1570 = vmatmul.bf16.gmra.mxu0 %v1547
      %v1571 = vpop.f32.mrf.mxu0
      %v1572 = vadd.f32 %v1525, %v1571
      %v1573 = vpop.f32.mrf.mxu0
      %v1574 = vadd.f32 %v1527, %v1573
      %1575 = vmatmul.bf16.gmra.mxu0 %v1550
      %v1576 = vpop.f32.mrf.mxu0
      %v1577 = vadd.f32 %v1530, %v1576
      %v1578 = vpop.f32.mrf.mxu0
      %v1579 = vadd.f32 %v1532, %v1578
      %1580 = vdwg.mxu0
      %v1581 = vld [vmem:[%s5] sm:$0x1]
      %v1583 = vperm.slane %v1581, 0
      %v1585 = vadd.f32 %v1562, %v1583
      %v1586 = vadd.f32 %v1564, %v1583
      %v1587 = vadd.f32 %v1567, %v1583
      %v1588 = vadd.f32 %v1569, %v1583
      %v1589 = vadd.f32 %v1572, %v1583
      %v1590 = vadd.f32 %v1574, %v1583
      %v1591 = vadd.f32 %v1577, %v1583
      %v1592 = vadd.f32 %v1579, %v1583
      %v1593 = vadd.f32 %v801, %v1585
      %v1594 = vadd.f32 %v802, %v1586
      %v1595 = vadd.f32 %v803, %v1587
      %v1596 = vadd.f32 %v804, %v1588
      %v1597 = vadd.f32 %v805, %v1589
      %v1598 = vadd.f32 %v806, %v1590
      %v1599 = vadd.f32 %v807, %v1591
      %v1600 = vadd.f32 %v808, %v1592
      %v1601 = vsel %vm751, %v1593, 0.0
      %1602 = vadd.xlane.f32.xlu0 %v1601
      %v1603 = vpop.xlane.xlu0 %1602
      %v1604 = vsel %vm751, %v1594, 0.0
      %1605 = vadd.xlane.f32.xlu0 %v1604
      %v1606 = vpop.xlane.xlu0 %1605
      %v1607 = vsel %vm751, %v1595, 0.0
      %1608 = vadd.xlane.f32.xlu0 %v1607
      %v1609 = vpop.xlane.xlu0 %1608
      %v1610 = vsel %vm751, %v1596, 0.0
      %1611 = vadd.xlane.f32.xlu0 %v1610
      %v1612 = vpop.xlane.xlu0 %1611
      %v1613 = vsel %vm751, %v1597, 0.0
      %1614 = vadd.xlane.f32.xlu0 %v1613
      %v1615 = vpop.xlane.xlu0 %1614
      %v1616 = vsel %vm751, %v1598, 0.0
      %1617 = vadd.xlane.f32.xlu0 %v1616
      %v1618 = vpop.xlane.xlu0 %1617
      %v1619 = vsel %vm751, %v1599, 0.0
      %1620 = vadd.xlane.f32.xlu0 %v1619
      %v1621 = vpop.xlane.xlu0 %1620
      %v1622 = vsel %vm751, %v1600, 0.0
      %1623 = vadd.xlane.f32.xlu0 %v1622
      %v1624 = vpop.xlane.xlu0 %1623
      %v1625 = vrcp.pop 32.0
      %v1626 = vmul.f32 32.0, %v1625
      %v1627 = vsub.f32 1.0, %v1626
      %v1628 = vmul.f32 %v1625, %v1627
      %v1629 = vadd.f32 %v1625, %v1628
      %vm1630 = vweird.f32 %v1625
      %v1631 = vsel %vm1630, %v1625, %v1629
      %v1632 = vmul.f32 %v1603, %v1631
      %v1633 = vmul.f32 %v1606, %v1631
      %v1634 = vmul.f32 %v1609, %v1631
      %v1635 = vmul.f32 %v1612, %v1631
      %v1636 = vmul.f32 %v1615, %v1631
      %v1637 = vmul.f32 %v1618, %v1631
      %v1638 = vmul.f32 %v1621, %v1631
      %v1639 = vmul.f32 %v1624, %v1631
      %v1640 = vsub.f32 %v1593, %v1632
      %v1641 = vsub.f32 %v1594, %v1633
      %v1642 = vsub.f32 %v1595, %v1634
      %v1643 = vsub.f32 %v1596, %v1635
      %v1644 = vsub.f32 %v1597, %v1636
      %v1645 = vsub.f32 %v1598, %v1637
      %v1646 = vsub.f32 %v1599, %v1638
      %v1647 = vsub.f32 %v1600, %v1639
      %v1648 = vmul.f32 %v1640, %v1640
      %v1649 = vmul.f32 %v1641, %v1641
      %v1650 = vmul.f32 %v1642, %v1642
      %v1651 = vmul.f32 %v1643, %v1643
      %v1652 = vmul.f32 %v1644, %v1644
      %v1653 = vmul.f32 %v1645, %v1645
      %v1654 = vmul.f32 %v1646, %v1646
      %v1655 = vmul.f32 %v1647, %v1647
      %v1656 = vsel %vm751, %v1648, 0.0
      %1657 = vadd.xlane.f32.xlu0 %v1656
      %v1658 = vpop.xlane.xlu0 %1657
      %v1659 = vsel %vm751, %v1649, 0.0
      %1660 = vadd.xlane.f32.xlu0 %v1659
      %v1661 = vpop.xlane.xlu0 %1660
      %v1662 = vsel %vm751, %v1650, 0.0
      %1663 = vadd.xlane.f32.xlu0 %v1662
      %v1664 = vpop.xlane.xlu0 %1663
      %v1665 = vsel %vm751, %v1651, 0.0
      %1666 = vadd.xlane.f32.xlu0 %v1665
      %v1667 = vpop.xlane.xlu0 %1666
      %v1668 = vsel %vm751, %v1652, 0.0
      %1669 = vadd.xlane.f32.xlu0 %v1668
      %v1670 = vpop.xlane.xlu0 %1669
      %v1671 = vsel %vm751, %v1653, 0.0
      %1672 = vadd.xlane.f32.xlu0 %v1671
      %v1673 = vpop.xlane.xlu0 %1672
      %v1674 = vsel %vm751, %v1654, 0.0
      %1675 = vadd.xlane.f32.xlu0 %v1674
      %v1676 = vpop.xlane.xlu0 %1675
      %v1677 = vsel %vm751, %v1655, 0.0
      %1678 = vadd.xlane.f32.xlu0 %v1677
      %v1679 = vpop.xlane.xlu0 %1678
      %v1680 = vmul.f32 %v1658, %v1631
      %v1681 = vmul.f32 %v1661, %v1631
      %v1682 = vmul.f32 %v1664, %v1631
      %v1683 = vmul.f32 %v1667, %v1631
      %v1684 = vmul.f32 %v1670, %v1631
      %v1685 = vmul.f32 %v1673, %v1631
      %v1686 = vmul.f32 %v1676, %v1631
      %v1687 = vmul.f32 %v1679, %v1631
      %v1688 = vadd.f32 %v1680, 1e-05
      %v1689 = vadd.f32 %v1681, 1e-05
      %v1690 = vadd.f32 %v1682, 1e-05
      %v1691 = vadd.f32 %v1683, 1e-05
      %v1692 = vadd.f32 %v1684, 1e-05
      %v1693 = vadd.f32 %v1685, 1e-05
      %v1694 = vadd.f32 %v1686, 1e-05
      %v1695 = vadd.f32 %v1687, 1e-05
      %v1696 = vrsqrt.pop %v1688
      %v1697 = vmul.f32 %v1696, %v1688
      %v1698 = vmul.f32 %v1697, %v1696
      %v1699 = vmul.f32 0.5, %v1698
      %v1700 = vsub.f32 1.5, %v1699
      %v1701 = vmul.f32 %v1696, %v1700
      %vm1702 = vweird.f32 %v1688
      %vm1703 = vweird.f32 %v1696
      %vm1704 = vmor %vm1702, %vm1703
      %v1705 = vsel %vm1704, %v1696, %v1701
      %v1706 = vrsqrt.pop %v1689
      %v1707 = vmul.f32 %v1706, %v1689
      %v1708 = vmul.f32 %v1707, %v1706
      %v1709 = vmul.f32 0.5, %v1708
      %v1710 = vsub.f32 1.5, %v1709
      %v1711 = vmul.f32 %v1706, %v1710
      %vm1712 = vweird.f32 %v1689
      %vm1713 = vweird.f32 %v1706
      %vm1714 = vmor %vm1712, %vm1713
      %v1715 = vsel %vm1714, %v1706, %v1711
      %v1716 = vrsqrt.pop %v1690
      %v1717 = vmul.f32 %v1716, %v1690
      %v1718 = vmul.f32 %v1717, %v1716
      %v1719 = vmul.f32 0.5, %v1718
      %v1720 = vsub.f32 1.5, %v1719
      %v1721 = vmul.f32 %v1716, %v1720
      %vm1722 = vweird.f32 %v1690
      %vm1723 = vweird.f32 %v1716
      %vm1724 = vmor %vm1722, %vm1723
      %v1725 = vsel %vm1724, %v1716, %v1721
      %v1726 = vrsqrt.pop %v1691
      %v1727 = vmul.f32 %v1726, %v1691
      %v1728 = vmul.f32 %v1727, %v1726
      %v1729 = vmul.f32 0.5, %v1728
      %v1730 = vsub.f32 1.5, %v1729
      %v1731 = vmul.f32 %v1726, %v1730
      %vm1732 = vweird.f32 %v1691
      %vm1733 = vweird.f32 %v1726
      %vm1734 = vmor %vm1732, %vm1733
      %v1735 = vsel %vm1734, %v1726, %v1731
      %v1736 = vrsqrt.pop %v1692
      %v1737 = vmul.f32 %v1736, %v1692
      %v1738 = vmul.f32 %v1737, %v1736
      %v1739 = vmul.f32 0.5, %v1738
      %v1740 = vsub.f32 1.5, %v1739
      %v1741 = vmul.f32 %v1736, %v1740
      %vm1742 = vweird.f32 %v1692
      %vm1743 = vweird.f32 %v1736
      %vm1744 = vmor %vm1742, %vm1743
      %v1745 = vsel %vm1744, %v1736, %v1741
      %v1746 = vrsqrt.pop %v1693
      %v1747 = vmul.f32 %v1746, %v1693
      %v1748 = vmul.f32 %v1747, %v1746
      %v1749 = vmul.f32 0.5, %v1748
      %v1750 = vsub.f32 1.5, %v1749
      %v1751 = vmul.f32 %v1746, %v1750
      %vm1752 = vweird.f32 %v1693
      %vm1753 = vweird.f32 %v1746
      %vm1754 = vmor %vm1752, %vm1753
      %v1755 = vsel %vm1754, %v1746, %v1751
      %v1756 = vrsqrt.pop %v1694
      %v1757 = vmul.f32 %v1756, %v1694
      %v1758 = vmul.f32 %v1757, %v1756
      %v1759 = vmul.f32 0.5, %v1758
      %v1760 = vsub.f32 1.5, %v1759
      %v1761 = vmul.f32 %v1756, %v1760
      %vm1762 = vweird.f32 %v1694
      %vm1763 = vweird.f32 %v1756
      %vm1764 = vmor %vm1762, %vm1763
      %v1765 = vsel %vm1764, %v1756, %v1761
      %v1766 = vrsqrt.pop %v1695
      %v1767 = vmul.f32 %v1766, %v1695
      %v1768 = vmul.f32 %v1767, %v1766
      %v1769 = vmul.f32 0.5, %v1768
      %v1770 = vsub.f32 1.5, %v1769
      %v1771 = vmul.f32 %v1766, %v1770
      %vm1772 = vweird.f32 %v1695
      %vm1773 = vweird.f32 %v1766
      %vm1774 = vmor %vm1772, %vm1773
      %v1775 = vsel %vm1774, %v1766, %v1771
      %v1776 = vmul.f32 %v1640, %v1705
      %v1777 = vmul.f32 %v1641, %v1715
      %v1778 = vmul.f32 %v1642, %v1725
      %v1779 = vmul.f32 %v1643, %v1735
      %v1780 = vmul.f32 %v1644, %v1745
      %v1781 = vmul.f32 %v1645, %v1755
      %v1782 = vmul.f32 %v1646, %v1765
      %v1783 = vmul.f32 %v1647, %v1775
      %v1784 = vld [vmem:[%s6] sm:$0x1]
      %v1786 = vperm.slane %v1784, 0
      %v1788 = vmul.f32 %v1776, %v1786
      %v1789 = vmul.f32 %v1777, %v1786
      %v1790 = vmul.f32 %v1778, %v1786
      %v1791 = vmul.f32 %v1779, %v1786
      %v1792 = vmul.f32 %v1780, %v1786
      %v1793 = vmul.f32 %v1781, %v1786
      %v1794 = vmul.f32 %v1782, %v1786
      %v1795 = vmul.f32 %v1783, %v1786
      %v1796 = vld [vmem:[%s7] sm:$0x1]
      %v1798 = vperm.slane %v1796, 0
      %v1800 = vadd.f32 %v1788, %v1798
      %v1801 = vadd.f32 %v1789, %v1798
      %v1802 = vadd.f32 %v1790, %v1798
      %v1803 = vadd.f32 %v1791, %v1798
      %v1804 = vadd.f32 %v1792, %v1798
      %v1805 = vadd.f32 %v1793, %v1798
      %v1806 = vadd.f32 %v1794, %v1798
      %v1807 = vadd.f32 %v1795, %v1798
      %v1808 = vpack.c.bf16 %v1801, %v1800
      %v1809 = vpack.c.bf16 %v1803, %v1802
      %v1810 = vpack.c.bf16 %v1805, %v1804
      %v1811 = vpack.c.bf16 %v1807, %v1806
      %v1812 = vld [vmem:[%s8] sm:$0xf]
      %v1813 = vld [vmem:[%s8 + $0x4] sm:$0xf]
      %v1814 = vld [vmem:[%s8 + $0x8] sm:$0xf]
      %v1815 = vld [vmem:[%s8 + $0xc] sm:$0xf]
      %v1816 = vld [vmem:[%s9] sm:$0x1]
      %v1818 = vperm.slane %v1816, 0
      %v1824 = vunpack.c.l.b16 %v1812
      %v1825 = vunpack.c.l.b16 %v1813
      %v1826 = vunpack.c.l.b16 %v1814
      %v1827 = vunpack.c.l.b16 %v1815
      %v1828 = vpack.c.b16 %v1825, %v1824
      %v1829 = vpack.c.b16 %v1827, %v1826
      %v1833 = vsel %vm751, %v1808, 0
      %v1836 = vsel %vm751, %v1809, 0
      %v1839 = vsel %vm751, %v1810, 0
      %v1842 = vsel %vm751, %v1811, 0
      %1844 = vmatpush.bf16.msra.mxu0 0
      %1845 = vmatpush.bf16.msra.mxu0 0
      %1846 = vmatpush.bf16.msra.mxu0 0
      %1847 = vmatpush.bf16.msra.mxu0 0
      %1848 = vmatpush.bf16.msra.mxu0 0
      %1849 = vmatpush.bf16.msra.mxu0 0
      %1850 = vmatpush.bf16.msra.mxu0 %v1829
      %1851 = vmatpush.bf16.msra.mxu0 %v1828
      %1852 = vmatmul.bf16.gmra.mxu0 %v1833
      %v1853 = vpop.f32.mrf.mxu0
      %v1854 = vadd.f32 %v1818, %v1853
      %v1855 = vpop.f32.mrf.mxu0
      %v1856 = vadd.f32 %v1818, %v1855
      %1857 = vmatmul.bf16.gmra.mxu0 %v1836
      %v1858 = vpop.f32.mrf.mxu0
      %v1859 = vadd.f32 %v1818, %v1858
      %v1860 = vpop.f32.mrf.mxu0
      %v1861 = vadd.f32 %v1818, %v1860
      %1862 = vmatmul.bf16.gmra.mxu0 %v1839
      %v1863 = vpop.f32.mrf.mxu0
      %v1864 = vadd.f32 %v1818, %v1863
      %v1865 = vpop.f32.mrf.mxu0
      %v1866 = vadd.f32 %v1818, %v1865
      %1867 = vmatmul.bf16.gmra.mxu0 %v1842
      %v1868 = vpop.f32.mrf.mxu0
      %v1869 = vadd.f32 %v1818, %v1868
      %v1870 = vpop.f32.mrf.mxu0
      %v1871 = vadd.f32 %v1818, %v1870
      %1872 = vdwg.mxu0
      %v1873 = vpack.c.bf16 %v1854, %v1854
      %v1874 = vpack.c.bf16 %v1856, %v1856
      %v1875 = vpack.c.bf16 %v1859, %v1859
      %v1876 = vpack.c.bf16 %v1861, %v1861
      %v1877 = vpack.c.bf16 %v1864, %v1864
      %v1878 = vpack.c.bf16 %v1866, %v1866
      %v1879 = vpack.c.bf16 %v1869, %v1869
      %v1880 = vpack.c.bf16 %v1871, %v1871
      %v1881 = vld [vmem:[%s10] sm:$0xf]
      %v1882 = vld [vmem:[%s10 + $0x4] sm:$0xf]
      %v1883 = vld [vmem:[%s10 + $0x8] sm:$0xf]
      %v1884 = vld [vmem:[%s10 + $0xc] sm:$0xf]
      %v1885 = vld [vmem:[%s11] sm:$0x1]
      %v1887 = vperm.slane %v1885, 0
      %v1893 = vunpack.c.l.b16 %v1881
      %v1894 = vunpack.c.l.b16 %v1882
      %v1895 = vunpack.c.l.b16 %v1883
      %v1896 = vunpack.c.l.b16 %v1884
      %v1897 = vpack.c.b16 %v1894, %v1893
      %v1898 = vpack.c.b16 %v1896, %v1895
      %v1902 = vsel %vm751, %v710, 0
      %1904 = vmatpush.bf16.msra.mxu0 0
      %1905 = vmatpush.bf16.msra.mxu0 0
      %1906 = vmatpush.bf16.msra.mxu0 0
      %1907 = vmatpush.bf16.msra.mxu0 0
      %1908 = vmatpush.bf16.msra.mxu0 0
      %1909 = vmatpush.bf16.msra.mxu0 0
      %1910 = vmatpush.bf16.msra.mxu0 %v1898
      %1911 = vmatpush.bf16.msra.mxu0 %v1897
      %1912 = vmatmul.bf16.gmra.mxu0 %v1902
      %v1913 = vpop.f32.mrf.mxu0
      %v1914 = vadd.f32 %v1887, %v1913
      %v1915 = vpop.f32.mrf.mxu0
      %1916 = vdwg.mxu0
      %v1917 = vpack.c.bf16 %v1914, %v1914
      %v1926 = vunpack.c.l.b16 %v1873
      %v1927 = vunpack.c.l.b16 %v1874
      %v1928 = vunpack.c.l.b16 %v1875
      %v1929 = vunpack.c.l.b16 %v1876
      %v1930 = vunpack.c.l.b16 %v1877
      %v1931 = vunpack.c.l.b16 %v1878
      %v1932 = vunpack.c.l.b16 %v1879
      %v1933 = vunpack.c.l.b16 %v1880
      %v1934 = vpack.c.b16 %v1927, %v1926
      %v1935 = vpack.c.b16 %v1929, %v1928
      %v1936 = vpack.c.b16 %v1931, %v1930
      %v1937 = vpack.c.b16 %v1933, %v1932
      %v1939 = vsel %vm837, %v1934, 0
      %v1942 = vsel %vm837, %v1935, 0
      %v1945 = vsel %vm837, %v1936, 0
      %v1948 = vsel %vm837, %v1937, 0
      %v1951 = vsel %vm837, %v1917, 0
      %1953 = vmatpush.bf16.xpose.msra.mxu0 0
      %1954 = vmatpush.bf16.xpose.msra.mxu0 0
      %1955 = vmatpush.bf16.xpose.msra.mxu0 0
      %1956 = vmatpush.bf16.xpose.msra.mxu0 0
      %1957 = vmatpush.bf16.xpose.msra.mxu0 0
      %1958 = vmatpush.bf16.xpose.msra.mxu0 0
      %1959 = vmatpush.bf16.xpose.msra.mxu0 0
      %1960 = vmatpush.bf16.xpose.msra.mxu0 %v1951
      %1961 = vmatmul.bf16.gmra.mxu0 %v1939
      %v1962 = vpop.f32.mrf.mxu0
      %v1963 = vadd.f32 0.0, %v1962
      %v1964 = vpop.f32.mrf.mxu0
      %v1965 = vadd.f32 0.0, %v1964
      %1966 = vmatmul.bf16.gmra.mxu0 %v1942
      %v1967 = vpop.f32.mrf.mxu0
      %v1968 = vadd.f32 0.0, %v1967
      %v1969 = vpop.f32.mrf.mxu0
      %v1970 = vadd.f32 0.0, %v1969
      %1971 = vmatmul.bf16.gmra.mxu0 %v1945
      %v1972 = vpop.f32.mrf.mxu0
      %v1973 = vadd.f32 0.0, %v1972
      %v1974 = vpop.f32.mrf.mxu0
      %v1975 = vadd.f32 0.0, %v1974
      %1976 = vmatmul.bf16.gmra.mxu0 %v1948
      %v1977 = vpop.f32.mrf.mxu0
      %v1978 = vadd.f32 0.0, %v1977
      %v1979 = vpop.f32.mrf.mxu0
      %v1980 = vadd.f32 0.0, %v1979
      %1981 = vdwg.mxu0
      %v1982 = vmul.f32 %v1963, 0.25
      %v1983 = vmul.f32 %v1965, 0.25
      %v1984 = vmul.f32 %v1968, 0.25
      %v1985 = vmul.f32 %v1970, 0.25
      %v1986 = vmul.f32 %v1973, 0.25
      %v1987 = vmul.f32 %v1975, 0.25
      %v1988 = vmul.f32 %v1978, 0.25
      %v1989 = vmul.f32 %v1980, 0.25
      %vm1990 = vcmask 31744
      %v1991 = vsel %vm1990, %v1982, -inf
      %1992 = vmax.xlane.f32.xlu0 %v1991
      %v1993 = vpop.xlane.xlu0 %1992
      %v1994 = vsel %vm1990, %v1983, -inf
      %1995 = vmax.xlane.f32.xlu0 %v1994
      %v1996 = vpop.xlane.xlu0 %1995
      %v1997 = vsel %vm1990, %v1984, -inf
      %1998 = vmax.xlane.f32.xlu0 %v1997
      %v1999 = vpop.xlane.xlu0 %1998
      %v2000 = vsel %vm1990, %v1985, -inf
      %2001 = vmax.xlane.f32.xlu0 %v2000
      %v2002 = vpop.xlane.xlu0 %2001
      %v2003 = vsel %vm1990, %v1986, -inf
      %2004 = vmax.xlane.f32.xlu0 %v2003
      %v2005 = vpop.xlane.xlu0 %2004
      %v2006 = vsel %vm1990, %v1987, -inf
      %2007 = vmax.xlane.f32.xlu0 %v2006
      %v2008 = vpop.xlane.xlu0 %2007
      %v2009 = vsel %vm1990, %v1988, -inf
      %2010 = vmax.xlane.f32.xlu0 %v2009
      %v2011 = vpop.xlane.xlu0 %2010
      %v2012 = vsel %vm1990, %v1989, -inf
      %2013 = vmax.xlane.f32.xlu0 %v2012
      %v2014 = vpop.xlane.xlu0 %2013
      %v2015 = vsub.f32 %v1982, %v1993
      %v2016 = vsub.f32 %v1983, %v1996
      %v2017 = vsub.f32 %v1984, %v1999
      %v2018 = vsub.f32 %v1985, %v2002
      %v2019 = vsub.f32 %v1986, %v2005
      %v2020 = vsub.f32 %v1987, %v2008
      %v2021 = vsub.f32 %v1988, %v2011
      %v2022 = vsub.f32 %v1989, %v2014
      %v2023 = vmul.f32 %v2015, 1.442695
      %v2024 = vpow.pop %v2023
      %v2025 = vmul.f32 %v2016, 1.442695
      %v2026 = vpow.pop %v2025
      %v2027 = vmul.f32 %v2017, 1.442695
      %v2028 = vpow.pop %v2027
      %v2029 = vmul.f32 %v2018, 1.442695
      %v2030 = vpow.pop %v2029
      %v2031 = vmul.f32 %v2019, 1.442695
      %v2032 = vpow.pop %v2031
      %v2033 = vmul.f32 %v2020, 1.442695
      %v2034 = vpow.pop %v2033
      %v2035 = vmul.f32 %v2021, 1.442695
      %v2036 = vpow.pop %v2035
      %v2037 = vmul.f32 %v2022, 1.442695
      %v2038 = vpow.pop %v2037
      %v2039 = vsel %vm1990, %v2024, 0.0
      %2040 = vadd.xlane.f32.xlu0 %v2039
      %v2041 = vpop.xlane.xlu0 %2040
      %v2042 = vsel %vm1990, %v2026, 0.0
      %2043 = vadd.xlane.f32.xlu0 %v2042
      %v2044 = vpop.xlane.xlu0 %2043
      %v2045 = vsel %vm1990, %v2028, 0.0
      %2046 = vadd.xlane.f32.xlu0 %v2045
      %v2047 = vpop.xlane.xlu0 %2046
      %v2048 = vsel %vm1990, %v2030, 0.0
      %2049 = vadd.xlane.f32.xlu0 %v2048
      %v2050 = vpop.xlane.xlu0 %2049
      %v2051 = vsel %vm1990, %v2032, 0.0
      %2052 = vadd.xlane.f32.xlu0 %v2051
      %v2053 = vpop.xlane.xlu0 %2052
      %v2054 = vsel %vm1990, %v2034, 0.0
      %2055 = vadd.xlane.f32.xlu0 %v2054
      %v2056 = vpop.xlane.xlu0 %2055
      %v2057 = vsel %vm1990, %v2036, 0.0
      %2058 = vadd.xlane.f32.xlu0 %v2057
      %v2059 = vpop.xlane.xlu0 %2058
      %v2060 = vsel %vm1990, %v2038, 0.0
      %2061 = vadd.xlane.f32.xlu0 %v2060
      %v2062 = vpop.xlane.xlu0 %2061
      %v2063 = vrcp.pop %v2041
      %v2064 = vmul.f32 %v2041, %v2063
      %v2065 = vsub.f32 1.0, %v2064
      %v2066 = vmul.f32 %v2063, %v2065
      %v2067 = vadd.f32 %v2063, %v2066
      %vm2068 = vweird.f32 %v2041
      %vm2069 = vweird.f32 %v2063
      %vm2070 = vmor %vm2068, %vm2069
      %v2071 = vsel %vm2070, %v2063, %v2067
      %v2072 = vand.u32 2147483647, %v2041
      %vm2073 = vcmp.eq.f32.partialorder %v2072, 8.507059e+37
      %v2074 = vand.u32 %v2041, 2147483648
      %v2075 = vor.u32 1.1754944e-38, %v2074
      %v2076 = vsel %vm2073, %v2075, %v2071
      %v2077 = vmul.f32 %v2024, %v2076
      %v2078 = vrcp.pop %v2044
      %v2079 = vmul.f32 %v2044, %v2078
      %v2080 = vsub.f32 1.0, %v2079
      %v2081 = vmul.f32 %v2078, %v2080
      %v2082 = vadd.f32 %v2078, %v2081
      %vm2083 = vweird.f32 %v2044
      %vm2084 = vweird.f32 %v2078
      %vm2085 = vmor %vm2083, %vm2084
      %v2086 = vsel %vm2085, %v2078, %v2082
      %v2087 = vand.u32 2147483647, %v2044
      %vm2088 = vcmp.eq.f32.partialorder %v2087, 8.507059e+37
      %v2089 = vand.u32 %v2044, 2147483648
      %v2090 = vor.u32 1.1754944e-38, %v2089
      %v2091 = vsel %vm2088, %v2090, %v2086
      %v2092 = vmul.f32 %v2026, %v2091
      %v2093 = vrcp.pop %v2047
      %v2094 = vmul.f32 %v2047, %v2093
      %v2095 = vsub.f32 1.0, %v2094
      %v2096 = vmul.f32 %v2093, %v2095
      %v2097 = vadd.f32 %v2093, %v2096
      %vm2098 = vweird.f32 %v2047
      %vm2099 = vweird.f32 %v2093
      %vm2100 = vmor %vm2098, %vm2099
      %v2101 = vsel %vm2100, %v2093, %v2097
      %v2102 = vand.u32 2147483647, %v2047
      %vm2103 = vcmp.eq.f32.partialorder %v2102, 8.507059e+37
      %v2104 = vand.u32 %v2047, 2147483648
      %v2105 = vor.u32 1.1754944e-38, %v2104
      %v2106 = vsel %vm2103, %v2105, %v2101
      %v2107 = vmul.f32 %v2028, %v2106
      %v2108 = vrcp.pop %v2050
      %v2109 = vmul.f32 %v2050, %v2108
      %v2110 = vsub.f32 1.0, %v2109
      %v2111 = vmul.f32 %v2108, %v2110
      %v2112 = vadd.f32 %v2108, %v2111
      %vm2113 = vweird.f32 %v2050
      %vm2114 = vweird.f32 %v2108
      %vm2115 = vmor %vm2113, %vm2114
      %v2116 = vsel %vm2115, %v2108, %v2112
      %v2117 = vand.u32 2147483647, %v2050
      %vm2118 = vcmp.eq.f32.partialorder %v2117, 8.507059e+37
      %v2119 = vand.u32 %v2050, 2147483648
      %v2120 = vor.u32 1.1754944e-38, %v2119
      %v2121 = vsel %vm2118, %v2120, %v2116
      %v2122 = vmul.f32 %v2030, %v2121
      %v2123 = vrcp.pop %v2053
      %v2124 = vmul.f32 %v2053, %v2123
      %v2125 = vsub.f32 1.0, %v2124
      %v2126 = vmul.f32 %v2123, %v2125
      %v2127 = vadd.f32 %v2123, %v2126
      %vm2128 = vweird.f32 %v2053
      %vm2129 = vweird.f32 %v2123
      %vm2130 = vmor %vm2128, %vm2129
      %v2131 = vsel %vm2130, %v2123, %v2127
      %v2132 = vand.u32 2147483647, %v2053
      %vm2133 = vcmp.eq.f32.partialorder %v2132, 8.507059e+37
      %v2134 = vand.u32 %v2053, 2147483648
      %v2135 = vor.u32 1.1754944e-38, %v2134
      %v2136 = vsel %vm2133, %v2135, %v2131
      %v2137 = vmul.f32 %v2032, %v2136
      %v2138 = vrcp.pop %v2056
      %v2139 = vmul.f32 %v2056, %v2138
      %v2140 = vsub.f32 1.0, %v2139
      %v2141 = vmul.f32 %v2138, %v2140
      %v2142 = vadd.f32 %v2138, %v2141
      %vm2143 = vweird.f32 %v2056
      %vm2144 = vweird.f32 %v2138
      %vm2145 = vmor %vm2143, %vm2144
      %v2146 = vsel %vm2145, %v2138, %v2142
      %v2147 = vand.u32 2147483647, %v2056
      %vm2148 = vcmp.eq.f32.partialorder %v2147, 8.507059e+37
      %v2149 = vand.u32 %v2056, 2147483648
      %v2150 = vor.u32 1.1754944e-38, %v2149
      %v2151 = vsel %vm2148, %v2150, %v2146
      %v2152 = vmul.f32 %v2034, %v2151
      %v2153 = vrcp.pop %v2059
      %v2154 = vmul.f32 %v2059, %v2153
      %v2155 = vsub.f32 1.0, %v2154
      %v2156 = vmul.f32 %v2153, %v2155
      %v2157 = vadd.f32 %v2153, %v2156
      %vm2158 = vweird.f32 %v2059
      %vm2159 = vweird.f32 %v2153
      %vm2160 = vmor %vm2158, %vm2159
      %v2161 = vsel %vm2160, %v2153, %v2157
      %v2162 = vand.u32 2147483647, %v2059
      %vm2163 = vcmp.eq.f32.partialorder %v2162, 8.507059e+37
      %v2164 = vand.u32 %v2059, 2147483648
      %v2165 = vor.u32 1.1754944e-38, %v2164
      %v2166 = vsel %vm2163, %v2165, %v2161
      %v2167 = vmul.f32 %v2036, %v2166
      %v2168 = vrcp.pop %v2062
      %v2169 = vmul.f32 %v2062, %v2168
      %v2170 = vsub.f32 1.0, %v2169
      %v2171 = vmul.f32 %v2168, %v2170
      %v2172 = vadd.f32 %v2168, %v2171
      %vm2173 = vweird.f32 %v2062
      %vm2174 = vweird.f32 %v2168
      %vm2175 = vmor %vm2173, %vm2174
      %v2176 = vsel %vm2175, %v2168, %v2172
      %v2177 = vand.u32 2147483647, %v2062
      %vm2178 = vcmp.eq.f32.partialorder %v2177, 8.507059e+37
      %v2179 = vand.u32 %v2062, 2147483648
      %v2180 = vor.u32 1.1754944e-38, %v2179
      %v2181 = vsel %vm2178, %v2180, %v2176
      %v2182 = vmul.f32 %v2038, %v2181
      %v2183 = vpack.c.bf16 %v2092, %v2077
      %v2184 = vpack.c.bf16 %v2122, %v2107
      %v2185 = vpack.c.bf16 %v2152, %v2137
      %v2186 = vpack.c.bf16 %v2182, %v2167
      %v2188 = vunpack.c.l.b16 %v1917
      %v2189 = vpack.c.b16 %v2188, %v2188
      %2190 = vrot.lane.b32.xlu0 %v2189, 96
      %v2191 = vpop.permute.xlu0 %2190
      %v2193 = vsel %vm1990, %v2183, 0
      %v2196 = vsel %vm1990, %v2184, 0
      %v2199 = vsel %vm1990, %v2185, 0
      %v2202 = vsel %vm1990, %v2186, 0
      %vm2204 = vcmask 1041408
      %v2206 = vsel %vm2204, %v2191, 0
      %2208 = vmatpush.bf16.msra.mxu0 0
      %2209 = vmatpush.bf16.msra.mxu0 0
      %2210 = vmatpush.bf16.msra.mxu0 0
      %2211 = vmatpush.bf16.msra.mxu0 0
      %2212 = vmatpush.bf16.msra.mxu0 0
      %2213 = vmatpush.bf16.msra.mxu0 0
      %2214 = vmatpush.bf16.msra.mxu0 0
      %2215 = vmatpush.bf16.msra.mxu0 %v2206
      %2216 = vmatmul.bf16.gmra.mxu0 %v2193
      %v2217 = vpop.f32.mrf.mxu0
      %v2218 = vadd.f32 0.0, %v2217
      %v2219 = vpop.f32.mrf.mxu0
      %v2220 = vadd.f32 0.0, %v2219
      %2221 = vmatmul.bf16.gmra.mxu0 %v2196
      %v2222 = vpop.f32.mrf.mxu0
      %v2223 = vadd.f32 0.0, %v2222
      %v2224 = vpop.f32.mrf.mxu0
      %v2225 = vadd.f32 0.0, %v2224
      %2226 = vmatmul.bf16.gmra.mxu0 %v2199
      %v2227 = vpop.f32.mrf.mxu0
      %v2228 = vadd.f32 0.0, %v2227
      %v2229 = vpop.f32.mrf.mxu0
      %v2230 = vadd.f32 0.0, %v2229
      %2231 = vmatmul.bf16.gmra.mxu0 %v2202
      %v2232 = vpop.f32.mrf.mxu0
      %v2233 = vadd.f32 0.0, %v2232
      %v2234 = vpop.f32.mrf.mxu0
      %v2235 = vadd.f32 0.0, %v2234
      %2236 = vdwg.mxu0
      %v2237 = vpack.c.bf16 %v2220, %v2218
      %v2238 = vpack.c.bf16 %v2225, %v2223
      %v2239 = vpack.c.bf16 %v2230, %v2228
      %v2240 = vpack.c.bf16 %v2235, %v2233
      %v2241 = vld [vmem:[%s12] sm:$0xf]
      %v2242 = vld [vmem:[%s12 + $0x4] sm:$0xf]
      %2243 = vrot.lane.b32.xlu0 %v1934, 112
      %v2244 = vpop.permute.xlu0 %2243
      %2245 = vrot.lane.b32.xlu0 %v1935, 112
      %v2246 = vpop.permute.xlu0 %2245
      %2247 = vrot.lane.b32.xlu0 %v1936, 112
      %v2248 = vpop.permute.xlu0 %2247
      %2249 = vrot.lane.b32.xlu0 %v1937, 112
      %v2250 = vpop.permute.xlu0 %2249
      %2251 = vrot.lane.b32.xlu0 %v2189, 112
      %v2252 = vpop.permute.xlu0 %2251
      %v2254 = vsel %vm837, %v2244, 0
      %v2257 = vsel %vm837, %v2246, 0
      %v2260 = vsel %vm837, %v2248, 0
      %v2263 = vsel %vm837, %v2250, 0
      %v2266 = vsel %vm837, %v2252, 0
      %2268 = vmatpush.bf16.xpose.msra.mxu0 0
      %2269 = vmatpush.bf16.xpose.msra.mxu0 0
      %2270 = vmatpush.bf16.xpose.msra.mxu0 0
      %2271 = vmatpush.bf16.xpose.msra.mxu0 0
      %2272 = vmatpush.bf16.xpose.msra.mxu0 0
      %2273 = vmatpush.bf16.xpose.msra.mxu0 0
      %2274 = vmatpush.bf16.xpose.msra.mxu0 0
      %2275 = vmatpush.bf16.xpose.msra.mxu0 %v2266
      %2276 = vmatmul.bf16.gmra.mxu0 %v2254
      %v2277 = vpop.f32.mrf.mxu0
      %v2278 = vadd.f32 0.0, %v2277
      %v2279 = vpop.f32.mrf.mxu0
      %v2280 = vadd.f32 0.0, %v2279
      %2281 = vmatmul.bf16.gmra.mxu0 %v2257
      %v2282 = vpop.f32.mrf.mxu0
      %v2283 = vadd.f32 0.0, %v2282
      %v2284 = vpop.f32.mrf.mxu0
      %v2285 = vadd.f32 0.0, %v2284
      %2286 = vmatmul.bf16.gmra.mxu0 %v2260
      %v2287 = vpop.f32.mrf.mxu0
      %v2288 = vadd.f32 0.0, %v2287
      %v2289 = vpop.f32.mrf.mxu0
      %v2290 = vadd.f32 0.0, %v2289
      %2291 = vmatmul.bf16.gmra.mxu0 %v2263
      %v2292 = vpop.f32.mrf.mxu0
      %v2293 = vadd.f32 0.0, %v2292
      %v2294 = vpop.f32.mrf.mxu0
      %v2295 = vadd.f32 0.0, %v2294
      %2296 = vdwg.mxu0
      %v2297 = vmul.f32 %v2278, 0.25
      %v2298 = vmul.f32 %v2280, 0.25
      %v2299 = vmul.f32 %v2283, 0.25
      %v2300 = vmul.f32 %v2285, 0.25
      %v2301 = vmul.f32 %v2288, 0.25
      %v2302 = vmul.f32 %v2290, 0.25
      %v2303 = vmul.f32 %v2293, 0.25
      %v2304 = vmul.f32 %v2295, 0.25
      %v2305 = vsel %vm1990, %v2297, -inf
      %2306 = vmax.xlane.f32.xlu0 %v2305
      %v2307 = vpop.xlane.xlu0 %2306
      %v2308 = vsel %vm1990, %v2298, -inf
      %2309 = vmax.xlane.f32.xlu0 %v2308
      %v2310 = vpop.xlane.xlu0 %2309
      %v2311 = vsel %vm1990, %v2299, -inf
      %2312 = vmax.xlane.f32.xlu0 %v2311
      %v2313 = vpop.xlane.xlu0 %2312
      %v2314 = vsel %vm1990, %v2300, -inf
      %2315 = vmax.xlane.f32.xlu0 %v2314
      %v2316 = vpop.xlane.xlu0 %2315
      %v2317 = vsel %vm1990, %v2301, -inf
      %2318 = vmax.xlane.f32.xlu0 %v2317
      %v2319 = vpop.xlane.xlu0 %2318
      %v2320 = vsel %vm1990, %v2302, -inf
      %2321 = vmax.xlane.f32.xlu0 %v2320
      %v2322 = vpop.xlane.xlu0 %2321
      %v2323 = vsel %vm1990, %v2303, -inf
      %2324 = vmax.xlane.f32.xlu0 %v2323
      %v2325 = vpop.xlane.xlu0 %2324
      %v2326 = vsel %vm1990, %v2304, -inf
      %2327 = vmax.xlane.f32.xlu0 %v2326
      %v2328 = vpop.xlane.xlu0 %2327
      %v2329 = vsub.f32 %v2297, %v2307
      %v2330 = vsub.f32 %v2298, %v2310
      %v2331 = vsub.f32 %v2299, %v2313
      %v2332 = vsub.f32 %v2300, %v2316
      %v2333 = vsub.f32 %v2301, %v2319
      %v2334 = vsub.f32 %v2302, %v2322
      %v2335 = vsub.f32 %v2303, %v2325
      %v2336 = vsub.f32 %v2304, %v2328
      %v2337 = vmul.f32 %v2329, 1.442695
      %v2338 = vpow.pop %v2337
      %v2339 = vmul.f32 %v2330, 1.442695
      %v2340 = vpow.pop %v2339
      %v2341 = vmul.f32 %v2331, 1.442695
      %v2342 = vpow.pop %v2341
      %v2343 = vmul.f32 %v2332, 1.442695
      %v2344 = vpow.pop %v2343
      %v2345 = vmul.f32 %v2333, 1.442695
      %v2346 = vpow.pop %v2345
      %v2347 = vmul.f32 %v2334, 1.442695
      %v2348 = vpow.pop %v2347
      %v2349 = vmul.f32 %v2335, 1.442695
      %v2350 = vpow.pop %v2349
      %v2351 = vmul.f32 %v2336, 1.442695
      %v2352 = vpow.pop %v2351
      %v2353 = vsel %vm1990, %v2338, 0.0
      %2354 = vadd.xlane.f32.xlu0 %v2353
      %v2355 = vpop.xlane.xlu0 %2354
      %v2356 = vsel %vm1990, %v2340, 0.0
      %2357 = vadd.xlane.f32.xlu0 %v2356
      %v2358 = vpop.xlane.xlu0 %2357
      %v2359 = vsel %vm1990, %v2342, 0.0
      %2360 = vadd.xlane.f32.xlu0 %v2359
      %v2361 = vpop.xlane.xlu0 %2360
      %v2362 = vsel %vm1990, %v2344, 0.0
      %2363 = vadd.xlane.f32.xlu0 %v2362
      %v2364 = vpop.xlane.xlu0 %2363
      %v2365 = vsel %vm1990, %v2346, 0.0
      %2366 = vadd.xlane.f32.xlu0 %v2365
      %v2367 = vpop.xlane.xlu0 %2366
      %v2368 = vsel %vm1990, %v2348, 0.0
      %2369 = vadd.xlane.f32.xlu0 %v2368
      %v2370 = vpop.xlane.xlu0 %2369
      %v2371 = vsel %vm1990, %v2350, 0.0
      %2372 = vadd.xlane.f32.xlu0 %v2371
      %v2373 = vpop.xlane.xlu0 %2372
      %v2374 = vsel %vm1990, %v2352, 0.0
      %2375 = vadd.xlane.f32.xlu0 %v2374
      %v2376 = vpop.xlane.xlu0 %2375
      %v2377 = vrcp.pop %v2355
      %v2378 = vmul.f32 %v2355, %v2377
      %v2379 = vsub.f32 1.0, %v2378
      %v2380 = vmul.f32 %v2377, %v2379
      %v2381 = vadd.f32 %v2377, %v2380
      %vm2382 = vweird.f32 %v2355
      %vm2383 = vweird.f32 %v2377
      %vm2384 = vmor %vm2382, %vm2383
      %v2385 = vsel %vm2384, %v2377, %v2381
      %v2386 = vand.u32 2147483647, %v2355
      %vm2387 = vcmp.eq.f32.partialorder %v2386, 8.507059e+37
      %v2388 = vand.u32 %v2355, 2147483648
      %v2389 = vor.u32 1.1754944e-38, %v2388
      %v2390 = vsel %vm2387, %v2389, %v2385
      %v2391 = vmul.f32 %v2338, %v2390
      %v2392 = vrcp.pop %v2358
      %v2393 = vmul.f32 %v2358, %v2392
      %v2394 = vsub.f32 1.0, %v2393
      %v2395 = vmul.f32 %v2392, %v2394
      %v2396 = vadd.f32 %v2392, %v2395
      %vm2397 = vweird.f32 %v2358
      %vm2398 = vweird.f32 %v2392
      %vm2399 = vmor %vm2397, %vm2398
      %v2400 = vsel %vm2399, %v2392, %v2396
      %v2401 = vand.u32 2147483647, %v2358
      %vm2402 = vcmp.eq.f32.partialorder %v2401, 8.507059e+37
      %v2403 = vand.u32 %v2358, 2147483648
      %v2404 = vor.u32 1.1754944e-38, %v2403
      %v2405 = vsel %vm2402, %v2404, %v2400
      %v2406 = vmul.f32 %v2340, %v2405
      %v2407 = vrcp.pop %v2361
      %v2408 = vmul.f32 %v2361, %v2407
      %v2409 = vsub.f32 1.0, %v2408
      %v2410 = vmul.f32 %v2407, %v2409
      %v2411 = vadd.f32 %v2407, %v2410
      %vm2412 = vweird.f32 %v2361
      %vm2413 = vweird.f32 %v2407
      %vm2414 = vmor %vm2412, %vm2413
      %v2415 = vsel %vm2414, %v2407, %v2411
      %v2416 = vand.u32 2147483647, %v2361
      %vm2417 = vcmp.eq.f32.partialorder %v2416, 8.507059e+37
      %v2418 = vand.u32 %v2361, 2147483648
      %v2419 = vor.u32 1.1754944e-38, %v2418
      %v2420 = vsel %vm2417, %v2419, %v2415
      %v2421 = vmul.f32 %v2342, %v2420
      %v2422 = vrcp.pop %v2364
      %v2423 = vmul.f32 %v2364, %v2422
      %v2424 = vsub.f32 1.0, %v2423
      %v2425 = vmul.f32 %v2422, %v2424
      %v2426 = vadd.f32 %v2422, %v2425
      %vm2427 = vweird.f32 %v2364
      %vm2428 = vweird.f32 %v2422
      %vm2429 = vmor %vm2427, %vm2428
      %v2430 = vsel %vm2429, %v2422, %v2426
      %v2431 = vand.u32 2147483647, %v2364
      %vm2432 = vcmp.eq.f32.partialorder %v2431, 8.507059e+37
      %v2433 = vand.u32 %v2364, 2147483648
      %v2434 = vor.u32 1.1754944e-38, %v2433
      %v2435 = vsel %vm2432, %v2434, %v2430
      %v2436 = vmul.f32 %v2344, %v2435
      %v2437 = vrcp.pop %v2367
      %v2438 = vmul.f32 %v2367, %v2437
      %v2439 = vsub.f32 1.0, %v2438
      %v2440 = vmul.f32 %v2437, %v2439
      %v2441 = vadd.f32 %v2437, %v2440
      %vm2442 = vweird.f32 %v2367
      %vm2443 = vweird.f32 %v2437
      %vm2444 = vmor %vm2442, %vm2443
      %v2445 = vsel %vm2444, %v2437, %v2441
      %v2446 = vand.u32 2147483647, %v2367
      %vm2447 = vcmp.eq.f32.partialorder %v2446, 8.507059e+37
      %v2448 = vand.u32 %v2367, 2147483648
      %v2449 = vor.u32 1.1754944e-38, %v2448
      %v2450 = vsel %vm2447, %v2449, %v2445
      %v2451 = vmul.f32 %v2346, %v2450
      %v2452 = vrcp.pop %v2370
      %v2453 = vmul.f32 %v2370, %v2452
      %v2454 = vsub.f32 1.0, %v2453
      %v2455 = vmul.f32 %v2452, %v2454
      %v2456 = vadd.f32 %v2452, %v2455
      %vm2457 = vweird.f32 %v2370
      %vm2458 = vweird.f32 %v2452
      %vm2459 = vmor %vm2457, %vm2458
      %v2460 = vsel %vm2459, %v2452, %v2456
      %v2461 = vand.u32 2147483647, %v2370
      %vm2462 = vcmp.eq.f32.partialorder %v2461, 8.507059e+37
      %v2463 = vand.u32 %v2370, 2147483648
      %v2464 = vor.u32 1.1754944e-38, %v2463
      %v2465 = vsel %vm2462, %v2464, %v2460
      %v2466 = vmul.f32 %v2348, %v2465
      %v2467 = vrcp.pop %v2373
      %v2468 = vmul.f32 %v2373, %v2467
      %v2469 = vsub.f32 1.0, %v2468
      %v2470 = vmul.f32 %v2467, %v2469
      %v2471 = vadd.f32 %v2467, %v2470
      %vm2472 = vweird.f32 %v2373
      %vm2473 = vweird.f32 %v2467
      %vm2474 = vmor %vm2472, %vm2473
      %v2475 = vsel %vm2474, %v2467, %v2471
      %v2476 = vand.u32 2147483647, %v2373
      %vm2477 = vcmp.eq.f32.partialorder %v2476, 8.507059e+37
      %v2478 = vand.u32 %v2373, 2147483648
      %v2479 = vor.u32 1.1754944e-38, %v2478
      %v2480 = vsel %vm2477, %v2479, %v2475
      %v2481 = vmul.f32 %v2350, %v2480
      %v2482 = vrcp.pop %v2376
      %v2483 = vmul.f32 %v2376, %v2482
      %v2484 = vsub.f32 1.0, %v2483
      %v2485 = vmul.f32 %v2482, %v2484
      %v2486 = vadd.f32 %v2482, %v2485
      %vm2487 = vweird.f32 %v2376
      %vm2488 = vweird.f32 %v2482
      %vm2489 = vmor %vm2487, %vm2488
      %v2490 = vsel %vm2489, %v2482, %v2486
      %v2491 = vand.u32 2147483647, %v2376
      %vm2492 = vcmp.eq.f32.partialorder %v2491, 8.507059e+37
      %v2493 = vand.u32 %v2376, 2147483648
      %v2494 = vor.u32 1.1754944e-38, %v2493
      %v2495 = vsel %vm2492, %v2494, %v2490
      %v2496 = vmul.f32 %v2352, %v2495
      %v2497 = vpack.c.bf16 %v2406, %v2391
      %v2498 = vpack.c.bf16 %v2436, %v2421
      %v2499 = vpack.c.bf16 %v2466, %v2451
      %v2500 = vpack.c.bf16 %v2496, %v2481
      %2501 = vrot.lane.b32.xlu0 %v2189, 80
      %v2502 = vpop.permute.xlu0 %2501
      %v2504 = vsel %vm1990, %v2497, 0
      %v2507 = vsel %vm1990, %v2498, 0
      %v2510 = vsel %vm1990, %v2499, 0
      %v2513 = vsel %vm1990, %v2500, 0
      %v2516 = vsel %vm2204, %v2502, 0
      %2518 = vmatpush.bf16.msra.mxu0 0
      %2519 = vmatpush.bf16.msra.mxu0 0
      %2520 = vmatpush.bf16.msra.mxu0 0
      %2521 = vmatpush.bf16.msra.mxu0 0
      %2522 = vmatpush.bf16.msra.mxu0 0
      %2523 = vmatpush.bf16.msra.mxu0 0
      %2524 = vmatpush.bf16.msra.mxu0 0
      %2525 = vmatpush.bf16.msra.mxu0 %v2516
      %2526 = vmatmul.bf16.gmra.mxu0 %v2504
      %v2527 = vpop.f32.mrf.mxu0
      %v2528 = vadd.f32 0.0, %v2527
      %v2529 = vpop.f32.mrf.mxu0
      %v2530 = vadd.f32 0.0, %v2529
      %2531 = vmatmul.bf16.gmra.mxu0 %v2507
      %v2532 = vpop.f32.mrf.mxu0
      %v2533 = vadd.f32 0.0, %v2532
      %v2534 = vpop.f32.mrf.mxu0
      %v2535 = vadd.f32 0.0, %v2534
      %2536 = vmatmul.bf16.gmra.mxu0 %v2510
      %v2537 = vpop.f32.mrf.mxu0
      %v2538 = vadd.f32 0.0, %v2537
      %v2539 = vpop.f32.mrf.mxu0
      %v2540 = vadd.f32 0.0, %v2539
      %2541 = vmatmul.bf16.gmra.mxu0 %v2513
      %v2542 = vpop.f32.mrf.mxu0
      %v2543 = vadd.f32 0.0, %v2542
      %v2544 = vpop.f32.mrf.mxu0
      %v2545 = vadd.f32 0.0, %v2544
      %2546 = vdwg.mxu0
      %v2547 = vpack.c.bf16 %v2530, %v2528
      %v2548 = vpack.c.bf16 %v2535, %v2533
      %v2549 = vpack.c.bf16 %v2540, %v2538
      %v2550 = vpack.c.bf16 %v2545, %v2543
      %v2551 = vld [vmem:[%s12 + $0x8] sm:$0xf]
      %v2552 = vld [vmem:[%s12 + $0xc] sm:$0xf]
      %v2555 = vunpack.c.l.b16 %v2551
      %v2556 = vunpack.c.l.b16 %v2552
      %v2557 = vpack.c.b16 %v2556, %v2555
      %v2560 = vsel %vm837, %v2547, 0
      %v2563 = vsel %vm837, %v2548, 0
      %v2566 = vsel %vm837, %v2549, 0
      %v2569 = vsel %vm837, %v2550, 0
      %2571 = vmatpush.bf16.msra.mxu0 0
      %2572 = vmatpush.bf16.msra.mxu0 0
      %2573 = vmatpush.bf16.msra.mxu0 0
      %2574 = vmatpush.bf16.msra.mxu0 0
      %2575 = vmatpush.bf16.msra.mxu0 0
      %2576 = vmatpush.bf16.msra.mxu0 0
      %2577 = vmatpush.bf16.msra.mxu0 0
      %2578 = vmatpush.bf16.msra.mxu0 %v2557
      %2579 = vmatmul.bf16.gmra.mxu0 %v2560
      %v2580 = vpop.f32.mrf.mxu0
      %v2581 = vadd.f32 0.0, %v2580
      %v2582 = vpop.f32.mrf.mxu0
      %v2583 = vadd.f32 0.0, %v2582
      %2584 = vmatmul.bf16.gmra.mxu0 %v2563
      %v2585 = vpop.f32.mrf.mxu0
      %v2586 = vadd.f32 0.0, %v2585
      %v2587 = vpop.f32.mrf.mxu0
      %v2588 = vadd.f32 0.0, %v2587
      %2589 = vmatmul.bf16.gmra.mxu0 %v2566
      %v2590 = vpop.f32.mrf.mxu0
      %v2591 = vadd.f32 0.0, %v2590
      %v2592 = vpop.f32.mrf.mxu0
      %v2593 = vadd.f32 0.0, %v2592
      %2594 = vmatmul.bf16.gmra.mxu0 %v2569
      %v2595 = vpop.f32.mrf.mxu0
      %v2596 = vadd.f32 0.0, %v2595
      %v2597 = vpop.f32.mrf.mxu0
      %v2598 = vadd.f32 0.0, %v2597
      %2599 = vdwg.mxu0
      %v2602 = vunpack.c.l.b16 %v2241
      %v2603 = vunpack.c.l.b16 %v2242
      %v2604 = vpack.c.b16 %v2603, %v2602
      %v2607 = vsel %vm837, %v2237, 0
      %v2610 = vsel %vm837, %v2238, 0
      %v2613 = vsel %vm837, %v2239, 0
      %v2616 = vsel %vm837, %v2240, 0
      %2618 = vmatpush.bf16.msra.mxu0 0
      %2619 = vmatpush.bf16.msra.mxu0 0
      %2620 = vmatpush.bf16.msra.mxu0 0
      %2621 = vmatpush.bf16.msra.mxu0 0
      %2622 = vmatpush.bf16.msra.mxu0 0
      %2623 = vmatpush.bf16.msra.mxu0 0
      %2624 = vmatpush.bf16.msra.mxu0 0
      %2625 = vmatpush.bf16.msra.mxu0 %v2604
      %2626 = vmatmul.bf16.gmra.mxu0 %v2607
      %v2627 = vpop.f32.mrf.mxu0
      %v2628 = vadd.f32 %v2581, %v2627
      %v2629 = vpop.f32.mrf.mxu0
      %v2630 = vadd.f32 %v2583, %v2629
      %2631 = vmatmul.bf16.gmra.mxu0 %v2610
      %v2632 = vpop.f32.mrf.mxu0
      %v2633 = vadd.f32 %v2586, %v2632
      %v2634 = vpop.f32.mrf.mxu0
      %v2635 = vadd.f32 %v2588, %v2634
      %2636 = vmatmul.bf16.gmra.mxu0 %v2613
      %v2637 = vpop.f32.mrf.mxu0
      %v2638 = vadd.f32 %v2591, %v2637
      %v2639 = vpop.f32.mrf.mxu0
      %v2640 = vadd.f32 %v2593, %v2639
      %2641 = vmatmul.bf16.gmra.mxu0 %v2616
      %v2642 = vpop.f32.mrf.mxu0
      %v2643 = vadd.f32 %v2596, %v2642
      %v2644 = vpop.f32.mrf.mxu0
      %v2645 = vadd.f32 %v2598, %v2644
      %2646 = vdwg.mxu0
      %v2647 = vld [vmem:[%s13] sm:$0x1]
      %v2649 = vperm.slane %v2647, 0
      %v2651 = vadd.f32 %v2628, %v2649
      %v2652 = vadd.f32 %v2630, %v2649
      %v2653 = vadd.f32 %v2633, %v2649
      %v2654 = vadd.f32 %v2635, %v2649
      %v2655 = vadd.f32 %v2638, %v2649
      %v2656 = vadd.f32 %v2640, %v2649
      %v2657 = vadd.f32 %v2643, %v2649
      %v2658 = vadd.f32 %v2645, %v2649
      %v2659 = vadd.f32 %v1800, %v2651
      %v2660 = vadd.f32 %v1801, %v2652
      %v2661 = vadd.f32 %v1802, %v2653
      %v2662 = vadd.f32 %v1803, %v2654
      %v2663 = vadd.f32 %v1804, %v2655
      %v2664 = vadd.f32 %v1805, %v2656
      %v2665 = vadd.f32 %v1806, %v2657
      %v2666 = vadd.f32 %v1807, %v2658
      %v2667 = vsel %vm751, %v2659, 0.0
      %2668 = vadd.xlane.f32.xlu0 %v2667
      %v2669 = vpop.xlane.xlu0 %2668
      %v2670 = vsel %vm751, %v2660, 0.0
      %2671 = vadd.xlane.f32.xlu0 %v2670
      %v2672 = vpop.xlane.xlu0 %2671
      %v2673 = vsel %vm751, %v2661, 0.0
      %2674 = vadd.xlane.f32.xlu0 %v2673
      %v2675 = vpop.xlane.xlu0 %2674
      %v2676 = vsel %vm751, %v2662, 0.0
      %2677 = vadd.xlane.f32.xlu0 %v2676
      %v2678 = vpop.xlane.xlu0 %2677
      %v2679 = vsel %vm751, %v2663, 0.0
      %2680 = vadd.xlane.f32.xlu0 %v2679
      %v2681 = vpop.xlane.xlu0 %2680
      %v2682 = vsel %vm751, %v2664, 0.0
      %2683 = vadd.xlane.f32.xlu0 %v2682
      %v2684 = vpop.xlane.xlu0 %2683
      %v2685 = vsel %vm751, %v2665, 0.0
      %2686 = vadd.xlane.f32.xlu0 %v2685
      %v2687 = vpop.xlane.xlu0 %2686
      %v2688 = vsel %vm751, %v2666, 0.0
      %2689 = vadd.xlane.f32.xlu0 %v2688
      %v2690 = vpop.xlane.xlu0 %2689
      %v2691 = vmul.f32 %v2669, %v1631
      %v2692 = vmul.f32 %v2672, %v1631
      %v2693 = vmul.f32 %v2675, %v1631
      %v2694 = vmul.f32 %v2678, %v1631
      %v2695 = vmul.f32 %v2681, %v1631
      %v2696 = vmul.f32 %v2684, %v1631
      %v2697 = vmul.f32 %v2687, %v1631
      %v2698 = vmul.f32 %v2690, %v1631
      %v2699 = vsub.f32 %v2659, %v2691
      %v2700 = vsub.f32 %v2660, %v2692
      %v2701 = vsub.f32 %v2661, %v2693
      %v2702 = vsub.f32 %v2662, %v2694
      %v2703 = vsub.f32 %v2663, %v2695
      %v2704 = vsub.f32 %v2664, %v2696
      %v2705 = vsub.f32 %v2665, %v2697
      %v2706 = vsub.f32 %v2666, %v2698
      %v2707 = vmul.f32 %v2699, %v2699
      %v2708 = vmul.f32 %v2700, %v2700
      %v2709 = vmul.f32 %v2701, %v2701
      %v2710 = vmul.f32 %v2702, %v2702
      %v2711 = vmul.f32 %v2703, %v2703
      %v2712 = vmul.f32 %v2704, %v2704
      %v2713 = vmul.f32 %v2705, %v2705
      %v2714 = vmul.f32 %v2706, %v2706
      %v2715 = vsel %vm751, %v2707, 0.0
      %2716 = vadd.xlane.f32.xlu0 %v2715
      %v2717 = vpop.xlane.xlu0 %2716
      %v2718 = vsel %vm751, %v2708, 0.0
      %2719 = vadd.xlane.f32.xlu0 %v2718
      %v2720 = vpop.xlane.xlu0 %2719
      %v2721 = vsel %vm751, %v2709, 0.0
      %2722 = vadd.xlane.f32.xlu0 %v2721
      %v2723 = vpop.xlane.xlu0 %2722
      %v2724 = vsel %vm751, %v2710, 0.0
      %2725 = vadd.xlane.f32.xlu0 %v2724
      %v2726 = vpop.xlane.xlu0 %2725
      %v2727 = vsel %vm751, %v2711, 0.0
      %2728 = vadd.xlane.f32.xlu0 %v2727
      %v2729 = vpop.xlane.xlu0 %2728
      %v2730 = vsel %vm751, %v2712, 0.0
      %2731 = vadd.xlane.f32.xlu0 %v2730
      %v2732 = vpop.xlane.xlu0 %2731
      %v2733 = vsel %vm751, %v2713, 0.0
      %2734 = vadd.xlane.f32.xlu0 %v2733
      %v2735 = vpop.xlane.xlu0 %2734
      %v2736 = vsel %vm751, %v2714, 0.0
      %2737 = vadd.xlane.f32.xlu0 %v2736
      %v2738 = vpop.xlane.xlu0 %2737
      %v2739 = vmul.f32 %v2717, %v1631
      %v2740 = vmul.f32 %v2720, %v1631
      %v2741 = vmul.f32 %v2723, %v1631
      %v2742 = vmul.f32 %v2726, %v1631
      %v2743 = vmul.f32 %v2729, %v1631
      %v2744 = vmul.f32 %v2732, %v1631
      %v2745 = vmul.f32 %v2735, %v1631
      %v2746 = vmul.f32 %v2738, %v1631
      %v2747 = vadd.f32 %v2739, 1e-05
      %v2748 = vadd.f32 %v2740, 1e-05
      %v2749 = vadd.f32 %v2741, 1e-05
      %v2750 = vadd.f32 %v2742, 1e-05
      %v2751 = vadd.f32 %v2743, 1e-05
      %v2752 = vadd.f32 %v2744, 1e-05
      %v2753 = vadd.f32 %v2745, 1e-05
      %v2754 = vadd.f32 %v2746, 1e-05
      %v2755 = vrsqrt.pop %v2747
      %v2756 = vmul.f32 %v2755, %v2747
      %v2757 = vmul.f32 %v2756, %v2755
      %v2758 = vmul.f32 0.5, %v2757
      %v2759 = vsub.f32 1.5, %v2758
      %v2760 = vmul.f32 %v2755, %v2759
      %vm2761 = vweird.f32 %v2747
      %vm2762 = vweird.f32 %v2755
      %vm2763 = vmor %vm2761, %vm2762
      %v2764 = vsel %vm2763, %v2755, %v2760
      %v2765 = vrsqrt.pop %v2748
      %v2766 = vmul.f32 %v2765, %v2748
      %v2767 = vmul.f32 %v2766, %v2765
      %v2768 = vmul.f32 0.5, %v2767
      %v2769 = vsub.f32 1.5, %v2768
      %v2770 = vmul.f32 %v2765, %v2769
      %vm2771 = vweird.f32 %v2748
      %vm2772 = vweird.f32 %v2765
      %vm2773 = vmor %vm2771, %vm2772
      %v2774 = vsel %vm2773, %v2765, %v2770
      %v2775 = vrsqrt.pop %v2749
      %v2776 = vmul.f32 %v2775, %v2749
      %v2777 = vmul.f32 %v2776, %v2775
      %v2778 = vmul.f32 0.5, %v2777
      %v2779 = vsub.f32 1.5, %v2778
      %v2780 = vmul.f32 %v2775, %v2779
      %vm2781 = vweird.f32 %v2749
      %vm2782 = vweird.f32 %v2775
      %vm2783 = vmor %vm2781, %vm2782
      %v2784 = vsel %vm2783, %v2775, %v2780
      %v2785 = vrsqrt.pop %v2750
      %v2786 = vmul.f32 %v2785, %v2750
      %v2787 = vmul.f32 %v2786, %v2785
      %v2788 = vmul.f32 0.5, %v2787
      %v2789 = vsub.f32 1.5, %v2788
      %v2790 = vmul.f32 %v2785, %v2789
      %vm2791 = vweird.f32 %v2750
      %vm2792 = vweird.f32 %v2785
      %vm2793 = vmor %vm2791, %vm2792
      %v2794 = vsel %vm2793, %v2785, %v2790
      %v2795 = vrsqrt.pop %v2751
      %v2796 = vmul.f32 %v2795, %v2751
      %v2797 = vmul.f32 %v2796, %v2795
      %v2798 = vmul.f32 0.5, %v2797
      %v2799 = vsub.f32 1.5, %v2798
      %v2800 = vmul.f32 %v2795, %v2799
      %vm2801 = vweird.f32 %v2751
      %vm2802 = vweird.f32 %v2795
      %vm2803 = vmor %vm2801, %vm2802
      %v2804 = vsel %vm2803, %v2795, %v2800
      %v2805 = vrsqrt.pop %v2752
      %v2806 = vmul.f32 %v2805, %v2752
      %v2807 = vmul.f32 %v2806, %v2805
      %v2808 = vmul.f32 0.5, %v2807
      %v2809 = vsub.f32 1.5, %v2808
      %v2810 = vmul.f32 %v2805, %v2809
      %vm2811 = vweird.f32 %v2752
      %vm2812 = vweird.f32 %v2805
      %vm2813 = vmor %vm2811, %vm2812
      %v2814 = vsel %vm2813, %v2805, %v2810
      %v2815 = vrsqrt.pop %v2753
      %v2816 = vmul.f32 %v2815, %v2753
      %v2817 = vmul.f32 %v2816, %v2815
      %v2818 = vmul.f32 0.5, %v2817
      %v2819 = vsub.f32 1.5, %v2818
      %v2820 = vmul.f32 %v2815, %v2819
      %vm2821 = vweird.f32 %v2753
      %vm2822 = vweird.f32 %v2815
      %vm2823 = vmor %vm2821, %vm2822
      %v2824 = vsel %vm2823, %v2815, %v2820
      %v2825 = vrsqrt.pop %v2754
      %v2826 = vmul.f32 %v2825, %v2754
      %v2827 = vmul.f32 %v2826, %v2825
      %v2828 = vmul.f32 0.5, %v2827
      %v2829 = vsub.f32 1.5, %v2828
      %v2830 = vmul.f32 %v2825, %v2829
      %vm2831 = vweird.f32 %v2754
      %vm2832 = vweird.f32 %v2825
      %vm2833 = vmor %vm2831, %vm2832
      %v2834 = vsel %vm2833, %v2825, %v2830
      %v2835 = vmul.f32 %v2699, %v2764
      %v2836 = vmul.f32 %v2700, %v2774
      %v2837 = vmul.f32 %v2701, %v2784
      %v2838 = vmul.f32 %v2702, %v2794
      %v2839 = vmul.f32 %v2703, %v2804
      %v2840 = vmul.f32 %v2704, %v2814
      %v2841 = vmul.f32 %v2705, %v2824
      %v2842 = vmul.f32 %v2706, %v2834
      %v2843 = vld [vmem:[%s14] sm:$0x1]
      %v2845 = vperm.slane %v2843, 0
      %v2847 = vmul.f32 %v2835, %v2845
      %v2848 = vmul.f32 %v2836, %v2845
      %v2849 = vmul.f32 %v2837, %v2845
      %v2850 = vmul.f32 %v2838, %v2845
      %v2851 = vmul.f32 %v2839, %v2845
      %v2852 = vmul.f32 %v2840, %v2845
      %v2853 = vmul.f32 %v2841, %v2845
      %v2854 = vmul.f32 %v2842, %v2845
      %v2855 = vld [vmem:[%s15] sm:$0x1]
      %v2857 = vperm.slane %v2855, 0
      %v2859 = vadd.f32 %v2847, %v2857
      %v2860 = vadd.f32 %v2848, %v2857
      %v2861 = vadd.f32 %v2849, %v2857
      %v2862 = vadd.f32 %v2850, %v2857
      %v2863 = vadd.f32 %v2851, %v2857
      %v2864 = vadd.f32 %v2852, %v2857
      %v2865 = vadd.f32 %v2853, %v2857
      %v2866 = vadd.f32 %v2854, %v2857
      %v2867 = vpack.c.bf16 %v2860, %v2859
      %v2868 = vpack.c.bf16 %v2862, %v2861
      %v2869 = vpack.c.bf16 %v2864, %v2863
      %v2870 = vpack.c.bf16 %v2866, %v2865
      %v2871 = vld [vmem:[%s16] sm:$0xff]
      %v2872 = vld [vmem:[%s16 + $0x8] sm:$0xff]
      %v2873 = vld [vmem:[%s16 + $0x10] sm:$0xff]
      %v2874 = vld [vmem:[%s16 + $0x18] sm:$0xff]
      %v2875 = vld [vmem:[%s16 + $0x20] sm:$0xff]
      %v2876 = vld [vmem:[%s16 + $0x28] sm:$0xff]
      %v2877 = vld [vmem:[%s16 + $0x30] sm:$0xff]
      %v2878 = vld [vmem:[%s16 + $0x38] sm:$0xff]
      %v2879 = vld [vmem:[%s16 + $0x40] sm:$0xff]
      %v2880 = vld [vmem:[%s16 + $0x48] sm:$0xff]
      %v2881 = vld [vmem:[%s16 + $0x50] sm:$0xff]
      %v2882 = vld [vmem:[%s16 + $0x58] sm:$0xff]
      %v2883 = vld [vmem:[%s16 + $0x60] sm:$0xff]
      %v2884 = vld [vmem:[%s16 + $0x68] sm:$0xff]
      %v2885 = vld [vmem:[%s16 + $0x70] sm:$0xff]
      %v2886 = vld [vmem:[%s16 + $0x78] sm:$0xff]
      %v2887 = vld [vmem:[%s16 + $0x80] sm:$0xff]
      %v2888 = vld [vmem:[%s16 + $0x88] sm:$0xff]
      %v2889 = vld [vmem:[%s16 + $0x90] sm:$0xff]
      %v2890 = vld [vmem:[%s16 + $0x98] sm:$0xff]
      %v2891 = vld [vmem:[%s16 + $0xa0] sm:$0xff]
      %v2892 = vld [vmem:[%s16 + $0xa8] sm:$0xff]
      %v2893 = vld [vmem:[%s16 + $0xb0] sm:$0xff]
      %v2894 = vld [vmem:[%s16 + $0xb8] sm:$0xff]
      %v2895 = vld [vmem:[%s16 + $0xc0] sm:$0xff]
      %v2896 = vld [vmem:[%s16 + $0xc8] sm:$0xff]
      %v2897 = vld [vmem:[%s16 + $0xd0] sm:$0xff]
      %v2898 = vld [vmem:[%s16 + $0xd8] sm:$0xff]
      %v2899 = vld [vmem:[%s16 + $0xe0] sm:$0xff]
      %v2900 = vld [vmem:[%s16 + $0xe8] sm:$0xff]
      %v2901 = vld [vmem:[%s16 + $0xf0] sm:$0xff]
      %v2902 = vld [vmem:[%s16 + $0xf8] sm:$0xff]
      %v2903 = vld [vmem:[%s17] sm:$0xff]
      %v2904 = vld [vmem:[%s17 + $0x8] sm:$0xff]
      %v2907 = vperm.slane %v2903, 0
      %v2908 = vperm.slane %v2903, 1
      %v2909 = vperm.slane %v2903, 2
      %v2910 = vperm.slane %v2903, 3
      %v2911 = vperm.slane %v2903, 4
      %v2912 = vperm.slane %v2903, 5
      %v2913 = vperm.slane %v2903, 6
      %v2914 = vperm.slane %v2903, 7
      %v2915 = vperm.slane %v2904, 0
      %v2916 = vperm.slane %v2904, 1
      %v2917 = vperm.slane %v2904, 2
      %v2918 = vperm.slane %v2904, 3
      %v2919 = vperm.slane %v2904, 4
      %v2920 = vperm.slane %v2904, 5
      %v2921 = vperm.slane %v2904, 6
      %v2922 = vperm.slane %v2904, 7
      %v2971 = vunpack.c.l.b16 %v2871
      %v2972 = vunpack.c.h.b16 %v2871
      %v2973 = vunpack.c.l.b16 %v2872
      %v2974 = vunpack.c.h.b16 %v2872
      %v2975 = vunpack.c.l.b16 %v2873
      %v2976 = vunpack.c.h.b16 %v2873
      %v2977 = vunpack.c.l.b16 %v2874
      %v2978 = vunpack.c.h.b16 %v2874
      %v2979 = vunpack.c.l.b16 %v2875
      %v2980 = vunpack.c.h.b16 %v2875
      %v2981 = vunpack.c.l.b16 %v2876
      %v2982 = vunpack.c.h.b16 %v2876
      %v2983 = vunpack.c.l.b16 %v2877
      %v2984 = vunpack.c.h.b16 %v2877
      %v2985 = vunpack.c.l.b16 %v2878
      %v2986 = vunpack.c.h.b16 %v2878
      %v2987 = vunpack.c.l.b16 %v2879
      %v2988 = vunpack.c.h.b16 %v2879
      %v2989 = vunpack.c.l.b16 %v2880
      %v2990 = vunpack.c.h.b16 %v2880
      %v2991 = vunpack.c.l.b16 %v2881
      %v2992 = vunpack.c.h.b16 %v2881
      %v2993 = vunpack.c.l.b16 %v2882
      %v2994 = vunpack.c.h.b16 %v2882
      %v2995 = vunpack.c.l.b16 %v2883
      %v2996 = vunpack.c.h.b16 %v2883
      %v2997 = vunpack.c.l.b16 %v2884
      %v2998 = vunpack.c.h.b16 %v2884
      %v2999 = vunpack.c.l.b16 %v2885
      %v3000 = vunpack.c.h.b16 %v2885
      %v3001 = vunpack.c.l.b16 %v2886
      %v3002 = vunpack.c.h.b16 %v2886
      %v3003 = vunpack.c.l.b16 %v2887
      %v3004 = vunpack.c.h.b16 %v2887
      %v3005 = vunpack.c.l.b16 %v2888
      %v3006 = vunpack.c.h.b16 %v2888
      %v3007 = vunpack.c.l.b16 %v2889
      %v3008 = vunpack.c.h.b16 %v2889
      %v3009 = vunpack.c.l.b16 %v2890
      %v3010 = vunpack.c.h.b16 %v2890
      %v3011 = vunpack.c.l.b16 %v2891
      %v3012 = vunpack.c.h.b16 %v2891
      %v3013 = vunpack.c.l.b16 %v2892
      %v3014 = vunpack.c.h.b16 %v2892
      %v3015 = vunpack.c.l.b16 %v2893
      %v3016 = vunpack.c.h.b16 %v2893
      %v3017 = vunpack.c.l.b16 %v2894
      %v3018 = vunpack.c.h.b16 %v2894
      %v3019 = vunpack.c.l.b16 %v2895
      %v3020 = vunpack.c.h.b16 %v2895
      %v3021 = vunpack.c.l.b16 %v2896
      %v3022 = vunpack.c.h.b16 %v2896
      %v3023 = vunpack.c.l.b16 %v2897
      %v3024 = vunpack.c.h.b16 %v2897
      %v3025 = vunpack.c.l.b16 %v2898
      %v3026 = vunpack.c.h.b16 %v2898
      %v3027 = vunpack.c.l.b16 %v2899
      %v3028 = vunpack.c.h.b16 %v2899
      %v3029 = vunpack.c.l.b16 %v2900
      %v3030 = vunpack.c.h.b16 %v2900
      %v3031 = vunpack.c.l.b16 %v2901
      %v3032 = vunpack.c.h.b16 %v2901
      %v3033 = vunpack.c.l.b16 %v2902
      %v3034 = vunpack.c.h.b16 %v2902
      %v3035 = vpack.c.b16 %v2987, %v2971
      %v3036 = vpack.c.b16 %v2988, %v2972
      %v3037 = vpack.c.b16 %v2989, %v2973
      %v3038 = vpack.c.b16 %v2990, %v2974
      %v3039 = vpack.c.b16 %v2991, %v2975
      %v3040 = vpack.c.b16 %v2992, %v2976
      %v3041 = vpack.c.b16 %v2993, %v2977
      %v3042 = vpack.c.b16 %v2994, %v2978
      %v3043 = vpack.c.b16 %v2995, %v2979
      %v3044 = vpack.c.b16 %v2996, %v2980
      %v3045 = vpack.c.b16 %v2997, %v2981
      %v3046 = vpack.c.b16 %v2998, %v2982
      %v3047 = vpack.c.b16 %v2999, %v2983
      %v3048 = vpack.c.b16 %v3000, %v2984
      %v3049 = vpack.c.b16 %v3001, %v2985
      %v3050 = vpack.c.b16 %v3002, %v2986
      %v3051 = vpack.c.b16 %v3019, %v3003
      %v3052 = vpack.c.b16 %v3020, %v3004
      %v3053 = vpack.c.b16 %v3021, %v3005
      %v3054 = vpack.c.b16 %v3022, %v3006
      %v3055 = vpack.c.b16 %v3023, %v3007
      %v3056 = vpack.c.b16 %v3024, %v3008
      %v3057 = vpack.c.b16 %v3025, %v3009
      %v3058 = vpack.c.b16 %v3026, %v3010
      %v3059 = vpack.c.b16 %v3027, %v3011
      %v3060 = vpack.c.b16 %v3028, %v3012
      %v3061 = vpack.c.b16 %v3029, %v3013
      %v3062 = vpack.c.b16 %v3030, %v3014
      %v3063 = vpack.c.b16 %v3031, %v3015
      %v3064 = vpack.c.b16 %v3032, %v3016
      %v3065 = vpack.c.b16 %v3033, %v3017
      %v3066 = vpack.c.b16 %v3034, %v3018
      %v3100 = vsel %vm751, %v2867, 0
      %v3103 = vsel %vm751, %v2868, 0
      %v3106 = vsel %vm751, %v2869, 0
      %v3109 = vsel %vm751, %v2870, 0
      %3111 = vmatpush.bf16.msra.mxu0 0
      %3112 = vmatpush.bf16.msra.mxu0 0
      %3113 = vmatpush.bf16.msra.mxu0 0
      %3114 = vmatpush.bf16.msra.mxu0 0
      %3115 = vmatpush.bf16.msra.mxu0 0
      %3116 = vmatpush.bf16.msra.mxu0 0
      %3117 = vmatpush.bf16.msra.mxu0 %v3051
      %3118 = vmatpush.bf16.msra.mxu0 %v3035
      %3119 = vmatmul.bf16.gmra.mxu0 %v3100
      %v3120 = vpop.f32.mrf.mxu0
      %v3121 = vadd.f32 %v2907, %v3120
      %v3122 = vpop.f32.mrf.mxu0
      %v3123 = vadd.f32 %v2907, %v3122
      %3124 = vmatmul.bf16.gmra.mxu0 %v3103
      %v3125 = vpop.f32.mrf.mxu0
      %v3126 = vadd.f32 %v2907, %v3125
      %v3127 = vpop.f32.mrf.mxu0
      %v3128 = vadd.f32 %v2907, %v3127
      %3129 = vmatmul.bf16.gmra.mxu0 %v3106
      %v3130 = vpop.f32.mrf.mxu0
      %v3131 = vadd.f32 %v2907, %v3130
      %v3132 = vpop.f32.mrf.mxu0
      %v3133 = vadd.f32 %v2907, %v3132
      %3134 = vmatmul.bf16.gmra.mxu0 %v3109
      %v3135 = vpop.f32.mrf.mxu0
      %v3136 = vadd.f32 %v2907, %v3135
      %v3137 = vpop.f32.mrf.mxu0
      %v3138 = vadd.f32 %v2907, %v3137
      %3139 = vdwg.mxu0
      %3140 = vmatpush.bf16.msra.mxu0 0
      %3141 = vmatpush.bf16.msra.mxu0 0
      %3142 = vmatpush.bf16.msra.mxu0 0
      %3143 = vmatpush.bf16.msra.mxu0 0
      %3144 = vmatpush.bf16.msra.mxu0 0
      %3145 = vmatpush.bf16.msra.mxu0 0
      %3146 = vmatpush.bf16.msra.mxu0 %v3052
      %3147 = vmatpush.bf16.msra.mxu0 %v3036
      %3148 = vmatmul.bf16.gmra.mxu0 %v3100
      %v3149 = vpop.f32.mrf.mxu0
      %v3150 = vadd.f32 %v2908, %v3149
      %v3151 = vpop.f32.mrf.mxu0
      %v3152 = vadd.f32 %v2908, %v3151
      %3153 = vmatmul.bf16.gmra.mxu0 %v3103
      %v3154 = vpop.f32.mrf.mxu0
      %v3155 = vadd.f32 %v2908, %v3154
      %v3156 = vpop.f32.mrf.mxu0
      %v3157 = vadd.f32 %v2908, %v3156
      %3158 = vmatmul.bf16.gmra.mxu0 %v3106
      %v3159 = vpop.f32.mrf.mxu0
      %v3160 = vadd.f32 %v2908, %v3159
      %v3161 = vpop.f32.mrf.mxu0
      %v3162 = vadd.f32 %v2908, %v3161
      %3163 = vmatmul.bf16.gmra.mxu0 %v3109
      %v3164 = vpop.f32.mrf.mxu0
      %v3165 = vadd.f32 %v2908, %v3164
      %v3166 = vpop.f32.mrf.mxu0
      %v3167 = vadd.f32 %v2908, %v3166
      %3168 = vdwg.mxu0
      %3169 = vmatpush.bf16.msra.mxu0 0
      %3170 = vmatpush.bf16.msra.mxu0 0
      %3171 = vmatpush.bf16.msra.mxu0 0
      %3172 = vmatpush.bf16.msra.mxu0 0
      %3173 = vmatpush.bf16.msra.mxu0 0
      %3174 = vmatpush.bf16.msra.mxu0 0
      %3175 = vmatpush.bf16.msra.mxu0 %v3053
      %3176 = vmatpush.bf16.msra.mxu0 %v3037
      %3177 = vmatmul.bf16.gmra.mxu0 %v3100
      %v3178 = vpop.f32.mrf.mxu0
      %v3179 = vadd.f32 %v2909, %v3178
      %v3180 = vpop.f32.mrf.mxu0
      %v3181 = vadd.f32 %v2909, %v3180
      %3182 = vmatmul.bf16.gmra.mxu0 %v3103
      %v3183 = vpop.f32.mrf.mxu0
      %v3184 = vadd.f32 %v2909, %v3183
      %v3185 = vpop.f32.mrf.mxu0
      %v3186 = vadd.f32 %v2909, %v3185
      %3187 = vmatmul.bf16.gmra.mxu0 %v3106
      %v3188 = vpop.f32.mrf.mxu0
      %v3189 = vadd.f32 %v2909, %v3188
      %v3190 = vpop.f32.mrf.mxu0
      %v3191 = vadd.f32 %v2909, %v3190
      %3192 = vmatmul.bf16.gmra.mxu0 %v3109
      %v3193 = vpop.f32.mrf.mxu0
      %v3194 = vadd.f32 %v2909, %v3193
      %v3195 = vpop.f32.mrf.mxu0
      %v3196 = vadd.f32 %v2909, %v3195
      %3197 = vdwg.mxu0
      %3198 = vmatpush.bf16.msra.mxu0 0
      %3199 = vmatpush.bf16.msra.mxu0 0
      %3200 = vmatpush.bf16.msra.mxu0 0
      %3201 = vmatpush.bf16.msra.mxu0 0
      %3202 = vmatpush.bf16.msra.mxu0 0
      %3203 = vmatpush.bf16.msra.mxu0 0
      %3204 = vmatpush.bf16.msra.mxu0 %v3054
      %3205 = vmatpush.bf16.msra.mxu0 %v3038
      %3206 = vmatmul.bf16.gmra.mxu0 %v3100
      %v3207 = vpop.f32.mrf.mxu0
      %v3208 = vadd.f32 %v2910, %v3207
      %v3209 = vpop.f32.mrf.mxu0
      %v3210 = vadd.f32 %v2910, %v3209
      %3211 = vmatmul.bf16.gmra.mxu0 %v3103
      %v3212 = vpop.f32.mrf.mxu0
      %v3213 = vadd.f32 %v2910, %v3212
      %v3214 = vpop.f32.mrf.mxu0
      %v3215 = vadd.f32 %v2910, %v3214
      %3216 = vmatmul.bf16.gmra.mxu0 %v3106
      %v3217 = vpop.f32.mrf.mxu0
      %v3218 = vadd.f32 %v2910, %v3217
      %v3219 = vpop.f32.mrf.mxu0
      %v3220 = vadd.f32 %v2910, %v3219
      %3221 = vmatmul.bf16.gmra.mxu0 %v3109
      %v3222 = vpop.f32.mrf.mxu0
      %v3223 = vadd.f32 %v2910, %v3222
      %v3224 = vpop.f32.mrf.mxu0
      %v3225 = vadd.f32 %v2910, %v3224
      %3226 = vdwg.mxu0
      %3227 = vmatpush.bf16.msra.mxu0 0
      %3228 = vmatpush.bf16.msra.mxu0 0
      %3229 = vmatpush.bf16.msra.mxu0 0
      %3230 = vmatpush.bf16.msra.mxu0 0
      %3231 = vmatpush.bf16.msra.mxu0 0
      %3232 = vmatpush.bf16.msra.mxu0 0
      %3233 = vmatpush.bf16.msra.mxu0 %v3055
      %3234 = vmatpush.bf16.msra.mxu0 %v3039
      %3235 = vmatmul.bf16.gmra.mxu0 %v3100
      %v3236 = vpop.f32.mrf.mxu0
      %v3237 = vadd.f32 %v2911, %v3236
      %v3238 = vpop.f32.mrf.mxu0
      %v3239 = vadd.f32 %v2911, %v3238
      %3240 = vmatmul.bf16.gmra.mxu0 %v3103
      %v3241 = vpop.f32.mrf.mxu0
      %v3242 = vadd.f32 %v2911, %v3241
      %v3243 = vpop.f32.mrf.mxu0
      %v3244 = vadd.f32 %v2911, %v3243
      %3245 = vmatmul.bf16.gmra.mxu0 %v3106
      %v3246 = vpop.f32.mrf.mxu0
      %v3247 = vadd.f32 %v2911, %v3246
      %v3248 = vpop.f32.mrf.mxu0
      %v3249 = vadd.f32 %v2911, %v3248
      %3250 = vmatmul.bf16.gmra.mxu0 %v3109
      %v3251 = vpop.f32.mrf.mxu0
      %v3252 = vadd.f32 %v2911, %v3251
      %v3253 = vpop.f32.mrf.mxu0
      %v3254 = vadd.f32 %v2911, %v3253
      %3255 = vdwg.mxu0
      %3256 = vmatpush.bf16.msra.mxu0 0
      %3257 = vmatpush.bf16.msra.mxu0 0
      %3258 = vmatpush.bf16.msra.mxu0 0
      %3259 = vmatpush.bf16.msra.mxu0 0
      %3260 = vmatpush.bf16.msra.mxu0 0
      %3261 = vmatpush.bf16.msra.mxu0 0
      %3262 = vmatpush.bf16.msra.mxu0 %v3056
      %3263 = vmatpush.bf16.msra.mxu0 %v3040
      %3264 = vmatmul.bf16.gmra.mxu0 %v3100
      %v3265 = vpop.f32.mrf.mxu0
      %v3266 = vadd.f32 %v2912, %v3265
      %v3267 = vpop.f32.mrf.mxu0
      %v3268 = vadd.f32 %v2912, %v3267
      %3269 = vmatmul.bf16.gmra.mxu0 %v3103
      %v3270 = vpop.f32.mrf.mxu0
      %v3271 = vadd.f32 %v2912, %v3270
      %v3272 = vpop.f32.mrf.mxu0
      %v3273 = vadd.f32 %v2912, %v3272
      %3274 = vmatmul.bf16.gmra.mxu0 %v3106
      %v3275 = vpop.f32.mrf.mxu0
      %v3276 = vadd.f32 %v2912, %v3275
      %v3277 = vpop.f32.mrf.mxu0
      %v3278 = vadd.f32 %v2912, %v3277
      %3279 = vmatmul.bf16.gmra.mxu0 %v3109
      %v3280 = vpop.f32.mrf.mxu0
      %v3281 = vadd.f32 %v2912, %v3280
      %v3282 = vpop.f32.mrf.mxu0
      %v3283 = vadd.f32 %v2912, %v3282
      %3284 = vdwg.mxu0
      %3285 = vmatpush.bf16.msra.mxu0 0
      %3286 = vmatpush.bf16.msra.mxu0 0
      %3287 = vmatpush.bf16.msra.mxu0 0
      %3288 = vmatpush.bf16.msra.mxu0 0
      %3289 = vmatpush.bf16.msra.mxu0 0
      %3290 = vmatpush.bf16.msra.mxu0 0
      %3291 = vmatpush.bf16.msra.mxu0 %v3057
      %3292 = vmatpush.bf16.msra.mxu0 %v3041
      %3293 = vmatmul.bf16.gmra.mxu0 %v3100
      %v3294 = vpop.f32.mrf.mxu0
      %v3295 = vadd.f32 %v2913, %v3294
      %v3296 = vpop.f32.mrf.mxu0
      %v3297 = vadd.f32 %v2913, %v3296
      %3298 = vmatmul.bf16.gmra.mxu0 %v3103
      %v3299 = vpop.f32.mrf.mxu0
      %v3300 = vadd.f32 %v2913, %v3299
      %v3301 = vpop.f32.mrf.mxu0
      %v3302 = vadd.f32 %v2913, %v3301
      %3303 = vmatmul.bf16.gmra.mxu0 %v3106
      %v3304 = vpop.f32.mrf.mxu0
      %v3305 = vadd.f32 %v2913, %v3304
      %v3306 = vpop.f32.mrf.mxu0
      %v3307 = vadd.f32 %v2913, %v3306
      %3308 = vmatmul.bf16.gmra.mxu0 %v3109
      %v3309 = vpop.f32.mrf.mxu0
      %v3310 = vadd.f32 %v2913, %v3309
      %v3311 = vpop.f32.mrf.mxu0
      %v3312 = vadd.f32 %v2913, %v3311
      %3313 = vdwg.mxu0
      %3314 = vmatpush.bf16.msra.mxu0 0
      %3315 = vmatpush.bf16.msra.mxu0 0
      %3316 = vmatpush.bf16.msra.mxu0 0
      %3317 = vmatpush.bf16.msra.mxu0 0
      %3318 = vmatpush.bf16.msra.mxu0 0
      %3319 = vmatpush.bf16.msra.mxu0 0
      %3320 = vmatpush.bf16.msra.mxu0 %v3058
      %3321 = vmatpush.bf16.msra.mxu0 %v3042
      %3322 = vmatmul.bf16.gmra.mxu0 %v3100
      %v3323 = vpop.f32.mrf.mxu0
      %v3324 = vadd.f32 %v2914, %v3323
      %v3325 = vpop.f32.mrf.mxu0
      %v3326 = vadd.f32 %v2914, %v3325
      %3327 = vmatmul.bf16.gmra.mxu0 %v3103
      %v3328 = vpop.f32.mrf.mxu0
      %v3329 = vadd.f32 %v2914, %v3328
      %v3330 = vpop.f32.mrf.mxu0
      %v3331 = vadd.f32 %v2914, %v3330
      %3332 = vmatmul.bf16.gmra.mxu0 %v3106
      %v3333 = vpop.f32.mrf.mxu0
      %v3334 = vadd.f32 %v2914, %v3333
      %v3335 = vpop.f32.mrf.mxu0
      %v3336 = vadd.f32 %v2914, %v3335
      %3337 = vmatmul.bf16.gmra.mxu0 %v3109
      %v3338 = vpop.f32.mrf.mxu0
      %v3339 = vadd.f32 %v2914, %v3338
      %v3340 = vpop.f32.mrf.mxu0
      %v3341 = vadd.f32 %v2914, %v3340
      %3342 = vdwg.mxu0
      %3343 = vmatpush.bf16.msra.mxu0 0
      %3344 = vmatpush.bf16.msra.mxu0 0
      %3345 = vmatpush.bf16.msra.mxu0 0
      %3346 = vmatpush.bf16.msra.mxu0 0
      %3347 = vmatpush.bf16.msra.mxu0 0
      %3348 = vmatpush.bf16.msra.mxu0 0
      %3349 = vmatpush.bf16.msra.mxu0 %v3059
      %3350 = vmatpush.bf16.msra.mxu0 %v3043
      %3351 = vmatmul.bf16.gmra.mxu0 %v3100
      %v3352 = vpop.f32.mrf.mxu0
      %v3353 = vadd.f32 %v2915, %v3352
      %v3354 = vpop.f32.mrf.mxu0
      %v3355 = vadd.f32 %v2915, %v3354
      %3356 = vmatmul.bf16.gmra.mxu0 %v3103
      %v3357 = vpop.f32.mrf.mxu0
      %v3358 = vadd.f32 %v2915, %v3357
      %v3359 = vpop.f32.mrf.mxu0
      %v3360 = vadd.f32 %v2915, %v3359
      %3361 = vmatmul.bf16.gmra.mxu0 %v3106
      %v3362 = vpop.f32.mrf.mxu0
      %v3363 = vadd.f32 %v2915, %v3362
      %v3364 = vpop.f32.mrf.mxu0
      %v3365 = vadd.f32 %v2915, %v3364
      %3366 = vmatmul.bf16.gmra.mxu0 %v3109
      %v3367 = vpop.f32.mrf.mxu0
      %v3368 = vadd.f32 %v2915, %v3367
      %v3369 = vpop.f32.mrf.mxu0
      %v3370 = vadd.f32 %v2915, %v3369
      %3371 = vdwg.mxu0
      %3372 = vmatpush.bf16.msra.mxu0 0
      %3373 = vmatpush.bf16.msra.mxu0 0
      %3374 = vmatpush.bf16.msra.mxu0 0
      %3375 = vmatpush.bf16.msra.mxu0 0
      %3376 = vmatpush.bf16.msra.mxu0 0
      %3377 = vmatpush.bf16.msra.mxu0 0
      %3378 = vmatpush.bf16.msra.mxu0 %v3060
      %3379 = vmatpush.bf16.msra.mxu0 %v3044
      %3380 = vmatmul.bf16.gmra.mxu0 %v3100
      %v3381 = vpop.f32.mrf.mxu0
      %v3382 = vadd.f32 %v2916, %v3381
      %v3383 = vpop.f32.mrf.mxu0
      %v3384 = vadd.f32 %v2916, %v3383
      %3385 = vmatmul.bf16.gmra.mxu0 %v3103
      %v3386 = vpop.f32.mrf.mxu0
      %v3387 = vadd.f32 %v2916, %v3386
      %v3388 = vpop.f32.mrf.mxu0
      %v3389 = vadd.f32 %v2916, %v3388
      %3390 = vmatmul.bf16.gmra.mxu0 %v3106
      %v3391 = vpop.f32.mrf.mxu0
      %v3392 = vadd.f32 %v2916, %v3391
      %v3393 = vpop.f32.mrf.mxu0
      %v3394 = vadd.f32 %v2916, %v3393
      %3395 = vmatmul.bf16.gmra.mxu0 %v3109
      %v3396 = vpop.f32.mrf.mxu0
      %v3397 = vadd.f32 %v2916, %v3396
      %v3398 = vpop.f32.mrf.mxu0
      %v3399 = vadd.f32 %v2916, %v3398
      %3400 = vdwg.mxu0
      %3401 = vmatpush.bf16.msra.mxu0 0
      %3402 = vmatpush.bf16.msra.mxu0 0
      %3403 = vmatpush.bf16.msra.mxu0 0
      %3404 = vmatpush.bf16.msra.mxu0 0
      %3405 = vmatpush.bf16.msra.mxu0 0
      %3406 = vmatpush.bf16.msra.mxu0 0
      %3407 = vmatpush.bf16.msra.mxu0 %v3061
      %3408 = vmatpush.bf16.msra.mxu0 %v3045
      %3409 = vmatmul.bf16.gmra.mxu0 %v3100
      %v3410 = vpop.f32.mrf.mxu0
      %v3411 = vadd.f32 %v2917, %v3410
      %v3412 = vpop.f32.mrf.mxu0
      %v3413 = vadd.f32 %v2917, %v3412
      %3414 = vmatmul.bf16.gmra.mxu0 %v3103
      %v3415 = vpop.f32.mrf.mxu0
      %v3416 = vadd.f32 %v2917, %v3415
      %v3417 = vpop.f32.mrf.mxu0
      %v3418 = vadd.f32 %v2917, %v3417
      %3419 = vmatmul.bf16.gmra.mxu0 %v3106
      %v3420 = vpop.f32.mrf.mxu0
      %v3421 = vadd.f32 %v2917, %v3420
      %v3422 = vpop.f32.mrf.mxu0
      %v3423 = vadd.f32 %v2917, %v3422
      %3424 = vmatmul.bf16.gmra.mxu0 %v3109
      %v3425 = vpop.f32.mrf.mxu0
      %v3426 = vadd.f32 %v2917, %v3425
      %v3427 = vpop.f32.mrf.mxu0
      %v3428 = vadd.f32 %v2917, %v3427
      %3429 = vdwg.mxu0
      %3430 = vmatpush.bf16.msra.mxu0 0
      %3431 = vmatpush.bf16.msra.mxu0 0
      %3432 = vmatpush.bf16.msra.mxu0 0
      %3433 = vmatpush.bf16.msra.mxu0 0
      %3434 = vmatpush.bf16.msra.mxu0 0
      %3435 = vmatpush.bf16.msra.mxu0 0
      %3436 = vmatpush.bf16.msra.mxu0 %v3062
      %3437 = vmatpush.bf16.msra.mxu0 %v3046
      %3438 = vmatmul.bf16.gmra.mxu0 %v3100
      %v3439 = vpop.f32.mrf.mxu0
      %v3440 = vadd.f32 %v2918, %v3439
      %v3441 = vpop.f32.mrf.mxu0
      %v3442 = vadd.f32 %v2918, %v3441
      %3443 = vmatmul.bf16.gmra.mxu0 %v3103
      %v3444 = vpop.f32.mrf.mxu0
      %v3445 = vadd.f32 %v2918, %v3444
      %v3446 = vpop.f32.mrf.mxu0
      %v3447 = vadd.f32 %v2918, %v3446
      %3448 = vmatmul.bf16.gmra.mxu0 %v3106
      %v3449 = vpop.f32.mrf.mxu0
      %v3450 = vadd.f32 %v2918, %v3449
      %v3451 = vpop.f32.mrf.mxu0
      %v3452 = vadd.f32 %v2918, %v3451
      %3453 = vmatmul.bf16.gmra.mxu0 %v3109
      %v3454 = vpop.f32.mrf.mxu0
      %v3455 = vadd.f32 %v2918, %v3454
      %v3456 = vpop.f32.mrf.mxu0
      %v3457 = vadd.f32 %v2918, %v3456
      %3458 = vdwg.mxu0
      %3459 = vmatpush.bf16.msra.mxu0 0
      %3460 = vmatpush.bf16.msra.mxu0 0
      %3461 = vmatpush.bf16.msra.mxu0 0
      %3462 = vmatpush.bf16.msra.mxu0 0
      %3463 = vmatpush.bf16.msra.mxu0 0
      %3464 = vmatpush.bf16.msra.mxu0 0
      %3465 = vmatpush.bf16.msra.mxu0 %v3063
      %3466 = vmatpush.bf16.msra.mxu0 %v3047
      %3467 = vmatmul.bf16.gmra.mxu0 %v3100
      %v3468 = vpop.f32.mrf.mxu0
      %v3469 = vadd.f32 %v2919, %v3468
      %v3470 = vpop.f32.mrf.mxu0
      %v3471 = vadd.f32 %v2919, %v3470
      %3472 = vmatmul.bf16.gmra.mxu0 %v3103
      %v3473 = vpop.f32.mrf.mxu0
      %v3474 = vadd.f32 %v2919, %v3473
      %v3475 = vpop.f32.mrf.mxu0
      %v3476 = vadd.f32 %v2919, %v3475
      %3477 = vmatmul.bf16.gmra.mxu0 %v3106
      %v3478 = vpop.f32.mrf.mxu0
      %v3479 = vadd.f32 %v2919, %v3478
      %v3480 = vpop.f32.mrf.mxu0
      %v3481 = vadd.f32 %v2919, %v3480
      %3482 = vmatmul.bf16.gmra.mxu0 %v3109
      %v3483 = vpop.f32.mrf.mxu0
      %v3484 = vadd.f32 %v2919, %v3483
      %v3485 = vpop.f32.mrf.mxu0
      %v3486 = vadd.f32 %v2919, %v3485
      %3487 = vdwg.mxu0
      %3488 = vmatpush.bf16.msra.mxu0 0
      %3489 = vmatpush.bf16.msra.mxu0 0
      %3490 = vmatpush.bf16.msra.mxu0 0
      %3491 = vmatpush.bf16.msra.mxu0 0
      %3492 = vmatpush.bf16.msra.mxu0 0
      %3493 = vmatpush.bf16.msra.mxu0 0
      %3494 = vmatpush.bf16.msra.mxu0 %v3064
      %3495 = vmatpush.bf16.msra.mxu0 %v3048
      %3496 = vmatmul.bf16.gmra.mxu0 %v3100
      %v3497 = vpop.f32.mrf.mxu0
      %v3498 = vadd.f32 %v2920, %v3497
      %v3499 = vpop.f32.mrf.mxu0
      %v3500 = vadd.f32 %v2920, %v3499
      %3501 = vmatmul.bf16.gmra.mxu0 %v3103
      %v3502 = vpop.f32.mrf.mxu0
      %v3503 = vadd.f32 %v2920, %v3502
      %v3504 = vpop.f32.mrf.mxu0
      %v3505 = vadd.f32 %v2920, %v3504
      %3506 = vmatmul.bf16.gmra.mxu0 %v3106
      %v3507 = vpop.f32.mrf.mxu0
      %v3508 = vadd.f32 %v2920, %v3507
      %v3509 = vpop.f32.mrf.mxu0
      %v3510 = vadd.f32 %v2920, %v3509
      %3511 = vmatmul.bf16.gmra.mxu0 %v3109
      %v3512 = vpop.f32.mrf.mxu0
      %v3513 = vadd.f32 %v2920, %v3512
      %v3514 = vpop.f32.mrf.mxu0
      %v3515 = vadd.f32 %v2920, %v3514
      %3516 = vdwg.mxu0
      %3517 = vmatpush.bf16.msra.mxu0 0
      %3518 = vmatpush.bf16.msra.mxu0 0
      %3519 = vmatpush.bf16.msra.mxu0 0
      %3520 = vmatpush.bf16.msra.mxu0 0
      %3521 = vmatpush.bf16.msra.mxu0 0
      %3522 = vmatpush.bf16.msra.mxu0 0
      %3523 = vmatpush.bf16.msra.mxu0 %v3065
      %3524 = vmatpush.bf16.msra.mxu0 %v3049
      %3525 = vmatmul.bf16.gmra.mxu0 %v3100
      %v3526 = vpop.f32.mrf.mxu0
      %v3527 = vadd.f32 %v2921, %v3526
      %v3528 = vpop.f32.mrf.mxu0
      %v3529 = vadd.f32 %v2921, %v3528
      %3530 = vmatmul.bf16.gmra.mxu0 %v3103
      %v3531 = vpop.f32.mrf.mxu0
      %v3532 = vadd.f32 %v2921, %v3531
      %v3533 = vpop.f32.mrf.mxu0
      %v3534 = vadd.f32 %v2921, %v3533
      %3535 = vmatmul.bf16.gmra.mxu0 %v3106
      %v3536 = vpop.f32.mrf.mxu0
      %v3537 = vadd.f32 %v2921, %v3536
      %v3538 = vpop.f32.mrf.mxu0
      %v3539 = vadd.f32 %v2921, %v3538
      %3540 = vmatmul.bf16.gmra.mxu0 %v3109
      %v3541 = vpop.f32.mrf.mxu0
      %v3542 = vadd.f32 %v2921, %v3541
      %v3543 = vpop.f32.mrf.mxu0
      %v3544 = vadd.f32 %v2921, %v3543
      %3545 = vdwg.mxu0
      %3546 = vmatpush.bf16.msra.mxu0 0
      %3547 = vmatpush.bf16.msra.mxu0 0
      %3548 = vmatpush.bf16.msra.mxu0 0
      %3549 = vmatpush.bf16.msra.mxu0 0
      %3550 = vmatpush.bf16.msra.mxu0 0
      %3551 = vmatpush.bf16.msra.mxu0 0
      %3552 = vmatpush.bf16.msra.mxu0 %v3066
      %3553 = vmatpush.bf16.msra.mxu0 %v3050
      %3554 = vmatmul.bf16.gmra.mxu0 %v3100
      %v3555 = vpop.f32.mrf.mxu0
      %v3556 = vadd.f32 %v2922, %v3555
      %v3557 = vpop.f32.mrf.mxu0
      %v3558 = vadd.f32 %v2922, %v3557
      %3559 = vmatmul.bf16.gmra.mxu0 %v3103
      %v3560 = vpop.f32.mrf.mxu0
      %v3561 = vadd.f32 %v2922, %v3560
      %v3562 = vpop.f32.mrf.mxu0
      %v3563 = vadd.f32 %v2922, %v3562
      %3564 = vmatmul.bf16.gmra.mxu0 %v3106
      %v3565 = vpop.f32.mrf.mxu0
      %v3566 = vadd.f32 %v2922, %v3565
      %v3567 = vpop.f32.mrf.mxu0
      %v3568 = vadd.f32 %v2922, %v3567
      %3569 = vmatmul.bf16.gmra.mxu0 %v3109
      %v3570 = vpop.f32.mrf.mxu0
      %v3571 = vadd.f32 %v2922, %v3570
      %v3572 = vpop.f32.mrf.mxu0
      %v3573 = vadd.f32 %v2922, %v3572
      %3574 = vdwg.mxu0
      %v3575 = vmax.f32 %v3121, 0.0
      %v3576 = vmax.f32 %v3150, 0.0
      %v3577 = vmax.f32 %v3179, 0.0
      %v3578 = vmax.f32 %v3208, 0.0
      %v3579 = vmax.f32 %v3237, 0.0
      %v3580 = vmax.f32 %v3266, 0.0
      %v3581 = vmax.f32 %v3295, 0.0
      %v3582 = vmax.f32 %v3324, 0.0
      %v3583 = vmax.f32 %v3353, 0.0
      %v3584 = vmax.f32 %v3382, 0.0
      %v3585 = vmax.f32 %v3411, 0.0
      %v3586 = vmax.f32 %v3440, 0.0
      %v3587 = vmax.f32 %v3469, 0.0
      %v3588 = vmax.f32 %v3498, 0.0
      %v3589 = vmax.f32 %v3527, 0.0
      %v3590 = vmax.f32 %v3556, 0.0
      %v3591 = vmax.f32 %v3123, 0.0
      %v3592 = vmax.f32 %v3152, 0.0
      %v3593 = vmax.f32 %v3181, 0.0
      %v3594 = vmax.f32 %v3210, 0.0
      %v3595 = vmax.f32 %v3239, 0.0
      %v3596 = vmax.f32 %v3268, 0.0
      %v3597 = vmax.f32 %v3297, 0.0
      %v3598 = vmax.f32 %v3326, 0.0
      %v3599 = vmax.f32 %v3355, 0.0
      %v3600 = vmax.f32 %v3384, 0.0
      %v3601 = vmax.f32 %v3413, 0.0
      %v3602 = vmax.f32 %v3442, 0.0
      %v3603 = vmax.f32 %v3471, 0.0
      %v3604 = vmax.f32 %v3500, 0.0
      %v3605 = vmax.f32 %v3529, 0.0
      %v3606 = vmax.f32 %v3558, 0.0
      %v3607 = vmax.f32 %v3126, 0.0
      %v3608 = vmax.f32 %v3155, 0.0
      %v3609 = vmax.f32 %v3184, 0.0
      %v3610 = vmax.f32 %v3213, 0.0
      %v3611 = vmax.f32 %v3242, 0.0
      %v3612 = vmax.f32 %v3271, 0.0
      %v3613 = vmax.f32 %v3300, 0.0
      %v3614 = vmax.f32 %v3329, 0.0
      %v3615 = vmax.f32 %v3358, 0.0
      %v3616 = vmax.f32 %v3387, 0.0
      %v3617 = vmax.f32 %v3416, 0.0
      %v3618 = vmax.f32 %v3445, 0.0
      %v3619 = vmax.f32 %v3474, 0.0
      %v3620 = vmax.f32 %v3503, 0.0
      %v3621 = vmax.f32 %v3532, 0.0
      %v3622 = vmax.f32 %v3561, 0.0
      %v3623 = vmax.f32 %v3128, 0.0
      %v3624 = vmax.f32 %v3157, 0.0
      %v3625 = vmax.f32 %v3186, 0.0
      %v3626 = vmax.f32 %v3215, 0.0
      %v3627 = vmax.f32 %v3244, 0.0
      %v3628 = vmax.f32 %v3273, 0.0
      %v3629 = vmax.f32 %v3302, 0.0
      %v3630 = vmax.f32 %v3331, 0.0
      %v3631 = vmax.f32 %v3360, 0.0
      %v3632 = vmax.f32 %v3389, 0.0
      %v3633 = vmax.f32 %v3418, 0.0
      %v3634 = vmax.f32 %v3447, 0.0
      %v3635 = vmax.f32 %v3476, 0.0
      %v3636 = vmax.f32 %v3505, 0.0
      %v3637 = vmax.f32 %v3534, 0.0
      %v3638 = vmax.f32 %v3563, 0.0
      %v3639 = vmax.f32 %v3131, 0.0
      %v3640 = vmax.f32 %v3160, 0.0
      %v3641 = vmax.f32 %v3189, 0.0
      %v3642 = vmax.f32 %v3218, 0.0
      %v3643 = vmax.f32 %v3247, 0.0
      %v3644 = vmax.f32 %v3276, 0.0
      %v3645 = vmax.f32 %v3305, 0.0
      %v3646 = vmax.f32 %v3334, 0.0
      %v3647 = vmax.f32 %v3363, 0.0
      %v3648 = vmax.f32 %v3392, 0.0
      %v3649 = vmax.f32 %v3421, 0.0
      %v3650 = vmax.f32 %v3450, 0.0
      %v3651 = vmax.f32 %v3479, 0.0
      %v3652 = vmax.f32 %v3508, 0.0
      %v3653 = vmax.f32 %v3537, 0.0
      %v3654 = vmax.f32 %v3566, 0.0
      %v3655 = vmax.f32 %v3133, 0.0
      %v3656 = vmax.f32 %v3162, 0.0
      %v3657 = vmax.f32 %v3191, 0.0
      %v3658 = vmax.f32 %v3220, 0.0
      %v3659 = vmax.f32 %v3249, 0.0
      %v3660 = vmax.f32 %v3278, 0.0
      %v3661 = vmax.f32 %v3307, 0.0
      %v3662 = vmax.f32 %v3336, 0.0
      %v3663 = vmax.f32 %v3365, 0.0
      %v3664 = vmax.f32 %v3394, 0.0
      %v3665 = vmax.f32 %v3423, 0.0
      %v3666 = vmax.f32 %v3452, 0.0
      %v3667 = vmax.f32 %v3481, 0.0
      %v3668 = vmax.f32 %v3510, 0.0
      %v3669 = vmax.f32 %v3539, 0.0
      %v3670 = vmax.f32 %v3568, 0.0
      %v3671 = vmax.f32 %v3136, 0.0
      %v3672 = vmax.f32 %v3165, 0.0
      %v3673 = vmax.f32 %v3194, 0.0
      %v3674 = vmax.f32 %v3223, 0.0
      %v3675 = vmax.f32 %v3252, 0.0
      %v3676 = vmax.f32 %v3281, 0.0
      %v3677 = vmax.f32 %v3310, 0.0
      %v3678 = vmax.f32 %v3339, 0.0
      %v3679 = vmax.f32 %v3368, 0.0
      %v3680 = vmax.f32 %v3397, 0.0
      %v3681 = vmax.f32 %v3426, 0.0
      %v3682 = vmax.f32 %v3455, 0.0
      %v3683 = vmax.f32 %v3484, 0.0
      %v3684 = vmax.f32 %v3513, 0.0
      %v3685 = vmax.f32 %v3542, 0.0
      %v3686 = vmax.f32 %v3571, 0.0
      %v3687 = vmax.f32 %v3138, 0.0
      %v3688 = vmax.f32 %v3167, 0.0
      %v3689 = vmax.f32 %v3196, 0.0
      %v3690 = vmax.f32 %v3225, 0.0
      %v3691 = vmax.f32 %v3254, 0.0
      %v3692 = vmax.f32 %v3283, 0.0
      %v3693 = vmax.f32 %v3312, 0.0
      %v3694 = vmax.f32 %v3341, 0.0
      %v3695 = vmax.f32 %v3370, 0.0
      %v3696 = vmax.f32 %v3399, 0.0
      %v3697 = vmax.f32 %v3428, 0.0
      %v3698 = vmax.f32 %v3457, 0.0
      %v3699 = vmax.f32 %v3486, 0.0
      %v3700 = vmax.f32 %v3515, 0.0
      %v3701 = vmax.f32 %v3544, 0.0
      %v3702 = vmax.f32 %v3573, 0.0
      %v3703 = vpack.c.bf16 %v3591, %v3575
      %v3704 = vpack.c.bf16 %v3592, %v3576
      %v3705 = vpack.c.bf16 %v3593, %v3577
      %v3706 = vpack.c.bf16 %v3594, %v3578
      %v3707 = vpack.c.bf16 %v3595, %v3579
      %v3708 = vpack.c.bf16 %v3596, %v3580
      %v3709 = vpack.c.bf16 %v3597, %v3581
      %v3710 = vpack.c.bf16 %v3598, %v3582
      %v3711 = vpack.c.bf16 %v3599, %v3583
      %v3712 = vpack.c.bf16 %v3600, %v3584
      %v3713 = vpack.c.bf16 %v3601, %v3585
      %v3714 = vpack.c.bf16 %v3602, %v3586
      %v3715 = vpack.c.bf16 %v3603, %v3587
      %v3716 = vpack.c.bf16 %v3604, %v3588
      %v3717 = vpack.c.bf16 %v3605, %v3589
      %v3718 = vpack.c.bf16 %v3606, %v3590
      %v3719 = vpack.c.bf16 %v3623, %v3607
      %v3720 = vpack.c.bf16 %v3624, %v3608
      %v3721 = vpack.c.bf16 %v3625, %v3609
      %v3722 = vpack.c.bf16 %v3626, %v3610
      %v3723 = vpack.c.bf16 %v3627, %v3611
      %v3724 = vpack.c.bf16 %v3628, %v3612
      %v3725 = vpack.c.bf16 %v3629, %v3613
      %v3726 = vpack.c.bf16 %v3630, %v3614
      %v3727 = vpack.c.bf16 %v3631, %v3615
      %v3728 = vpack.c.bf16 %v3632, %v3616
      %v3729 = vpack.c.bf16 %v3633, %v3617
      %v3730 = vpack.c.bf16 %v3634, %v3618
      %v3731 = vpack.c.bf16 %v3635, %v3619
      %v3732 = vpack.c.bf16 %v3636, %v3620
      %v3733 = vpack.c.bf16 %v3637, %v3621
      %v3734 = vpack.c.bf16 %v3638, %v3622
      %v3735 = vpack.c.bf16 %v3655, %v3639
      %v3736 = vpack.c.bf16 %v3656, %v3640
      %v3737 = vpack.c.bf16 %v3657, %v3641
      %v3738 = vpack.c.bf16 %v3658, %v3642
      %v3739 = vpack.c.bf16 %v3659, %v3643
      %v3740 = vpack.c.bf16 %v3660, %v3644
      %v3741 = vpack.c.bf16 %v3661, %v3645
      %v3742 = vpack.c.bf16 %v3662, %v3646
      %v3743 = vpack.c.bf16 %v3663, %v3647
      %v3744 = vpack.c.bf16 %v3664, %v3648
      %v3745 = vpack.c.bf16 %v3665, %v3649
      %v3746 = vpack.c.bf16 %v3666, %v3650
      %v3747 = vpack.c.bf16 %v3667, %v3651
      %v3748 = vpack.c.bf16 %v3668, %v3652
      %v3749 = vpack.c.bf16 %v3669, %v3653
      %v3750 = vpack.c.bf16 %v3670, %v3654
      %v3751 = vpack.c.bf16 %v3687, %v3671
      %v3752 = vpack.c.bf16 %v3688, %v3672
      %v3753 = vpack.c.bf16 %v3689, %v3673
      %v3754 = vpack.c.bf16 %v3690, %v3674
      %v3755 = vpack.c.bf16 %v3691, %v3675
      %v3756 = vpack.c.bf16 %v3692, %v3676
      %v3757 = vpack.c.bf16 %v3693, %v3677
      %v3758 = vpack.c.bf16 %v3694, %v3678
      %v3759 = vpack.c.bf16 %v3695, %v3679
      %v3760 = vpack.c.bf16 %v3696, %v3680
      %v3761 = vpack.c.bf16 %v3697, %v3681
      %v3762 = vpack.c.bf16 %v3698, %v3682
      %v3763 = vpack.c.bf16 %v3699, %v3683
      %v3764 = vpack.c.bf16 %v3700, %v3684
      %v3765 = vpack.c.bf16 %v3701, %v3685
      %v3766 = vpack.c.bf16 %v3702, %v3686
      %v3767 = vld [vmem:[%s18] sm:$0xf]
      %v3768 = vld [vmem:[%s18 + $0x4] sm:$0xf]
      %v3769 = vld [vmem:[%s18 + $0x8] sm:$0xf]
      %v3770 = vld [vmem:[%s18 + $0xc] sm:$0xf]
      %v3771 = vld [vmem:[%s18 + $0x10] sm:$0xf]
      %v3772 = vld [vmem:[%s18 + $0x14] sm:$0xf]
      %v3773 = vld [vmem:[%s18 + $0x18] sm:$0xf]
      %v3774 = vld [vmem:[%s18 + $0x1c] sm:$0xf]
      %v3775 = vld [vmem:[%s18 + $0x20] sm:$0xf]
      %v3776 = vld [vmem:[%s18 + $0x24] sm:$0xf]
      %v3777 = vld [vmem:[%s18 + $0x28] sm:$0xf]
      %v3778 = vld [vmem:[%s18 + $0x2c] sm:$0xf]
      %v3779 = vld [vmem:[%s18 + $0x30] sm:$0xf]
      %v3780 = vld [vmem:[%s18 + $0x34] sm:$0xf]
      %v3781 = vld [vmem:[%s18 + $0x38] sm:$0xf]
      %v3782 = vld [vmem:[%s18 + $0x3c] sm:$0xf]
      %v3783 = vld [vmem:[%s18 + $0x40] sm:$0xf]
      %v3784 = vld [vmem:[%s18 + $0x44] sm:$0xf]
      %v3785 = vld [vmem:[%s18 + $0x48] sm:$0xf]
      %v3786 = vld [vmem:[%s18 + $0x4c] sm:$0xf]
      %v3787 = vld [vmem:[%s18 + $0x50] sm:$0xf]
      %v3788 = vld [vmem:[%s18 + $0x54] sm:$0xf]
      %v3789 = vld [vmem:[%s18 + $0x58] sm:$0xf]
      %v3790 = vld [vmem:[%s18 + $0x5c] sm:$0xf]
      %v3791 = vld [vmem:[%s18 + $0x60] sm:$0xf]
      %v3792 = vld [vmem:[%s18 + $0x64] sm:$0xf]
      %v3793 = vld [vmem:[%s18 + $0x68] sm:$0xf]
      %v3794 = vld [vmem:[%s18 + $0x6c] sm:$0xf]
      %v3795 = vld [vmem:[%s18 + $0x70] sm:$0xf]
      %v3796 = vld [vmem:[%s18 + $0x74] sm:$0xf]
      %v3797 = vld [vmem:[%s18 + $0x78] sm:$0xf]
      %v3798 = vld [vmem:[%s18 + $0x7c] sm:$0xf]
      %v3799 = vld [vmem:[%s18 + $0x80] sm:$0xf]
      %v3800 = vld [vmem:[%s18 + $0x84] sm:$0xf]
      %v3801 = vld [vmem:[%s18 + $0x88] sm:$0xf]
      %v3802 = vld [vmem:[%s18 + $0x8c] sm:$0xf]
      %v3803 = vld [vmem:[%s18 + $0x90] sm:$0xf]
      %v3804 = vld [vmem:[%s18 + $0x94] sm:$0xf]
      %v3805 = vld [vmem:[%s18 + $0x98] sm:$0xf]
      %v3806 = vld [vmem:[%s18 + $0x9c] sm:$0xf]
      %v3807 = vld [vmem:[%s18 + $0xa0] sm:$0xf]
      %v3808 = vld [vmem:[%s18 + $0xa4] sm:$0xf]
      %v3809 = vld [vmem:[%s18 + $0xa8] sm:$0xf]
      %v3810 = vld [vmem:[%s18 + $0xac] sm:$0xf]
      %v3811 = vld [vmem:[%s18 + $0xb0] sm:$0xf]
      %v3812 = vld [vmem:[%s18 + $0xb4] sm:$0xf]
      %v3813 = vld [vmem:[%s18 + $0xb8] sm:$0xf]
      %v3814 = vld [vmem:[%s18 + $0xbc] sm:$0xf]
      %v3815 = vld [vmem:[%s18 + $0xc0] sm:$0xf]
      %v3816 = vld [vmem:[%s18 + $0xc4] sm:$0xf]
      %v3817 = vld [vmem:[%s18 + $0xc8] sm:$0xf]
      %v3818 = vld [vmem:[%s18 + $0xcc] sm:$0xf]
      %v3819 = vld [vmem:[%s18 + $0xd0] sm:$0xf]
      %v3820 = vld [vmem:[%s18 + $0xd4] sm:$0xf]
      %v3821 = vld [vmem:[%s18 + $0xd8] sm:$0xf]
      %v3822 = vld [vmem:[%s18 + $0xdc] sm:$0xf]
      %v3823 = vld [vmem:[%s18 + $0xe0] sm:$0xf]
      %v3824 = vld [vmem:[%s18 + $0xe4] sm:$0xf]
      %v3825 = vld [vmem:[%s18 + $0xe8] sm:$0xf]
      %v3826 = vld [vmem:[%s18 + $0xec] sm:$0xf]
      %v3827 = vld [vmem:[%s18 + $0xf0] sm:$0xf]
      %v3828 = vld [vmem:[%s18 + $0xf4] sm:$0xf]
      %v3829 = vld [vmem:[%s18 + $0xf8] sm:$0xf]
      %v3830 = vld [vmem:[%s18 + $0xfc] sm:$0xf]
      %v3831 = vld [vmem:[%s18 + $0x100] sm:$0xf]
      %v3832 = vld [vmem:[%s18 + $0x104] sm:$0xf]
      %v3833 = vld [vmem:[%s18 + $0x108] sm:$0xf]
      %v3834 = vld [vmem:[%s18 + $0x10c] sm:$0xf]
      %v3835 = vld [vmem:[%s18 + $0x110] sm:$0xf]
      %v3836 = vld [vmem:[%s18 + $0x114] sm:$0xf]
      %v3837 = vld [vmem:[%s18 + $0x118] sm:$0xf]
      %v3838 = vld [vmem:[%s18 + $0x11c] sm:$0xf]
      %v3839 = vld [vmem:[%s18 + $0x120] sm:$0xf]
      %v3840 = vld [vmem:[%s18 + $0x124] sm:$0xf]
      %v3841 = vld [vmem:[%s18 + $0x128] sm:$0xf]
      %v3842 = vld [vmem:[%s18 + $0x12c] sm:$0xf]
      %v3843 = vld [vmem:[%s18 + $0x130] sm:$0xf]
      %v3844 = vld [vmem:[%s18 + $0x134] sm:$0xf]
      %v3845 = vld [vmem:[%s18 + $0x138] sm:$0xf]
      %v3846 = vld [vmem:[%s18 + $0x13c] sm:$0xf]
      %v3847 = vld [vmem:[%s18 + $0x140] sm:$0xf]
      %v3848 = vld [vmem:[%s18 + $0x144] sm:$0xf]
      %v3849 = vld [vmem:[%s18 + $0x148] sm:$0xf]
      %v3850 = vld [vmem:[%s18 + $0x14c] sm:$0xf]
      %v3851 = vld [vmem:[%s18 + $0x150] sm:$0xf]
      %v3852 = vld [vmem:[%s18 + $0x154] sm:$0xf]
      %v3853 = vld [vmem:[%s18 + $0x158] sm:$0xf]
      %v3854 = vld [vmem:[%s18 + $0x15c] sm:$0xf]
      %v3855 = vld [vmem:[%s18 + $0x160] sm:$0xf]
      %v3856 = vld [vmem:[%s18 + $0x164] sm:$0xf]
      %v3857 = vld [vmem:[%s18 + $0x168] sm:$0xf]
      %v3858 = vld [vmem:[%s18 + $0x16c] sm:$0xf]
      %v3859 = vld [vmem:[%s18 + $0x170] sm:$0xf]
      %v3860 = vld [vmem:[%s18 + $0x174] sm:$0xf]
      %v3861 = vld [vmem:[%s18 + $0x178] sm:$0xf]
      %v3862 = vld [vmem:[%s18 + $0x17c] sm:$0xf]
      %v3863 = vld [vmem:[%s18 + $0x180] sm:$0xf]
      %v3864 = vld [vmem:[%s18 + $0x184] sm:$0xf]
      %v3865 = vld [vmem:[%s18 + $0x188] sm:$0xf]
      %v3866 = vld [vmem:[%s18 + $0x18c] sm:$0xf]
      %v3867 = vld [vmem:[%s18 + $0x190] sm:$0xf]
      %v3868 = vld [vmem:[%s18 + $0x194] sm:$0xf]
      %v3869 = vld [vmem:[%s18 + $0x198] sm:$0xf]
      %v3870 = vld [vmem:[%s18 + $0x19c] sm:$0xf]
      %v3871 = vld [vmem:[%s18 + $0x1a0] sm:$0xf]
      %v3872 = vld [vmem:[%s18 + $0x1a4] sm:$0xf]
      %v3873 = vld [vmem:[%s18 + $0x1a8] sm:$0xf]
      %v3874 = vld [vmem:[%s18 + $0x1ac] sm:$0xf]
      %v3875 = vld [vmem:[%s18 + $0x1b0] sm:$0xf]
      %v3876 = vld [vmem:[%s18 + $0x1b4] sm:$0xf]
      %v3877 = vld [vmem:[%s18 + $0x1b8] sm:$0xf]
      %v3878 = vld [vmem:[%s18 + $0x1bc] sm:$0xf]
      %v3879 = vld [vmem:[%s18 + $0x1c0] sm:$0xf]
      %v3880 = vld [vmem:[%s18 + $0x1c4] sm:$0xf]
      %v3881 = vld [vmem:[%s18 + $0x1c8] sm:$0xf]
      %v3882 = vld [vmem:[%s18 + $0x1cc] sm:$0xf]
      %v3883 = vld [vmem:[%s18 + $0x1d0] sm:$0xf]
      %v3884 = vld [vmem:[%s18 + $0x1d4] sm:$0xf]
      %v3885 = vld [vmem:[%s18 + $0x1d8] sm:$0xf]
      %v3886 = vld [vmem:[%s18 + $0x1dc] sm:$0xf]
      %v3887 = vld [vmem:[%s18 + $0x1e0] sm:$0xf]
      %v3888 = vld [vmem:[%s18 + $0x1e4] sm:$0xf]
      %v3889 = vld [vmem:[%s18 + $0x1e8] sm:$0xf]
      %v3890 = vld [vmem:[%s18 + $0x1ec] sm:$0xf]
      %v3891 = vld [vmem:[%s18 + $0x1f0] sm:$0xf]
      %v3892 = vld [vmem:[%s18 + $0x1f4] sm:$0xf]
      %v3893 = vld [vmem:[%s18 + $0x1f8] sm:$0xf]
      %v3894 = vld [vmem:[%s18 + $0x1fc] sm:$0xf]
      %v3895 = vld [vmem:[%s18 + $0x200] sm:$0xf]
      %v3896 = vld [vmem:[%s18 + $0x204] sm:$0xf]
      %v3897 = vld [vmem:[%s18 + $0x208] sm:$0xf]
      %v3898 = vld [vmem:[%s18 + $0x20c] sm:$0xf]
      %v3899 = vld [vmem:[%s18 + $0x210] sm:$0xf]
      %v3900 = vld [vmem:[%s18 + $0x214] sm:$0xf]
      %v3901 = vld [vmem:[%s18 + $0x218] sm:$0xf]
      %v3902 = vld [vmem:[%s18 + $0x21c] sm:$0xf]
      %v3903 = vld [vmem:[%s18 + $0x220] sm:$0xf]
      %v3904 = vld [vmem:[%s18 + $0x224] sm:$0xf]
      %v3905 = vld [vmem:[%s18 + $0x228] sm:$0xf]
      %v3906 = vld [vmem:[%s18 + $0x22c] sm:$0xf]
      %v3907 = vld [vmem:[%s18 + $0x230] sm:$0xf]
      %v3908 = vld [vmem:[%s18 + $0x234] sm:$0xf]
      %v3909 = vld [vmem:[%s18 + $0x238] sm:$0xf]
      %v3910 = vld [vmem:[%s18 + $0x23c] sm:$0xf]
      %v3911 = vld [vmem:[%s18 + $0x240] sm:$0xf]
      %v3912 = vld [vmem:[%s18 + $0x244] sm:$0xf]
      %v3913 = vld [vmem:[%s18 + $0x248] sm:$0xf]
      %v3914 = vld [vmem:[%s18 + $0x24c] sm:$0xf]
      %v3915 = vld [vmem:[%s18 + $0x250] sm:$0xf]
      %v3916 = vld [vmem:[%s18 + $0x254] sm:$0xf]
      %v3917 = vld [vmem:[%s18 + $0x258] sm:$0xf]
      %v3918 = vld [vmem:[%s18 + $0x25c] sm:$0xf]
      %v3919 = vld [vmem:[%s18 + $0x260] sm:$0xf]
      %v3920 = vld [vmem:[%s18 + $0x264] sm:$0xf]
      %v3921 = vld [vmem:[%s18 + $0x268] sm:$0xf]
      %v3922 = vld [vmem:[%s18 + $0x26c] sm:$0xf]
      %v3923 = vld [vmem:[%s18 + $0x270] sm:$0xf]
      %v3924 = vld [vmem:[%s18 + $0x274] sm:$0xf]
      %v3925 = vld [vmem:[%s18 + $0x278] sm:$0xf]
      %v3926 = vld [vmem:[%s18 + $0x27c] sm:$0xf]
      %v3927 = vld [vmem:[%s18 + $0x280] sm:$0xf]
      %v3928 = vld [vmem:[%s18 + $0x284] sm:$0xf]
      %v3929 = vld [vmem:[%s18 + $0x288] sm:$0xf]
      %v3930 = vld [vmem:[%s18 + $0x28c] sm:$0xf]
      %v3931 = vld [vmem:[%s18 + $0x290] sm:$0xf]
      %v3932 = vld [vmem:[%s18 + $0x294] sm:$0xf]
      %v3933 = vld [vmem:[%s18 + $0x298] sm:$0xf]
      %v3934 = vld [vmem:[%s18 + $0x29c] sm:$0xf]
      %v3935 = vld [vmem:[%s18 + $0x2a0] sm:$0xf]
      %v3936 = vld [vmem:[%s18 + $0x2a4] sm:$0xf]
      %v3937 = vld [vmem:[%s18 + $0x2a8] sm:$0xf]
      %v3938 = vld [vmem:[%s18 + $0x2ac] sm:$0xf]
      %v3939 = vld [vmem:[%s18 + $0x2b0] sm:$0xf]
      %v3940 = vld [vmem:[%s18 + $0x2b4] sm:$0xf]
      %v3941 = vld [vmem:[%s18 + $0x2b8] sm:$0xf]
      %v3942 = vld [vmem:[%s18 + $0x2bc] sm:$0xf]
      %v3943 = vld [vmem:[%s18 + $0x2c0] sm:$0xf]
      %v3944 = vld [vmem:[%s18 + $0x2c4] sm:$0xf]
      %v3945 = vld [vmem:[%s18 + $0x2c8] sm:$0xf]
      %v3946 = vld [vmem:[%s18 + $0x2cc] sm:$0xf]
      %v3947 = vld [vmem:[%s18 + $0x2d0] sm:$0xf]
      %v3948 = vld [vmem:[%s18 + $0x2d4] sm:$0xf]
      %v3949 = vld [vmem:[%s18 + $0x2d8] sm:$0xf]
      %v3950 = vld [vmem:[%s18 + $0x2dc] sm:$0xf]
      %v3951 = vld [vmem:[%s18 + $0x2e0] sm:$0xf]
      %v3952 = vld [vmem:[%s18 + $0x2e4] sm:$0xf]
      %v3953 = vld [vmem:[%s18 + $0x2e8] sm:$0xf]
      %v3954 = vld [vmem:[%s18 + $0x2ec] sm:$0xf]
      %v3955 = vld [vmem:[%s18 + $0x2f0] sm:$0xf]
      %v3956 = vld [vmem:[%s18 + $0x2f4] sm:$0xf]
      %v3957 = vld [vmem:[%s18 + $0x2f8] sm:$0xf]
      %v3958 = vld [vmem:[%s18 + $0x2fc] sm:$0xf]
      %v3959 = vld [vmem:[%s18 + $0x300] sm:$0xf]
      %v3960 = vld [vmem:[%s18 + $0x304] sm:$0xf]
      %v3961 = vld [vmem:[%s18 + $0x308] sm:$0xf]
      %v3962 = vld [vmem:[%s18 + $0x30c] sm:$0xf]
      %v3963 = vld [vmem:[%s18 + $0x310] sm:$0xf]
      %v3964 = vld [vmem:[%s18 + $0x314] sm:$0xf]
      %v3965 = vld [vmem:[%s18 + $0x318] sm:$0xf]
      %v3966 = vld [vmem:[%s18 + $0x31c] sm:$0xf]
      %v3967 = vld [vmem:[%s18 + $0x320] sm:$0xf]
      %v3968 = vld [vmem:[%s18 + $0x324] sm:$0xf]
      %v3969 = vld [vmem:[%s18 + $0x328] sm:$0xf]
      %v3970 = vld [vmem:[%s18 + $0x32c] sm:$0xf]
      %v3971 = vld [vmem:[%s18 + $0x330] sm:$0xf]
      %v3972 = vld [vmem:[%s18 + $0x334] sm:$0xf]
      %v3973 = vld [vmem:[%s18 + $0x338] sm:$0xf]
      %v3974 = vld [vmem:[%s18 + $0x33c] sm:$0xf]
      %v3975 = vld [vmem:[%s18 + $0x340] sm:$0xf]
      %v3976 = vld [vmem:[%s18 + $0x344] sm:$0xf]
      %v3977 = vld [vmem:[%s18 + $0x348] sm:$0xf]
      %v3978 = vld [vmem:[%s18 + $0x34c] sm:$0xf]
      %v3979 = vld [vmem:[%s18 + $0x350] sm:$0xf]
      %v3980 = vld [vmem:[%s18 + $0x354] sm:$0xf]
      %v3981 = vld [vmem:[%s18 + $0x358] sm:$0xf]
      %v3982 = vld [vmem:[%s18 + $0x35c] sm:$0xf]
      %v3983 = vld [vmem:[%s18 + $0x360] sm:$0xf]
      %v3984 = vld [vmem:[%s18 + $0x364] sm:$0xf]
      %v3985 = vld [vmem:[%s18 + $0x368] sm:$0xf]
      %v3986 = vld [vmem:[%s18 + $0x36c] sm:$0xf]
      %v3987 = vld [vmem:[%s18 + $0x370] sm:$0xf]
      %v3988 = vld [vmem:[%s18 + $0x374] sm:$0xf]
      %v3989 = vld [vmem:[%s18 + $0x378] sm:$0xf]
      %v3990 = vld [vmem:[%s18 + $0x37c] sm:$0xf]
      %v3991 = vld [vmem:[%s18 + $0x380] sm:$0xf]
      %v3992 = vld [vmem:[%s18 + $0x384] sm:$0xf]
      %v3993 = vld [vmem:[%s18 + $0x388] sm:$0xf]
      %v3994 = vld [vmem:[%s18 + $0x38c] sm:$0xf]
      %v3995 = vld [vmem:[%s18 + $0x390] sm:$0xf]
      %v3996 = vld [vmem:[%s18 + $0x394] sm:$0xf]
      %v3997 = vld [vmem:[%s18 + $0x398] sm:$0xf]
      %v3998 = vld [vmem:[%s18 + $0x39c] sm:$0xf]
      %v3999 = vld [vmem:[%s18 + $0x3a0] sm:$0xf]
      %v4000 = vld [vmem:[%s18 + $0x3a4] sm:$0xf]
      %v4001 = vld [vmem:[%s18 + $0x3a8] sm:$0xf]
      %v4002 = vld [vmem:[%s18 + $0x3ac] sm:$0xf]
      %v4003 = vld [vmem:[%s18 + $0x3b0] sm:$0xf]
      %v4004 = vld [vmem:[%s18 + $0x3b4] sm:$0xf]
      %v4005 = vld [vmem:[%s18 + $0x3b8] sm:$0xf]
      %v4006 = vld [vmem:[%s18 + $0x3bc] sm:$0xf]
      %v4007 = vld [vmem:[%s18 + $0x3c0] sm:$0xf]
      %v4008 = vld [vmem:[%s18 + $0x3c4] sm:$0xf]
      %v4009 = vld [vmem:[%s18 + $0x3c8] sm:$0xf]
      %v4010 = vld [vmem:[%s18 + $0x3cc] sm:$0xf]
      %v4011 = vld [vmem:[%s18 + $0x3d0] sm:$0xf]
      %v4012 = vld [vmem:[%s18 + $0x3d4] sm:$0xf]
      %v4013 = vld [vmem:[%s18 + $0x3d8] sm:$0xf]
      %v4014 = vld [vmem:[%s18 + $0x3dc] sm:$0xf]
      %v4015 = vld [vmem:[%s18 + $0x3e0] sm:$0xf]
      %v4016 = vld [vmem:[%s18 + $0x3e4] sm:$0xf]
      %v4017 = vld [vmem:[%s18 + $0x3e8] sm:$0xf]
      %v4018 = vld [vmem:[%s18 + $0x3ec] sm:$0xf]
      %v4019 = vld [vmem:[%s18 + $0x3f0] sm:$0xf]
      %v4020 = vld [vmem:[%s18 + $0x3f4] sm:$0xf]
      %v4021 = vld [vmem:[%s18 + $0x3f8] sm:$0xf]
      %v4022 = vld [vmem:[%s18 + $0x3fc] sm:$0xf]
      %v4023 = vld [vmem:[%s19] sm:$0x1]
      %v4025 = vperm.slane %v4023, 0
      %v4283 = vunpack.c.l.b16 %v3767
      %v4284 = vunpack.c.l.b16 %v3768
      %v4285 = vunpack.c.l.b16 %v3769
      %v4286 = vunpack.c.l.b16 %v3770
      %v4287 = vunpack.c.l.b16 %v3771
      %v4288 = vunpack.c.l.b16 %v3772
      %v4289 = vunpack.c.l.b16 %v3773
      %v4290 = vunpack.c.l.b16 %v3774
      %v4291 = vunpack.c.l.b16 %v3775
      %v4292 = vunpack.c.l.b16 %v3776
      %v4293 = vunpack.c.l.b16 %v3777
      %v4294 = vunpack.c.l.b16 %v3778
      %v4295 = vunpack.c.l.b16 %v3779
      %v4296 = vunpack.c.l.b16 %v3780
      %v4297 = vunpack.c.l.b16 %v3781
      %v4298 = vunpack.c.l.b16 %v3782
      %v4299 = vunpack.c.l.b16 %v3783
      %v4300 = vunpack.c.l.b16 %v3784
      %v4301 = vunpack.c.l.b16 %v3785
      %v4302 = vunpack.c.l.b16 %v3786
      %v4303 = vunpack.c.l.b16 %v3787
      %v4304 = vunpack.c.l.b16 %v3788
      %v4305 = vunpack.c.l.b16 %v3789
      %v4306 = vunpack.c.l.b16 %v3790
      %v4307 = vunpack.c.l.b16 %v3791
      %v4308 = vunpack.c.l.b16 %v3792
      %v4309 = vunpack.c.l.b16 %v3793
      %v4310 = vunpack.c.l.b16 %v3794
      %v4311 = vunpack.c.l.b16 %v3795
      %v4312 = vunpack.c.l.b16 %v3796
      %v4313 = vunpack.c.l.b16 %v3797
      %v4314 = vunpack.c.l.b16 %v3798
      %v4315 = vunpack.c.l.b16 %v3799
      %v4316 = vunpack.c.l.b16 %v3800
      %v4317 = vunpack.c.l.b16 %v3801
      %v4318 = vunpack.c.l.b16 %v3802
      %v4319 = vunpack.c.l.b16 %v3803
      %v4320 = vunpack.c.l.b16 %v3804
      %v4321 = vunpack.c.l.b16 %v3805
      %v4322 = vunpack.c.l.b16 %v3806
      %v4323 = vunpack.c.l.b16 %v3807
      %v4324 = vunpack.c.l.b16 %v3808
      %v4325 = vunpack.c.l.b16 %v3809
      %v4326 = vunpack.c.l.b16 %v3810
      %v4327 = vunpack.c.l.b16 %v3811
      %v4328 = vunpack.c.l.b16 %v3812
      %v4329 = vunpack.c.l.b16 %v3813
      %v4330 = vunpack.c.l.b16 %v3814
      %v4331 = vunpack.c.l.b16 %v3815
      %v4332 = vunpack.c.l.b16 %v3816
      %v4333 = vunpack.c.l.b16 %v3817
      %v4334 = vunpack.c.l.b16 %v3818
      %v4335 = vunpack.c.l.b16 %v3819
      %v4336 = vunpack.c.l.b16 %v3820
      %v4337 = vunpack.c.l.b16 %v3821
      %v4338 = vunpack.c.l.b16 %v3822
      %v4339 = vunpack.c.l.b16 %v3823
      %v4340 = vunpack.c.l.b16 %v3824
      %v4341 = vunpack.c.l.b16 %v3825
      %v4342 = vunpack.c.l.b16 %v3826
      %v4343 = vunpack.c.l.b16 %v3827
      %v4344 = vunpack.c.l.b16 %v3828
      %v4345 = vunpack.c.l.b16 %v3829
      %v4346 = vunpack.c.l.b16 %v3830
      %v4347 = vunpack.c.l.b16 %v3831
      %v4348 = vunpack.c.l.b16 %v3832
      %v4349 = vunpack.c.l.b16 %v3833
      %v4350 = vunpack.c.l.b16 %v3834
      %v4351 = vunpack.c.l.b16 %v3835
      %v4352 = vunpack.c.l.b16 %v3836
      %v4353 = vunpack.c.l.b16 %v3837
      %v4354 = vunpack.c.l.b16 %v3838
      %v4355 = vunpack.c.l.b16 %v3839
      %v4356 = vunpack.c.l.b16 %v3840
      %v4357 = vunpack.c.l.b16 %v3841
      %v4358 = vunpack.c.l.b16 %v3842
      %v4359 = vunpack.c.l.b16 %v3843
      %v4360 = vunpack.c.l.b16 %v3844
      %v4361 = vunpack.c.l.b16 %v3845
      %v4362 = vunpack.c.l.b16 %v3846
      %v4363 = vunpack.c.l.b16 %v3847
      %v4364 = vunpack.c.l.b16 %v3848
      %v4365 = vunpack.c.l.b16 %v3849
      %v4366 = vunpack.c.l.b16 %v3850
      %v4367 = vunpack.c.l.b16 %v3851
      %v4368 = vunpack.c.l.b16 %v3852
      %v4369 = vunpack.c.l.b16 %v3853
      %v4370 = vunpack.c.l.b16 %v3854
      %v4371 = vunpack.c.l.b16 %v3855
      %v4372 = vunpack.c.l.b16 %v3856
      %v4373 = vunpack.c.l.b16 %v3857
      %v4374 = vunpack.c.l.b16 %v3858
      %v4375 = vunpack.c.l.b16 %v3859
      %v4376 = vunpack.c.l.b16 %v3860
      %v4377 = vunpack.c.l.b16 %v3861
      %v4378 = vunpack.c.l.b16 %v3862
      %v4379 = vunpack.c.l.b16 %v3863
      %v4380 = vunpack.c.l.b16 %v3864
      %v4381 = vunpack.c.l.b16 %v3865
      %v4382 = vunpack.c.l.b16 %v3866
      %v4383 = vunpack.c.l.b16 %v3867
      %v4384 = vunpack.c.l.b16 %v3868
      %v4385 = vunpack.c.l.b16 %v3869
      %v4386 = vunpack.c.l.b16 %v3870
      %v4387 = vunpack.c.l.b16 %v3871
      %v4388 = vunpack.c.l.b16 %v3872
      %v4389 = vunpack.c.l.b16 %v3873
      %v4390 = vunpack.c.l.b16 %v3874
      %v4391 = vunpack.c.l.b16 %v3875
      %v4392 = vunpack.c.l.b16 %v3876
      %v4393 = vunpack.c.l.b16 %v3877
      %v4394 = vunpack.c.l.b16 %v3878
      %v4395 = vunpack.c.l.b16 %v3879
      %v4396 = vunpack.c.l.b16 %v3880
      %v4397 = vunpack.c.l.b16 %v3881
      %v4398 = vunpack.c.l.b16 %v3882
      %v4399 = vunpack.c.l.b16 %v3883
      %v4400 = vunpack.c.l.b16 %v3884
      %v4401 = vunpack.c.l.b16 %v3885
      %v4402 = vunpack.c.l.b16 %v3886
      %v4403 = vunpack.c.l.b16 %v3887
      %v4404 = vunpack.c.l.b16 %v3888
      %v4405 = vunpack.c.l.b16 %v3889
      %v4406 = vunpack.c.l.b16 %v3890
      %v4407 = vunpack.c.l.b16 %v3891
      %v4408 = vunpack.c.l.b16 %v3892
      %v4409 = vunpack.c.l.b16 %v3893
      %v4410 = vunpack.c.l.b16 %v3894
      %v4411 = vunpack.c.l.b16 %v3895
      %v4412 = vunpack.c.l.b16 %v3896
      %v4413 = vunpack.c.l.b16 %v3897
      %v4414 = vunpack.c.l.b16 %v3898
      %v4415 = vunpack.c.l.b16 %v3899
      %v4416 = vunpack.c.l.b16 %v3900
      %v4417 = vunpack.c.l.b16 %v3901
      %v4418 = vunpack.c.l.b16 %v3902
      %v4419 = vunpack.c.l.b16 %v3903
      %v4420 = vunpack.c.l.b16 %v3904
      %v4421 = vunpack.c.l.b16 %v3905
      %v4422 = vunpack.c.l.b16 %v3906
      %v4423 = vunpack.c.l.b16 %v3907
      %v4424 = vunpack.c.l.b16 %v3908
      %v4425 = vunpack.c.l.b16 %v3909
      %v4426 = vunpack.c.l.b16 %v3910
      %v4427 = vunpack.c.l.b16 %v3911
      %v4428 = vunpack.c.l.b16 %v3912
      %v4429 = vunpack.c.l.b16 %v3913
      %v4430 = vunpack.c.l.b16 %v3914
      %v4431 = vunpack.c.l.b16 %v3915
      %v4432 = vunpack.c.l.b16 %v3916
      %v4433 = vunpack.c.l.b16 %v3917
      %v4434 = vunpack.c.l.b16 %v3918
      %v4435 = vunpack.c.l.b16 %v3919
      %v4436 = vunpack.c.l.b16 %v3920
      %v4437 = vunpack.c.l.b16 %v3921
      %v4438 = vunpack.c.l.b16 %v3922
      %v4439 = vunpack.c.l.b16 %v3923
      %v4440 = vunpack.c.l.b16 %v3924
      %v4441 = vunpack.c.l.b16 %v3925
      %v4442 = vunpack.c.l.b16 %v3926
      %v4443 = vunpack.c.l.b16 %v3927
      %v4444 = vunpack.c.l.b16 %v3928
      %v4445 = vunpack.c.l.b16 %v3929
      %v4446 = vunpack.c.l.b16 %v3930
      %v4447 = vunpack.c.l.b16 %v3931
      %v4448 = vunpack.c.l.b16 %v3932
      %v4449 = vunpack.c.l.b16 %v3933
      %v4450 = vunpack.c.l.b16 %v3934
      %v4451 = vunpack.c.l.b16 %v3935
      %v4452 = vunpack.c.l.b16 %v3936
      %v4453 = vunpack.c.l.b16 %v3937
      %v4454 = vunpack.c.l.b16 %v3938
      %v4455 = vunpack.c.l.b16 %v3939
      %v4456 = vunpack.c.l.b16 %v3940
      %v4457 = vunpack.c.l.b16 %v3941
      %v4458 = vunpack.c.l.b16 %v3942
      %v4459 = vunpack.c.l.b16 %v3943
      %v4460 = vunpack.c.l.b16 %v3944
      %v4461 = vunpack.c.l.b16 %v3945
      %v4462 = vunpack.c.l.b16 %v3946
      %v4463 = vunpack.c.l.b16 %v3947
      %v4464 = vunpack.c.l.b16 %v3948
      %v4465 = vunpack.c.l.b16 %v3949
      %v4466 = vunpack.c.l.b16 %v3950
      %v4467 = vunpack.c.l.b16 %v3951
      %v4468 = vunpack.c.l.b16 %v3952
      %v4469 = vunpack.c.l.b16 %v3953
      %v4470 = vunpack.c.l.b16 %v3954
      %v4471 = vunpack.c.l.b16 %v3955
      %v4472 = vunpack.c.l.b16 %v3956
      %v4473 = vunpack.c.l.b16 %v3957
      %v4474 = vunpack.c.l.b16 %v3958
      %v4475 = vunpack.c.l.b16 %v3959
      %v4476 = vunpack.c.l.b16 %v3960
      %v4477 = vunpack.c.l.b16 %v3961
      %v4478 = vunpack.c.l.b16 %v3962
      %v4479 = vunpack.c.l.b16 %v3963
      %v4480 = vunpack.c.l.b16 %v3964
      %v4481 = vunpack.c.l.b16 %v3965
      %v4482 = vunpack.c.l.b16 %v3966
      %v4483 = vunpack.c.l.b16 %v3967
      %v4484 = vunpack.c.l.b16 %v3968
      %v4485 = vunpack.c.l.b16 %v3969
      %v4486 = vunpack.c.l.b16 %v3970
      %v4487 = vunpack.c.l.b16 %v3971
      %v4488 = vunpack.c.l.b16 %v3972
      %v4489 = vunpack.c.l.b16 %v3973
      %v4490 = vunpack.c.l.b16 %v3974
      %v4491 = vunpack.c.l.b16 %v3975
      %v4492 = vunpack.c.l.b16 %v3976
      %v4493 = vunpack.c.l.b16 %v3977
      %v4494 = vunpack.c.l.b16 %v3978
      %v4495 = vunpack.c.l.b16 %v3979
      %v4496 = vunpack.c.l.b16 %v3980
      %v4497 = vunpack.c.l.b16 %v3981
      %v4498 = vunpack.c.l.b16 %v3982
      %v4499 = vunpack.c.l.b16 %v3983
      %v4500 = vunpack.c.l.b16 %v3984
      %v4501 = vunpack.c.l.b16 %v3985
      %v4502 = vunpack.c.l.b16 %v3986
      %v4503 = vunpack.c.l.b16 %v3987
      %v4504 = vunpack.c.l.b16 %v3988
      %v4505 = vunpack.c.l.b16 %v3989
      %v4506 = vunpack.c.l.b16 %v3990
      %v4507 = vunpack.c.l.b16 %v3991
      %v4508 = vunpack.c.l.b16 %v3992
      %v4509 = vunpack.c.l.b16 %v3993
      %v4510 = vunpack.c.l.b16 %v3994
      %v4511 = vunpack.c.l.b16 %v3995
      %v4512 = vunpack.c.l.b16 %v3996
      %v4513 = vunpack.c.l.b16 %v3997
      %v4514 = vunpack.c.l.b16 %v3998
      %v4515 = vunpack.c.l.b16 %v3999
      %v4516 = vunpack.c.l.b16 %v4000
      %v4517 = vunpack.c.l.b16 %v4001
      %v4518 = vunpack.c.l.b16 %v4002
      %v4519 = vunpack.c.l.b16 %v4003
      %v4520 = vunpack.c.l.b16 %v4004
      %v4521 = vunpack.c.l.b16 %v4005
      %v4522 = vunpack.c.l.b16 %v4006
      %v4523 = vunpack.c.l.b16 %v4007
      %v4524 = vunpack.c.l.b16 %v4008
      %v4525 = vunpack.c.l.b16 %v4009
      %v4526 = vunpack.c.l.b16 %v4010
      %v4527 = vunpack.c.l.b16 %v4011
      %v4528 = vunpack.c.l.b16 %v4012
      %v4529 = vunpack.c.l.b16 %v4013
      %v4530 = vunpack.c.l.b16 %v4014
      %v4531 = vunpack.c.l.b16 %v4015
      %v4532 = vunpack.c.l.b16 %v4016
      %v4533 = vunpack.c.l.b16 %v4017
      %v4534 = vunpack.c.l.b16 %v4018
      %v4535 = vunpack.c.l.b16 %v4019
      %v4536 = vunpack.c.l.b16 %v4020
      %v4537 = vunpack.c.l.b16 %v4021
      %v4538 = vunpack.c.l.b16 %v4022
      %v4539 = vpack.c.b16 %v4284, %v4283
      %v4540 = vpack.c.b16 %v4286, %v4285
      %v4541 = vpack.c.b16 %v4288, %v4287
      %v4542 = vpack.c.b16 %v4290, %v4289
      %v4543 = vpack.c.b16 %v4292, %v4291
      %v4544 = vpack.c.b16 %v4294, %v4293
      %v4545 = vpack.c.b16 %v4296, %v4295
      %v4546 = vpack.c.b16 %v4298, %v4297
      %v4547 = vpack.c.b16 %v4300, %v4299
      %v4548 = vpack.c.b16 %v4302, %v4301
      %v4549 = vpack.c.b16 %v4304, %v4303
      %v4550 = vpack.c.b16 %v4306, %v4305
      %v4551 = vpack.c.b16 %v4308, %v4307
      %v4552 = vpack.c.b16 %v4310, %v4309
      %v4553 = vpack.c.b16 %v4312, %v4311
      %v4554 = vpack.c.b16 %v4314, %v4313
      %v4555 = vpack.c.b16 %v4316, %v4315
      %v4556 = vpack.c.b16 %v4318, %v4317
      %v4557 = vpack.c.b16 %v4320, %v4319
      %v4558 = vpack.c.b16 %v4322, %v4321
      %v4559 = vpack.c.b16 %v4324, %v4323
      %v4560 = vpack.c.b16 %v4326, %v4325
      %v4561 = vpack.c.b16 %v4328, %v4327
      %v4562 = vpack.c.b16 %v4330, %v4329
      %v4563 = vpack.c.b16 %v4332, %v4331
      %v4564 = vpack.c.b16 %v4334, %v4333
      %v4565 = vpack.c.b16 %v4336, %v4335
      %v4566 = vpack.c.b16 %v4338, %v4337
      %v4567 = vpack.c.b16 %v4340, %v4339
      %v4568 = vpack.c.b16 %v4342, %v4341
      %v4569 = vpack.c.b16 %v4344, %v4343
      %v4570 = vpack.c.b16 %v4346, %v4345
      %v4571 = vpack.c.b16 %v4348, %v4347
      %v4572 = vpack.c.b16 %v4350, %v4349
      %v4573 = vpack.c.b16 %v4352, %v4351
      %v4574 = vpack.c.b16 %v4354, %v4353
      %v4575 = vpack.c.b16 %v4356, %v4355
      %v4576 = vpack.c.b16 %v4358, %v4357
      %v4577 = vpack.c.b16 %v4360, %v4359
      %v4578 = vpack.c.b16 %v4362, %v4361
      %v4579 = vpack.c.b16 %v4364, %v4363
      %v4580 = vpack.c.b16 %v4366, %v4365
      %v4581 = vpack.c.b16 %v4368, %v4367
      %v4582 = vpack.c.b16 %v4370, %v4369
      %v4583 = vpack.c.b16 %v4372, %v4371
      %v4584 = vpack.c.b16 %v4374, %v4373
      %v4585 = vpack.c.b16 %v4376, %v4375
      %v4586 = vpack.c.b16 %v4378, %v4377
      %v4587 = vpack.c.b16 %v4380, %v4379
      %v4588 = vpack.c.b16 %v4382, %v4381
      %v4589 = vpack.c.b16 %v4384, %v4383
      %v4590 = vpack.c.b16 %v4386, %v4385
      %v4591 = vpack.c.b16 %v4388, %v4387
      %v4592 = vpack.c.b16 %v4390, %v4389
      %v4593 = vpack.c.b16 %v4392, %v4391
      %v4594 = vpack.c.b16 %v4394, %v4393
      %v4595 = vpack.c.b16 %v4396, %v4395
      %v4596 = vpack.c.b16 %v4398, %v4397
      %v4597 = vpack.c.b16 %v4400, %v4399
      %v4598 = vpack.c.b16 %v4402, %v4401
      %v4599 = vpack.c.b16 %v4404, %v4403
      %v4600 = vpack.c.b16 %v4406, %v4405
      %v4601 = vpack.c.b16 %v4408, %v4407
      %v4602 = vpack.c.b16 %v4410, %v4409
      %v4603 = vpack.c.b16 %v4412, %v4411
      %v4604 = vpack.c.b16 %v4414, %v4413
      %v4605 = vpack.c.b16 %v4416, %v4415
      %v4606 = vpack.c.b16 %v4418, %v4417
      %v4607 = vpack.c.b16 %v4420, %v4419
      %v4608 = vpack.c.b16 %v4422, %v4421
      %v4609 = vpack.c.b16 %v4424, %v4423
      %v4610 = vpack.c.b16 %v4426, %v4425
      %v4611 = vpack.c.b16 %v4428, %v4427
      %v4612 = vpack.c.b16 %v4430, %v4429
      %v4613 = vpack.c.b16 %v4432, %v4431
      %v4614 = vpack.c.b16 %v4434, %v4433
      %v4615 = vpack.c.b16 %v4436, %v4435
      %v4616 = vpack.c.b16 %v4438, %v4437
      %v4617 = vpack.c.b16 %v4440, %v4439
      %v4618 = vpack.c.b16 %v4442, %v4441
      %v4619 = vpack.c.b16 %v4444, %v4443
      %v4620 = vpack.c.b16 %v4446, %v4445
      %v4621 = vpack.c.b16 %v4448, %v4447
      %v4622 = vpack.c.b16 %v4450, %v4449
      %v4623 = vpack.c.b16 %v4452, %v4451
      %v4624 = vpack.c.b16 %v4454, %v4453
      %v4625 = vpack.c.b16 %v4456, %v4455
      %v4626 = vpack.c.b16 %v4458, %v4457
      %v4627 = vpack.c.b16 %v4460, %v4459
      %v4628 = vpack.c.b16 %v4462, %v4461
      %v4629 = vpack.c.b16 %v4464, %v4463
      %v4630 = vpack.c.b16 %v4466, %v4465
      %v4631 = vpack.c.b16 %v4468, %v4467
      %v4632 = vpack.c.b16 %v4470, %v4469
      %v4633 = vpack.c.b16 %v4472, %v4471
      %v4634 = vpack.c.b16 %v4474, %v4473
      %v4635 = vpack.c.b16 %v4476, %v4475
      %v4636 = vpack.c.b16 %v4478, %v4477
      %v4637 = vpack.c.b16 %v4480, %v4479
      %v4638 = vpack.c.b16 %v4482, %v4481
      %v4639 = vpack.c.b16 %v4484, %v4483
      %v4640 = vpack.c.b16 %v4486, %v4485
      %v4641 = vpack.c.b16 %v4488, %v4487
      %v4642 = vpack.c.b16 %v4490, %v4489
      %v4643 = vpack.c.b16 %v4492, %v4491
      %v4644 = vpack.c.b16 %v4494, %v4493
      %v4645 = vpack.c.b16 %v4496, %v4495
      %v4646 = vpack.c.b16 %v4498, %v4497
      %v4647 = vpack.c.b16 %v4500, %v4499
      %v4648 = vpack.c.b16 %v4502, %v4501
      %v4649 = vpack.c.b16 %v4504, %v4503
      %v4650 = vpack.c.b16 %v4506, %v4505
      %v4651 = vpack.c.b16 %v4508, %v4507
      %v4652 = vpack.c.b16 %v4510, %v4509
      %v4653 = vpack.c.b16 %v4512, %v4511
      %v4654 = vpack.c.b16 %v4514, %v4513
      %v4655 = vpack.c.b16 %v4516, %v4515
      %v4656 = vpack.c.b16 %v4518, %v4517
      %v4657 = vpack.c.b16 %v4520, %v4519
      %v4658 = vpack.c.b16 %v4522, %v4521
      %v4659 = vpack.c.b16 %v4524, %v4523
      %v4660 = vpack.c.b16 %v4526, %v4525
      %v4661 = vpack.c.b16 %v4528, %v4527
      %v4662 = vpack.c.b16 %v4530, %v4529
      %v4663 = vpack.c.b16 %v4532, %v4531
      %v4664 = vpack.c.b16 %v4534, %v4533
      %v4665 = vpack.c.b16 %v4536, %v4535
      %v4666 = vpack.c.b16 %v4538, %v4537
      %4795 = vmatpush.bf16.msra.mxu0 %v4546
      %4796 = vmatpush.bf16.msra.mxu0 %v4545
      %4797 = vmatpush.bf16.msra.mxu0 %v4544
      %4798 = vmatpush.bf16.msra.mxu0 %v4543
      %4799 = vmatpush.bf16.msra.mxu0 %v4542
      %4800 = vmatpush.bf16.msra.mxu0 %v4541
      %4801 = vmatpush.bf16.msra.mxu0 %v4540
      %4802 = vmatpush.bf16.msra.mxu0 %v4539
      %4803 = vmatmul.bf16.gmra.mxu0 %v3703
      %v4804 = vpop.f32.mrf.mxu0
      %v4805 = vadd.f32 %v4025, %v4804
      %v4806 = vpop.f32.mrf.mxu0
      %v4807 = vadd.f32 %v4025, %v4806
      %4808 = vmatmul.bf16.gmra.mxu0 %v3719
      %v4809 = vpop.f32.mrf.mxu0
      %v4810 = vadd.f32 %v4025, %v4809
      %v4811 = vpop.f32.mrf.mxu0
      %v4812 = vadd.f32 %v4025, %v4811
      %4813 = vmatmul.bf16.gmra.mxu0 %v3735
      %v4814 = vpop.f32.mrf.mxu0
      %v4815 = vadd.f32 %v4025, %v4814
      %v4816 = vpop.f32.mrf.mxu0
      %v4817 = vadd.f32 %v4025, %v4816
      %4818 = vmatmul.bf16.gmra.mxu0 %v3751
      %v4819 = vpop.f32.mrf.mxu0
      %v4820 = vadd.f32 %v4025, %v4819
      %v4821 = vpop.f32.mrf.mxu0
      %v4822 = vadd.f32 %v4025, %v4821
      %4823 = vdwg.mxu0
      %4824 = vmatpush.bf16.msra.mxu0 %v4554
      %4825 = vmatpush.bf16.msra.mxu0 %v4553
      %4826 = vmatpush.bf16.msra.mxu0 %v4552
      %4827 = vmatpush.bf16.msra.mxu0 %v4551
      %4828 = vmatpush.bf16.msra.mxu0 %v4550
      %4829 = vmatpush.bf16.msra.mxu0 %v4549
      %4830 = vmatpush.bf16.msra.mxu0 %v4548
      %4831 = vmatpush.bf16.msra.mxu0 %v4547
      %4832 = vmatmul.bf16.gmra.mxu0 %v3704
      %v4833 = vpop.f32.mrf.mxu0
      %v4834 = vadd.f32 %v4805, %v4833
      %v4835 = vpop.f32.mrf.mxu0
      %v4836 = vadd.f32 %v4807, %v4835
      %4837 = vmatmul.bf16.gmra.mxu0 %v3720
      %v4838 = vpop.f32.mrf.mxu0
      %v4839 = vadd.f32 %v4810, %v4838
      %v4840 = vpop.f32.mrf.mxu0
      %v4841 = vadd.f32 %v4812, %v4840
      %4842 = vmatmul.bf16.gmra.mxu0 %v3736
      %v4843 = vpop.f32.mrf.mxu0
      %v4844 = vadd.f32 %v4815, %v4843
      %v4845 = vpop.f32.mrf.mxu0
      %v4846 = vadd.f32 %v4817, %v4845
      %4847 = vmatmul.bf16.gmra.mxu0 %v3752
      %v4848 = vpop.f32.mrf.mxu0
      %v4849 = vadd.f32 %v4820, %v4848
      %v4850 = vpop.f32.mrf.mxu0
      %v4851 = vadd.f32 %v4822, %v4850
      %4852 = vdwg.mxu0
      %4853 = vmatpush.bf16.msra.mxu0 %v4562
      %4854 = vmatpush.bf16.msra.mxu0 %v4561
      %4855 = vmatpush.bf16.msra.mxu0 %v4560
      %4856 = vmatpush.bf16.msra.mxu0 %v4559
      %4857 = vmatpush.bf16.msra.mxu0 %v4558
      %4858 = vmatpush.bf16.msra.mxu0 %v4557
      %4859 = vmatpush.bf16.msra.mxu0 %v4556
      %4860 = vmatpush.bf16.msra.mxu0 %v4555
      %4861 = vmatmul.bf16.gmra.mxu0 %v3705
      %v4862 = vpop.f32.mrf.mxu0
      %v4863 = vadd.f32 %v4834, %v4862
      %v4864 = vpop.f32.mrf.mxu0
      %v4865 = vadd.f32 %v4836, %v4864
      %4866 = vmatmul.bf16.gmra.mxu0 %v3721
      %v4867 = vpop.f32.mrf.mxu0
      %v4868 = vadd.f32 %v4839, %v4867
      %v4869 = vpop.f32.mrf.mxu0
      %v4870 = vadd.f32 %v4841, %v4869
      %4871 = vmatmul.bf16.gmra.mxu0 %v3737
      %v4872 = vpop.f32.mrf.mxu0
      %v4873 = vadd.f32 %v4844, %v4872
      %v4874 = vpop.f32.mrf.mxu0
      %v4875 = vadd.f32 %v4846, %v4874
      %4876 = vmatmul.bf16.gmra.mxu0 %v3753
      %v4877 = vpop.f32.mrf.mxu0
      %v4878 = vadd.f32 %v4849, %v4877
      %v4879 = vpop.f32.mrf.mxu0
      %v4880 = vadd.f32 %v4851, %v4879
      %4881 = vdwg.mxu0
      %4882 = vmatpush.bf16.msra.mxu0 %v4570
      %4883 = vmatpush.bf16.msra.mxu0 %v4569
      %4884 = vmatpush.bf16.msra.mxu0 %v4568
      %4885 = vmatpush.bf16.msra.mxu0 %v4567
      %4886 = vmatpush.bf16.msra.mxu0 %v4566
      %4887 = vmatpush.bf16.msra.mxu0 %v4565
      %4888 = vmatpush.bf16.msra.mxu0 %v4564
      %4889 = vmatpush.bf16.msra.mxu0 %v4563
      %4890 = vmatmul.bf16.gmra.mxu0 %v3706
      %v4891 = vpop.f32.mrf.mxu0
      %v4892 = vadd.f32 %v4863, %v4891
      %v4893 = vpop.f32.mrf.mxu0
      %v4894 = vadd.f32 %v4865, %v4893
      %4895 = vmatmul.bf16.gmra.mxu0 %v3722
      %v4896 = vpop.f32.mrf.mxu0
      %v4897 = vadd.f32 %v4868, %v4896
      %v4898 = vpop.f32.mrf.mxu0
      %v4899 = vadd.f32 %v4870, %v4898
      %4900 = vmatmul.bf16.gmra.mxu0 %v3738
      %v4901 = vpop.f32.mrf.mxu0
      %v4902 = vadd.f32 %v4873, %v4901
      %v4903 = vpop.f32.mrf.mxu0
      %v4904 = vadd.f32 %v4875, %v4903
      %4905 = vmatmul.bf16.gmra.mxu0 %v3754
      %v4906 = vpop.f32.mrf.mxu0
      %v4907 = vadd.f32 %v4878, %v4906
      %v4908 = vpop.f32.mrf.mxu0
      %v4909 = vadd.f32 %v4880, %v4908
      %4910 = vdwg.mxu0
      %4911 = vmatpush.bf16.msra.mxu0 %v4578
      %4912 = vmatpush.bf16.msra.mxu0 %v4577
      %4913 = vmatpush.bf16.msra.mxu0 %v4576
      %4914 = vmatpush.bf16.msra.mxu0 %v4575
      %4915 = vmatpush.bf16.msra.mxu0 %v4574
      %4916 = vmatpush.bf16.msra.mxu0 %v4573
      %4917 = vmatpush.bf16.msra.mxu0 %v4572
      %4918 = vmatpush.bf16.msra.mxu0 %v4571
      %4919 = vmatmul.bf16.gmra.mxu0 %v3707
      %v4920 = vpop.f32.mrf.mxu0
      %v4921 = vadd.f32 %v4892, %v4920
      %v4922 = vpop.f32.mrf.mxu0
      %v4923 = vadd.f32 %v4894, %v4922
      %4924 = vmatmul.bf16.gmra.mxu0 %v3723
      %v4925 = vpop.f32.mrf.mxu0
      %v4926 = vadd.f32 %v4897, %v4925
      %v4927 = vpop.f32.mrf.mxu0
      %v4928 = vadd.f32 %v4899, %v4927
      %4929 = vmatmul.bf16.gmra.mxu0 %v3739
      %v4930 = vpop.f32.mrf.mxu0
      %v4931 = vadd.f32 %v4902, %v4930
      %v4932 = vpop.f32.mrf.mxu0
      %v4933 = vadd.f32 %v4904, %v4932
      %4934 = vmatmul.bf16.gmra.mxu0 %v3755
      %v4935 = vpop.f32.mrf.mxu0
      %v4936 = vadd.f32 %v4907, %v4935
      %v4937 = vpop.f32.mrf.mxu0
      %v4938 = vadd.f32 %v4909, %v4937
      %4939 = vdwg.mxu0
      %4940 = vmatpush.bf16.msra.mxu0 %v4586
      %4941 = vmatpush.bf16.msra.mxu0 %v4585
      %4942 = vmatpush.bf16.msra.mxu0 %v4584
      %4943 = vmatpush.bf16.msra.mxu0 %v4583
      %4944 = vmatpush.bf16.msra.mxu0 %v4582
      %4945 = vmatpush.bf16.msra.mxu0 %v4581
      %4946 = vmatpush.bf16.msra.mxu0 %v4580
      %4947 = vmatpush.bf16.msra.mxu0 %v4579
      %4948 = vmatmul.bf16.gmra.mxu0 %v3708
      %v4949 = vpop.f32.mrf.mxu0
      %v4950 = vadd.f32 %v4921, %v4949
      %v4951 = vpop.f32.mrf.mxu0
      %v4952 = vadd.f32 %v4923, %v4951
      %4953 = vmatmul.bf16.gmra.mxu0 %v3724
      %v4954 = vpop.f32.mrf.mxu0
      %v4955 = vadd.f32 %v4926, %v4954
      %v4956 = vpop.f32.mrf.mxu0
      %v4957 = vadd.f32 %v4928, %v4956
      %4958 = vmatmul.bf16.gmra.mxu0 %v3740
      %v4959 = vpop.f32.mrf.mxu0
      %v4960 = vadd.f32 %v4931, %v4959
      %v4961 = vpop.f32.mrf.mxu0
      %v4962 = vadd.f32 %v4933, %v4961
      %4963 = vmatmul.bf16.gmra.mxu0 %v3756
      %v4964 = vpop.f32.mrf.mxu0
      %v4965 = vadd.f32 %v4936, %v4964
      %v4966 = vpop.f32.mrf.mxu0
      %v4967 = vadd.f32 %v4938, %v4966
      %4968 = vdwg.mxu0
      %4969 = vmatpush.bf16.msra.mxu0 %v4594
      %4970 = vmatpush.bf16.msra.mxu0 %v4593
      %4971 = vmatpush.bf16.msra.mxu0 %v4592
      %4972 = vmatpush.bf16.msra.mxu0 %v4591
      %4973 = vmatpush.bf16.msra.mxu0 %v4590
      %4974 = vmatpush.bf16.msra.mxu0 %v4589
      %4975 = vmatpush.bf16.msra.mxu0 %v4588
      %4976 = vmatpush.bf16.msra.mxu0 %v4587
      %4977 = vmatmul.bf16.gmra.mxu0 %v3709
      %v4978 = vpop.f32.mrf.mxu0
      %v4979 = vadd.f32 %v4950, %v4978
      %v4980 = vpop.f32.mrf.mxu0
      %v4981 = vadd.f32 %v4952, %v4980
      %4982 = vmatmul.bf16.gmra.mxu0 %v3725
      %v4983 = vpop.f32.mrf.mxu0
      %v4984 = vadd.f32 %v4955, %v4983
      %v4985 = vpop.f32.mrf.mxu0
      %v4986 = vadd.f32 %v4957, %v4985
      %4987 = vmatmul.bf16.gmra.mxu0 %v3741
      %v4988 = vpop.f32.mrf.mxu0
      %v4989 = vadd.f32 %v4960, %v4988
      %v4990 = vpop.f32.mrf.mxu0
      %v4991 = vadd.f32 %v4962, %v4990
      %4992 = vmatmul.bf16.gmra.mxu0 %v3757
      %v4993 = vpop.f32.mrf.mxu0
      %v4994 = vadd.f32 %v4965, %v4993
      %v4995 = vpop.f32.mrf.mxu0
      %v4996 = vadd.f32 %v4967, %v4995
      %4997 = vdwg.mxu0
      %4998 = vmatpush.bf16.msra.mxu0 %v4602
      %4999 = vmatpush.bf16.msra.mxu0 %v4601
      %5000 = vmatpush.bf16.msra.mxu0 %v4600
      %5001 = vmatpush.bf16.msra.mxu0 %v4599
      %5002 = vmatpush.bf16.msra.mxu0 %v4598
      %5003 = vmatpush.bf16.msra.mxu0 %v4597
      %5004 = vmatpush.bf16.msra.mxu0 %v4596
      %5005 = vmatpush.bf16.msra.mxu0 %v4595
      %5006 = vmatmul.bf16.gmra.mxu0 %v3710
      %v5007 = vpop.f32.mrf.mxu0
      %v5008 = vadd.f32 %v4979, %v5007
      %v5009 = vpop.f32.mrf.mxu0
      %v5010 = vadd.f32 %v4981, %v5009
      %5011 = vmatmul.bf16.gmra.mxu0 %v3726
      %v5012 = vpop.f32.mrf.mxu0
      %v5013 = vadd.f32 %v4984, %v5012
      %v5014 = vpop.f32.mrf.mxu0
      %v5015 = vadd.f32 %v4986, %v5014
      %5016 = vmatmul.bf16.gmra.mxu0 %v3742
      %v5017 = vpop.f32.mrf.mxu0
      %v5018 = vadd.f32 %v4989, %v5017
      %v5019 = vpop.f32.mrf.mxu0
      %v5020 = vadd.f32 %v4991, %v5019
      %5021 = vmatmul.bf16.gmra.mxu0 %v3758
      %v5022 = vpop.f32.mrf.mxu0
      %v5023 = vadd.f32 %v4994, %v5022
      %v5024 = vpop.f32.mrf.mxu0
      %v5025 = vadd.f32 %v4996, %v5024
      %5026 = vdwg.mxu0
      %5027 = vmatpush.bf16.msra.mxu0 %v4610
      %5028 = vmatpush.bf16.msra.mxu0 %v4609
      %5029 = vmatpush.bf16.msra.mxu0 %v4608
      %5030 = vmatpush.bf16.msra.mxu0 %v4607
      %5031 = vmatpush.bf16.msra.mxu0 %v4606
      %5032 = vmatpush.bf16.msra.mxu0 %v4605
      %5033 = vmatpush.bf16.msra.mxu0 %v4604
      %5034 = vmatpush.bf16.msra.mxu0 %v4603
      %5035 = vmatmul.bf16.gmra.mxu0 %v3711
      %v5036 = vpop.f32.mrf.mxu0
      %v5037 = vadd.f32 %v5008, %v5036
      %v5038 = vpop.f32.mrf.mxu0
      %v5039 = vadd.f32 %v5010, %v5038
      %5040 = vmatmul.bf16.gmra.mxu0 %v3727
      %v5041 = vpop.f32.mrf.mxu0
      %v5042 = vadd.f32 %v5013, %v5041
      %v5043 = vpop.f32.mrf.mxu0
      %v5044 = vadd.f32 %v5015, %v5043
      %5045 = vmatmul.bf16.gmra.mxu0 %v3743
      %v5046 = vpop.f32.mrf.mxu0
      %v5047 = vadd.f32 %v5018, %v5046
      %v5048 = vpop.f32.mrf.mxu0
      %v5049 = vadd.f32 %v5020, %v5048
      %5050 = vmatmul.bf16.gmra.mxu0 %v3759
      %v5051 = vpop.f32.mrf.mxu0
      %v5052 = vadd.f32 %v5023, %v5051
      %v5053 = vpop.f32.mrf.mxu0
      %v5054 = vadd.f32 %v5025, %v5053
      %5055 = vdwg.mxu0
      %5056 = vmatpush.bf16.msra.mxu0 %v4618
      %5057 = vmatpush.bf16.msra.mxu0 %v4617
      %5058 = vmatpush.bf16.msra.mxu0 %v4616
      %5059 = vmatpush.bf16.msra.mxu0 %v4615
      %5060 = vmatpush.bf16.msra.mxu0 %v4614
      %5061 = vmatpush.bf16.msra.mxu0 %v4613
      %5062 = vmatpush.bf16.msra.mxu0 %v4612
      %5063 = vmatpush.bf16.msra.mxu0 %v4611
      %5064 = vmatmul.bf16.gmra.mxu0 %v3712
      %v5065 = vpop.f32.mrf.mxu0
      %v5066 = vadd.f32 %v5037, %v5065
      %v5067 = vpop.f32.mrf.mxu0
      %v5068 = vadd.f32 %v5039, %v5067
      %5069 = vmatmul.bf16.gmra.mxu0 %v3728
      %v5070 = vpop.f32.mrf.mxu0
      %v5071 = vadd.f32 %v5042, %v5070
      %v5072 = vpop.f32.mrf.mxu0
      %v5073 = vadd.f32 %v5044, %v5072
      %5074 = vmatmul.bf16.gmra.mxu0 %v3744
      %v5075 = vpop.f32.mrf.mxu0
      %v5076 = vadd.f32 %v5047, %v5075
      %v5077 = vpop.f32.mrf.mxu0
      %v5078 = vadd.f32 %v5049, %v5077
      %5079 = vmatmul.bf16.gmra.mxu0 %v3760
      %v5080 = vpop.f32.mrf.mxu0
      %v5081 = vadd.f32 %v5052, %v5080
      %v5082 = vpop.f32.mrf.mxu0
      %v5083 = vadd.f32 %v5054, %v5082
      %5084 = vdwg.mxu0
      %5085 = vmatpush.bf16.msra.mxu0 %v4626
      %5086 = vmatpush.bf16.msra.mxu0 %v4625
      %5087 = vmatpush.bf16.msra.mxu0 %v4624
      %5088 = vmatpush.bf16.msra.mxu0 %v4623
      %5089 = vmatpush.bf16.msra.mxu0 %v4622
      %5090 = vmatpush.bf16.msra.mxu0 %v4621
      %5091 = vmatpush.bf16.msra.mxu0 %v4620
      %5092 = vmatpush.bf16.msra.mxu0 %v4619
      %5093 = vmatmul.bf16.gmra.mxu0 %v3713
      %v5094 = vpop.f32.mrf.mxu0
      %v5095 = vadd.f32 %v5066, %v5094
      %v5096 = vpop.f32.mrf.mxu0
      %v5097 = vadd.f32 %v5068, %v5096
      %5098 = vmatmul.bf16.gmra.mxu0 %v3729
      %v5099 = vpop.f32.mrf.mxu0
      %v5100 = vadd.f32 %v5071, %v5099
      %v5101 = vpop.f32.mrf.mxu0
      %v5102 = vadd.f32 %v5073, %v5101
      %5103 = vmatmul.bf16.gmra.mxu0 %v3745
      %v5104 = vpop.f32.mrf.mxu0
      %v5105 = vadd.f32 %v5076, %v5104
      %v5106 = vpop.f32.mrf.mxu0
      %v5107 = vadd.f32 %v5078, %v5106
      %5108 = vmatmul.bf16.gmra.mxu0 %v3761
      %v5109 = vpop.f32.mrf.mxu0
      %v5110 = vadd.f32 %v5081, %v5109
      %v5111 = vpop.f32.mrf.mxu0
      %v5112 = vadd.f32 %v5083, %v5111
      %5113 = vdwg.mxu0
      %5114 = vmatpush.bf16.msra.mxu0 %v4634
      %5115 = vmatpush.bf16.msra.mxu0 %v4633
      %5116 = vmatpush.bf16.msra.mxu0 %v4632
      %5117 = vmatpush.bf16.msra.mxu0 %v4631
      %5118 = vmatpush.bf16.msra.mxu0 %v4630
      %5119 = vmatpush.bf16.msra.mxu0 %v4629
      %5120 = vmatpush.bf16.msra.mxu0 %v4628
      %5121 = vmatpush.bf16.msra.mxu0 %v4627
      %5122 = vmatmul.bf16.gmra.mxu0 %v3714
      %v5123 = vpop.f32.mrf.mxu0
      %v5124 = vadd.f32 %v5095, %v5123
      %v5125 = vpop.f32.mrf.mxu0
      %v5126 = vadd.f32 %v5097, %v5125
      %5127 = vmatmul.bf16.gmra.mxu0 %v3730
      %v5128 = vpop.f32.mrf.mxu0
      %v5129 = vadd.f32 %v5100, %v5128
      %v5130 = vpop.f32.mrf.mxu0
      %v5131 = vadd.f32 %v5102, %v5130
      %5132 = vmatmul.bf16.gmra.mxu0 %v3746
      %v5133 = vpop.f32.mrf.mxu0
      %v5134 = vadd.f32 %v5105, %v5133
      %v5135 = vpop.f32.mrf.mxu0
      %v5136 = vadd.f32 %v5107, %v5135
      %5137 = vmatmul.bf16.gmra.mxu0 %v3762
      %v5138 = vpop.f32.mrf.mxu0
      %v5139 = vadd.f32 %v5110, %v5138
      %v5140 = vpop.f32.mrf.mxu0
      %v5141 = vadd.f32 %v5112, %v5140
      %5142 = vdwg.mxu0
      %5143 = vmatpush.bf16.msra.mxu0 %v4642
      %5144 = vmatpush.bf16.msra.mxu0 %v4641
      %5145 = vmatpush.bf16.msra.mxu0 %v4640
      %5146 = vmatpush.bf16.msra.mxu0 %v4639
      %5147 = vmatpush.bf16.msra.mxu0 %v4638
      %5148 = vmatpush.bf16.msra.mxu0 %v4637
      %5149 = vmatpush.bf16.msra.mxu0 %v4636
      %5150 = vmatpush.bf16.msra.mxu0 %v4635
      %5151 = vmatmul.bf16.gmra.mxu0 %v3715
      %v5152 = vpop.f32.mrf.mxu0
      %v5153 = vadd.f32 %v5124, %v5152
      %v5154 = vpop.f32.mrf.mxu0
      %v5155 = vadd.f32 %v5126, %v5154
      %5156 = vmatmul.bf16.gmra.mxu0 %v3731
      %v5157 = vpop.f32.mrf.mxu0
      %v5158 = vadd.f32 %v5129, %v5157
      %v5159 = vpop.f32.mrf.mxu0
      %v5160 = vadd.f32 %v5131, %v5159
      %5161 = vmatmul.bf16.gmra.mxu0 %v3747
      %v5162 = vpop.f32.mrf.mxu0
      %v5163 = vadd.f32 %v5134, %v5162
      %v5164 = vpop.f32.mrf.mxu0
      %v5165 = vadd.f32 %v5136, %v5164
      %5166 = vmatmul.bf16.gmra.mxu0 %v3763
      %v5167 = vpop.f32.mrf.mxu0
      %v5168 = vadd.f32 %v5139, %v5167
      %v5169 = vpop.f32.mrf.mxu0
      %v5170 = vadd.f32 %v5141, %v5169
      %5171 = vdwg.mxu0
      %5172 = vmatpush.bf16.msra.mxu0 %v4650
      %5173 = vmatpush.bf16.msra.mxu0 %v4649
      %5174 = vmatpush.bf16.msra.mxu0 %v4648
      %5175 = vmatpush.bf16.msra.mxu0 %v4647
      %5176 = vmatpush.bf16.msra.mxu0 %v4646
      %5177 = vmatpush.bf16.msra.mxu0 %v4645
      %5178 = vmatpush.bf16.msra.mxu0 %v4644
      %5179 = vmatpush.bf16.msra.mxu0 %v4643
      %5180 = vmatmul.bf16.gmra.mxu0 %v3716
      %v5181 = vpop.f32.mrf.mxu0
      %v5182 = vadd.f32 %v5153, %v5181
      %v5183 = vpop.f32.mrf.mxu0
      %v5184 = vadd.f32 %v5155, %v5183
      %5185 = vmatmul.bf16.gmra.mxu0 %v3732
      %v5186 = vpop.f32.mrf.mxu0
      %v5187 = vadd.f32 %v5158, %v5186
      %v5188 = vpop.f32.mrf.mxu0
      %v5189 = vadd.f32 %v5160, %v5188
      %5190 = vmatmul.bf16.gmra.mxu0 %v3748
      %v5191 = vpop.f32.mrf.mxu0
      %v5192 = vadd.f32 %v5163, %v5191
      %v5193 = vpop.f32.mrf.mxu0
      %v5194 = vadd.f32 %v5165, %v5193
      %5195 = vmatmul.bf16.gmra.mxu0 %v3764
      %v5196 = vpop.f32.mrf.mxu0
      %v5197 = vadd.f32 %v5168, %v5196
      %v5198 = vpop.f32.mrf.mxu0
      %v5199 = vadd.f32 %v5170, %v5198
      %5200 = vdwg.mxu0
      %5201 = vmatpush.bf16.msra.mxu0 %v4658
      %5202 = vmatpush.bf16.msra.mxu0 %v4657
      %5203 = vmatpush.bf16.msra.mxu0 %v4656
      %5204 = vmatpush.bf16.msra.mxu0 %v4655
      %5205 = vmatpush.bf16.msra.mxu0 %v4654
      %5206 = vmatpush.bf16.msra.mxu0 %v4653
      %5207 = vmatpush.bf16.msra.mxu0 %v4652
      %5208 = vmatpush.bf16.msra.mxu0 %v4651
      %5209 = vmatmul.bf16.gmra.mxu0 %v3717
      %v5210 = vpop.f32.mrf.mxu0
      %v5211 = vadd.f32 %v5182, %v5210
      %v5212 = vpop.f32.mrf.mxu0
      %v5213 = vadd.f32 %v5184, %v5212
      %5214 = vmatmul.bf16.gmra.mxu0 %v3733
      %v5215 = vpop.f32.mrf.mxu0
      %v5216 = vadd.f32 %v5187, %v5215
      %v5217 = vpop.f32.mrf.mxu0
      %v5218 = vadd.f32 %v5189, %v5217
      %5219 = vmatmul.bf16.gmra.mxu0 %v3749
      %v5220 = vpop.f32.mrf.mxu0
      %v5221 = vadd.f32 %v5192, %v5220
      %v5222 = vpop.f32.mrf.mxu0
      %v5223 = vadd.f32 %v5194, %v5222
      %5224 = vmatmul.bf16.gmra.mxu0 %v3765
      %v5225 = vpop.f32.mrf.mxu0
      %v5226 = vadd.f32 %v5197, %v5225
      %v5227 = vpop.f32.mrf.mxu0
      %v5228 = vadd.f32 %v5199, %v5227
      %5229 = vdwg.mxu0
      %5230 = vmatpush.bf16.msra.mxu0 %v4666
      %5231 = vmatpush.bf16.msra.mxu0 %v4665
      %5232 = vmatpush.bf16.msra.mxu0 %v4664
      %5233 = vmatpush.bf16.msra.mxu0 %v4663
      %5234 = vmatpush.bf16.msra.mxu0 %v4662
      %5235 = vmatpush.bf16.msra.mxu0 %v4661
      %5236 = vmatpush.bf16.msra.mxu0 %v4660
      %5237 = vmatpush.bf16.msra.mxu0 %v4659
      %5238 = vmatmul.bf16.gmra.mxu0 %v3718
      %v5239 = vpop.f32.mrf.mxu0
      %v5240 = vadd.f32 %v5211, %v5239
      %v5241 = vpop.f32.mrf.mxu0
      %v5242 = vadd.f32 %v5213, %v5241
      %5243 = vmatmul.bf16.gmra.mxu0 %v3734
      %v5244 = vpop.f32.mrf.mxu0
      %v5245 = vadd.f32 %v5216, %v5244
      %v5246 = vpop.f32.mrf.mxu0
      %v5247 = vadd.f32 %v5218, %v5246
      %5248 = vmatmul.bf16.gmra.mxu0 %v3750
      %v5249 = vpop.f32.mrf.mxu0
      %v5250 = vadd.f32 %v5221, %v5249
      %v5251 = vpop.f32.mrf.mxu0
      %v5252 = vadd.f32 %v5223, %v5251
      %5253 = vmatmul.bf16.gmra.mxu0 %v3766
      %v5254 = vpop.f32.mrf.mxu0
      %v5255 = vadd.f32 %v5226, %v5254
      %v5256 = vpop.f32.mrf.mxu0
      %v5257 = vadd.f32 %v5228, %v5256
      %5258 = vdwg.mxu0
      %v5259 = vadd.f32 %v2859, %v5240
      %v5260 = vadd.f32 %v2860, %v5242
      %v5261 = vadd.f32 %v2861, %v5245
      %v5262 = vadd.f32 %v2862, %v5247
      %v5263 = vadd.f32 %v2863, %v5250
      %v5264 = vadd.f32 %v2864, %v5252
      %v5265 = vadd.f32 %v2865, %v5255
      %v5266 = vadd.f32 %v2866, %v5257
      %v5267 = vsel %vm751, %v5259, 0.0
      %5268 = vadd.xlane.f32.xlu0 %v5267
      %v5269 = vpop.xlane.xlu0 %5268
      %v5270 = vsel %vm751, %v5260, 0.0
      %5271 = vadd.xlane.f32.xlu0 %v5270
      %v5272 = vpop.xlane.xlu0 %5271
      %v5273 = vsel %vm751, %v5261, 0.0
      %5274 = vadd.xlane.f32.xlu0 %v5273
      %v5275 = vpop.xlane.xlu0 %5274
      %v5276 = vsel %vm751, %v5262, 0.0
      %5277 = vadd.xlane.f32.xlu0 %v5276
      %v5278 = vpop.xlane.xlu0 %5277
      %v5279 = vsel %vm751, %v5263, 0.0
      %5280 = vadd.xlane.f32.xlu0 %v5279
      %v5281 = vpop.xlane.xlu0 %5280
      %v5282 = vsel %vm751, %v5264, 0.0
      %5283 = vadd.xlane.f32.xlu0 %v5282
      %v5284 = vpop.xlane.xlu0 %5283
      %v5285 = vsel %vm751, %v5265, 0.0
      %5286 = vadd.xlane.f32.xlu0 %v5285
      %v5287 = vpop.xlane.xlu0 %5286
      %v5288 = vsel %vm751, %v5266, 0.0
      %5289 = vadd.xlane.f32.xlu0 %v5288
      %v5290 = vpop.xlane.xlu0 %5289
      %v5291 = vmul.f32 %v5269, %v1631
      %v5292 = vmul.f32 %v5272, %v1631
      %v5293 = vmul.f32 %v5275, %v1631
      %v5294 = vmul.f32 %v5278, %v1631
      %v5295 = vmul.f32 %v5281, %v1631
      %v5296 = vmul.f32 %v5284, %v1631
      %v5297 = vmul.f32 %v5287, %v1631
      %v5298 = vmul.f32 %v5290, %v1631
      %v5299 = vsub.f32 %v5259, %v5291
      %v5300 = vsub.f32 %v5260, %v5292
      %v5301 = vsub.f32 %v5261, %v5293
      %v5302 = vsub.f32 %v5262, %v5294
      %v5303 = vsub.f32 %v5263, %v5295
      %v5304 = vsub.f32 %v5264, %v5296
      %v5305 = vsub.f32 %v5265, %v5297
      %v5306 = vsub.f32 %v5266, %v5298
      %v5307 = vmul.f32 %v5299, %v5299
      %v5308 = vmul.f32 %v5300, %v5300
      %v5309 = vmul.f32 %v5301, %v5301
      %v5310 = vmul.f32 %v5302, %v5302
      %v5311 = vmul.f32 %v5303, %v5303
      %v5312 = vmul.f32 %v5304, %v5304
      %v5313 = vmul.f32 %v5305, %v5305
      %v5314 = vmul.f32 %v5306, %v5306
      %v5315 = vsel %vm751, %v5307, 0.0
      %5316 = vadd.xlane.f32.xlu0 %v5315
      %v5317 = vpop.xlane.xlu0 %5316
      %v5318 = vsel %vm751, %v5308, 0.0
      %5319 = vadd.xlane.f32.xlu0 %v5318
      %v5320 = vpop.xlane.xlu0 %5319
      %v5321 = vsel %vm751, %v5309, 0.0
      %5322 = vadd.xlane.f32.xlu0 %v5321
      %v5323 = vpop.xlane.xlu0 %5322
      %v5324 = vsel %vm751, %v5310, 0.0
      %5325 = vadd.xlane.f32.xlu0 %v5324
      %v5326 = vpop.xlane.xlu0 %5325
      %v5327 = vsel %vm751, %v5311, 0.0
      %5328 = vadd.xlane.f32.xlu0 %v5327
      %v5329 = vpop.xlane.xlu0 %5328
      %v5330 = vsel %vm751, %v5312, 0.0
      %5331 = vadd.xlane.f32.xlu0 %v5330
      %v5332 = vpop.xlane.xlu0 %5331
      %v5333 = vsel %vm751, %v5313, 0.0
      %5334 = vadd.xlane.f32.xlu0 %v5333
      %v5335 = vpop.xlane.xlu0 %5334
      %v5336 = vsel %vm751, %v5314, 0.0
      %5337 = vadd.xlane.f32.xlu0 %v5336
      %v5338 = vpop.xlane.xlu0 %5337
      %v5339 = vmul.f32 %v5317, %v1631
      %v5340 = vmul.f32 %v5320, %v1631
      %v5341 = vmul.f32 %v5323, %v1631
      %v5342 = vmul.f32 %v5326, %v1631
      %v5343 = vmul.f32 %v5329, %v1631
      %v5344 = vmul.f32 %v5332, %v1631
      %v5345 = vmul.f32 %v5335, %v1631
      %v5346 = vmul.f32 %v5338, %v1631
      %v5347 = vadd.f32 %v5339, 1e-05
      %v5348 = vadd.f32 %v5340, 1e-05
      %v5349 = vadd.f32 %v5341, 1e-05
      %v5350 = vadd.f32 %v5342, 1e-05
      %v5351 = vadd.f32 %v5343, 1e-05
      %v5352 = vadd.f32 %v5344, 1e-05
      %v5353 = vadd.f32 %v5345, 1e-05
      %v5354 = vadd.f32 %v5346, 1e-05
      %v5355 = vrsqrt.pop %v5347
      %v5356 = vmul.f32 %v5355, %v5347
      %v5357 = vmul.f32 %v5356, %v5355
      %v5358 = vmul.f32 0.5, %v5357
      %v5359 = vsub.f32 1.5, %v5358
      %v5360 = vmul.f32 %v5355, %v5359
      %vm5361 = vweird.f32 %v5347
      %vm5362 = vweird.f32 %v5355
      %vm5363 = vmor %vm5361, %vm5362
      %v5364 = vsel %vm5363, %v5355, %v5360
      %v5365 = vrsqrt.pop %v5348
      %v5366 = vmul.f32 %v5365, %v5348
      %v5367 = vmul.f32 %v5366, %v5365
      %v5368 = vmul.f32 0.5, %v5367
      %v5369 = vsub.f32 1.5, %v5368
      %v5370 = vmul.f32 %v5365, %v5369
      %vm5371 = vweird.f32 %v5348
      %vm5372 = vweird.f32 %v5365
      %vm5373 = vmor %vm5371, %vm5372
      %v5374 = vsel %vm5373, %v5365, %v5370
      %v5375 = vrsqrt.pop %v5349
      %v5376 = vmul.f32 %v5375, %v5349
      %v5377 = vmul.f32 %v5376, %v5375
      %v5378 = vmul.f32 0.5, %v5377
      %v5379 = vsub.f32 1.5, %v5378
      %v5380 = vmul.f32 %v5375, %v5379
      %vm5381 = vweird.f32 %v5349
      %vm5382 = vweird.f32 %v5375
      %vm5383 = vmor %vm5381, %vm5382
      %v5384 = vsel %vm5383, %v5375, %v5380
      %v5385 = vrsqrt.pop %v5350
      %v5386 = vmul.f32 %v5385, %v5350
      %v5387 = vmul.f32 %v5386, %v5385
      %v5388 = vmul.f32 0.5, %v5387
      %v5389 = vsub.f32 1.5, %v5388
      %v5390 = vmul.f32 %v5385, %v5389
      %vm5391 = vweird.f32 %v5350
      %vm5392 = vweird.f32 %v5385
      %vm5393 = vmor %vm5391, %vm5392
      %v5394 = vsel %vm5393, %v5385, %v5390
      %v5395 = vrsqrt.pop %v5351
      %v5396 = vmul.f32 %v5395, %v5351
      %v5397 = vmul.f32 %v5396, %v5395
      %v5398 = vmul.f32 0.5, %v5397
      %v5399 = vsub.f32 1.5, %v5398
      %v5400 = vmul.f32 %v5395, %v5399
      %vm5401 = vweird.f32 %v5351
      %vm5402 = vweird.f32 %v5395
      %vm5403 = vmor %vm5401, %vm5402
      %v5404 = vsel %vm5403, %v5395, %v5400
      %v5405 = vrsqrt.pop %v5352
      %v5406 = vmul.f32 %v5405, %v5352
      %v5407 = vmul.f32 %v5406, %v5405
      %v5408 = vmul.f32 0.5, %v5407
      %v5409 = vsub.f32 1.5, %v5408
      %v5410 = vmul.f32 %v5405, %v5409
      %vm5411 = vweird.f32 %v5352
      %vm5412 = vweird.f32 %v5405
      %vm5413 = vmor %vm5411, %vm5412
      %v5414 = vsel %vm5413, %v5405, %v5410
      %v5415 = vrsqrt.pop %v5353
      %v5416 = vmul.f32 %v5415, %v5353
      %v5417 = vmul.f32 %v5416, %v5415
      %v5418 = vmul.f32 0.5, %v5417
      %v5419 = vsub.f32 1.5, %v5418
      %v5420 = vmul.f32 %v5415, %v5419
      %vm5421 = vweird.f32 %v5353
      %vm5422 = vweird.f32 %v5415
      %vm5423 = vmor %vm5421, %vm5422
      %v5424 = vsel %vm5423, %v5415, %v5420
      %v5425 = vrsqrt.pop %v5354
      %v5426 = vmul.f32 %v5425, %v5354
      %v5427 = vmul.f32 %v5426, %v5425
      %v5428 = vmul.f32 0.5, %v5427
      %v5429 = vsub.f32 1.5, %v5428
      %v5430 = vmul.f32 %v5425, %v5429
      %vm5431 = vweird.f32 %v5354
      %vm5432 = vweird.f32 %v5425
      %vm5433 = vmor %vm5431, %vm5432
      %v5434 = vsel %vm5433, %v5425, %v5430
      %v5435 = vmul.f32 %v5299, %v5364
      %v5436 = vmul.f32 %v5300, %v5374
      %v5437 = vmul.f32 %v5301, %v5384
      %v5438 = vmul.f32 %v5302, %v5394
      %v5439 = vmul.f32 %v5303, %v5404
      %v5440 = vmul.f32 %v5304, %v5414
      %v5441 = vmul.f32 %v5305, %v5424
      %v5442 = vmul.f32 %v5306, %v5434
      %v5443 = vld [vmem:[%s20] sm:$0x1]
      %v5445 = vperm.slane %v5443, 0
      %v5447 = vmul.f32 %v5435, %v5445
      %v5448 = vmul.f32 %v5436, %v5445
      %v5449 = vmul.f32 %v5437, %v5445
      %v5450 = vmul.f32 %v5438, %v5445
      %v5451 = vmul.f32 %v5439, %v5445
      %v5452 = vmul.f32 %v5440, %v5445
      %v5453 = vmul.f32 %v5441, %v5445
      %v5454 = vmul.f32 %v5442, %v5445
      %v5455 = vld [vmem:[%s21] sm:$0x1]
      %v5457 = vperm.slane %v5455, 0
      %v5459 = vadd.f32 %v5447, %v5457
      %v5460 = vadd.f32 %v5448, %v5457
      %v5461 = vadd.f32 %v5449, %v5457
      %v5462 = vadd.f32 %v5450, %v5457
      %v5463 = vadd.f32 %v5451, %v5457
      %v5464 = vadd.f32 %v5452, %v5457
      %v5465 = vadd.f32 %v5453, %v5457
      %v5466 = vadd.f32 %v5454, %v5457
      %v5467 = vpack.c.bf16 %v5459, %v5459
      %v5468 = vpack.c.bf16 %v5460, %v5460
      %v5469 = vpack.c.bf16 %v5461, %v5461
      %v5470 = vpack.c.bf16 %v5462, %v5462
      %v5471 = vpack.c.bf16 %v5463, %v5463
      %v5472 = vpack.c.bf16 %v5464, %v5464
      %v5473 = vpack.c.bf16 %v5465, %v5465
      %v5474 = vpack.c.bf16 %v5466, %v5466
      %vm5475 = vcmask 257024
      %5476 = vst.msk [vmem:[%s700] sm:$0xf] %vm5475, %v5467
      %5477 = vst.msk [vmem:[%s700 + $0x4] sm:$0xf] %vm5475, %v5468
      %5478 = vst.msk [vmem:[%s700 + $0x8] sm:$0xf] %vm5475, %v5469
      %5479 = vst.msk [vmem:[%s700 + $0xc] sm:$0xf] %vm5475, %v5470
      %5480 = vst.msk [vmem:[%s700 + $0x10] sm:$0xf] %vm5475, %v5471
      %5481 = vst.msk [vmem:[%s700 + $0x14] sm:$0xf] %vm5475, %v5472
      %5482 = vst.msk [vmem:[%s700 + $0x18] sm:$0xf] %vm5475, %v5473
      %5483 = vst.msk [vmem:[%s700 + $0x1c] sm:$0xf] %vm5475, %v5474
      %p5484 = scmp.lt.s32.totalorder %s33, 1
      %s5485 = scalar_select %p5484, %s33, 1
      %s5486 = smul.addr %s5485, 8
      %s5487 = smul.addr %s5486, 4
      %s5488 = scalar_lea.vmem %s22, %s5487
      // Predicated region
      $region109: #{unet_forward.15} parent=107 // pred_check
        %p5489 = pneg %p523
      $region110: #{unet_forward.15} parent=107 // pred_check_branch
        %5491 = sbr.rel (%p5489) target = $region112
      $region111: #{unet_forward.15} parent=107 // pred_region
        _
      $region112: #{unet_forward.15} parent=107 // pred_fallthru
        _
    $region108: #{unet_forward.15} parent=5 // pred_fallthru
      _
    %p5492 = scmp.le.s32.totalorder 2, %s28
    // Predicated region
    $region113: #{unet_forward.15} parent=5 // pred_check
      %p5493 = pneg %p5492
    $region114: #{unet_forward.15} parent=5 // pred_check_branch
      %5495 = sbr.rel (%p5493) target = $region116
    $region115: #{unet_forward.15} parent=5 // pred_region
      %s5496 = ssub.s32 %s28, 2
      // Predicated region
      $region117: #{unet_forward.15} parent=115 // pred_check
        %p5497 = pneg %p529
      $region118: #{unet_forward.15} parent=115 // pred_check_branch
        %5499 = sbr.rel (%p5497) target = $region120
      $region119: #{unet_forward.15} parent=115 // pred_region
        %p5500 = scmp.lt.s32.totalorder %s34, 1
        %s5501 = scalar_select %p5500, %s34, 1
        %s5502 = smul.addr %s5501, 8
        %s5503 = smul.addr %s5502, 4
        %s5504 = scalar_lea.vmem %s22, %s5503
      $region120: #{unet_forward.15} parent=115 // pred_fallthru
        _
    $region116: #{unet_forward.15} parent=5 // pred_fallthru
      _
  $region6: #{unet_forward.15} parent=0 // loop_footer
    %s32 = sadd.s32 1, %s28
  $region7: #{unet_forward.15} parent=0 // loop_footer_branch
    %27 = sbr.rel target = $region3
  $region8: #{unet_forward.15} parent=0 // loop_exit
    _

// kernel: unet_forward.17
$region0: #{unet_forward.17}
  #allocation0 [shape = 'u32[]', space=smem, size = 0x4, offset = 0x4, fixed_abs, tag = 'smem constant byte address 0x4 - core index']
  #allocation1 [shape = 'u32[72,128]{1,0:T(1,128)}', space=vmem, size = 0x9000, scoped, tag = 'internal scratch']
  %s0 = inlined_call_operand.vmem [shape: bf16[8,144], index: 0, kind: input, shape index: {}]
  %s1 = inlined_call_operand.vmem [shape: bf16[144,512], index: 1, kind: input, shape index: {}]
  %s2 = inlined_call_operand.vmem [shape: f32[8,1], index: 2, kind: input, shape index: {}]
  %s3 = inlined_call_operand.vmem [shape: bf16[8,512], index: 3, kind: output, shape index: {}]
  %s4 = sld [smem:[#allocation0]]
  $region83: #{unet_forward.17} parent=0
    _
  %s6 = ssub.s32 1, %s4
  %s7 = scalar_select 0, %s6, %s4
  $region1: #{unet_forward.17} parent=0
    #allocation2 [shape = 'u8[147456]{0}', space=vmem, size = 0x24000, scoped, tag = 'input window, operand 1']
    loop: start=0, step=1, limit=4
    $region2: #{unet_forward.17} parent=1 // loop_pre_header
      _
    $region3: #{unet_forward.17} parent=1 // loop_header
      %s9 = sphi 0, %s13
      %p10 = scmp.ge.s32.totalorder %s9, 4
      %s17 = sphi 0, %s17
      %s19 = sphi 0, %s17
      %s20 = sphi 0, %s19
      %s34 = sphi 0, %s20
      %s40 = sphi 0, %s42
      %s43 = sphi 0, %s40
      %s44 = sphi 0, %s43
      %s60 = sphi 0, %s44
      %s64 = sphi 0, %s64
      %s66 = sphi 0, %s64
      %s67 = sphi 0, %s66
      %s81 = sphi 0, %s67
      %s87 = sphi 0, %s89
      %s90 = sphi 0, %s87
      %s91 = sphi 0, %s90
      %s107 = sphi 0, %s91
    $region4: #{unet_forward.17} parent=1 // loop_header_branch
      %12 = sbr.rel (%p10) target = $region8
    $region5: #{unet_forward.17} parent=1 // loop_body
      %s14 = ssub.s32 %s9, 1
      %s15 = ssub.s32 %s9, 2
      %s16 = sadd.s32 %s9, 1
      %s18 = sadd.s32 %s17, 1
      %p21 = scmp.eq.s32.totalorder %s9, 1
      %p22 = scmp.ne.s32.totalorder %s17, %s19
      %p23 = scmp.eq.s32.totalorder %s9, 0
      %p24 = por %p22, %p23
      %p25 = scmp.ne.s32.totalorder %s17, %s19
      %p26 = scmp.eq.s32.totalorder %s14, 1
      %p27 = por %p25, %p26
      %p28 = scmp.ne.s32.totalorder %s19, %s20
      %p29 = scmp.eq.s32.totalorder %s14, 0
      %p30 = por %p28, %p29
      %p31 = scmp.ne.s32.totalorder %s19, %s20
      %p32 = scmp.eq.s32.totalorder %s15, 1
      %p33 = por %p31, %p32
      %p35 = scmp.ne.s32.totalorder %s20, %s34
      %p36 = scmp.eq.s32.totalorder %s15, 0
      %p37 = por %p35, %p36
      %s38 = ssub.s32 %s9, %s16
      %p39 = scmp.eq.s32.totalorder %s38, 0
      %s41 = sadd.s32 %s40, 1
      %s42 = scalar_select %p39, %s40, %s41
      %p45 = pneg %p39
      %p46 = scmp.eq.s32.totalorder %s9, 1
      %p47 = por %p45, %p46
      %p48 = scmp.ne.s32.totalorder %s40, %s43
      %p49 = scmp.eq.s32.totalorder %s9, 0
      %p50 = por %p48, %p49
      %p51 = scmp.ne.s32.totalorder %s40, %s43
      %p52 = scmp.eq.s32.totalorder %s14, 1
      %p53 = por %p51, %p52
      %p54 = scmp.ne.s32.totalorder %s43, %s44
      %p55 = scmp.eq.s32.totalorder %s14, 0
      %p56 = por %p54, %p55
      %p57 = scmp.ne.s32.totalorder %s43, %s44
      %p58 = scmp.eq.s32.totalorder %s15, 1
      %p59 = por %p57, %p58
      %p61 = scmp.ne.s32.totalorder %s44, %s60
      %p62 = scmp.eq.s32.totalorder %s15, 0
      %p63 = por %p61, %p62
      %s65 = sadd.s32 %s64, 1
      %p68 = scmp.eq.s32.totalorder %s9, 1
      %p69 = scmp.ne.s32.totalorder %s64, %s66
      %p70 = scmp.eq.s32.totalorder %s9, 0
      %p71 = por %p69, %p70
      %p72 = scmp.ne.s32.totalorder %s64, %s66
      %p73 = scmp.eq.s32.totalorder %s14, 1
      %p74 = por %p72, %p73
      %p75 = scmp.ne.s32.totalorder %s66, %s67
      %p76 = scmp.eq.s32.totalorder %s14, 0
      %p77 = por %p75, %p76
      %p78 = scmp.ne.s32.totalorder %s66, %s67
      %p79 = scmp.eq.s32.totalorder %s15, 1
      %p80 = por %p78, %p79
      %p82 = scmp.ne.s32.totalorder %s67, %s81
      %p83 = scmp.eq.s32.totalorder %s15, 0
      %p84 = por %p82, %p83
      %s85 = ssub.s32 %s9, %s16
      %p86 = scmp.eq.s32.totalorder %s85, 0
      %s88 = sadd.s32 %s87, 1
      %s89 = scalar_select %p86, %s87, %s88
      %p92 = pneg %p86
      %p93 = scmp.eq.s32.totalorder %s9, 1
      %p94 = por %p92, %p93
      %p95 = scmp.ne.s32.totalorder %s87, %s90
      %p96 = scmp.eq.s32.totalorder %s9, 0
      %p97 = por %p95, %p96
      %p98 = scmp.ne.s32.totalorder %s87, %s90
      %p99 = scmp.eq.s32.totalorder %s14, 1
      %p100 = por %p98, %p99
      %p101 = scmp.ne.s32.totalorder %s90, %s91
      %p102 = scmp.eq.s32.totalorder %s14, 0
      %p103 = por %p101, %p102
      %p104 = scmp.ne.s32.totalorder %s90, %s91
      %p105 = scmp.eq.s32.totalorder %s15, 1
      %p106 = por %p104, %p105
      %p108 = scmp.ne.s32.totalorder %s91, %s107
      %p109 = scmp.eq.s32.totalorder %s15, 0
      %p110 = por %p108, %p109
      %p111 = scmp.le.s32.totalorder 1, %s9
      %p112 = scmp.lt.s32.totalorder %s9, 3
      %p113 = pnand %p111, %p112
      %p114 = pneg %p113
      // Predicated region
      $region9: #{unet_forward.17} parent=5 // pred_check
        _
      $region10: #{unet_forward.17} parent=5 // pred_check_branch
        %116 = sbr.rel (%p113) target = $region12
      $region11: #{unet_forward.17} parent=5 // pred_region
        %s117 = ssub.s32 %s9, 1
        // Predicated region
        $region13: #{unet_forward.17} parent=11 // pred_check
          %p118 = pneg %p30
        $region14: #{unet_forward.17} parent=11 // pred_check_branch
          %120 = sbr.rel (%p118) target = $region16
        $region15: #{unet_forward.17} parent=11 // pred_region
          _
        $region16: #{unet_forward.17} parent=11 // pred_fallthru
          _
        // Predicated region
        $region17: #{unet_forward.17} parent=11 // pred_check
          %p121 = pneg %p77
        $region18: #{unet_forward.17} parent=11 // pred_check_branch
          %123 = sbr.rel (%p121) target = $region20
        $region19: #{unet_forward.17} parent=11 // pred_region
          _
        $region20: #{unet_forward.17} parent=11 // pred_fallthru
          _
      $region12: #{unet_forward.17} parent=5 // pred_fallthru
        _
      %p124 = scmp.lt.s32.totalorder %s9, 2
      // Predicated region
      $region21: #{unet_forward.17} parent=5 // pred_check
        %p125 = pneg %p124
      $region22: #{unet_forward.17} parent=5 // pred_check_branch
        %127 = sbr.rel (%p125) target = $region24
      $region23: #{unet_forward.17} parent=5 // pred_region
        // Predicated region
        $region25: #{unet_forward.17} parent=23 // pred_check
          %p128 = pneg %p50
        $region26: #{unet_forward.17} parent=23 // pred_check_branch
          %130 = sbr.rel (%p128) target = $region28
        $region27: #{unet_forward.17} parent=23 // pred_region
          %s131 = sand.u32 %s40, 1
          %s132 = sand.u32 %s40, 1
          %s133 = smul.addr %s132, 144
          %s134 = scalar_lea.vmem [#allocation2], %s133
          %s135 = smul.u32 2, %s9
          %s136 = smul.addr %s135, 4
          %s137 = scalar_lea.vmem %s1, %s136
          // Predicated region
          $region29: #{unet_forward.17} parent=27 // pred_check
            _
          $region30: #{unet_forward.17} parent=27 // pred_check_branch
            %139 = sbr.rel (0) target = $region32
          $region31: #{unet_forward.17} parent=27 // pred_region
            // Predicated region
            $region33: #{unet_forward.17} parent=31 // pred_check
              _
            $region34: #{unet_forward.17} parent=31 // pred_check_branch
              %141 = sbr.rel (0) target = $region36
            $region35: #{unet_forward.17} parent=31 // pred_region
              // Predicated region
              $region48: #{unet_forward.17} parent=35 // pred_check
                _
              $region49: #{unet_forward.17} parent=35 // pred_check_branch
                %191 = sbr.rel (0) target = $region51
              $region50: #{unet_forward.17} parent=35 // pred_region
                loop: start=0, step=1, limit=1
                $region52: #{unet_forward.17} parent=50 // loop_pre_header
                  _
                $region53: #{unet_forward.17} parent=50 // loop_header
                  %s193 = sphi 0, %s197
                  %p194 = scmp.ge.s32.totalorder %s193, 1
                  %s198 = sphi %s137, %s137
                  %s199 = sphi %s134, %s134
                $region54: #{unet_forward.17} parent=50 // loop_header_branch
                  %196 = sbr.rel (%p194) target = $region58
                $region55: #{unet_forward.17} parent=50 // loop_body
                  %v200 = vld [vmem:[%s198] sm:$0xff]
                  %201 = vst [vmem:[%s199] sm:$0xff] %v200
                  %v202 = vld [vmem:[%s198 + $0x10] sm:$0xff]
                  %203 = vst [vmem:[%s199 + $0x8] sm:$0xff] %v202
                  %v204 = vld [vmem:[%s198 + $0x20] sm:$0xff]
                  %205 = vst [vmem:[%s199 + $0x10] sm:$0xff] %v204
                  %v206 = vld [vmem:[%s198 + $0x30] sm:$0xff]
                  %207 = vst [vmem:[%s199 + $0x18] sm:$0xff] %v206
                  %v208 = vld [vmem:[%s198 + $0x40] sm:$0xff]
                  %209 = vst [vmem:[%s199 + $0x20] sm:$0xff] %v208
                  %v210 = vld [vmem:[%s198 + $0x50] sm:$0xff]
                  %211 = vst [vmem:[%s199 + $0x28] sm:$0xff] %v210
                  %v212 = vld [vmem:[%s198 + $0x60] sm:$0xff]
                  %213 = vst [vmem:[%s199 + $0x30] sm:$0xff] %v212
                  %v214 = vld [vmem:[%s198 + $0x70] sm:$0xff]
                  %215 = vst [vmem:[%s199 + $0x38] sm:$0xff] %v214
                  %v216 = vld [vmem:[%s198 + $0x80] sm:$0xff]
                  %217 = vst [vmem:[%s199 + $0x40] sm:$0xff] %v216
                  %v218 = vld [vmem:[%s198 + $0x90] sm:$0xff]
                  %219 = vst [vmem:[%s199 + $0x48] sm:$0xff] %v218
                  %v220 = vld [vmem:[%s198 + $0xa0] sm:$0xff]
                  %221 = vst [vmem:[%s199 + $0x50] sm:$0xff] %v220
                  %v222 = vld [vmem:[%s198 + $0xb0] sm:$0xff]
                  %223 = vst [vmem:[%s199 + $0x58] sm:$0xff] %v222
                  %v224 = vld [vmem:[%s198 + $0xc0] sm:$0xff]
                  %225 = vst [vmem:[%s199 + $0x60] sm:$0xff] %v224
                  %v226 = vld [vmem:[%s198 + $0xd0] sm:$0xff]
                  %227 = vst [vmem:[%s199 + $0x68] sm:$0xff] %v226
                  %v228 = vld [vmem:[%s198 + $0xe0] sm:$0xff]
                  %229 = vst [vmem:[%s199 + $0x70] sm:$0xff] %v228
                  %v230 = vld [vmem:[%s198 + $0xf0] sm:$0xff]
                  %231 = vst [vmem:[%s199 + $0x78] sm:$0xff] %v230
                  %v232 = vld [vmem:[%s198 + $0x100] sm:$0xff]
                  %233 = vst [vmem:[%s199 + $0x80] sm:$0xff] %v232
                  %v234 = vld [vmem:[%s198 + $0x110] sm:$0xff]
                  %235 = vst [vmem:[%s199 + $0x88] sm:$0xff] %v234
                $region56: #{unet_forward.17} parent=50 // loop_footer
                  %s197 = sadd.s32 1, %s193
                $region57: #{unet_forward.17} parent=50 // loop_footer_branch
                  %192 = sbr.rel target = $region53
                $region58: #{unet_forward.17} parent=50 // loop_exit
                  _
              $region51: #{unet_forward.17} parent=35 // pred_fallthru
                _
              // Predicated region
              $region59: #{unet_forward.17} parent=35 // pred_check
                _
              $region60: #{unet_forward.17} parent=35 // pred_check_branch
                %237 = sbr.rel target = $region62
              $region61: #{unet_forward.17} parent=35 // pred_region
                _
              $region62: #{unet_forward.17} parent=35 // pred_fallthru
                _
            $region36: #{unet_forward.17} parent=31 // pred_fallthru
              _
            // Predicated region
            $region37: #{unet_forward.17} parent=31 // pred_check
              _
            $region38: #{unet_forward.17} parent=31 // pred_check_branch
              %143 = sbr.rel target = $region40
            $region39: #{unet_forward.17} parent=31 // pred_region
              %s145 = ssub.s32 256, 1
              loop: start=0, step=1, limit=1
              $region41: #{unet_forward.17} parent=39 // loop_pre_header
                _
              $region42: #{unet_forward.17} parent=39 // loop_header
                %s147 = sphi 0, %s151
                %p148 = scmp.ge.s32.totalorder %s147, 1
                %s152 = sphi %s137, %s137
                %s153 = sphi %s134, %s134
              $region43: #{unet_forward.17} parent=39 // loop_header_branch
                %150 = sbr.rel (%p148) target = $region47
              $region44: #{unet_forward.17} parent=39 // loop_body
                %v154 = vld [vmem:[%s152] sm:%s145]
                %155 = vst [vmem:[%s153] sm:%s145] %v154
                %v156 = vld [vmem:[%s152 + $0x10] sm:%s145]
                %157 = vst [vmem:[%s153 + $0x8] sm:%s145] %v156
                %v158 = vld [vmem:[%s152 + $0x20] sm:%s145]
                %159 = vst [vmem:[%s153 + $0x10] sm:%s145] %v158
                %v160 = vld [vmem:[%s152 + $0x30] sm:%s145]
                %161 = vst [vmem:[%s153 + $0x18] sm:%s145] %v160
                %v162 = vld [vmem:[%s152 + $0x40] sm:%s145]
                %163 = vst [vmem:[%s153 + $0x20] sm:%s145] %v162
                %v164 = vld [vmem:[%s152 + $0x50] sm:%s145]
                %165 = vst [vmem:[%s153 + $0x28] sm:%s145] %v164
                %v166 = vld [vmem:[%s152 + $0x60] sm:%s145]
                %167 = vst [vmem:[%s153 + $0x30] sm:%s145] %v166
                %v168 = vld [vmem:[%s152 + $0x70] sm:%s145]
                %169 = vst [vmem:[%s153 + $0x38] sm:%s145] %v168
                %v170 = vld [vmem:[%s152 + $0x80] sm:%s145]
                %171 = vst [vmem:[%s153 + $0x40] sm:%s145] %v170
                %v172 = vld [vmem:[%s152 + $0x90] sm:%s145]
                %173 = vst [vmem:[%s153 + $0x48] sm:%s145] %v172
                %v174 = vld [vmem:[%s152 + $0xa0] sm:%s145]
                %175 = vst [vmem:[%s153 + $0x50] sm:%s145] %v174
                %v176 = vld [vmem:[%s152 + $0xb0] sm:%s145]
                %177 = vst [vmem:[%s153 + $0x58] sm:%s145] %v176
                %v178 = vld [vmem:[%s152 + $0xc0] sm:%s145]
                %179 = vst [vmem:[%s153 + $0x60] sm:%s145] %v178
                %v180 = vld [vmem:[%s152 + $0xd0] sm:%s145]
                %181 = vst [vmem:[%s153 + $0x68] sm:%s145] %v180
                %v182 = vld [vmem:[%s152 + $0xe0] sm:%s145]
                %183 = vst [vmem:[%s153 + $0x70] sm:%s145] %v182
                %v184 = vld [vmem:[%s152 + $0xf0] sm:%s145]
                %185 = vst [vmem:[%s153 + $0x78] sm:%s145] %v184
                %v186 = vld [vmem:[%s152 + $0x100] sm:%s145]
                %187 = vst [vmem:[%s153 + $0x80] sm:%s145] %v186
                %v188 = vld [vmem:[%s152 + $0x110] sm:%s145]
                %189 = vst [vmem:[%s153 + $0x88] sm:%s145] %v188
              $region45: #{unet_forward.17} parent=39 // loop_footer
                %s151 = sadd.s32 1, %s147
              $region46: #{unet_forward.17} parent=39 // loop_footer_branch
                %146 = sbr.rel target = $region42
              $region47: #{unet_forward.17} parent=39 // loop_exit
                _
            $region40: #{unet_forward.17} parent=31 // pred_fallthru
              _
          $region32: #{unet_forward.17} parent=27 // pred_fallthru
            _
          %238 = vnop
        $region28: #{unet_forward.17} parent=23 // pred_fallthru
          _
      $region24: #{unet_forward.17} parent=5 // pred_fallthru
        _
      %p239 = scmp.le.s32.totalorder 1, %s9
      %p240 = scmp.lt.s32.totalorder %s9, 3
      %p241 = pnand %p239, %p240
      %p242 = pneg %p241
      // Predicated region
      $region63: #{unet_forward.17} parent=5 // pred_check
        _
      $region64: #{unet_forward.17} parent=5 // pred_check_branch
        %244 = sbr.rel (%p241) target = $region66
      $region65: #{unet_forward.17} parent=5 // pred_region
        %s245 = ssub.s32 %s9, 1
        %s246 = sand.u32 %s43, 1
        %s247 = sand.u32 %s43, 1
        %s248 = smul.addr %s247, 144
        %s249 = scalar_lea.vmem [#allocation2], %s248
        // Predicated region
        $region67: #{unet_forward.17} parent=65 // pred_check
          %p250 = pneg %p56
        $region68: #{unet_forward.17} parent=65 // pred_check_branch
          %252 = sbr.rel (%p250) target = $region70
        $region69: #{unet_forward.17} parent=65 // pred_region
          _
        $region70: #{unet_forward.17} parent=65 // pred_fallthru
          _
        %p253 = pneg %p30
        %p254 = pneg %p27
        %s255 = sand.u32 %s43, 1
        %s256 = sand.u32 %s43, 1
        %s257 = smul.addr %s256, 144
        %s258 = scalar_lea.vmem [#allocation2], %s257
        %p259 = pneg %p56
        %p260 = pneg %p53
        %p261 = pneg %p77
        %p262 = pneg %p74
        %p263 = pneg %p103
        %p264 = pneg %p100
        %s265 = smul.u32 2, %s14
        %p266 = scmp.lt.s32.totalorder %s265, 3
        %s267 = scalar_select %p266, %s265, 3
        %s268 = smul.addr %s267, 4
        %s269 = scalar_lea.vmem %s3, %s268
        %s270 = smul.u32 2, %s14
        %s271 = smul.u32 2, %s14
        %p272 = scmp.lt.s32.totalorder %s271, 3
        %s273 = scalar_select %p272, %s271, 3
        %s274 = smul.addr %s273, 4
        %s275 = scalar_lea.vmem %s3, %s274
        %s276 = smul.u32 2, %s14
        %v278 = vld [vmem:[%s0] sm:$0xff]
        %v279 = vld [vmem:[%s249] sm:$0xff]
        %v280 = vld [vmem:[%s249 + $0x8] sm:$0xff]
        %v281 = vld [vmem:[%s249 + $0x10] sm:$0xff]
        %v282 = vld [vmem:[%s249 + $0x18] sm:$0xff]
        %v283 = vld [vmem:[%s249 + $0x20] sm:$0xff]
        %v284 = vld [vmem:[%s249 + $0x28] sm:$0xff]
        %v285 = vld [vmem:[%s249 + $0x30] sm:$0xff]
        %v286 = vld [vmem:[%s249 + $0x38] sm:$0xff]
        %v287 = vld [vmem:[%s249 + $0x40] sm:$0xff]
        %v288 = vld [vmem:[%s249 + $0x48] sm:$0xff]
        %v289 = vld [vmem:[%s249 + $0x50] sm:$0xff]
        %v290 = vld [vmem:[%s249 + $0x58] sm:$0xff]
        %v291 = vld [vmem:[%s249 + $0x60] sm:$0xff]
        %v292 = vld [vmem:[%s249 + $0x68] sm:$0xff]
        %v293 = vld [vmem:[%s249 + $0x70] sm:$0xff]
        %v294 = vld [vmem:[%s249 + $0x78] sm:$0xff]
        %v295 = vld [vmem:[%s249 + $0x80] sm:$0xff]
        %v296 = vld [vmem:[%s249 + $0x88] sm:$0xff]
        %v297 = vld [vmem:[%s2] sm:$0xff]
        %299 = vset.pattern.permute.xlu0 0
        %300 = vperm.xlu0 %299, %v297
        %v301 = vpop.permute.xlu0 %300
        %v304 = vunpack.c.l.b16 %v278
        %v305 = vunpack.c.h.b16 %v278
        %v306 = vpack.c.b16 %v304, %v304
        %v307 = vpack.c.b16 %v305, %v305
        %v327 = vunpack.c.l.b16 %v279
        %v328 = vunpack.c.h.b16 %v279
        %v329 = vunpack.c.l.b16 %v280
        %v330 = vunpack.c.h.b16 %v280
        %v331 = vunpack.c.l.b16 %v281
        %v332 = vunpack.c.h.b16 %v281
        %v333 = vunpack.c.l.b16 %v282
        %v334 = vunpack.c.h.b16 %v282
        %v335 = vunpack.c.l.b16 %v283
        %v336 = vunpack.c.h.b16 %v283
        %v337 = vunpack.c.l.b16 %v284
        %v338 = vunpack.c.h.b16 %v284
        %v339 = vunpack.c.l.b16 %v285
        %v340 = vunpack.c.h.b16 %v285
        %v341 = vunpack.c.l.b16 %v286
        %v342 = vunpack.c.h.b16 %v286
        %v343 = vunpack.c.l.b16 %v287
        %v344 = vunpack.c.h.b16 %v287
        %v345 = vunpack.c.l.b16 %v288
        %v346 = vunpack.c.h.b16 %v288
        %v347 = vunpack.c.l.b16 %v289
        %v348 = vunpack.c.h.b16 %v289
        %v349 = vunpack.c.l.b16 %v290
        %v350 = vunpack.c.h.b16 %v290
        %v351 = vunpack.c.l.b16 %v291
        %v352 = vunpack.c.h.b16 %v291
        %v353 = vunpack.c.l.b16 %v292
        %v354 = vunpack.c.h.b16 %v292
        %v355 = vunpack.c.l.b16 %v293
        %v356 = vunpack.c.h.b16 %v293
        %v357 = vunpack.c.l.b16 %v294
        %v358 = vunpack.c.h.b16 %v294
        %v359 = vunpack.c.l.b16 %v295
        %v360 = vunpack.c.h.b16 %v295
        %v361 = vunpack.c.l.b16 %v296
        %v362 = vunpack.c.h.b16 %v296
        %v363 = vpack.c.b16 %v329, %v327
        %v364 = vpack.c.b16 %v330, %v328
        %v365 = vpack.c.b16 %v333, %v331
        %v366 = vpack.c.b16 %v334, %v332
        %v367 = vpack.c.b16 %v337, %v335
        %v368 = vpack.c.b16 %v338, %v336
        %v369 = vpack.c.b16 %v341, %v339
        %v370 = vpack.c.b16 %v342, %v340
        %v371 = vpack.c.b16 %v345, %v343
        %v372 = vpack.c.b16 %v346, %v344
        %v373 = vpack.c.b16 %v349, %v347
        %v374 = vpack.c.b16 %v350, %v348
        %v375 = vpack.c.b16 %v353, %v351
        %v376 = vpack.c.b16 %v354, %v352
        %v377 = vpack.c.b16 %v357, %v355
        %v378 = vpack.c.b16 %v358, %v356
        %v379 = vpack.c.b16 %v361, %v359
        %v380 = vpack.c.b16 %v362, %v360
        %vm399 = vcmask 130048
        %v401 = vsel %vm399, %v307, 0
        %403 = vmatpush.bf16.msra.mxu0 %v377
        %404 = vmatpush.bf16.msra.mxu0 %v375
        %405 = vmatpush.bf16.msra.mxu0 %v373
        %406 = vmatpush.bf16.msra.mxu0 %v371
        %407 = vmatpush.bf16.msra.mxu0 %v369
        %408 = vmatpush.bf16.msra.mxu0 %v367
        %409 = vmatpush.bf16.msra.mxu0 %v365
        %410 = vmatpush.bf16.msra.mxu0 %v363
        %411 = vmatmul.bf16.gmra.mxu0 %v306
        %v412 = vpop.f32.mrf.mxu0
        %v413 = vadd.f32 %v301, %v412
        %v414 = vpop.f32.mrf.mxu0
        %415 = vdwg.mxu0
        %416 = vmatpush.bf16.msra.mxu0 0
        %417 = vmatpush.bf16.msra.mxu0 0
        %418 = vmatpush.bf16.msra.mxu0 0
        %419 = vmatpush.bf16.msra.mxu0 0
        %420 = vmatpush.bf16.msra.mxu0 0
        %421 = vmatpush.bf16.msra.mxu0 0
        %422 = vmatpush.bf16.msra.mxu0 0
        %423 = vmatpush.bf16.msra.mxu0 %v379
        %424 = vmatmul.bf16.gmra.mxu0 %v401
        %v425 = vpop.f32.mrf.mxu0
        %v426 = vadd.f32 %v413, %v425
        %v427 = vpop.f32.mrf.mxu0
        %428 = vdwg.mxu0
        %429 = vmatpush.bf16.msra.mxu0 %v378
        %430 = vmatpush.bf16.msra.mxu0 %v376
        %431 = vmatpush.bf16.msra.mxu0 %v374
        %432 = vmatpush.bf16.msra.mxu0 %v372
        %433 = vmatpush.bf16.msra.mxu0 %v370
        %434 = vmatpush.bf16.msra.mxu0 %v368
        %435 = vmatpush.bf16.msra.mxu0 %v366
        %436 = vmatpush.bf16.msra.mxu0 %v364
        %437 = vmatmul.bf16.gmra.mxu0 %v306
        %v438 = vpop.f32.mrf.mxu0
        %v439 = vadd.f32 %v301, %v438
        %v440 = vpop.f32.mrf.mxu0
        %441 = vdwg.mxu0
        %442 = vmatpush.bf16.msra.mxu0 0
        %443 = vmatpush.bf16.msra.mxu0 0
        %444 = vmatpush.bf16.msra.mxu0 0
        %445 = vmatpush.bf16.msra.mxu0 0
        %446 = vmatpush.bf16.msra.mxu0 0
        %447 = vmatpush.bf16.msra.mxu0 0
        %448 = vmatpush.bf16.msra.mxu0 0
        %449 = vmatpush.bf16.msra.mxu0 %v380
        %450 = vmatmul.bf16.gmra.mxu0 %v401
        %v451 = vpop.f32.mrf.mxu0
        %v452 = vadd.f32 %v439, %v451
        %v453 = vpop.f32.mrf.mxu0
        %454 = vdwg.mxu0
        %v455 = vpack.c.bf16 %v452, %v426
        %456 = vst [vmem:[%s275] sm:$0xff] %v455
        %s457 = smul.u32 2, %s14
        %p458 = scmp.lt.s32.totalorder %s457, 3
        %s459 = scalar_select %p458, %s457, 3
        %s460 = smul.addr %s459, 4
        %s461 = scalar_lea.vmem %s3, %s460
        // Predicated region
        $region71: #{unet_forward.17} parent=65 // pred_check
          %p462 = pneg %p100
        $region72: #{unet_forward.17} parent=65 // pred_check_branch
          %464 = sbr.rel (%p462) target = $region74
        $region73: #{unet_forward.17} parent=65 // pred_region
          %s465 = smul.u32 2, %s14
        $region74: #{unet_forward.17} parent=65 // pred_fallthru
          _
      $region66: #{unet_forward.17} parent=5 // pred_fallthru
        _
      %p466 = scmp.le.s32.totalorder 2, %s9
      // Predicated region
      $region75: #{unet_forward.17} parent=5 // pred_check
        %p467 = pneg %p466
      $region76: #{unet_forward.17} parent=5 // pred_check_branch
        %469 = sbr.rel (%p467) target = $region78
      $region77: #{unet_forward.17} parent=5 // pred_region
        %s470 = ssub.s32 %s9, 2
        // Predicated region
        $region79: #{unet_forward.17} parent=77 // pred_check
          %p471 = pneg %p106
        $region80: #{unet_forward.17} parent=77 // pred_check_branch
          %473 = sbr.rel (%p471) target = $region82
        $region81: #{unet_forward.17} parent=77 // pred_region
          %s474 = smul.u32 2, %s15
          %p475 = scmp.lt.s32.totalorder %s474, 3
          %s476 = scalar_select %p475, %s474, 3
          %s477 = smul.addr %s476, 4
          %s478 = scalar_lea.vmem %s3, %s477
        $region82: #{unet_forward.17} parent=77 // pred_fallthru
          _
      $region78: #{unet_forward.17} parent=5 // pred_fallthru
        _
    $region6: #{unet_forward.17} parent=1 // loop_footer
      %s13 = sadd.s32 1, %s9
    $region7: #{unet_forward.17} parent=1 // loop_footer_branch
      %8 = sbr.rel target = $region3
    $region8: #{unet_forward.17} parent=1 // loop_exit
      _

// kernel: unet_forward.18
$region0: #{unet_forward.18}
  #allocation0 [shape = 'u32[]', space=smem, size = 0x4, offset = 0x4, fixed_abs, tag = 'smem constant byte address 0x4 - core index']
  #allocation1 [shape = 'u32[72,128]{1,0:T(1,128)}', space=vmem, size = 0x9000, scoped, tag = 'internal scratch']
  %s0 = inlined_call_operand.vmem [shape: bf16[16,32], index: 0, kind: input, shape index: {}]
  %s1 = inlined_call_operand.vmem [shape: bf16[32,512], index: 1, kind: input, shape index: {}]
  %s2 = inlined_call_operand.vmem [shape: f32[16,1], index: 2, kind: input, shape index: {}]
  %s3 = inlined_call_operand.vmem [shape: bf16[16,512], index: 3, kind: output, shape index: {}]
  %s4 = sld [smem:[#allocation0]]
  $region117: #{unet_forward.18} parent=0
    _
  %s6 = ssub.s32 1, %s4
  %s7 = scalar_select 0, %s6, %s4
  $region1: #{unet_forward.18} parent=0
    #allocation2 [shape = 'u8[32768]{0}', space=vmem, size = 0x8000, scoped, tag = 'input window, operand 1']
    #allocation3 [shape = 'u8[16384]{0}', space=vmem, size = 0x4000, scoped, tag = 'output window, operand 0']
    loop: start=0, step=1, limit=4
    $region2: #{unet_forward.18} parent=1 // loop_pre_header
      _
    $region3: #{unet_forward.18} parent=1 // loop_header
      %s9 = sphi 0, %s13
      %p10 = scmp.ge.s32.totalorder %s9, 4
      %s17 = sphi 0, %s17
      %s19 = sphi 0, %s17
      %s20 = sphi 0, %s19
      %s34 = sphi 0, %s20
      %s40 = sphi 0, %s42
      %s43 = sphi 0, %s40
      %s44 = sphi 0, %s43
      %s60 = sphi 0, %s44
      %s64 = sphi 0, %s64
      %s66 = sphi 0, %s64
      %s67 = sphi 0, %s66
      %s81 = sphi 0, %s67
      %s87 = sphi 0, %s89
      %s90 = sphi 0, %s87
      %s91 = sphi 0, %s90
      %s107 = sphi 0, %s91
    $region4: #{unet_forward.18} parent=1 // loop_header_branch
      %12 = sbr.rel (%p10) target = $region8
    $region5: #{unet_forward.18} parent=1 // loop_body
      %s14 = ssub.s32 %s9, 1
      %s15 = ssub.s32 %s9, 2
      %s16 = sadd.s32 %s9, 1
      %s18 = sadd.s32 %s17, 1
      %p21 = scmp.eq.s32.totalorder %s9, 1
      %p22 = scmp.ne.s32.totalorder %s17, %s19
      %p23 = scmp.eq.s32.totalorder %s9, 0
      %p24 = por %p22, %p23
      %p25 = scmp.ne.s32.totalorder %s17, %s19
      %p26 = scmp.eq.s32.totalorder %s14, 1
      %p27 = por %p25, %p26
      %p28 = scmp.ne.s32.totalorder %s19, %s20
      %p29 = scmp.eq.s32.totalorder %s14, 0
      %p30 = por %p28, %p29
      %p31 = scmp.ne.s32.totalorder %s19, %s20
      %p32 = scmp.eq.s32.totalorder %s15, 1
      %p33 = por %p31, %p32
      %p35 = scmp.ne.s32.totalorder %s20, %s34
      %p36 = scmp.eq.s32.totalorder %s15, 0
      %p37 = por %p35, %p36
      %s38 = ssub.s32 %s9, %s16
      %p39 = scmp.eq.s32.totalorder %s38, 0
      %s41 = sadd.s32 %s40, 1
      %s42 = scalar_select %p39, %s40, %s41
      %p45 = pneg %p39
      %p46 = scmp.eq.s32.totalorder %s9, 1
      %p47 = por %p45, %p46
      %p48 = scmp.ne.s32.totalorder %s40, %s43
      %p49 = scmp.eq.s32.totalorder %s9, 0
      %p50 = por %p48, %p49
      %p51 = scmp.ne.s32.totalorder %s40, %s43
      %p52 = scmp.eq.s32.totalorder %s14, 1
      %p53 = por %p51, %p52
      %p54 = scmp.ne.s32.totalorder %s43, %s44
      %p55 = scmp.eq.s32.totalorder %s14, 0
      %p56 = por %p54, %p55
      %p57 = scmp.ne.s32.totalorder %s43, %s44
      %p58 = scmp.eq.s32.totalorder %s15, 1
      %p59 = por %p57, %p58
      %p61 = scmp.ne.s32.totalorder %s44, %s60
      %p62 = scmp.eq.s32.totalorder %s15, 0
      %p63 = por %p61, %p62
      %s65 = sadd.s32 %s64, 1
      %p68 = scmp.eq.s32.totalorder %s9, 1
      %p69 = scmp.ne.s32.totalorder %s64, %s66
      %p70 = scmp.eq.s32.totalorder %s9, 0
      %p71 = por %p69, %p70
      %p72 = scmp.ne.s32.totalorder %s64, %s66
      %p73 = scmp.eq.s32.totalorder %s14, 1
      %p74 = por %p72, %p73
      %p75 = scmp.ne.s32.totalorder %s66, %s67
      %p76 = scmp.eq.s32.totalorder %s14, 0
      %p77 = por %p75, %p76
      %p78 = scmp.ne.s32.totalorder %s66, %s67
      %p79 = scmp.eq.s32.totalorder %s15, 1
      %p80 = por %p78, %p79
      %p82 = scmp.ne.s32.totalorder %s67, %s81
      %p83 = scmp.eq.s32.totalorder %s15, 0
      %p84 = por %p82, %p83
      %s85 = ssub.s32 %s9, %s16
      %p86 = scmp.eq.s32.totalorder %s85, 0
      %s88 = sadd.s32 %s87, 1
      %s89 = scalar_select %p86, %s87, %s88
      %p92 = pneg %p86
      %p93 = scmp.eq.s32.totalorder %s9, 1
      %p94 = por %p92, %p93
      %p95 = scmp.ne.s32.totalorder %s87, %s90
      %p96 = scmp.eq.s32.totalorder %s9, 0
      %p97 = por %p95, %p96
      %p98 = scmp.ne.s32.totalorder %s87, %s90
      %p99 = scmp.eq.s32.totalorder %s14, 1
      %p100 = por %p98, %p99
      %p101 = scmp.ne.s32.totalorder %s90, %s91
      %p102 = scmp.eq.s32.totalorder %s14, 0
      %p103 = por %p101, %p102
      %p104 = scmp.ne.s32.totalorder %s90, %s91
      %p105 = scmp.eq.s32.totalorder %s15, 1
      %p106 = por %p104, %p105
      %p108 = scmp.ne.s32.totalorder %s91, %s107
      %p109 = scmp.eq.s32.totalorder %s15, 0
      %p110 = por %p108, %p109
      %p111 = scmp.le.s32.totalorder 1, %s9
      %p112 = scmp.lt.s32.totalorder %s9, 3
      %p113 = pnand %p111, %p112
      %p114 = pneg %p113
      // Predicated region
      $region9: #{unet_forward.18} parent=5 // pred_check
        _
      $region10: #{unet_forward.18} parent=5 // pred_check_branch
        %116 = sbr.rel (%p113) target = $region12
      $region11: #{unet_forward.18} parent=5 // pred_region
        %s117 = ssub.s32 %s9, 1
        // Predicated region
        $region13: #{unet_forward.18} parent=11 // pred_check
          %p118 = pneg %p30
        $region14: #{unet_forward.18} parent=11 // pred_check_branch
          %120 = sbr.rel (%p118) target = $region16
        $region15: #{unet_forward.18} parent=11 // pred_region
          _
        $region16: #{unet_forward.18} parent=11 // pred_fallthru
          _
        // Predicated region
        $region17: #{unet_forward.18} parent=11 // pred_check
          %p121 = pneg %p77
        $region18: #{unet_forward.18} parent=11 // pred_check_branch
          %123 = sbr.rel (%p121) target = $region20
        $region19: #{unet_forward.18} parent=11 // pred_region
          _
        $region20: #{unet_forward.18} parent=11 // pred_fallthru
          _
      $region12: #{unet_forward.18} parent=5 // pred_fallthru
        _
      %p124 = scmp.lt.s32.totalorder %s9, 2
      // Predicated region
      $region21: #{unet_forward.18} parent=5 // pred_check
        %p125 = pneg %p124
      $region22: #{unet_forward.18} parent=5 // pred_check_branch
        %127 = sbr.rel (%p125) target = $region24
      $region23: #{unet_forward.18} parent=5 // pred_region
        // Predicated region
        $region25: #{unet_forward.18} parent=23 // pred_check
          %p128 = pneg %p50
        $region26: #{unet_forward.18} parent=23 // pred_check_branch
          %130 = sbr.rel (%p128) target = $region28
        $region27: #{unet_forward.18} parent=23 // pred_region
          %s131 = sand.u32 %s40, 1
          %s132 = sand.u32 %s40, 1
          %s133 = smul.addr %s132, 32
          %s134 = scalar_lea.vmem [#allocation2], %s133
          %s135 = smul.u32 2, %s9
          %s136 = smul.addr %s135, 4
          %s137 = scalar_lea.vmem %s1, %s136
          // Predicated region
          $region29: #{unet_forward.18} parent=27 // pred_check
            _
          $region30: #{unet_forward.18} parent=27 // pred_check_branch
            %139 = sbr.rel (0) target = $region32
          $region31: #{unet_forward.18} parent=27 // pred_region
            // Predicated region
            $region33: #{unet_forward.18} parent=31 // pred_check
              _
            $region34: #{unet_forward.18} parent=31 // pred_check_branch
              %141 = sbr.rel (0) target = $region36
            $region35: #{unet_forward.18} parent=31 // pred_region
              // Predicated region
              $region48: #{unet_forward.18} parent=35 // pred_check
                _
              $region49: #{unet_forward.18} parent=35 // pred_check_branch
                %163 = sbr.rel (0) target = $region51
              $region50: #{unet_forward.18} parent=35 // pred_region
                loop: start=0, step=1, limit=1
                $region52: #{unet_forward.18} parent=50 // loop_pre_header
                  _
                $region53: #{unet_forward.18} parent=50 // loop_header
                  %s165 = sphi 0, %s169
                  %p166 = scmp.ge.s32.totalorder %s165, 1
                  %s170 = sphi %s137, %s137
                  %s171 = sphi %s134, %s134
                $region54: #{unet_forward.18} parent=50 // loop_header_branch
                  %168 = sbr.rel (%p166) target = $region58
                $region55: #{unet_forward.18} parent=50 // loop_body
                  %v172 = vld [vmem:[%s170] sm:$0xff]
                  %173 = vst [vmem:[%s171] sm:$0xff] %v172
                  %v174 = vld [vmem:[%s170 + $0x10] sm:$0xff]
                  %175 = vst [vmem:[%s171 + $0x8] sm:$0xff] %v174
                  %v176 = vld [vmem:[%s170 + $0x20] sm:$0xff]
                  %177 = vst [vmem:[%s171 + $0x10] sm:$0xff] %v176
                  %v178 = vld [vmem:[%s170 + $0x30] sm:$0xff]
                  %179 = vst [vmem:[%s171 + $0x18] sm:$0xff] %v178
                $region56: #{unet_forward.18} parent=50 // loop_footer
                  %s169 = sadd.s32 1, %s165
                $region57: #{unet_forward.18} parent=50 // loop_footer_branch
                  %164 = sbr.rel target = $region53
                $region58: #{unet_forward.18} parent=50 // loop_exit
                  _
              $region51: #{unet_forward.18} parent=35 // pred_fallthru
                _
              // Predicated region
              $region59: #{unet_forward.18} parent=35 // pred_check
                _
              $region60: #{unet_forward.18} parent=35 // pred_check_branch
                %181 = sbr.rel target = $region62
              $region61: #{unet_forward.18} parent=35 // pred_region
                _
              $region62: #{unet_forward.18} parent=35 // pred_fallthru
                _
            $region36: #{unet_forward.18} parent=31 // pred_fallthru
              _
            // Predicated region
            $region37: #{unet_forward.18} parent=31 // pred_check
              _
            $region38: #{unet_forward.18} parent=31 // pred_check_branch
              %143 = sbr.rel target = $region40
            $region39: #{unet_forward.18} parent=31 // pred_region
              %s145 = ssub.s32 256, 1
              loop: start=0, step=1, limit=1
              $region41: #{unet_forward.18} parent=39 // loop_pre_header
                _
              $region42: #{unet_forward.18} parent=39 // loop_header
                %s147 = sphi 0, %s151
                %p148 = scmp.ge.s32.totalorder %s147, 1
                %s152 = sphi %s137, %s137
                %s153 = sphi %s134, %s134
              $region43: #{unet_forward.18} parent=39 // loop_header_branch
                %150 = sbr.rel (%p148) target = $region47
              $region44: #{unet_forward.18} parent=39 // loop_body
                %v154 = vld [vmem:[%s152] sm:%s145]
                %155 = vst [vmem:[%s153] sm:%s145] %v154
                %v156 = vld [vmem:[%s152 + $0x10] sm:%s145]
                %157 = vst [vmem:[%s153 + $0x8] sm:%s145] %v156
                %v158 = vld [vmem:[%s152 + $0x20] sm:%s145]
                %159 = vst [vmem:[%s153 + $0x10] sm:%s145] %v158
                %v160 = vld [vmem:[%s152 + $0x30] sm:%s145]
                %161 = vst [vmem:[%s153 + $0x18] sm:%s145] %v160
              $region45: #{unet_forward.18} parent=39 // loop_footer
                %s151 = sadd.s32 1, %s147
              $region46: #{unet_forward.18} parent=39 // loop_footer_branch
                %146 = sbr.rel target = $region42
              $region47: #{unet_forward.18} parent=39 // loop_exit
                _
            $region40: #{unet_forward.18} parent=31 // pred_fallthru
              _
          $region32: #{unet_forward.18} parent=27 // pred_fallthru
            _
          %182 = vnop
        $region28: #{unet_forward.18} parent=23 // pred_fallthru
          _
      $region24: #{unet_forward.18} parent=5 // pred_fallthru
        _
      %p183 = scmp.le.s32.totalorder 1, %s9
      %p184 = scmp.lt.s32.totalorder %s9, 3
      %p185 = pnand %p183, %p184
      %p186 = pneg %p185
      // Predicated region
      $region63: #{unet_forward.18} parent=5 // pred_check
        _
      $region64: #{unet_forward.18} parent=5 // pred_check_branch
        %188 = sbr.rel (%p185) target = $region66
      $region65: #{unet_forward.18} parent=5 // pred_region
        %s189 = ssub.s32 %s9, 1
        %s190 = sand.u32 %s43, 1
        %s191 = sand.u32 %s43, 1
        %s192 = smul.addr %s191, 32
        %s193 = scalar_lea.vmem [#allocation2], %s192
        // Predicated region
        $region67: #{unet_forward.18} parent=65 // pred_check
          %p194 = pneg %p56
        $region68: #{unet_forward.18} parent=65 // pred_check_branch
          %196 = sbr.rel (%p194) target = $region70
        $region69: #{unet_forward.18} parent=65 // pred_region
          _
        $region70: #{unet_forward.18} parent=65 // pred_fallthru
          _
        %p197 = pneg %p30
        %p198 = pneg %p27
        %s199 = sand.u32 %s43, 1
        %s200 = sand.u32 %s43, 1
        %s201 = smul.addr %s200, 32
        %s202 = scalar_lea.vmem [#allocation2], %s201
        %p203 = pneg %p56
        %p204 = pneg %p53
        %p205 = pneg %p77
        %p206 = pneg %p74
        %p207 = pneg %p103
        %p208 = pneg %p100
        %s209 = sand.u32 %s90, 1
        %s210 = sand.u32 %s90, 1
        %s211 = smul.addr %s210, 16
        %s212 = scalar_lea.vmem [#allocation3], %s211
        %s213 = smul.u32 2, %s14
        %s214 = smul.u32 2, %s14
        %v216 = vld [vmem:[%s0] sm:$0xf]
        %v217 = vld [vmem:[%s0 + $0x4] sm:$0xf]
        %v218 = vld [vmem:[%s193] sm:$0xff]
        %v219 = vld [vmem:[%s193 + $0x8] sm:$0xff]
        %v220 = vld [vmem:[%s193 + $0x10] sm:$0xff]
        %v221 = vld [vmem:[%s193 + $0x18] sm:$0xff]
        %v222 = vld [vmem:[%s2] sm:$0xff]
        %v223 = vld [vmem:[%s2 + $0x8] sm:$0xff]
        %225 = vset.pattern.permute.xlu0 0
        %226 = vperm.xlu0 %225, %v222
        %v227 = vpop.permute.xlu0 %226
        %230 = vset.pattern.permute.xlu0 0
        %231 = vperm.xlu0 %230, %v223
        %v232 = vpop.permute.xlu0 %231
        %v236 = vunpack.c.l.b16 %v216
        %v237 = vunpack.c.l.b16 %v217
        %v238 = vpack.c.b16 %v237, %v236
        %v243 = vunpack.c.l.b16 %v218
        %v244 = vunpack.c.h.b16 %v218
        %v245 = vunpack.c.l.b16 %v219
        %v246 = vunpack.c.h.b16 %v219
        %v247 = vunpack.c.l.b16 %v220
        %v248 = vunpack.c.h.b16 %v220
        %v249 = vunpack.c.l.b16 %v221
        %v250 = vunpack.c.h.b16 %v221
        %v251 = vpack.c.b16 %v245, %v243
        %v252 = vpack.c.b16 %v246, %v244
        %v253 = vpack.c.b16 %v249, %v247
        %v254 = vpack.c.b16 %v250, %v248
        %vm259 = vcmask 261120
        %v261 = vsel %vm259, %v238, 0
        %263 = vmatpush.bf16.msra.mxu0 0
        %264 = vmatpush.bf16.msra.mxu0 0
        %265 = vmatpush.bf16.msra.mxu0 0
        %266 = vmatpush.bf16.msra.mxu0 0
        %267 = vmatpush.bf16.msra.mxu0 0
        %268 = vmatpush.bf16.msra.mxu0 0
        %269 = vmatpush.bf16.msra.mxu0 %v253
        %270 = vmatpush.bf16.msra.mxu0 %v251
        %271 = vmatmul.bf16.gmra.mxu0 %v261
        %v272 = vpop.f32.mrf.mxu0
        %v273 = vadd.f32 %v227, %v272
        %v274 = vpop.f32.mrf.mxu0
        %v275 = vadd.f32 %v232, %v274
        %276 = vdwg.mxu0
        %277 = vmatpush.bf16.msra.mxu0 0
        %278 = vmatpush.bf16.msra.mxu0 0
        %279 = vmatpush.bf16.msra.mxu0 0
        %280 = vmatpush.bf16.msra.mxu0 0
        %281 = vmatpush.bf16.msra.mxu0 0
        %282 = vmatpush.bf16.msra.mxu0 0
        %283 = vmatpush.bf16.msra.mxu0 %v254
        %284 = vmatpush.bf16.msra.mxu0 %v252
        %285 = vmatmul.bf16.gmra.mxu0 %v261
        %v286 = vpop.f32.mrf.mxu0
        %v287 = vadd.f32 %v227, %v286
        %v288 = vpop.f32.mrf.mxu0
        %v289 = vadd.f32 %v232, %v288
        %290 = vdwg.mxu0
        %v291 = vpack.c.bf16 %v287, %v273
        %v292 = vpack.c.bf16 %v289, %v275
        %293 = vst [vmem:[%s212] sm:$0xff] %v291
        %294 = vst [vmem:[%s212 + $0x8] sm:$0xff] %v292
        %s295 = sand.u32 %s90, 1
        %s296 = sand.u32 %s90, 1
        %s297 = smul.addr %s296, 16
        %s298 = scalar_lea.vmem [#allocation3], %s297
        // Predicated region
        $region71: #{unet_forward.18} parent=65 // pred_check
          %p299 = pneg %p100
        $region72: #{unet_forward.18} parent=65 // pred_check_branch
          %301 = sbr.rel (%p299) target = $region74
        $region73: #{unet_forward.18} parent=65 // pred_region
          %s302 = smul.u32 2, %s14
          %s303 = smul.addr %s302, 4
          %s304 = scalar_lea.vmem %s3, %s303
          // Predicated region
          $region75: #{unet_forward.18} parent=73 // pred_check
            _
          $region76: #{unet_forward.18} parent=73 // pred_check_branch
            %306 = sbr.rel (0) target = $region78
          $region77: #{unet_forward.18} parent=73 // pred_region
            // Predicated region
            $region79: #{unet_forward.18} parent=77 // pred_check
              _
            $region80: #{unet_forward.18} parent=77 // pred_check_branch
              %308 = sbr.rel (0) target = $region82
            $region81: #{unet_forward.18} parent=77 // pred_region
              // Predicated region
              $region94: #{unet_forward.18} parent=81 // pred_check
                _
              $region95: #{unet_forward.18} parent=81 // pred_check_branch
                %326 = sbr.rel (0) target = $region97
              $region96: #{unet_forward.18} parent=81 // pred_region
                loop: start=0, step=1, limit=1
                $region98: #{unet_forward.18} parent=96 // loop_pre_header
                  _
                $region99: #{unet_forward.18} parent=96 // loop_header
                  %s328 = sphi 0, %s332
                  %p329 = scmp.ge.s32.totalorder %s328, 1
                  %s333 = sphi %s298, %s298
                  %s334 = sphi %s304, %s304
                $region100: #{unet_forward.18} parent=96 // loop_header_branch
                  %331 = sbr.rel (%p329) target = $region104
                $region101: #{unet_forward.18} parent=96 // loop_body
                  %v335 = vld [vmem:[%s333] sm:$0xff]
                  %336 = vst [vmem:[%s334] sm:$0xff] %v335
                  %v337 = vld [vmem:[%s333 + $0x8] sm:$0xff]
                  %338 = vst [vmem:[%s334 + $0x10] sm:$0xff] %v337
                $region102: #{unet_forward.18} parent=96 // loop_footer
                  %s332 = sadd.s32 1, %s328
                $region103: #{unet_forward.18} parent=96 // loop_footer_branch
                  %327 = sbr.rel target = $region99
                $region104: #{unet_forward.18} parent=96 // loop_exit
                  _
              $region97: #{unet_forward.18} parent=81 // pred_fallthru
                _
              // Predicated region
              $region105: #{unet_forward.18} parent=81 // pred_check
                _
              $region106: #{unet_forward.18} parent=81 // pred_check_branch
                %340 = sbr.rel target = $region108
              $region107: #{unet_forward.18} parent=81 // pred_region
                _
              $region108: #{unet_forward.18} parent=81 // pred_fallthru
                _
            $region82: #{unet_forward.18} parent=77 // pred_fallthru
              _
            // Predicated region
            $region83: #{unet_forward.18} parent=77 // pred_check
              _
            $region84: #{unet_forward.18} parent=77 // pred_check_branch
              %310 = sbr.rel target = $region86
            $region85: #{unet_forward.18} parent=77 // pred_region
              %s312 = ssub.s32 256, 1
              loop: start=0, step=1, limit=1
              $region87: #{unet_forward.18} parent=85 // loop_pre_header
                _
              $region88: #{unet_forward.18} parent=85 // loop_header
                %s314 = sphi 0, %s318
                %p315 = scmp.ge.s32.totalorder %s314, 1
                %s319 = sphi %s298, %s298
                %s320 = sphi %s304, %s304
              $region89: #{unet_forward.18} parent=85 // loop_header_branch
                %317 = sbr.rel (%p315) target = $region93
              $region90: #{unet_forward.18} parent=85 // loop_body
                %v321 = vld [vmem:[%s319] sm:%s312]
                %322 = vst [vmem:[%s320] sm:%s312] %v321
                %v323 = vld [vmem:[%s319 + $0x8] sm:%s312]
                %324 = vst [vmem:[%s320 + $0x10] sm:%s312] %v323
              $region91: #{unet_forward.18} parent=85 // loop_footer
                %s318 = sadd.s32 1, %s314
              $region92: #{unet_forward.18} parent=85 // loop_footer_branch
                %313 = sbr.rel target = $region88
              $region93: #{unet_forward.18} parent=85 // loop_exit
                _
            $region86: #{unet_forward.18} parent=77 // pred_fallthru
              _
          $region78: #{unet_forward.18} parent=73 // pred_fallthru
            _
          %341 = vnop
        $region74: #{unet_forward.18} parent=65 // pred_fallthru
          _
      $region66: #{unet_forward.18} parent=5 // pred_fallthru
        _
      %p342 = scmp.le.s32.totalorder 2, %s9
      // Predicated region
      $region109: #{unet_forward.18} parent=5 // pred_check
        %p343 = pneg %p342
      $region110: #{unet_forward.18} parent=5 // pred_check_branch
        %345 = sbr.rel (%p343) target = $region112
      $region111: #{unet_forward.18} parent=5 // pred_region
        %s346 = ssub.s32 %s9, 2
        // Predicated region
        $region113: #{unet_forward.18} parent=111 // pred_check
          %p347 = pneg %p106
        $region114: #{unet_forward.18} parent=111 // pred_check_branch
          %349 = sbr.rel (%p347) target = $region116
        $region115: #{unet_forward.18} parent=111 // pred_region
          %s350 = sand.u32 %s91, 1
          %s351 = sand.u32 %s91, 1
          %s352 = smul.addr %s351, 16
          %s353 = scalar_lea.vmem [#allocation3], %s352
        $region116: #{unet_forward.18} parent=111 // pred_fallthru
          _
      $region112: #{unet_forward.18} parent=5 // pred_fallthru
        _
    $region6: #{unet_forward.18} parent=1 // loop_footer
      %s13 = sadd.s32 1, %s9
    $region7: #{unet_forward.18} parent=1 // loop_footer_branch
      %8 = sbr.rel target = $region3
    $region8: #{unet_forward.18} parent=1 // loop_exit
      _

// kernel: unet_forward.19
$region0: #{unet_forward.19}
  #allocation0 [shape = 'u32[]', space=smem, size = 0x4, offset = 0x4, fixed_abs, tag = 'smem constant byte address 0x4 - core index']
  #allocation1 [shape = 'u32[72,128]{1,0:T(1,128)}', space=vmem, size = 0x9000, scoped, tag = 'internal scratch']
  %s0 = inlined_call_operand.vmem [shape: bf16[4,72], index: 0, kind: input, shape index: {}]
  %s1 = inlined_call_operand.vmem [shape: bf16[72,2048], index: 1, kind: input, shape index: {}]
  %s2 = inlined_call_operand.vmem [shape: f32[4,1], index: 2, kind: input, shape index: {}]
  %s3 = inlined_call_operand.vmem [shape: f32[4,2048], index: 3, kind: output, shape index: {}]
  %s4 = sld [smem:[#allocation0]]
  $region68: #{unet_forward.19} parent=0
    _
  %s6 = ssub.s32 1, %s4
  %s7 = scalar_select 0, %s6, %s4
  $region1: #{unet_forward.19} parent=0
    #allocation2 [shape = 'u8[147456]{0}', space=vmem, size = 0x24000, scoped, tag = 'input window, operand 1']
    loop: start=0, step=1, limit=6
    $region2: #{unet_forward.19} parent=1 // loop_pre_header
      _
    $region3: #{unet_forward.19} parent=1 // loop_header
      %s9 = sphi 0, %s13
      %p10 = scmp.ge.s32.totalorder %s9, 6
      %s17 = sphi 0, %s17
      %s19 = sphi 0, %s17
      %s20 = sphi 0, %s19
      %s34 = sphi 0, %s20
      %s40 = sphi 0, %s42
      %s43 = sphi 0, %s40
      %s44 = sphi 0, %s43
      %s60 = sphi 0, %s44
      %s64 = sphi 0, %s64
      %s66 = sphi 0, %s64
      %s67 = sphi 0, %s66
      %s81 = sphi 0, %s67
      %s87 = sphi 0, %s89
      %s90 = sphi 0, %s87
      %s91 = sphi 0, %s90
      %s107 = sphi 0, %s91
    $region4: #{unet_forward.19} parent=1 // loop_header_branch
      %12 = sbr.rel (%p10) target = $region8
    $region5: #{unet_forward.19} parent=1 // loop_body
      %s14 = ssub.s32 %s9, 1
      %s15 = ssub.s32 %s9, 2
      %s16 = sadd.s32 %s9, 1
      %s18 = sadd.s32 %s17, 1
      %p21 = scmp.eq.s32.totalorder %s9, 3
      %p22 = scmp.ne.s32.totalorder %s17, %s19
      %p23 = scmp.eq.s32.totalorder %s9, 0
      %p24 = por %p22, %p23
      %p25 = scmp.ne.s32.totalorder %s17, %s19
      %p26 = scmp.eq.s32.totalorder %s14, 3
      %p27 = por %p25, %p26
      %p28 = scmp.ne.s32.totalorder %s19, %s20
      %p29 = scmp.eq.s32.totalorder %s14, 0
      %p30 = por %p28, %p29
      %p31 = scmp.ne.s32.totalorder %s19, %s20
      %p32 = scmp.eq.s32.totalorder %s15, 3
      %p33 = por %p31, %p32
      %p35 = scmp.ne.s32.totalorder %s20, %s34
      %p36 = scmp.eq.s32.totalorder %s15, 0
      %p37 = por %p35, %p36
      %s38 = ssub.s32 %s9, %s16
      %p39 = scmp.eq.s32.totalorder %s38, 0
      %s41 = sadd.s32 %s40, 1
      %s42 = scalar_select %p39, %s40, %s41
      %p45 = pneg %p39
      %p46 = scmp.eq.s32.totalorder %s9, 3
      %p47 = por %p45, %p46
      %p48 = scmp.ne.s32.totalorder %s40, %s43
      %p49 = scmp.eq.s32.totalorder %s9, 0
      %p50 = por %p48, %p49
      %p51 = scmp.ne.s32.totalorder %s40, %s43
      %p52 = scmp.eq.s32.totalorder %s14, 3
      %p53 = por %p51, %p52
      %p54 = scmp.ne.s32.totalorder %s43, %s44
      %p55 = scmp.eq.s32.totalorder %s14, 0
      %p56 = por %p54, %p55
      %p57 = scmp.ne.s32.totalorder %s43, %s44
      %p58 = scmp.eq.s32.totalorder %s15, 3
      %p59 = por %p57, %p58
      %p61 = scmp.ne.s32.totalorder %s44, %s60
      %p62 = scmp.eq.s32.totalorder %s15, 0
      %p63 = por %p61, %p62
      %s65 = sadd.s32 %s64, 1
      %p68 = scmp.eq.s32.totalorder %s9, 3
      %p69 = scmp.ne.s32.totalorder %s64, %s66
      %p70 = scmp.eq.s32.totalorder %s9, 0
      %p71 = por %p69, %p70
      %p72 = scmp.ne.s32.totalorder %s64, %s66
      %p73 = scmp.eq.s32.totalorder %s14, 3
      %p74 = por %p72, %p73
      %p75 = scmp.ne.s32.totalorder %s66, %s67
      %p76 = scmp.eq.s32.totalorder %s14, 0
      %p77 = por %p75, %p76
      %p78 = scmp.ne.s32.totalorder %s66, %s67
      %p79 = scmp.eq.s32.totalorder %s15, 3
      %p80 = por %p78, %p79
      %p82 = scmp.ne.s32.totalorder %s67, %s81
      %p83 = scmp.eq.s32.totalorder %s15, 0
      %p84 = por %p82, %p83
      %s85 = ssub.s32 %s9, %s16
      %p86 = scmp.eq.s32.totalorder %s85, 0
      %s88 = sadd.s32 %s87, 1
      %s89 = scalar_select %p86, %s87, %s88
      %p92 = pneg %p86
      %p93 = scmp.eq.s32.totalorder %s9, 3
      %p94 = por %p92, %p93
      %p95 = scmp.ne.s32.totalorder %s87, %s90
      %p96 = scmp.eq.s32.totalorder %s9, 0
      %p97 = por %p95, %p96
      %p98 = scmp.ne.s32.totalorder %s87, %s90
      %p99 = scmp.eq.s32.totalorder %s14, 3
      %p100 = por %p98, %p99
      %p101 = scmp.ne.s32.totalorder %s90, %s91
      %p102 = scmp.eq.s32.totalorder %s14, 0
      %p103 = por %p101, %p102
      %p104 = scmp.ne.s32.totalorder %s90, %s91
      %p105 = scmp.eq.s32.totalorder %s15, 3
      %p106 = por %p104, %p105
      %p108 = scmp.ne.s32.totalorder %s91, %s107
      %p109 = scmp.eq.s32.totalorder %s15, 0
      %p110 = por %p108, %p109
      %p111 = scmp.le.s32.totalorder 1, %s9
      %p112 = scmp.lt.s32.totalorder %s9, 5
      %p113 = pnand %p111, %p112
      %p114 = pneg %p113
      // Predicated region
      $region9: #{unet_forward.19} parent=5 // pred_check
        _
      $region10: #{unet_forward.19} parent=5 // pred_check_branch
        %116 = sbr.rel (%p113) target = $region12
      $region11: #{unet_forward.19} parent=5 // pred_region
        %s117 = ssub.s32 %s9, 1
        // Predicated region
        $region13: #{unet_forward.19} parent=11 // pred_check
          %p118 = pneg %p30
        $region14: #{unet_forward.19} parent=11 // pred_check_branch
          %120 = sbr.rel (%p118) target = $region16
        $region15: #{unet_forward.19} parent=11 // pred_region
          _
        $region16: #{unet_forward.19} parent=11 // pred_fallthru
          _
        // Predicated region
        $region17: #{unet_forward.19} parent=11 // pred_check
          %p121 = pneg %p77
        $region18: #{unet_forward.19} parent=11 // pred_check_branch
          %123 = sbr.rel (%p121) target = $region20
        $region19: #{unet_forward.19} parent=11 // pred_region
          _
        $region20: #{unet_forward.19} parent=11 // pred_fallthru
          _
      $region12: #{unet_forward.19} parent=5 // pred_fallthru
        _
      %p124 = scmp.lt.s32.totalorder %s9, 4
      // Predicated region
      $region21: #{unet_forward.19} parent=5 // pred_check
        %p125 = pneg %p124
      $region22: #{unet_forward.19} parent=5 // pred_check_branch
        %127 = sbr.rel (%p125) target = $region24
      $region23: #{unet_forward.19} parent=5 // pred_region
        // Predicated region
        $region25: #{unet_forward.19} parent=23 // pred_check
          %p128 = pneg %p50
        $region26: #{unet_forward.19} parent=23 // pred_check_branch
          %130 = sbr.rel (%p128) target = $region28
        $region27: #{unet_forward.19} parent=23 // pred_region
          %s131 = sand.u32 %s40, 1
          %s132 = sand.u32 %s40, 1
          %s133 = smul.addr %s132, 144
          %s134 = scalar_lea.vmem [#allocation2], %s133
          %s135 = smul.u32 4, %s9
          %s136 = smul.addr %s135, 4
          %s137 = scalar_lea.vmem %s1, %s136
          // Predicated region
          $region29: #{unet_forward.19} parent=27 // pred_check
            _
          $region30: #{unet_forward.19} parent=27 // pred_check_branch
            %139 = sbr.rel (0) target = $region32
          $region31: #{unet_forward.19} parent=27 // pred_region
            // Predicated region
            $region33: #{unet_forward.19} parent=31 // pred_check
              _
            $region34: #{unet_forward.19} parent=31 // pred_check_branch
              %141 = sbr.rel (0) target = $region36
            $region35: #{unet_forward.19} parent=31 // pred_region
              loop: start=0, step=1, limit=1
              $region37: #{unet_forward.19} parent=35 // loop_pre_header
                _
              $region38: #{unet_forward.19} parent=35 // loop_header
                %s143 = sphi 0, %s147
                %p144 = scmp.ge.s32.totalorder %s143, 1
                %s148 = sphi %s137, %s137
                %s149 = sphi %s134, %s134
              $region39: #{unet_forward.19} parent=35 // loop_header_branch
                %146 = sbr.rel (%p144) target = $region43
              $region40: #{unet_forward.19} parent=35 // loop_body
                %v150 = vld [vmem:[%s148] sm:$0xff]
                %151 = vst [vmem:[%s149] sm:$0xff] %v150
                %v152 = vld [vmem:[%s148 + $0x8] sm:$0xff]
                %153 = vst [vmem:[%s149 + $0x8] sm:$0xff] %v152
                %v154 = vld [vmem:[%s148 + $0x40] sm:$0xff]
                %155 = vst [vmem:[%s149 + $0x10] sm:$0xff] %v154
                %v156 = vld [vmem:[%s148 + $0x48] sm:$0xff]
                %157 = vst [vmem:[%s149 + $0x18] sm:$0xff] %v156
                %v158 = vld [vmem:[%s148 + $0x80] sm:$0xff]
                %159 = vst [vmem:[%s149 + $0x20] sm:$0xff] %v158
                %v160 = vld [vmem:[%s148 + $0x88] sm:$0xff]
                %161 = vst [vmem:[%s149 + $0x28] sm:$0xff] %v160
                %v162 = vld [vmem:[%s148 + $0xc0] sm:$0xff]
                %163 = vst [vmem:[%s149 + $0x30] sm:$0xff] %v162
                %v164 = vld [vmem:[%s148 + $0xc8] sm:$0xff]
                %165 = vst [vmem:[%s149 + $0x38] sm:$0xff] %v164
                %v166 = vld [vmem:[%s148 + $0x100] sm:$0xff]
                %167 = vst [vmem:[%s149 + $0x40] sm:$0xff] %v166
                %v168 = vld [vmem:[%s148 + $0x108] sm:$0xff]
                %169 = vst [vmem:[%s149 + $0x48] sm:$0xff] %v168
                %v170 = vld [vmem:[%s148 + $0x140] sm:$0xff]
                %171 = vst [vmem:[%s149 + $0x50] sm:$0xff] %v170
                %v172 = vld [vmem:[%s148 + $0x148] sm:$0xff]
                %173 = vst [vmem:[%s149 + $0x58] sm:$0xff] %v172
                %v174 = vld [vmem:[%s148 + $0x180] sm:$0xff]
                %175 = vst [vmem:[%s149 + $0x60] sm:$0xff] %v174
                %v176 = vld [vmem:[%s148 + $0x188] sm:$0xff]
                %177 = vst [vmem:[%s149 + $0x68] sm:$0xff] %v176
                %v178 = vld [vmem:[%s148 + $0x1c0] sm:$0xff]
                %179 = vst [vmem:[%s149 + $0x70] sm:$0xff] %v178
                %v180 = vld [vmem:[%s148 + $0x1c8] sm:$0xff]
                %181 = vst [vmem:[%s149 + $0x78] sm:$0xff] %v180
                %v182 = vld [vmem:[%s148 + $0x200] sm:$0xff]
                %183 = vst [vmem:[%s149 + $0x80] sm:$0xff] %v182
                %v184 = vld [vmem:[%s148 + $0x208] sm:$0xff]
                %185 = vst [vmem:[%s149 + $0x88] sm:$0xff] %v184
              $region41: #{unet_forward.19} parent=35 // loop_footer
                %s147 = sadd.s32 1, %s143
              $region42: #{unet_forward.19} parent=35 // loop_footer_branch
                %142 = sbr.rel target = $region38
              $region43: #{unet_forward.19} parent=35 // loop_exit
                _
            $region36: #{unet_forward.19} parent=31 // pred_fallthru
              _
            // Predicated region
            $region44: #{unet_forward.19} parent=31 // pred_check
              _
            $region45: #{unet_forward.19} parent=31 // pred_check_branch
              %187 = sbr.rel target = $region47
            $region46: #{unet_forward.19} parent=31 // pred_region
              _
            $region47: #{unet_forward.19} parent=31 // pred_fallthru
              _
          $region32: #{unet_forward.19} parent=27 // pred_fallthru
            _
          %188 = vnop
        $region28: #{unet_forward.19} parent=23 // pred_fallthru
          _
      $region24: #{unet_forward.19} parent=5 // pred_fallthru
        _
      %p189 = scmp.le.s32.totalorder 1, %s9
      %p190 = scmp.lt.s32.totalorder %s9, 5
      %p191 = pnand %p189, %p190
      %p192 = pneg %p191
      // Predicated region
      $region48: #{unet_forward.19} parent=5 // pred_check
        _
      $region49: #{unet_forward.19} parent=5 // pred_check_branch
        %194 = sbr.rel (%p191) target = $region51
      $region50: #{unet_forward.19} parent=5 // pred_region
        %s195 = ssub.s32 %s9, 1
        %s196 = sand.u32 %s43, 1
        %s197 = sand.u32 %s43, 1
        %s198 = smul.addr %s197, 144
        %s199 = scalar_lea.vmem [#allocation2], %s198
        // Predicated region
        $region52: #{unet_forward.19} parent=50 // pred_check
          %p200 = pneg %p56
        $region53: #{unet_forward.19} parent=50 // pred_check_branch
          %202 = sbr.rel (%p200) target = $region55
        $region54: #{unet_forward.19} parent=50 // pred_region
          _
        $region55: #{unet_forward.19} parent=50 // pred_fallthru
          _
        %p203 = pneg %p30
        %p204 = pneg %p27
        %s205 = sand.u32 %s43, 1
        %s206 = sand.u32 %s43, 1
        %s207 = smul.addr %s206, 144
        %s208 = scalar_lea.vmem [#allocation2], %s207
        %p209 = pneg %p56
        %p210 = pneg %p53
        %p211 = pneg %p77
        %p212 = pneg %p74
        %p213 = pneg %p103
        %p214 = pneg %p100
        %s215 = smul.u32 4, %s14
        %p216 = scmp.lt.s32.totalorder %s215, 15
        %s217 = scalar_select %p216, %s215, 15
        %s218 = smul.addr %s217, 4
        %s219 = scalar_lea.vmem %s3, %s218
        %s220 = smul.u32 4, %s14
        %s221 = smul.u32 4, %s14
        %p222 = scmp.lt.s32.totalorder %s221, 15
        %s223 = scalar_select %p222, %s221, 15
        %s224 = smul.addr %s223, 4
        %s225 = scalar_lea.vmem %s3, %s224
        %s226 = smul.u32 4, %s14
        %v228 = vld [vmem:[%s0] sm:$0x3]
        %v229 = vld [vmem:[%s199] sm:$0xff]
        %v230 = vld [vmem:[%s199 + $0x8] sm:$0xff]
        %v231 = vld [vmem:[%s199 + $0x10] sm:$0xff]
        %v232 = vld [vmem:[%s199 + $0x18] sm:$0xff]
        %v233 = vld [vmem:[%s199 + $0x20] sm:$0xff]
        %v234 = vld [vmem:[%s199 + $0x28] sm:$0xff]
        %v235 = vld [vmem:[%s199 + $0x30] sm:$0xff]
        %v236 = vld [vmem:[%s199 + $0x38] sm:$0xff]
        %v237 = vld [vmem:[%s199 + $0x40] sm:$0xff]
        %v238 = vld [vmem:[%s199 + $0x48] sm:$0xff]
        %v239 = vld [vmem:[%s199 + $0x50] sm:$0xff]
        %v240 = vld [vmem:[%s199 + $0x58] sm:$0xff]
        %v241 = vld [vmem:[%s199 + $0x60] sm:$0xff]
        %v242 = vld [vmem:[%s199 + $0x68] sm:$0xff]
        %v243 = vld [vmem:[%s199 + $0x70] sm:$0xff]
        %v244 = vld [vmem:[%s199 + $0x78] sm:$0xff]
        %v245 = vld [vmem:[%s199 + $0x80] sm:$0xff]
        %v246 = vld [vmem:[%s199 + $0x88] sm:$0xff]
        %v247 = vld [vmem:[%s2] sm:$0xf]
        %249 = vset.pattern.permute.xlu0 0
        %250 = vperm.xlu0 %249, %v247
        %v251 = vpop.permute.xlu0 %250
        %v271 = vunpack.c.l.b16 %v229
        %v272 = vunpack.c.h.b16 %v229
        %v273 = vunpack.c.l.b16 %v230
        %v274 = vunpack.c.h.b16 %v230
        %v275 = vunpack.c.l.b16 %v231
        %v276 = vunpack.c.h.b16 %v231
        %v277 = vunpack.c.l.b16 %v232
        %v278 = vunpack.c.h.b16 %v232
        %v279 = vunpack.c.l.b16 %v233
        %v280 = vunpack.c.h.b16 %v233
        %v281 = vunpack.c.l.b16 %v234
        %v282 = vunpack.c.h.b16 %v234
        %v283 = vunpack.c.l.b16 %v235
        %v284 = vunpack.c.h.b16 %v235
        %v285 = vunpack.c.l.b16 %v236
        %v286 = vunpack.c.h.b16 %v236
        %v287 = vunpack.c.l.b16 %v237
        %v288 = vunpack.c.h.b16 %v237
        %v289 = vunpack.c.l.b16 %v238
        %v290 = vunpack.c.h.b16 %v238
        %v291 = vunpack.c.l.b16 %v239
        %v292 = vunpack.c.h.b16 %v239
        %v293 = vunpack.c.l.b16 %v240
        %v294 = vunpack.c.h.b16 %v240
        %v295 = vunpack.c.l.b16 %v241
        %v296 = vunpack.c.h.b16 %v241
        %v297 = vunpack.c.l.b16 %v242
        %v298 = vunpack.c.h.b16 %v242
        %v299 = vunpack.c.l.b16 %v243
        %v300 = vunpack.c.h.b16 %v243
        %v301 = vunpack.c.l.b16 %v244
        %v302 = vunpack.c.h.b16 %v244
        %v303 = vunpack.c.l.b16 %v245
        %v304 = vunpack.c.h.b16 %v245
        %v305 = vunpack.c.l.b16 %v246
        %v306 = vunpack.c.h.b16 %v246
        %v307 = vpack.c.b16 %v275, %v271
        %v308 = vpack.c.b16 %v276, %v272
        %v309 = vpack.c.b16 %v277, %v273
        %v310 = vpack.c.b16 %v278, %v274
        %v311 = vpack.c.b16 %v283, %v279
        %v312 = vpack.c.b16 %v284, %v280
        %v313 = vpack.c.b16 %v285, %v281
        %v314 = vpack.c.b16 %v286, %v282
        %v315 = vpack.c.b16 %v291, %v287
        %v316 = vpack.c.b16 %v292, %v288
        %v317 = vpack.c.b16 %v293, %v289
        %v318 = vpack.c.b16 %v294, %v290
        %v319 = vpack.c.b16 %v299, %v295
        %v320 = vpack.c.b16 %v300, %v296
        %v321 = vpack.c.b16 %v301, %v297
        %v322 = vpack.c.b16 %v302, %v298
        %v323 = vpack.c.b16 %v303, %v303
        %v324 = vpack.c.b16 %v304, %v304
        %v325 = vpack.c.b16 %v305, %v305
        %v326 = vpack.c.b16 %v306, %v306
        %vm343 = vcmask 588800
        %v345 = vsel %vm343, %v228, 0
        %vm347 = vcmask 1043456
        %v349 = vsel %vm347, %v323, 0
        %v352 = vsel %vm347, %v324, 0
        %v355 = vsel %vm347, %v325, 0
        %v358 = vsel %vm347, %v326, 0
        %360 = vmatpush.bf16.msra.mxu0 0
        %361 = vmatpush.bf16.msra.mxu0 0
        %362 = vmatpush.bf16.msra.mxu0 0
        %363 = vmatpush.bf16.msra.mxu0 %v349
        %364 = vmatpush.bf16.msra.mxu0 %v319
        %365 = vmatpush.bf16.msra.mxu0 %v315
        %366 = vmatpush.bf16.msra.mxu0 %v311
        %367 = vmatpush.bf16.msra.mxu0 %v307
        %368 = vmatmul.bf16.gmra.mxu0 %v345
        %v369 = vpop.f32.mrf.mxu0
        %v370 = vadd.f32 %v251, %v369
        %v371 = vpop.f32.mrf.mxu0
        %372 = vdwg.mxu0
        %373 = vmatpush.bf16.msra.mxu0 0
        %374 = vmatpush.bf16.msra.mxu0 0
        %375 = vmatpush.bf16.msra.mxu0 0
        %376 = vmatpush.bf16.msra.mxu0 %v352
        %377 = vmatpush.bf16.msra.mxu0 %v320
        %378 = vmatpush.bf16.msra.mxu0 %v316
        %379 = vmatpush.bf16.msra.mxu0 %v312
        %380 = vmatpush.bf16.msra.mxu0 %v308
        %381 = vmatmul.bf16.gmra.mxu0 %v345
        %v382 = vpop.f32.mrf.mxu0
        %v383 = vadd.f32 %v251, %v382
        %v384 = vpop.f32.mrf.mxu0
        %385 = vdwg.mxu0
        %386 = vmatpush.bf16.msra.mxu0 0
        %387 = vmatpush.bf16.msra.mxu0 0
        %388 = vmatpush.bf16.msra.mxu0 0
        %389 = vmatpush.bf16.msra.mxu0 %v355
        %390 = vmatpush.bf16.msra.mxu0 %v321
        %391 = vmatpush.bf16.msra.mxu0 %v317
        %392 = vmatpush.bf16.msra.mxu0 %v313
        %393 = vmatpush.bf16.msra.mxu0 %v309
        %394 = vmatmul.bf16.gmra.mxu0 %v345
        %v395 = vpop.f32.mrf.mxu0
        %v396 = vadd.f32 %v251, %v395
        %v397 = vpop.f32.mrf.mxu0
        %398 = vdwg.mxu0
        %399 = vmatpush.bf16.msra.mxu0 0
        %400 = vmatpush.bf16.msra.mxu0 0
        %401 = vmatpush.bf16.msra.mxu0 0
        %402 = vmatpush.bf16.msra.mxu0 %v358
        %403 = vmatpush.bf16.msra.mxu0 %v322
        %404 = vmatpush.bf16.msra.mxu0 %v318
        %405 = vmatpush.bf16.msra.mxu0 %v314
        %406 = vmatpush.bf16.msra.mxu0 %v310
        %407 = vmatmul.bf16.gmra.mxu0 %v345
        %v408 = vpop.f32.mrf.mxu0
        %v409 = vadd.f32 %v251, %v408
        %v410 = vpop.f32.mrf.mxu0
        %411 = vdwg.mxu0
        %v416 = vrot.slane %v383, 4
        %v417 = vrot.slane %v409, 4
        %v418 = vsel %vm347, %v370, %v416
        %v419 = vsel %vm347, %v396, %v417
        %422 = vst [vmem:[%s225] sm:$0xff] %v418
        %423 = vst [vmem:[%s225 + $0x8] sm:$0xff] %v419
        %s424 = smul.u32 4, %s14
        %p425 = scmp.lt.s32.totalorder %s424, 15
        %s426 = scalar_select %p425, %s424, 15
        %s427 = smul.addr %s426, 4
        %s428 = scalar_lea.vmem %s3, %s427
        // Predicated region
        $region56: #{unet_forward.19} parent=50 // pred_check
          %p429 = pneg %p100
        $region57: #{unet_forward.19} parent=50 // pred_check_branch
          %431 = sbr.rel (%p429) target = $region59
        $region58: #{unet_forward.19} parent=50 // pred_region
          %s432 = smul.u32 4, %s14
        $region59: #{unet_forward.19} parent=50 // pred_fallthru
          _
      $region51: #{unet_forward.19} parent=5 // pred_fallthru
        _
      %p433 = scmp.le.s32.totalorder 2, %s9
      // Predicated region
      $region60: #{unet_forward.19} parent=5 // pred_check
        %p434 = pneg %p433
      $region61: #{unet_forward.19} parent=5 // pred_check_branch
        %436 = sbr.rel (%p434) target = $region63
      $region62: #{unet_forward.19} parent=5 // pred_region
        %s437 = ssub.s32 %s9, 2
        // Predicated region
        $region64: #{unet_forward.19} parent=62 // pred_check
          %p438 = pneg %p106
        $region65: #{unet_forward.19} parent=62 // pred_check_branch
          %440 = sbr.rel (%p438) target = $region67
        $region66: #{unet_forward.19} parent=62 // pred_region
          %s441 = smul.u32 4, %s15
          %p442 = scmp.lt.s32.totalorder %s441, 15
          %s443 = scalar_select %p442, %s441, 15
          %s444 = smul.addr %s443, 4
          %s445 = scalar_lea.vmem %s3, %s444
        $region67: #{unet_forward.19} parent=62 // pred_fallthru
          _
      $region63: #{unet_forward.19} parent=5 // pred_fallthru
        _
    $region6: #{unet_forward.19} parent=1 // loop_footer
      %s13 = sadd.s32 1, %s9
    $region7: #{unet_forward.19} parent=1 // loop_footer_branch
      %8 = sbr.rel target = $region3
    $region8: #{unet_forward.19} parent=1 // loop_exit
      _

</llo_original>
